<compile_context>
chip_gen: v6e
topology: v6e:2x2x1
jax: 0.10.0
libtpu: 0.0.40
codegen_flags: <defaults>
</compile_context>

<pallas_src>
import functools
import math

import jax
import jax.numpy as jnp
from jax.experimental import pallas as pl
from jax.experimental.pallas import tpu as pltpu


# ------------------------------------------------------------------ kernel ---

def _layernorm(x, w, b, eps, d):
    # matches torch: mean over last dim, unbiased std (ddof=1), (x-mu)/(std+eps)
    mean = jnp.mean(x, axis=-1, keepdims=True)
    var = jnp.sum((x - mean) ** 2, axis=-1, keepdims=True) / (d - 1)
    std = jnp.sqrt(var)
    return w * ((x - mean) / (std + eps)) + b


def _cast(a, dt):
    return a if dt is None else a.astype(dt)


def decoder_block_kernel(
    x_ref,
    ln1w_ref, ln1b_ref,
    wqkv_ref, bqkv_ref,
    wo_ref, bo_ref,
    ln2w_ref, ln2b_ref,
    wfc_ref, bfc_ref,
    wpr_ref, bpr_ref,
    y_ref, k_out_ref, v_out_ref,
    *, d_model, n_head, eps, tq, tk, mlp_chunk, mxu_dtype, approx_recip):
    S = x_ref.shape[1]
    D = d_model
    H = n_head
    dh = D // H
    f32 = jnp.float32

    x = x_ref[0].astype(f32)                                   # (S, D)

    # ---------------- ln_1 ----------------
    h = _layernorm(x, ln1w_ref[0], ln1b_ref[0], eps, D)

    # ---------------- fused QKV projection (one lane-dense matmul) ----------
    qkv = jnp.dot(_cast(h, mxu_dtype), _cast(wqkv_ref[...], mxu_dtype),
                  preferred_element_type=f32) + bqkv_ref[0].astype(f32)
    q = qkv[:, 0 * D:1 * D]
    k = qkv[:, 1 * D:2 * D]
    v = qkv[:, 2 * D:3 * D]

    # presents: single lane-dense (S, D) stores; wrapper reshapes to (B,H,S,dh)
    k_out_ref[0] = k.astype(k_out_ref.dtype)
    v_out_ref[0] = v.astype(v_out_ref.dtype)

    # ---------------- flash-style causal multi-head attention ---------------
    # (S, D) -> (H, S, dh) once per tensor; attention runs over (tq, tk) tiles.
    qh = pltpu.einshape("shd->hsd", q.reshape(S, H, dh))       # f32
    kh = _cast(pltpu.einshape("shd->hsd", k.reshape(S, H, dh)), mxu_dtype)
    vh = _cast(pltpu.einshape("shd->hsd", v.reshape(S, H, dh)), mxu_dtype)

    # head-merge folded into the output projection (no lane transpose):
    wo_h = _cast(wo_ref[...], mxu_dtype).reshape(H, dh, D)     # (H, dh, D)
    bo = bo_ref[0].astype(f32)

    scale = 1.0 / math.sqrt(dh)
    n_q = S // tq
    attn_rows = []
    for qi in range(n_q):                                      # static q-tile loop
        q_lo = qi * tq
        q_blk = _cast(qh[:, q_lo:q_lo + tq, :] * scale, mxu_dtype)

        m_i = jnp.full((H, tq, 1), -jnp.inf, f32)
        l_i = jnp.zeros((H, tq, 1), f32)
        acc = jnp.zeros((H, tq, dh), f32)

        # key tiles entirely above the causal diagonal are skipped (trace time)
        n_k = (q_lo + tq + tk - 1) // tk
        for ki in range(n_k):                                  # static k-tile loop
            k_lo = ki * tk
            k_blk = kh[:, k_lo:k_lo + tk, :]
            v_blk = vh[:, k_lo:k_lo + tk, :]

            s = jnp.einsum("hqd,hkd->hqk", q_blk, k_blk,
                           preferred_element_type=f32)         # (H, tq, tk)
            if k_lo + tk - 1 > q_lo:                           # tile touches diagonal
                rows = jax.lax.broadcasted_iota(jnp.int32, (tq, tk), 0) + q_lo
                cols = jax.lax.broadcasted_iota(jnp.int32, (tq, tk), 1) + k_lo
                s = jnp.where((rows >= cols)[None, :, :], s, -1e9)

            m_new = jnp.maximum(m_i, jnp.max(s, axis=-1, keepdims=True))
            alpha = jnp.exp(m_i - m_new)
            p = jnp.exp(s - m_new)
            l_i = alpha * l_i + jnp.sum(p, axis=-1, keepdims=True)
            acc = alpha * acc + jnp.einsum("hqk,hkd->hqd",
                                           _cast(p, mxu_dtype), v_blk,
                                           preferred_element_type=f32)
            m_i = m_new

        if approx_recip:
            o_tile = acc * pl.reciprocal(l_i, approx=True)     # EUP slot
        else:
            o_tile = acc / l_i                                  # exact (default)

        # per-head projection and head-sum: full-D output, no (S,D) transpose
        attn_q = jnp.einsum("hqd,hdD->hqD", _cast(o_tile, mxu_dtype), wo_h,
                            preferred_element_type=f32).sum(axis=0)   # (tq, D)
        attn_rows.append(attn_q)

    attn = attn_rows[0] if n_q == 1 else jnp.concatenate(attn_rows, axis=0)
    attn = attn + bo

    x1 = x + attn                                              # residual 1

    # ---------------- ln_2 + MLP (hidden dim chunked) -----------------------
    h2 = _layernorm(x1, ln2w_ref[0], ln2b_ref[0], eps, D)
    h2_m = _cast(h2, mxu_dtype)                                # cast hoisted out of loop
    hidden = wfc_ref.shape[1]
    chunk = mlp_chunk
    n_chunks = hidden // chunk
    inv_sqrt2 = 1.0 / math.sqrt(2.0)

    mlp_acc = jnp.zeros((S, D), f32)
    for c in range(n_chunks):                                  # static chunk loop
        lo = c * chunk
        hi = lo + chunk
        ff = jnp.dot(h2_m, _cast(wfc_ref[:, lo:hi], mxu_dtype),
                     preferred_element_type=f32) + bfc_ref[0, lo:hi].astype(f32)
        # exact GELU (nn.GELU default): 0.5 * x * (1 + erf(x / sqrt(2)))
        ff = 0.5 * ff * (1.0 + jax.lax.erf(ff * inv_sqrt2))
        mlp_acc = mlp_acc + jnp.dot(_cast(ff, mxu_dtype),
                                    _cast(wpr_ref[lo:hi, :], mxu_dtype),
                                    preferred_element_type=f32)

    y_ref[0] = (x1 + mlp_acc + bpr_ref[0].astype(f32)).astype(y_ref.dtype)


# ---------------------------------------------------------------- wrappers ---

_PARAM_ORDER = ("ln1_w", "ln1_b", "w_qkv", "b_qkv", "w_o", "b_o",
                "ln2_w", "ln2_b", "w_fc", "b_fc", "w_pr", "b_pr")


def decoder_block(x, params, *, d_model, n_head, eps,
                  attn_tile=128, mlp_chunk=512,
                  mxu_dtype=None, weight_dtype=None, approx_recip=False):
    B, S, D = x.shape
    assert D == d_model and d_model % n_head == 0
    dh = d_model // n_head

    # attention tile sizes (query == key tile); degrade to a single tile if
    # S is not divisible by the requested tile.
    tq = tk = min(S, attn_tile)
    if S % tq != 0:
        tq = tk = S

    weights = [params[key] for key in _PARAM_ORDER]
    if weight_dtype is not None:
        weights = [w.astype(weight_dtype) for w in weights]    # cast once, host side

    hidden = params["w_fc"].shape[1]
    chunk = min(hidden, mlp_chunk)
    if hidden % chunk != 0:
        chunk = hidden

    kernel = functools.partial(
        decoder_block_kernel, d_model=d_model, n_head=n_head, eps=eps,
        tq=tq, tk=tk, mlp_chunk=chunk, mxu_dtype=mxu_dtype,
        approx_recip=approx_recip)

    out_specs = [
        pl.BlockSpec((1, S, D), lambda b: (b, 0, 0)),   # y
        pl.BlockSpec((1, S, D), lambda b: (b, 0, 0)),   # k present, lane-dense
        pl.BlockSpec((1, S, D), lambda b: (b, 0, 0)),   # v present, lane-dense
    ]
    out_shape = [
        jax.ShapeDtypeStruct((B, S, D), x.dtype),
        jax.ShapeDtypeStruct((B, S, D), x.dtype),
        jax.ShapeDtypeStruct((B, S, D), x.dtype),
    ]

    # Chip-aware VMEM budget (v7x has only 64 MiB per TensorCore).
    try:
        vmem_cap = int(pltpu.get_tpu_info().vmem_capacity_bytes)
    except Exception:
        vmem_cap = 64 << 20

    def run(single_buffer_weights):
        def weight_spec(a):
            nd = a.ndim
            kwargs = {}
            if single_buffer_weights:
                # constant index_map across the grid -> no need to double-buffer
                kwargs["pipeline_mode"] = pl.Buffered(1)
            return pl.BlockSpec(a.shape, lambda b, _nd=nd: (0,) * _nd, **kwargs)

        in_specs = [pl.BlockSpec((1, S, D), lambda b: (b, 0, 0))]
        in_specs += [weight_spec(w) for w in weights]

        w_mult = 1 if single_buffer_weights else 2
        w_bytes = w_mult * sum(int(w.size) * w.dtype.itemsize for w in weights)
        io_bytes = 2 * 4 * S * D * x.dtype.itemsize            # 4 slabs, 2x buffered
        act_bytes = 4 * (16 * S * D                             # x,h,qkv,q/k/v heads,x1,h2,...
                         + 3 * n_head * tq * tk                 # per-tile scores / probs
                         + 2 * n_head * tq * dh                 # per-tile acc / o
                         + n_head * tq * D                      # per-head projection
                         + 2 * S * chunk)                       # MLP chunk intermediates
        need = w_bytes + io_bytes + act_bytes + (4 << 20)
        vmem_limit = int(max(min(need, vmem_cap - (8 << 20)), 16 << 20))

        return pl.pallas_call(
            kernel,
            grid=(B,),
            in_specs=in_specs,
            out_specs=out_specs,
            out_shape=out_shape,
            compiler_params=pltpu.CompilerParams(
                dimension_semantics=("parallel",),
                vmem_limit_bytes=vmem_limit),
        )(x, *weights)

    try:
        y, k_slab, v_slab = run(True)
    except Exception:
        # pl.Buffered(1) not accepted by this jax version: fall back to defaults.
        y, k_slab, v_slab = run(False)

    # Layout plumbing outside the kernel: (B, S, D) -> (B, H, S, dh).
    k_present = k_slab.reshape(B, S, n_head, dh).transpose(0, 2, 1, 3)
    v_present = v_slab.reshape(B, S, n_head, dh).transpose(0, 2, 1, 3)
    return y, (k_present, v_present)


def decoder_forward(x, layer_pasts, all_params, *, d_model, n_head, eps,
                    attn_tile=128, mlp_chunk=512,
                    mxu_dtype=None, weight_dtype=None, approx_recip=False):
    N = len(all_params)
    assert len(layer_pasts) == N, "length of layer_pasts need to be same as N"
    presents = []
    for i in range(N):
        x, present = decoder_block(
            x, all_params[i], d_model=d_model, n_head=n_head, eps=eps,
            attn_tile=attn_tile, mlp_chunk=mlp_chunk, mxu_dtype=mxu_dtype,
            weight_dtype=weight_dtype, approx_recip=approx_recip)
        presents.append(present)
    return x, presents


# ---------------------------------------------------------------- params -----

def init_block_params(key, d_model, mlp_scale):
    ks = jax.random.split(key, 4)
    s = 0.02
    f32 = jnp.float32
    return {
        "ln1_w": jnp.ones((1, d_model), f32),
        "ln1_b": jnp.zeros((1, d_model), f32),
        "w_qkv": s * jax.random.normal(ks[0], (d_model, 3 * d_model), f32),
        "b_qkv": jnp.zeros((1, 3 * d_model), f32),
        "w_o":   s * jax.random.normal(ks[1], (d_model, d_model), f32),
        "b_o":   jnp.zeros((1, d_model), f32),
        "ln2_w": jnp.ones((1, d_model), f32),
        "ln2_b": jnp.zeros((1, d_model), f32),
        "w_fc":  s * jax.random.normal(ks[2], (d_model, mlp_scale * d_model), f32),
        "b_fc":  jnp.zeros((1, mlp_scale * d_model), f32),
        "w_pr":  s * jax.random.normal(ks[3], (mlp_scale * d_model, d_model), f32),
        "b_pr":  jnp.zeros((1, d_model), f32),
    }


# ------------------------------------------------------------- JAX reference -

def _reference_decoder(x, all_params, *, n_head, eps):
    HI = jax.lax.Precision.HIGHEST

    def ln(t, w, b):
        mu = jnp.mean(t, axis=-1, keepdims=True)
        var = jnp.sum((t - mu) ** 2, axis=-1, keepdims=True) / (t.shape[-1] - 1)
        return w[0] * ((t - mu) / (jnp.sqrt(var) + eps)) + b[0]

    B, S, D = x.shape
    dh = D // n_head
    presents = []
    for p in all_params:
        h = ln(x, p["ln1_w"], p["ln1_b"])
        qkv = jnp.dot(h, p["w_qkv"], precision=HI) + p["b_qkv"][0]
        q, k, v = qkv[..., :D], qkv[..., D:2 * D], qkv[..., 2 * D:]
        qh = q.reshape(B, S, n_head, dh).transpose(0, 2, 1, 3)
        kh = k.reshape(B, S, n_head, dh).transpose(0, 2, 1, 3)
        vh = v.reshape(B, S, n_head, dh).transpose(0, 2, 1, 3)
        presents.append((kh, vh))
        s = jnp.einsum("bhqd,bhkd->bhqk", qh, kh, precision=HI) / math.sqrt(dh)
        mask = jnp.tril(jnp.ones((S, S), bool))
        s = jnp.where(mask, s, -1e9)
        w_attn = jax.nn.softmax(s, axis=-1)
        o = jnp.einsum("bhqk,bhkd->bhqd", w_attn, vh, precision=HI)
        o = o.transpose(0, 2, 1, 3).reshape(B, S, D)
        x = x + jnp.dot(o, p["w_o"], precision=HI) + p["b_o"][0]
        h2 = ln(x, p["ln2_w"], p["ln2_b"])
        ff = jnp.dot(h2, p["w_fc"], precision=HI) + p["b_fc"][0]
        ff = 0.5 * ff * (1.0 + jax.lax.erf(ff / math.sqrt(2.0)))
        x = x + jnp.dot(ff, p["w_pr"], precision=HI) + p["b_pr"][0]
    return x, presents


# ------------------------------------------------------------------- main ----

if __name__ == "__main__":
    # Decoder(d_model=32, head=4, drop=None, eps=1e-7, N=2, mlp_scale=4,
    #         attention_type='transformer', context=None, groups=None, seq_len=16)
    B, S, D, H = 2, 16, 32, 4
    MLP_SCALE, N, EPS = 4, 2, 1e-7

    root = jax.random.PRNGKey(0)
    key_x, key_p = jax.random.split(root)
    x = jax.random.normal(key_x, (B, S, D), dtype=jnp.float32)

    block_keys = jax.random.split(key_p, N)
    all_params = [init_block_params(block_keys[i], D, MLP_SCALE) for i in range(N)]

    layer_pasts = [None] * N
    # Defaults keep exact f32 PyTorch semantics; for peak MXU throughput on
    # v5e/v6e/v7x pass mxu_dtype=jnp.bfloat16, weight_dtype=jnp.bfloat16.
    # attn_tile=8 exercises the flash-style tiling + causal tile-skip path.
    y, presents = decoder_forward(x, layer_pasts, all_params,
                                  d_model=D, n_head=H, eps=EPS,
                                  attn_tile=8, mxu_dtype=None,
                                  weight_dtype=None, approx_recip=False)

    jax.block_until_ready(y)
    for kp, vp in presents:
        jax.block_until_ready(kp)
        jax.block_until_ready(vp)

    assert y.shape == (B, S, D)
    assert presents[0][0].shape == (B, H, S, D // H)
    assert presents[0][1].shape == (B, H, S, D // H)
    assert bool(jnp.isfinite(y).all())

    # Correctness check against a pure-JAX reference of the same math.
    y_ref, presents_ref = _reference_decoder(x, all_params, n_head=H, eps=EPS)
    assert bool(jnp.allclose(y, y_ref, rtol=2e-2, atol=2e-3)), "output mismatch"
    for (kp, vp), (kr, vr) in zip(presents, presents_ref):
        assert bool(jnp.allclose(kp, kr, rtol=2e-2, atol=2e-3)), "k present mismatch"
        assert bool(jnp.allclose(vp, vr, rtol=2e-2, atol=2e-3)), "v present mismatch"

    print("KERNEL_OK")
</pallas_src>

<mosaic_0001>
module attributes {stable_mosaic.version = 11 : i64} {
  func.func @decoder_block_kernel(%arg0: i32, %arg1: memref<1x16x32xf32, #tpu.memory_space<vmem>>, %arg2: memref<1x32xf32, #tpu.memory_space<vmem>>, %arg3: memref<1x32xf32, #tpu.memory_space<vmem>>, %arg4: memref<32x96xf32, #tpu.memory_space<vmem>>, %arg5: memref<1x96xf32, #tpu.memory_space<vmem>>, %arg6: memref<32x32xf32, #tpu.memory_space<vmem>>, %arg7: memref<1x32xf32, #tpu.memory_space<vmem>>, %arg8: memref<1x32xf32, #tpu.memory_space<vmem>>, %arg9: memref<1x32xf32, #tpu.memory_space<vmem>>, %arg10: memref<32x128xf32, #tpu.memory_space<vmem>>, %arg11: memref<1x128xf32, #tpu.memory_space<vmem>>, %arg12: memref<128x32xf32, #tpu.memory_space<vmem>>, %arg13: memref<1x32xf32, #tpu.memory_space<vmem>>, %arg14: memref<1x16x32xf32, #tpu.memory_space<vmem>>, %arg15: memref<1x16x32xf32, #tpu.memory_space<vmem>>, %arg16: memref<1x16x32xf32, #tpu.memory_space<vmem>>) attributes {dimension_semantics = [#tpu.dimension_semantics<parallel>], iteration_bounds = array<i64: 2>, scalar_prefetch = 0 : i64, scratch_operands = 0 : i64, tpu.core_type = #tpu.core_type<tc>, window_params = [{transform_indices = @transform_0, window_bounds = array<i64: 1, 16, 32>}, {pipeline_mode = #tpu.pipeline_mode<synchronous>, transform_indices = @transform_1, window_bounds = array<i64: 1, 32>}, {pipeline_mode = #tpu.pipeline_mode<synchronous>, transform_indices = @transform_2, window_bounds = array<i64: 1, 32>}, {pipeline_mode = #tpu.pipeline_mode<synchronous>, transform_indices = @transform_3, window_bounds = array<i64: 32, 96>}, {pipeline_mode = #tpu.pipeline_mode<synchronous>, transform_indices = @transform_4, window_bounds = array<i64: 1, 96>}, {pipeline_mode = #tpu.pipeline_mode<synchronous>, transform_indices = @transform_5, window_bounds = array<i64: 32, 32>}, {pipeline_mode = #tpu.pipeline_mode<synchronous>, transform_indices = @transform_6, window_bounds = array<i64: 1, 32>}, {pipeline_mode = #tpu.pipeline_mode<synchronous>, transform_indices = @transform_7, window_bounds = array<i64: 1, 32>}, {pipeline_mode = #tpu.pipeline_mode<synchronous>, transform_indices = @transform_8, window_bounds = array<i64: 1, 32>}, {pipeline_mode = #tpu.pipeline_mode<synchronous>, transform_indices = @transform_9, window_bounds = array<i64: 32, 128>}, {pipeline_mode = #tpu.pipeline_mode<synchronous>, transform_indices = @transform_10, window_bounds = array<i64: 1, 128>}, {pipeline_mode = #tpu.pipeline_mode<synchronous>, transform_indices = @transform_11, window_bounds = array<i64: 128, 32>}, {pipeline_mode = #tpu.pipeline_mode<synchronous>, transform_indices = @transform_12, window_bounds = array<i64: 1, 32>}, {transform_indices = @transform_13, window_bounds = array<i64: 1, 16, 32>}, {transform_indices = @transform_14, window_bounds = array<i64: 1, 16, 32>}, {transform_indices = @transform_15, window_bounds = array<i64: 1, 16, 32>}]} {
    %c0 = arith.constant 0 : index
    %c0_0 = arith.constant 0 : index
    %c0_1 = arith.constant 0 : index
    %0 = vector.load %arg1[%c0, %c0_0, %c0_1] : memref<1x16x32xf32, #tpu.memory_space<vmem>>, vector<1x16x32xf32>
    %1 = vector.shape_cast %0 : vector<1x16x32xf32> to vector<16x32xf32>
    %c0_2 = arith.constant 0 : index
    %c0_3 = arith.constant 0 : index
    %2 = vector.load %arg2[%c0_2, %c0_3] : memref<1x32xf32, #tpu.memory_space<vmem>>, vector<1x32xf32>
    %3 = vector.shape_cast %2 : vector<1x32xf32> to vector<32xf32>
    %c0_4 = arith.constant 0 : index
    %c0_5 = arith.constant 0 : index
    %4 = vector.load %arg3[%c0_4, %c0_5] : memref<1x32xf32, #tpu.memory_space<vmem>>, vector<1x32xf32>
    %5 = vector.shape_cast %4 : vector<1x32xf32> to vector<32xf32>
    %cst = arith.constant dense<0.000000e+00> : vector<16xf32>
    %6 = vector.multi_reduction <add>, %1, %cst [1] : vector<16x32xf32> to vector<16xf32>
    %7 = vector.shape_cast %6 : vector<16xf32> to vector<16x1xf32>
    %cst_6 = arith.constant 3.200000e+01 : f32
    %8 = vector.broadcast %cst_6 : f32 to vector<16x1xf32>
    %9 = arith.divf %7, %8 : vector<16x1xf32>
    %10 = vector.broadcast %9 : vector<16x1xf32> to vector<16x32xf32>
    %11 = arith.subf %1, %10 : vector<16x32xf32>
    %12 = arith.mulf %11, %11 : vector<16x32xf32>
    %cst_7 = arith.constant dense<0.000000e+00> : vector<16xf32>
    %13 = vector.multi_reduction <add>, %12, %cst_7 [1] : vector<16x32xf32> to vector<16xf32>
    %14 = vector.shape_cast %13 : vector<16xf32> to vector<16x1xf32>
    %cst_8 = arith.constant 3.100000e+01 : f32
    %15 = vector.broadcast %cst_8 : f32 to vector<16x1xf32>
    %16 = arith.divf %14, %15 : vector<16x1xf32>
    %17 = math.sqrt %16 : vector<16x1xf32>
    %18 = vector.broadcast %9 : vector<16x1xf32> to vector<16x32xf32>
    %19 = arith.subf %1, %18 : vector<16x32xf32>
    %cst_9 = arith.constant 1.000000e-07 : f32
    %20 = vector.broadcast %cst_9 : f32 to vector<16x1xf32>
    %21 = arith.addf %17, %20 : vector<16x1xf32>
    %22 = vector.broadcast %21 : vector<16x1xf32> to vector<16x32xf32>
    %23 = arith.divf %19, %22 : vector<16x32xf32>
    %24 = vector.shape_cast %3 : vector<32xf32> to vector<1x32xf32>
    %25 = vector.broadcast %24 : vector<1x32xf32> to vector<16x32xf32>
    %26 = arith.mulf %25, %23 : vector<16x32xf32>
    %27 = vector.shape_cast %5 : vector<32xf32> to vector<1x32xf32>
    %28 = vector.broadcast %27 : vector<1x32xf32> to vector<16x32xf32>
    %29 = arith.addf %26, %28 : vector<16x32xf32>
    %c0_10 = arith.constant 0 : index
    %c0_11 = arith.constant 0 : index
    %30 = vector.load %arg4[%c0_10, %c0_11] : memref<32x96xf32, #tpu.memory_space<vmem>>, vector<32x96xf32>
    %cst_12 = arith.constant dense<0.000000e+00> : vector<16x96xf32>
    %31 = tpu.matmul %29, %30, %cst_12 {dimension_numbers = #tpu.dot_dimension_numbers<[1], [0], [0], [1], [0, 0, 1, 1], [], []>} : vector<16x32xf32>, vector<32x96xf32>, vector<16x96xf32> -> vector<16x96xf32>
    %c0_13 = arith.constant 0 : index
    %c0_14 = arith.constant 0 : index
    %32 = vector.load %arg5[%c0_13, %c0_14] : memref<1x96xf32, #tpu.memory_space<vmem>>, vector<1x96xf32>
    %33 = vector.shape_cast %32 : vector<1x96xf32> to vector<96xf32>
    %34 = vector.shape_cast %33 : vector<96xf32> to vector<1x96xf32>
    %35 = vector.broadcast %34 : vector<1x96xf32> to vector<16x96xf32>
    %36 = arith.addf %31, %35 : vector<16x96xf32>
    %37 = vector.extract_strided_slice %36 {offsets = [0, 0], sizes = [16, 32], strides = [1, 1]} : vector<16x96xf32> to vector<16x32xf32>
    %38 = vector.extract_strided_slice %36 {offsets = [0, 32], sizes = [16, 32], strides = [1, 1]} : vector<16x96xf32> to vector<16x32xf32>
    %39 = vector.extract_strided_slice %36 {offsets = [0, 64], sizes = [16, 32], strides = [1, 1]} : vector<16x96xf32> to vector<16x32xf32>
    %c0_15 = arith.constant 0 : index
    %c0_16 = arith.constant 0 : index
    %c0_17 = arith.constant 0 : index
    %40 = vector.load %arg15[%c0_15, %c0_16, %c0_17] : memref<1x16x32xf32, #tpu.memory_space<vmem>>, vector<1x16x32xf32>
    %41 = vector.shape_cast %40 : vector<1x16x32xf32> to vector<16x32xf32>
    %42 = vector.shape_cast %38 : vector<16x32xf32> to vector<1x16x32xf32>
    tpu.vector_store %arg15[%c0_15, %c0_16, %c0_17], %42 {strides = array<i32>} : memref<1x16x32xf32, #tpu.memory_space<vmem>>, vector<1x16x32xf32>,
    %c0_18 = arith.constant 0 : index
    %c0_19 = arith.constant 0 : index
    %c0_20 = arith.constant 0 : index
    %43 = vector.load %arg16[%c0_18, %c0_19, %c0_20] : memref<1x16x32xf32, #tpu.memory_space<vmem>>, vector<1x16x32xf32>
    %44 = vector.shape_cast %43 : vector<1x16x32xf32> to vector<16x32xf32>
    %45 = vector.shape_cast %39 : vector<16x32xf32> to vector<1x16x32xf32>
    tpu.vector_store %arg16[%c0_18, %c0_19, %c0_20], %45 {strides = array<i32>} : memref<1x16x32xf32, #tpu.memory_space<vmem>>, vector<1x16x32xf32>,
    %46 = vector.shape_cast %37 : vector<16x32xf32> to vector<16x4x8xf32>
    %47 = tpu.transpose %46, [1, 0, 2] : vector<16x4x8xf32> -> vector<4x16x8xf32>
    %48 = vector.shape_cast %38 : vector<16x32xf32> to vector<16x4x8xf32>
    %49 = tpu.transpose %48, [1, 0, 2] : vector<16x4x8xf32> -> vector<4x16x8xf32>
    %50 = vector.shape_cast %39 : vector<16x32xf32> to vector<16x4x8xf32>
    %51 = tpu.transpose %50, [1, 0, 2] : vector<16x4x8xf32> -> vector<4x16x8xf32>
    %c0_21 = arith.constant 0 : index
    %c0_22 = arith.constant 0 : index
    %52 = vector.load %arg6[%c0_21, %c0_22] : memref<32x32xf32, #tpu.memory_space<vmem>>, vector<32x32xf32>
    %53 = vector.shape_cast %52 : vector<32x32xf32> to vector<4x8x32xf32>
    %c0_23 = arith.constant 0 : index
    %c0_24 = arith.constant 0 : index
    %54 = vector.load %arg7[%c0_23, %c0_24] : memref<1x32xf32, #tpu.memory_space<vmem>>, vector<1x32xf32>
    %55 = vector.shape_cast %54 : vector<1x32xf32> to vector<32xf32>
    %56 = vector.extract_strided_slice %47 {offsets = [0, 0, 0], sizes = [4, 8, 8], strides = [1, 1, 1]} : vector<4x16x8xf32> to vector<4x8x8xf32>
    %cst_25 = arith.constant 0.353553385 : f32
    %57 = vector.broadcast %cst_25 : f32 to vector<4x8x8xf32>
    %58 = arith.mulf %56, %57 : vector<4x8x8xf32>
    %cst_26 = arith.constant 0xFF800000 : f32
    %59 = vector.broadcast %cst_26 : f32 to vector<4x8x1xf32>
    %cst_27 = arith.constant 0.000000e+00 : f32
    %60 = vector.broadcast %cst_27 : f32 to vector<4x8x1xf32>
    %cst_28 = arith.constant 0.000000e+00 : f32
    %61 = vector.broadcast %cst_28 : f32 to vector<4x8x8xf32>
    %62 = vector.extract_strided_slice %49 {offsets = [0, 0, 0], sizes = [4, 8, 8], strides = [1, 1, 1]} : vector<4x16x8xf32> to vector<4x8x8xf32>
    %63 = vector.extract_strided_slice %51 {offsets = [0, 0, 0], sizes = [4, 8, 8], strides = [1, 1, 1]} : vector<4x16x8xf32> to vector<4x8x8xf32>
    "tpu.trace_start"() <{level = 10 : i32, message = "hqd,hkd->hqk"}> : () -> ()
    %cst_29 = arith.constant dense<0.000000e+00> : vector<4x8x8xf32>
    %64 = tpu.matmul %58, %62, %cst_29 {dimension_numbers = #tpu.dot_dimension_numbers<[2], [2], [1], [1], [0, 0, 0, 1, 1, 1], [0], [0]>} : vector<4x8x8xf32>, vector<4x8x8xf32>, vector<4x8x8xf32> -> vector<4x8x8xf32>
    "tpu.trace_stop"() : () -> ()
    %65 = tpu.iota {dimensions = array<i32: 0>} : vector<8x8xi32>
    %c0_i32 = arith.constant 0 : i32
    %66 = vector.broadcast %c0_i32 : i32 to vector<8x8xi32>
    %67 = arith.addi %65, %66 : vector<8x8xi32>
    %68 = tpu.iota {dimensions = array<i32: 1>} : vector<8x8xi32>
    %c0_i32_30 = arith.constant 0 : i32
    %69 = vector.broadcast %c0_i32_30 : i32 to vector<8x8xi32>
    %70 = arith.addi %68, %69 : vector<8x8xi32>
    %71 = arith.cmpi sge, %67, %70 : vector<8x8xi32>
    %72 = vector.shape_cast %71 : vector<8x8xi1> to vector<1x8x8xi1>
    %cst_31 = arith.constant -1.000000e+09 : f32
    %73 = vector.shape_cast %72 : vector<1x8x8xi1> to vector<1x8x8xi1>
    %74 = vector.broadcast %73 : vector<1x8x8xi1> to vector<4x8x8xi1>
    %75 = vector.broadcast %cst_31 : f32 to vector<4x8x8xf32>
    %76 = arith.select %74, %64, %75 : vector<4x8x8xi1>, vector<4x8x8xf32>
    %cst_32 = arith.constant dense<0xFF800000> : vector<4x8xf32>
    %77 = vector.multi_reduction <maximumf>, %76, %cst_32 [2] : vector<4x8x8xf32> to vector<4x8xf32>
    %78 = vector.shape_cast %77 : vector<4x8xf32> to vector<4x8x1xf32>
    %79 = arith.maximumf %59, %78 : vector<4x8x1xf32>
    %80 = arith.subf %59, %79 : vector<4x8x1xf32>
    %81 = math.exp %80 : vector<4x8x1xf32>
    %82 = vector.broadcast %79 : vector<4x8x1xf32> to vector<4x8x8xf32>
    %83 = arith.subf %76, %82 : vector<4x8x8xf32>
    %84 = math.exp %83 : vector<4x8x8xf32>
    %85 = arith.mulf %81, %60 : vector<4x8x1xf32>
    %cst_33 = arith.constant dense<0.000000e+00> : vector<4x8xf32>
    %86 = vector.multi_reduction <add>, %84, %cst_33 [2] : vector<4x8x8xf32> to vector<4x8xf32>
    %87 = vector.shape_cast %86 : vector<4x8xf32> to vector<4x8x1xf32>
    %88 = arith.addf %85, %87 : vector<4x8x1xf32>
    %89 = vector.broadcast %81 : vector<4x8x1xf32> to vector<4x8x8xf32>
    %90 = arith.mulf %89, %61 : vector<4x8x8xf32>
    "tpu.trace_start"() <{level = 10 : i32, message = "hqk,hkd->hqd"}> : () -> ()
    %cst_34 = arith.constant dense<0.000000e+00> : vector<4x8x8xf32>
    %91 = tpu.matmul %84, %63, %cst_34 {dimension_numbers = #tpu.dot_dimension_numbers<[2], [1], [1], [2], [0, 0, 0, 1, 1, 2], [0], [0]>} : vector<4x8x8xf32>, vector<4x8x8xf32>, vector<4x8x8xf32> -> vector<4x8x8xf32>
    "tpu.trace_stop"() : () -> ()
    %92 = arith.addf %90, %91 : vector<4x8x8xf32>
    %93 = vector.broadcast %88 : vector<4x8x1xf32> to vector<4x8x8xf32>
    %94 = arith.divf %92, %93 : vector<4x8x8xf32>
    "tpu.trace_start"() <{level = 10 : i32, message = "hqd,hdD->hqD"}> : () -> ()
    %cst_35 = arith.constant dense<0.000000e+00> : vector<4x8x32xf32>
    %95 = tpu.matmul %94, %53, %cst_35 {dimension_numbers = #tpu.dot_dimension_numbers<[2], [1], [1], [2], [0, 0, 0, 1, 1, 2], [0], [0]>} : vector<4x8x8xf32>, vector<4x8x32xf32>, vector<4x8x32xf32> -> vector<4x8x32xf32>
    "tpu.trace_stop"() : () -> ()
    %cst_36 = arith.constant dense<0.000000e+00> : vector<8x32xf32>
    %96 = vector.multi_reduction <add>, %95, %cst_36 [0] : vector<4x8x32xf32> to vector<8x32xf32>
    %97 = vector.extract_strided_slice %47 {offsets = [0, 8, 0], sizes = [4, 8, 8], strides = [1, 1, 1]} : vector<4x16x8xf32> to vector<4x8x8xf32>
    %cst_37 = arith.constant 0.353553385 : f32
    %98 = vector.broadcast %cst_37 : f32 to vector<4x8x8xf32>
    %99 = arith.mulf %97, %98 : vector<4x8x8xf32>
    %cst_38 = arith.constant 0xFF800000 : f32
    %100 = vector.broadcast %cst_38 : f32 to vector<4x8x1xf32>
    %cst_39 = arith.constant 0.000000e+00 : f32
    %101 = vector.broadcast %cst_39 : f32 to vector<4x8x1xf32>
    %cst_40 = arith.constant 0.000000e+00 : f32
    %102 = vector.broadcast %cst_40 : f32 to vector<4x8x8xf32>
    %103 = vector.extract_strided_slice %49 {offsets = [0, 0, 0], sizes = [4, 8, 8], strides = [1, 1, 1]} : vector<4x16x8xf32> to vector<4x8x8xf32>
    %104 = vector.extract_strided_slice %51 {offsets = [0, 0, 0], sizes = [4, 8, 8], strides = [1, 1, 1]} : vector<4x16x8xf32> to vector<4x8x8xf32>
    "tpu.trace_start"() <{level = 10 : i32, message = "hqd,hkd->hqk"}> : () -> ()
    %cst_41 = arith.constant dense<0.000000e+00> : vector<4x8x8xf32>
    %105 = tpu.matmul %99, %103, %cst_41 {dimension_numbers = #tpu.dot_dimension_numbers<[2], [2], [1], [1], [0, 0, 0, 1, 1, 1], [0], [0]>} : vector<4x8x8xf32>, vector<4x8x8xf32>, vector<4x8x8xf32> -> vector<4x8x8xf32>
    "tpu.trace_stop"() : () -> ()
    %cst_42 = arith.constant dense<0xFF800000> : vector<4x8xf32>
    %106 = vector.multi_reduction <maximumf>, %105, %cst_42 [2] : vector<4x8x8xf32> to vector<4x8xf32>
    %107 = vector.shape_cast %106 : vector<4x8xf32> to vector<4x8x1xf32>
    %108 = arith.maximumf %100, %107 : vector<4x8x1xf32>
    %109 = arith.subf %100, %108 : vector<4x8x1xf32>
    %110 = math.exp %109 : vector<4x8x1xf32>
    %111 = vector.broadcast %108 : vector<4x8x1xf32> to vector<4x8x8xf32>
    %112 = arith.subf %105, %111 : vector<4x8x8xf32>
    %113 = math.exp %112 : vector<4x8x8xf32>
    %114 = arith.mulf %110, %101 : vector<4x8x1xf32>
    %cst_43 = arith.constant dense<0.000000e+00> : vector<4x8xf32>
    %115 = vector.multi_reduction <add>, %113, %cst_43 [2] : vector<4x8x8xf32> to vector<4x8xf32>
    %116 = vector.shape_cast %115 : vector<4x8xf32> to vector<4x8x1xf32>
    %117 = arith.addf %114, %116 : vector<4x8x1xf32>
    %118 = vector.broadcast %110 : vector<4x8x1xf32> to vector<4x8x8xf32>
    %119 = arith.mulf %118, %102 : vector<4x8x8xf32>
    "tpu.trace_start"() <{level = 10 : i32, message = "hqk,hkd->hqd"}> : () -> ()
    %cst_44 = arith.constant dense<0.000000e+00> : vector<4x8x8xf32>
    %120 = tpu.matmul %113, %104, %cst_44 {dimension_numbers = #tpu.dot_dimension_numbers<[2], [1], [1], [2], [0, 0, 0, 1, 1, 2], [0], [0]>} : vector<4x8x8xf32>, vector<4x8x8xf32>, vector<4x8x8xf32> -> vector<4x8x8xf32>
    "tpu.trace_stop"() : () -> ()
    %121 = arith.addf %119, %120 : vector<4x8x8xf32>
    %122 = vector.extract_strided_slice %49 {offsets = [0, 8, 0], sizes = [4, 8, 8], strides = [1, 1, 1]} : vector<4x16x8xf32> to vector<4x8x8xf32>
    %123 = vector.extract_strided_slice %51 {offsets = [0, 8, 0], sizes = [4, 8, 8], strides = [1, 1, 1]} : vector<4x16x8xf32> to vector<4x8x8xf32>
    "tpu.trace_start"() <{level = 10 : i32, message = "hqd,hkd->hqk"}> : () -> ()
    %cst_45 = arith.constant dense<0.000000e+00> : vector<4x8x8xf32>
    %124 = tpu.matmul %99, %122, %cst_45 {dimension_numbers = #tpu.dot_dimension_numbers<[2], [2], [1], [1], [0, 0, 0, 1, 1, 1], [0], [0]>} : vector<4x8x8xf32>, vector<4x8x8xf32>, vector<4x8x8xf32> -> vector<4x8x8xf32>
    "tpu.trace_stop"() : () -> ()
    %125 = tpu.iota {dimensions = array<i32: 0>} : vector<8x8xi32>
    %c8_i32 = arith.constant 8 : i32
    %126 = vector.broadcast %c8_i32 : i32 to vector<8x8xi32>
    %127 = arith.addi %125, %126 : vector<8x8xi32>
    %128 = tpu.iota {dimensions = array<i32: 1>} : vector<8x8xi32>
    %c8_i32_46 = arith.constant 8 : i32
    %129 = vector.broadcast %c8_i32_46 : i32 to vector<8x8xi32>
    %130 = arith.addi %128, %129 : vector<8x8xi32>
    %131 = arith.cmpi sge, %127, %130 : vector<8x8xi32>
    %132 = vector.shape_cast %131 : vector<8x8xi1> to vector<1x8x8xi1>
    %cst_47 = arith.constant -1.000000e+09 : f32
    %133 = vector.shape_cast %132 : vector<1x8x8xi1> to vector<1x8x8xi1>
    %134 = vector.broadcast %133 : vector<1x8x8xi1> to vector<4x8x8xi1>
    %135 = vector.broadcast %cst_47 : f32 to vector<4x8x8xf32>
    %136 = arith.select %134, %124, %135 : vector<4x8x8xi1>, vector<4x8x8xf32>
    %cst_48 = arith.constant dense<0xFF800000> : vector<4x8xf32>
    %137 = vector.multi_reduction <maximumf>, %136, %cst_48 [2] : vector<4x8x8xf32> to vector<4x8xf32>
    %138 = vector.shape_cast %137 : vector<4x8xf32> to vector<4x8x1xf32>
    %139 = arith.maximumf %108, %138 : vector<4x8x1xf32>
    %140 = arith.subf %108, %139 : vector<4x8x1xf32>
    %141 = math.exp %140 : vector<4x8x1xf32>
    %142 = vector.broadcast %139 : vector<4x8x1xf32> to vector<4x8x8xf32>
    %143 = arith.subf %136, %142 : vector<4x8x8xf32>
    %144 = math.exp %143 : vector<4x8x8xf32>
    %145 = arith.mulf %141, %117 : vector<4x8x1xf32>
    %cst_49 = arith.constant dense<0.000000e+00> : vector<4x8xf32>
    %146 = vector.multi_reduction <add>, %144, %cst_49 [2] : vector<4x8x8xf32> to vector<4x8xf32>
    %147 = vector.shape_cast %146 : vector<4x8xf32> to vector<4x8x1xf32>
    %148 = arith.addf %145, %147 : vector<4x8x1xf32>
    %149 = vector.broadcast %141 : vector<4x8x1xf32> to vector<4x8x8xf32>
    %150 = arith.mulf %149, %121 : vector<4x8x8xf32>
    "tpu.trace_start"() <{level = 10 : i32, message = "hqk,hkd->hqd"}> : () -> ()
    %cst_50 = arith.constant dense<0.000000e+00> : vector<4x8x8xf32>
    %151 = tpu.matmul %144, %123, %cst_50 {dimension_numbers = #tpu.dot_dimension_numbers<[2], [1], [1], [2], [0, 0, 0, 1, 1, 2], [0], [0]>} : vector<4x8x8xf32>, vector<4x8x8xf32>, vector<4x8x8xf32> -> vector<4x8x8xf32>
    "tpu.trace_stop"() : () -> ()
    %152 = arith.addf %150, %151 : vector<4x8x8xf32>
    %153 = vector.broadcast %148 : vector<4x8x1xf32> to vector<4x8x8xf32>
    %154 = arith.divf %152, %153 : vector<4x8x8xf32>
    "tpu.trace_start"() <{level = 10 : i32, message = "hqd,hdD->hqD"}> : () -> ()
    %cst_51 = arith.constant dense<0.000000e+00> : vector<4x8x32xf32>
    %155 = tpu.matmul %154, %53, %cst_51 {dimension_numbers = #tpu.dot_dimension_numbers<[2], [1], [1], [2], [0, 0, 0, 1, 1, 2], [0], [0]>} : vector<4x8x8xf32>, vector<4x8x32xf32>, vector<4x8x32xf32> -> vector<4x8x32xf32>
    "tpu.trace_stop"() : () -> ()
    %cst_52 = arith.constant dense<0.000000e+00> : vector<8x32xf32>
    %156 = vector.multi_reduction <add>, %155, %cst_52 [0] : vector<4x8x32xf32> to vector<8x32xf32>
    %157 = tpu.concatenate %96, %156 in 0 : vector<8x32xf32>, vector<8x32xf32> -> vector<16x32xf32>
    %158 = vector.shape_cast %55 : vector<32xf32> to vector<1x32xf32>
    %159 = vector.broadcast %158 : vector<1x32xf32> to vector<16x32xf32>
    %160 = arith.addf %157, %159 : vector<16x32xf32>
    %161 = arith.addf %1, %160 : vector<16x32xf32>
    %c0_53 = arith.constant 0 : index
    %c0_54 = arith.constant 0 : index
    %162 = vector.load %arg8[%c0_53, %c0_54] : memref<1x32xf32, #tpu.memory_space<vmem>>, vector<1x32xf32>
    %163 = vector.shape_cast %162 : vector<1x32xf32> to vector<32xf32>
    %c0_55 = arith.constant 0 : index
    %c0_56 = arith.constant 0 : index
    %164 = vector.load %arg9[%c0_55, %c0_56] : memref<1x32xf32, #tpu.memory_space<vmem>>, vector<1x32xf32>
    %165 = vector.shape_cast %164 : vector<1x32xf32> to vector<32xf32>
    %cst_57 = arith.constant dense<0.000000e+00> : vector<16xf32>
    %166 = vector.multi_reduction <add>, %161, %cst_57 [1] : vector<16x32xf32> to vector<16xf32>
    %167 = vector.shape_cast %166 : vector<16xf32> to vector<16x1xf32>
    %cst_58 = arith.constant 3.200000e+01 : f32
    %168 = vector.broadcast %cst_58 : f32 to vector<16x1xf32>
    %169 = arith.divf %167, %168 : vector<16x1xf32>
    %170 = vector.broadcast %169 : vector<16x1xf32> to vector<16x32xf32>
    %171 = arith.subf %161, %170 : vector<16x32xf32>
    %172 = arith.mulf %171, %171 : vector<16x32xf32>
    %cst_59 = arith.constant dense<0.000000e+00> : vector<16xf32>
    %173 = vector.multi_reduction <add>, %172, %cst_59 [1] : vector<16x32xf32> to vector<16xf32>
    %174 = vector.shape_cast %173 : vector<16xf32> to vector<16x1xf32>
    %cst_60 = arith.constant 3.100000e+01 : f32
    %175 = vector.broadcast %cst_60 : f32 to vector<16x1xf32>
    %176 = arith.divf %174, %175 : vector<16x1xf32>
    %177 = math.sqrt %176 : vector<16x1xf32>
    %178 = vector.broadcast %169 : vector<16x1xf32> to vector<16x32xf32>
    %179 = arith.subf %161, %178 : vector<16x32xf32>
    %cst_61 = arith.constant 1.000000e-07 : f32
    %180 = vector.broadcast %cst_61 : f32 to vector<16x1xf32>
    %181 = arith.addf %177, %180 : vector<16x1xf32>
    %182 = vector.broadcast %181 : vector<16x1xf32> to vector<16x32xf32>
    %183 = arith.divf %179, %182 : vector<16x32xf32>
    %184 = vector.shape_cast %163 : vector<32xf32> to vector<1x32xf32>
    %185 = vector.broadcast %184 : vector<1x32xf32> to vector<16x32xf32>
    %186 = arith.mulf %185, %183 : vector<16x32xf32>
    %187 = vector.shape_cast %165 : vector<32xf32> to vector<1x32xf32>
    %188 = vector.broadcast %187 : vector<1x32xf32> to vector<16x32xf32>
    %189 = arith.addf %186, %188 : vector<16x32xf32>
    %cst_62 = arith.constant 0.000000e+00 : f32
    %190 = vector.broadcast %cst_62 : f32 to vector<16x32xf32>
    %c0_63 = arith.constant 0 : index
    %c0_64 = arith.constant 0 : index
    %191 = vector.load %arg10[%c0_63, %c0_64] : memref<32x128xf32, #tpu.memory_space<vmem>>, vector<32x128xf32>
    %cst_65 = arith.constant dense<0.000000e+00> : vector<16x128xf32>
    %192 = tpu.matmul %189, %191, %cst_65 {dimension_numbers = #tpu.dot_dimension_numbers<[1], [0], [0], [1], [0, 0, 1, 1], [], []>} : vector<16x32xf32>, vector<32x128xf32>, vector<16x128xf32> -> vector<16x128xf32>
    %c0_66 = arith.constant 0 : index
    %c0_67 = arith.constant 0 : index
    %193 = vector.load %arg11[%c0_66, %c0_67] : memref<1x128xf32, #tpu.memory_space<vmem>>, vector<1x128xf32>
    %194 = vector.shape_cast %193 : vector<1x128xf32> to vector<128xf32>
    %195 = vector.shape_cast %194 : vector<128xf32> to vector<1x128xf32>
    %196 = vector.broadcast %195 : vector<1x128xf32> to vector<16x128xf32>
    %197 = arith.addf %192, %196 : vector<16x128xf32>
    %cst_68 = arith.constant 5.000000e-01 : f32
    %198 = vector.broadcast %cst_68 : f32 to vector<16x128xf32>
    %199 = arith.mulf %198, %197 : vector<16x128xf32>
    %cst_69 = arith.constant 0.707106769 : f32
    %200 = vector.broadcast %cst_69 : f32 to vector<16x128xf32>
    %201 = arith.mulf %197, %200 : vector<16x128xf32>
    %202 = math.erf %201 : vector<16x128xf32>
    %cst_70 = arith.constant 1.000000e+00 : f32
    %203 = vector.broadcast %cst_70 : f32 to vector<16x128xf32>
    %204 = arith.addf %203, %202 : vector<16x128xf32>
    %205 = arith.mulf %199, %204 : vector<16x128xf32>
    %c0_71 = arith.constant 0 : index
    %c0_72 = arith.constant 0 : index
    %206 = vector.load %arg12[%c0_71, %c0_72] : memref<128x32xf32, #tpu.memory_space<vmem>>, vector<128x32xf32>
    %cst_73 = arith.constant dense<0.000000e+00> : vector<16x32xf32>
    %207 = tpu.matmul %205, %206, %cst_73 {dimension_numbers = #tpu.dot_dimension_numbers<[1], [0], [0], [1], [0, 0, 1, 1], [], []>} : vector<16x128xf32>, vector<128x32xf32>, vector<16x32xf32> -> vector<16x32xf32>
    %208 = arith.addf %190, %207 : vector<16x32xf32>
    %209 = arith.addf %161, %208 : vector<16x32xf32>
    %c0_74 = arith.constant 0 : index
    %c0_75 = arith.constant 0 : index
    %210 = vector.load %arg13[%c0_74, %c0_75] : memref<1x32xf32, #tpu.memory_space<vmem>>, vector<1x32xf32>
    %211 = vector.shape_cast %210 : vector<1x32xf32> to vector<32xf32>
    %212 = vector.shape_cast %211 : vector<32xf32> to vector<1x32xf32>
    %213 = vector.broadcast %212 : vector<1x32xf32> to vector<16x32xf32>
    %214 = arith.addf %209, %213 : vector<16x32xf32>
    %c0_76 = arith.constant 0 : index
    %c0_77 = arith.constant 0 : index
    %c0_78 = arith.constant 0 : index
    %215 = vector.load %arg14[%c0_76, %c0_77, %c0_78] : memref<1x16x32xf32, #tpu.memory_space<vmem>>, vector<1x16x32xf32>
    %216 = vector.shape_cast %215 : vector<1x16x32xf32> to vector<16x32xf32>
    %217 = vector.shape_cast %214 : vector<16x32xf32> to vector<1x16x32xf32>
    tpu.vector_store %arg14[%c0_76, %c0_77, %c0_78], %217 {strides = array<i32>} : memref<1x16x32xf32, #tpu.memory_space<vmem>>, vector<1x16x32xf32>,
    return
  }
  func.func @transform_0(%arg0: i32) -> (i32, i32, i32) {
    %c0_i32 = arith.constant 0 : i32
    %c0_i32_0 = arith.constant 0 : i32
    %c0_i32_1 = arith.constant 0 : i32
    return %arg0, %c0_i32, %c0_i32_0 : i32, i32, i32
  }
  func.func @transform_1(%arg0: i32) -> (i32, i32) {
    %c0_i32 = arith.constant 0 : i32
    %c0_i32_0 = arith.constant 0 : i32
    %c0_i32_1 = arith.constant 0 : i32
    return %c0_i32, %c0_i32_0 : i32, i32
  }
  func.func @transform_2(%arg0: i32) -> (i32, i32) {
    %c0_i32 = arith.constant 0 : i32
    %c0_i32_0 = arith.constant 0 : i32
    %c0_i32_1 = arith.constant 0 : i32
    return %c0_i32, %c0_i32_0 : i32, i32
  }
  func.func @transform_3(%arg0: i32) -> (i32, i32) {
    %c0_i32 = arith.constant 0 : i32
    %c0_i32_0 = arith.constant 0 : i32
    %c0_i32_1 = arith.constant 0 : i32
    return %c0_i32, %c0_i32_0 : i32, i32
  }
  func.func @transform_4(%arg0: i32) -> (i32, i32) {
    %c0_i32 = arith.constant 0 : i32
    %c0_i32_0 = arith.constant 0 : i32
    %c0_i32_1 = arith.constant 0 : i32
    return %c0_i32, %c0_i32_0 : i32, i32
  }
  func.func @transform_5(%arg0: i32) -> (i32, i32) {
    %c0_i32 = arith.constant 0 : i32
    %c0_i32_0 = arith.constant 0 : i32
    %c0_i32_1 = arith.constant 0 : i32
    return %c0_i32, %c0_i32_0 : i32, i32
  }
  func.func @transform_6(%arg0: i32) -> (i32, i32) {
    %c0_i32 = arith.constant 0 : i32
    %c0_i32_0 = arith.constant 0 : i32
    %c0_i32_1 = arith.constant 0 : i32
    return %c0_i32, %c0_i32_0 : i32, i32
  }
  func.func @transform_7(%arg0: i32) -> (i32, i32) {
    %c0_i32 = arith.constant 0 : i32
    %c0_i32_0 = arith.constant 0 : i32
    %c0_i32_1 = arith.constant 0 : i32
    return %c0_i32, %c0_i32_0 : i32, i32
  }
  func.func @transform_8(%arg0: i32) -> (i32, i32) {
    %c0_i32 = arith.constant 0 : i32
    %c0_i32_0 = arith.constant 0 : i32
    %c0_i32_1 = arith.constant 0 : i32
    return %c0_i32, %c0_i32_0 : i32, i32
  }
  func.func @transform_9(%arg0: i32) -> (i32, i32) {
    %c0_i32 = arith.constant 0 : i32
    %c0_i32_0 = arith.constant 0 : i32
    %c0_i32_1 = arith.constant 0 : i32
    return %c0_i32, %c0_i32_0 : i32, i32
  }
  func.func @transform_10(%arg0: i32) -> (i32, i32) {
    %c0_i32 = arith.constant 0 : i32
    %c0_i32_0 = arith.constant 0 : i32
    %c0_i32_1 = arith.constant 0 : i32
    return %c0_i32, %c0_i32_0 : i32, i32
  }
  func.func @transform_11(%arg0: i32) -> (i32, i32) {
    %c0_i32 = arith.constant 0 : i32
    %c0_i32_0 = arith.constant 0 : i32
    %c0_i32_1 = arith.constant 0 : i32
    return %c0_i32, %c0_i32_0 : i32, i32
  }
  func.func @transform_12(%arg0: i32) -> (i32, i32) {
    %c0_i32 = arith.constant 0 : i32
    %c0_i32_0 = arith.constant 0 : i32
    %c0_i32_1 = arith.constant 0 : i32
    return %c0_i32, %c0_i32_0 : i32, i32
  }
  func.func @transform_13(%arg0: i32) -> (i32, i32, i32) {
    %c0_i32 = arith.constant 0 : i32
    %c0_i32_0 = arith.constant 0 : i32
    %c0_i32_1 = arith.constant 0 : i32
    return %arg0, %c0_i32, %c0_i32_0 : i32, i32, i32
  }
  func.func @transform_14(%arg0: i32) -> (i32, i32, i32) {
    %c0_i32 = arith.constant 0 : i32
    %c0_i32_0 = arith.constant 0 : i32
    %c0_i32_1 = arith.constant 0 : i32
    return %arg0, %c0_i32, %c0_i32_0 : i32, i32, i32
  }
  func.func @transform_15(%arg0: i32) -> (i32, i32, i32) {
    %c0_i32 = arith.constant 0 : i32
    %c0_i32_0 = arith.constant 0 : i32
    %c0_i32_1 = arith.constant 0 : i32
    return %arg0, %c0_i32, %c0_i32_0 : i32, i32, i32
  }
}

module attributes {stable_mosaic.version = 11 : i64} {
  func.func @decoder_block_kernel(%arg0: i32, %arg1: memref<1x16x32xf32, #tpu.memory_space<vmem>>, %arg2: memref<1x32xf32, #tpu.memory_space<vmem>>, %arg3: memref<1x32xf32, #tpu.memory_space<vmem>>, %arg4: memref<32x96xf32, #tpu.memory_space<vmem>>, %arg5: memref<1x96xf32, #tpu.memory_space<vmem>>, %arg6: memref<32x32xf32, #tpu.memory_space<vmem>>, %arg7: memref<1x32xf32, #tpu.memory_space<vmem>>, %arg8: memref<1x32xf32, #tpu.memory_space<vmem>>, %arg9: memref<1x32xf32, #tpu.memory_space<vmem>>, %arg10: memref<32x128xf32, #tpu.memory_space<vmem>>, %arg11: memref<1x128xf32, #tpu.memory_space<vmem>>, %arg12: memref<128x32xf32, #tpu.memory_space<vmem>>, %arg13: memref<1x32xf32, #tpu.memory_space<vmem>>, %arg14: memref<1x16x32xf32, #tpu.memory_space<vmem>>, %arg15: memref<1x16x32xf32, #tpu.memory_space<vmem>>, %arg16: memref<1x16x32xf32, #tpu.memory_space<vmem>>) attributes {dimension_semantics = [#tpu.dimension_semantics<parallel>], iteration_bounds = array<i64: 2>, scalar_prefetch = 0 : i64, scratch_operands = 0 : i64, tpu.core_type = #tpu.core_type<tc>, window_params = [{transform_indices = @transform_0, window_bounds = array<i64: 1, 16, 32>}, {pipeline_mode = #tpu.pipeline_mode<synchronous>, transform_indices = @transform_1, window_bounds = array<i64: 1, 32>}, {pipeline_mode = #tpu.pipeline_mode<synchronous>, transform_indices = @transform_2, window_bounds = array<i64: 1, 32>}, {pipeline_mode = #tpu.pipeline_mode<synchronous>, transform_indices = @transform_3, window_bounds = array<i64: 32, 96>}, {pipeline_mode = #tpu.pipeline_mode<synchronous>, transform_indices = @transform_4, window_bounds = array<i64: 1, 96>}, {pipeline_mode = #tpu.pipeline_mode<synchronous>, transform_indices = @transform_5, window_bounds = array<i64: 32, 32>}, {pipeline_mode = #tpu.pipeline_mode<synchronous>, transform_indices = @transform_6, window_bounds = array<i64: 1, 32>}, {pipeline_mode = #tpu.pipeline_mode<synchronous>, transform_indices = @transform_7, window_bounds = array<i64: 1, 32>}, {pipeline_mode = #tpu.pipeline_mode<synchronous>, transform_indices = @transform_8, window_bounds = array<i64: 1, 32>}, {pipeline_mode = #tpu.pipeline_mode<synchronous>, transform_indices = @transform_9, window_bounds = array<i64: 32, 128>}, {pipeline_mode = #tpu.pipeline_mode<synchronous>, transform_indices = @transform_10, window_bounds = array<i64: 1, 128>}, {pipeline_mode = #tpu.pipeline_mode<synchronous>, transform_indices = @transform_11, window_bounds = array<i64: 128, 32>}, {pipeline_mode = #tpu.pipeline_mode<synchronous>, transform_indices = @transform_12, window_bounds = array<i64: 1, 32>}, {transform_indices = @transform_13, window_bounds = array<i64: 1, 16, 32>}, {transform_indices = @transform_14, window_bounds = array<i64: 1, 16, 32>}, {transform_indices = @transform_15, window_bounds = array<i64: 1, 16, 32>}]} {
    %c0 = arith.constant 0 : index
    %c0_0 = arith.constant 0 : index
    %c0_1 = arith.constant 0 : index
    %0 = vector.load %arg1[%c0, %c0_0, %c0_1] : memref<1x16x32xf32, #tpu.memory_space<vmem>>, vector<1x16x32xf32>
    %1 = vector.shape_cast %0 : vector<1x16x32xf32> to vector<16x32xf32>
    %c0_2 = arith.constant 0 : index
    %c0_3 = arith.constant 0 : index
    %2 = vector.load %arg2[%c0_2, %c0_3] : memref<1x32xf32, #tpu.memory_space<vmem>>, vector<1x32xf32>
    %3 = vector.shape_cast %2 : vector<1x32xf32> to vector<32xf32>
    %c0_4 = arith.constant 0 : index
    %c0_5 = arith.constant 0 : index
    %4 = vector.load %arg3[%c0_4, %c0_5] : memref<1x32xf32, #tpu.memory_space<vmem>>, vector<1x32xf32>
    %5 = vector.shape_cast %4 : vector<1x32xf32> to vector<32xf32>
    %cst = arith.constant dense<0.000000e+00> : vector<16xf32>
    %6 = vector.multi_reduction <add>, %1, %cst [1] : vector<16x32xf32> to vector<16xf32>
    %7 = vector.shape_cast %6 : vector<16xf32> to vector<16x1xf32>
    %cst_6 = arith.constant 3.200000e+01 : f32
    %8 = vector.broadcast %cst_6 : f32 to vector<16x1xf32>
    %9 = arith.divf %7, %8 : vector<16x1xf32>
    %10 = vector.broadcast %9 : vector<16x1xf32> to vector<16x32xf32>
    %11 = arith.subf %1, %10 : vector<16x32xf32>
    %12 = arith.mulf %11, %11 : vector<16x32xf32>
    %cst_7 = arith.constant dense<0.000000e+00> : vector<16xf32>
    %13 = vector.multi_reduction <add>, %12, %cst_7 [1] : vector<16x32xf32> to vector<16xf32>
    %14 = vector.shape_cast %13 : vector<16xf32> to vector<16x1xf32>
    %cst_8 = arith.constant 3.100000e+01 : f32
    %15 = vector.broadcast %cst_8 : f32 to vector<16x1xf32>
    %16 = arith.divf %14, %15 : vector<16x1xf32>
    %17 = math.sqrt %16 : vector<16x1xf32>
    %18 = vector.broadcast %9 : vector<16x1xf32> to vector<16x32xf32>
    %19 = arith.subf %1, %18 : vector<16x32xf32>
    %cst_9 = arith.constant 1.000000e-07 : f32
    %20 = vector.broadcast %cst_9 : f32 to vector<16x1xf32>
    %21 = arith.addf %17, %20 : vector<16x1xf32>
    %22 = vector.broadcast %21 : vector<16x1xf32> to vector<16x32xf32>
    %23 = arith.divf %19, %22 : vector<16x32xf32>
    %24 = vector.shape_cast %3 : vector<32xf32> to vector<1x32xf32>
    %25 = vector.broadcast %24 : vector<1x32xf32> to vector<16x32xf32>
    %26 = arith.mulf %25, %23 : vector<16x32xf32>
    %27 = vector.shape_cast %5 : vector<32xf32> to vector<1x32xf32>
    %28 = vector.broadcast %27 : vector<1x32xf32> to vector<16x32xf32>
    %29 = arith.addf %26, %28 : vector<16x32xf32>
    %c0_10 = arith.constant 0 : index
    %c0_11 = arith.constant 0 : index
    %30 = vector.load %arg4[%c0_10, %c0_11] : memref<32x96xf32, #tpu.memory_space<vmem>>, vector<32x96xf32>
    %cst_12 = arith.constant dense<0.000000e+00> : vector<16x96xf32>
    %31 = tpu.matmul %29, %30, %cst_12 {dimension_numbers = #tpu.dot_dimension_numbers<[1], [0], [0], [1], [0, 0, 1, 1], [], []>} : vector<16x32xf32>, vector<32x96xf32>, vector<16x96xf32> -> vector<16x96xf32>
    %c0_13 = arith.constant 0 : index
    %c0_14 = arith.constant 0 : index
    %32 = vector.load %arg5[%c0_13, %c0_14] : memref<1x96xf32, #tpu.memory_space<vmem>>, vector<1x96xf32>
    %33 = vector.shape_cast %32 : vector<1x96xf32> to vector<96xf32>
    %34 = vector.shape_cast %33 : vector<96xf32> to vector<1x96xf32>
    %35 = vector.broadcast %34 : vector<1x96xf32> to vector<16x96xf32>
    %36 = arith.addf %31, %35 : vector<16x96xf32>
    %37 = vector.extract_strided_slice %36 {offsets = [0, 0], sizes = [16, 32], strides = [1, 1]} : vector<16x96xf32> to vector<16x32xf32>
    %38 = vector.extract_strided_slice %36 {offsets = [0, 32], sizes = [16, 32], strides = [1, 1]} : vector<16x96xf32> to vector<16x32xf32>
    %39 = vector.extract_strided_slice %36 {offsets = [0, 64], sizes = [16, 32], strides = [1, 1]} : vector<16x96xf32> to vector<16x32xf32>
    %c0_15 = arith.constant 0 : index
    %c0_16 = arith.constant 0 : index
    %c0_17 = arith.constant 0 : index
    %40 = vector.load %arg15[%c0_15, %c0_16, %c0_17] : memref<1x16x32xf32, #tpu.memory_space<vmem>>, vector<1x16x32xf32>
    %41 = vector.shape_cast %40 : vector<1x16x32xf32> to vector<16x32xf32>
    %42 = vector.shape_cast %38 : vector<16x32xf32> to vector<1x16x32xf32>
    tpu.vector_store %arg15[%c0_15, %c0_16, %c0_17], %42 {strides = array<i32>} : memref<1x16x32xf32, #tpu.memory_space<vmem>>, vector<1x16x32xf32>,
    %c0_18 = arith.constant 0 : index
    %c0_19 = arith.constant 0 : index
    %c0_20 = arith.constant 0 : index
    %43 = vector.load %arg16[%c0_18, %c0_19, %c0_20] : memref<1x16x32xf32, #tpu.memory_space<vmem>>, vector<1x16x32xf32>
    %44 = vector.shape_cast %43 : vector<1x16x32xf32> to vector<16x32xf32>
    %45 = vector.shape_cast %39 : vector<16x32xf32> to vector<1x16x32xf32>
    tpu.vector_store %arg16[%c0_18, %c0_19, %c0_20], %45 {strides = array<i32>} : memref<1x16x32xf32, #tpu.memory_space<vmem>>, vector<1x16x32xf32>,
    %46 = vector.shape_cast %37 : vector<16x32xf32> to vector<16x4x8xf32>
    %47 = tpu.transpose %46, [1, 0, 2] : vector<16x4x8xf32> -> vector<4x16x8xf32>
    %48 = vector.shape_cast %38 : vector<16x32xf32> to vector<16x4x8xf32>
    %49 = tpu.transpose %48, [1, 0, 2] : vector<16x4x8xf32> -> vector<4x16x8xf32>
    %50 = vector.shape_cast %39 : vector<16x32xf32> to vector<16x4x8xf32>
    %51 = tpu.transpose %50, [1, 0, 2] : vector<16x4x8xf32> -> vector<4x16x8xf32>
    %c0_21 = arith.constant 0 : index
    %c0_22 = arith.constant 0 : index
    %52 = vector.load %arg6[%c0_21, %c0_22] : memref<32x32xf32, #tpu.memory_space<vmem>>, vector<32x32xf32>
    %53 = vector.shape_cast %52 : vector<32x32xf32> to vector<4x8x32xf32>
    %c0_23 = arith.constant 0 : index
    %c0_24 = arith.constant 0 : index
    %54 = vector.load %arg7[%c0_23, %c0_24] : memref<1x32xf32, #tpu.memory_space<vmem>>, vector<1x32xf32>
    %55 = vector.shape_cast %54 : vector<1x32xf32> to vector<32xf32>
    %56 = vector.extract_strided_slice %47 {offsets = [0, 0, 0], sizes = [4, 8, 8], strides = [1, 1, 1]} : vector<4x16x8xf32> to vector<4x8x8xf32>
    %cst_25 = arith.constant 0.353553385 : f32
    %57 = vector.broadcast %cst_25 : f32 to vector<4x8x8xf32>
    %58 = arith.mulf %56, %57 : vector<4x8x8xf32>
    %cst_26 = arith.constant 0xFF800000 : f32
    %59 = vector.broadcast %cst_26 : f32 to vector<4x8x1xf32>
    %cst_27 = arith.constant 0.000000e+00 : f32
    %60 = vector.broadcast %cst_27 : f32 to vector<4x8x1xf32>
    %cst_28 = arith.constant 0.000000e+00 : f32
    %61 = vector.broadcast %cst_28 : f32 to vector<4x8x8xf32>
    %62 = vector.extract_strided_slice %49 {offsets = [0, 0, 0], sizes = [4, 8, 8], strides = [1, 1, 1]} : vector<4x16x8xf32> to vector<4x8x8xf32>
    %63 = vector.extract_strided_slice %51 {offsets = [0, 0, 0], sizes = [4, 8, 8], strides = [1, 1, 1]} : vector<4x16x8xf32> to vector<4x8x8xf32>
    "tpu.trace_start"() <{level = 10 : i32, message = "hqd,hkd->hqk"}> : () -> ()
    %cst_29 = arith.constant dense<0.000000e+00> : vector<4x8x8xf32>
    %64 = tpu.matmul %58, %62, %cst_29 {dimension_numbers = #tpu.dot_dimension_numbers<[2], [2], [1], [1], [0, 0, 0, 1, 1, 1], [0], [0]>} : vector<4x8x8xf32>, vector<4x8x8xf32>, vector<4x8x8xf32> -> vector<4x8x8xf32>
    "tpu.trace_stop"() : () -> ()
    %65 = tpu.iota {dimensions = array<i32: 0>} : vector<8x8xi32>
    %c0_i32 = arith.constant 0 : i32
    %66 = vector.broadcast %c0_i32 : i32 to vector<8x8xi32>
    %67 = arith.addi %65, %66 : vector<8x8xi32>
    %68 = tpu.iota {dimensions = array<i32: 1>} : vector<8x8xi32>
    %c0_i32_30 = arith.constant 0 : i32
    %69 = vector.broadcast %c0_i32_30 : i32 to vector<8x8xi32>
    %70 = arith.addi %68, %69 : vector<8x8xi32>
    %71 = arith.cmpi sge, %67, %70 : vector<8x8xi32>
    %72 = vector.shape_cast %71 : vector<8x8xi1> to vector<1x8x8xi1>
    %cst_31 = arith.constant -1.000000e+09 : f32
    %73 = vector.shape_cast %72 : vector<1x8x8xi1> to vector<1x8x8xi1>
    %74 = vector.broadcast %73 : vector<1x8x8xi1> to vector<4x8x8xi1>
    %75 = vector.broadcast %cst_31 : f32 to vector<4x8x8xf32>
    %76 = arith.select %74, %64, %75 : vector<4x8x8xi1>, vector<4x8x8xf32>
    %cst_32 = arith.constant dense<0xFF800000> : vector<4x8xf32>
    %77 = vector.multi_reduction <maximumf>, %76, %cst_32 [2] : vector<4x8x8xf32> to vector<4x8xf32>
    %78 = vector.shape_cast %77 : vector<4x8xf32> to vector<4x8x1xf32>
    %79 = arith.maximumf %59, %78 : vector<4x8x1xf32>
    %80 = arith.subf %59, %79 : vector<4x8x1xf32>
    %81 = math.exp %80 : vector<4x8x1xf32>
    %82 = vector.broadcast %79 : vector<4x8x1xf32> to vector<4x8x8xf32>
    %83 = arith.subf %76, %82 : vector<4x8x8xf32>
    %84 = math.exp %83 : vector<4x8x8xf32>
    %85 = arith.mulf %81, %60 : vector<4x8x1xf32>
    %cst_33 = arith.constant dense<0.000000e+00> : vector<4x8xf32>
    %86 = vector.multi_reduction <add>, %84, %cst_33 [2] : vector<4x8x8xf32> to vector<4x8xf32>
    %87 = vector.shape_cast %86 : vector<4x8xf32> to vector<4x8x1xf32>
    %88 = arith.addf %85, %87 : vector<4x8x1xf32>
    %89 = vector.broadcast %81 : vector<4x8x1xf32> to vector<4x8x8xf32>
    %90 = arith.mulf %89, %61 : vector<4x8x8xf32>
    "tpu.trace_start"() <{level = 10 : i32, message = "hqk,hkd->hqd"}> : () -> ()
    %cst_34 = arith.constant dense<0.000000e+00> : vector<4x8x8xf32>
    %91 = tpu.matmul %84, %63, %cst_34 {dimension_numbers = #tpu.dot_dimension_numbers<[2], [1], [1], [2], [0, 0, 0, 1, 1, 2], [0], [0]>} : vector<4x8x8xf32>, vector<4x8x8xf32>, vector<4x8x8xf32> -> vector<4x8x8xf32>
    "tpu.trace_stop"() : () -> ()
    %92 = arith.addf %90, %91 : vector<4x8x8xf32>
    %93 = vector.broadcast %88 : vector<4x8x1xf32> to vector<4x8x8xf32>
    %94 = arith.divf %92, %93 : vector<4x8x8xf32>
    "tpu.trace_start"() <{level = 10 : i32, message = "hqd,hdD->hqD"}> : () -> ()
    %cst_35 = arith.constant dense<0.000000e+00> : vector<4x8x32xf32>
    %95 = tpu.matmul %94, %53, %cst_35 {dimension_numbers = #tpu.dot_dimension_numbers<[2], [1], [1], [2], [0, 0, 0, 1, 1, 2], [0], [0]>} : vector<4x8x8xf32>, vector<4x8x32xf32>, vector<4x8x32xf32> -> vector<4x8x32xf32>
    "tpu.trace_stop"() : () -> ()
    %cst_36 = arith.constant dense<0.000000e+00> : vector<8x32xf32>
    %96 = vector.multi_reduction <add>, %95, %cst_36 [0] : vector<4x8x32xf32> to vector<8x32xf32>
    %97 = vector.extract_strided_slice %47 {offsets = [0, 8, 0], sizes = [4, 8, 8], strides = [1, 1, 1]} : vector<4x16x8xf32> to vector<4x8x8xf32>
    %cst_37 = arith.constant 0.353553385 : f32
    %98 = vector.broadcast %cst_37 : f32 to vector<4x8x8xf32>
    %99 = arith.mulf %97, %98 : vector<4x8x8xf32>
    %cst_38 = arith.constant 0xFF800000 : f32
    %100 = vector.broadcast %cst_38 : f32 to vector<4x8x1xf32>
    %cst_39 = arith.constant 0.000000e+00 : f32
    %101 = vector.broadcast %cst_39 : f32 to vector<4x8x1xf32>
    %cst_40 = arith.constant 0.000000e+00 : f32
    %102 = vector.broadcast %cst_40 : f32 to vector<4x8x8xf32>
    %103 = vector.extract_strided_slice %49 {offsets = [0, 0, 0], sizes = [4, 8, 8], strides = [1, 1, 1]} : vector<4x16x8xf32> to vector<4x8x8xf32>
    %104 = vector.extract_strided_slice %51 {offsets = [0, 0, 0], sizes = [4, 8, 8], strides = [1, 1, 1]} : vector<4x16x8xf32> to vector<4x8x8xf32>
    "tpu.trace_start"() <{level = 10 : i32, message = "hqd,hkd->hqk"}> : () -> ()
    %cst_41 = arith.constant dense<0.000000e+00> : vector<4x8x8xf32>
    %105 = tpu.matmul %99, %103, %cst_41 {dimension_numbers = #tpu.dot_dimension_numbers<[2], [2], [1], [1], [0, 0, 0, 1, 1, 1], [0], [0]>} : vector<4x8x8xf32>, vector<4x8x8xf32>, vector<4x8x8xf32> -> vector<4x8x8xf32>
    "tpu.trace_stop"() : () -> ()
    %cst_42 = arith.constant dense<0xFF800000> : vector<4x8xf32>
    %106 = vector.multi_reduction <maximumf>, %105, %cst_42 [2] : vector<4x8x8xf32> to vector<4x8xf32>
    %107 = vector.shape_cast %106 : vector<4x8xf32> to vector<4x8x1xf32>
    %108 = arith.maximumf %100, %107 : vector<4x8x1xf32>
    %109 = arith.subf %100, %108 : vector<4x8x1xf32>
    %110 = math.exp %109 : vector<4x8x1xf32>
    %111 = vector.broadcast %108 : vector<4x8x1xf32> to vector<4x8x8xf32>
    %112 = arith.subf %105, %111 : vector<4x8x8xf32>
    %113 = math.exp %112 : vector<4x8x8xf32>
    %114 = arith.mulf %110, %101 : vector<4x8x1xf32>
    %cst_43 = arith.constant dense<0.000000e+00> : vector<4x8xf32>
    %115 = vector.multi_reduction <add>, %113, %cst_43 [2] : vector<4x8x8xf32> to vector<4x8xf32>
    %116 = vector.shape_cast %115 : vector<4x8xf32> to vector<4x8x1xf32>
    %117 = arith.addf %114, %116 : vector<4x8x1xf32>
    %118 = vector.broadcast %110 : vector<4x8x1xf32> to vector<4x8x8xf32>
    %119 = arith.mulf %118, %102 : vector<4x8x8xf32>
    "tpu.trace_start"() <{level = 10 : i32, message = "hqk,hkd->hqd"}> : () -> ()
    %cst_44 = arith.constant dense<0.000000e+00> : vector<4x8x8xf32>
    %120 = tpu.matmul %113, %104, %cst_44 {dimension_numbers = #tpu.dot_dimension_numbers<[2], [1], [1], [2], [0, 0, 0, 1, 1, 2], [0], [0]>} : vector<4x8x8xf32>, vector<4x8x8xf32>, vector<4x8x8xf32> -> vector<4x8x8xf32>
    "tpu.trace_stop"() : () -> ()
    %121 = arith.addf %119, %120 : vector<4x8x8xf32>
    %122 = vector.extract_strided_slice %49 {offsets = [0, 8, 0], sizes = [4, 8, 8], strides = [1, 1, 1]} : vector<4x16x8xf32> to vector<4x8x8xf32>
    %123 = vector.extract_strided_slice %51 {offsets = [0, 8, 0], sizes = [4, 8, 8], strides = [1, 1, 1]} : vector<4x16x8xf32> to vector<4x8x8xf32>
    "tpu.trace_start"() <{level = 10 : i32, message = "hqd,hkd->hqk"}> : () -> ()
    %cst_45 = arith.constant dense<0.000000e+00> : vector<4x8x8xf32>
    %124 = tpu.matmul %99, %122, %cst_45 {dimension_numbers = #tpu.dot_dimension_numbers<[2], [2], [1], [1], [0, 0, 0, 1, 1, 1], [0], [0]>} : vector<4x8x8xf32>, vector<4x8x8xf32>, vector<4x8x8xf32> -> vector<4x8x8xf32>
    "tpu.trace_stop"() : () -> ()
    %125 = tpu.iota {dimensions = array<i32: 0>} : vector<8x8xi32>
    %c8_i32 = arith.constant 8 : i32
    %126 = vector.broadcast %c8_i32 : i32 to vector<8x8xi32>
    %127 = arith.addi %125, %126 : vector<8x8xi32>
    %128 = tpu.iota {dimensions = array<i32: 1>} : vector<8x8xi32>
    %c8_i32_46 = arith.constant 8 : i32
    %129 = vector.broadcast %c8_i32_46 : i32 to vector<8x8xi32>
    %130 = arith.addi %128, %129 : vector<8x8xi32>
    %131 = arith.cmpi sge, %127, %130 : vector<8x8xi32>
    %132 = vector.shape_cast %131 : vector<8x8xi1> to vector<1x8x8xi1>
    %cst_47 = arith.constant -1.000000e+09 : f32
    %133 = vector.shape_cast %132 : vector<1x8x8xi1> to vector<1x8x8xi1>
    %134 = vector.broadcast %133 : vector<1x8x8xi1> to vector<4x8x8xi1>
    %135 = vector.broadcast %cst_47 : f32 to vector<4x8x8xf32>
    %136 = arith.select %134, %124, %135 : vector<4x8x8xi1>, vector<4x8x8xf32>
    %cst_48 = arith.constant dense<0xFF800000> : vector<4x8xf32>
    %137 = vector.multi_reduction <maximumf>, %136, %cst_48 [2] : vector<4x8x8xf32> to vector<4x8xf32>
    %138 = vector.shape_cast %137 : vector<4x8xf32> to vector<4x8x1xf32>
    %139 = arith.maximumf %108, %138 : vector<4x8x1xf32>
    %140 = arith.subf %108, %139 : vector<4x8x1xf32>
    %141 = math.exp %140 : vector<4x8x1xf32>
    %142 = vector.broadcast %139 : vector<4x8x1xf32> to vector<4x8x8xf32>
    %143 = arith.subf %136, %142 : vector<4x8x8xf32>
    %144 = math.exp %143 : vector<4x8x8xf32>
    %145 = arith.mulf %141, %117 : vector<4x8x1xf32>
    %cst_49 = arith.constant dense<0.000000e+00> : vector<4x8xf32>
    %146 = vector.multi_reduction <add>, %144, %cst_49 [2] : vector<4x8x8xf32> to vector<4x8xf32>
    %147 = vector.shape_cast %146 : vector<4x8xf32> to vector<4x8x1xf32>
    %148 = arith.addf %145, %147 : vector<4x8x1xf32>
    %149 = vector.broadcast %141 : vector<4x8x1xf32> to vector<4x8x8xf32>
    %150 = arith.mulf %149, %121 : vector<4x8x8xf32>
    "tpu.trace_start"() <{level = 10 : i32, message = "hqk,hkd->hqd"}> : () -> ()
    %cst_50 = arith.constant dense<0.000000e+00> : vector<4x8x8xf32>
    %151 = tpu.matmul %144, %123, %cst_50 {dimension_numbers = #tpu.dot_dimension_numbers<[2], [1], [1], [2], [0, 0, 0, 1, 1, 2], [0], [0]>} : vector<4x8x8xf32>, vector<4x8x8xf32>, vector<4x8x8xf32> -> vector<4x8x8xf32>
    "tpu.trace_stop"() : () -> ()
    %152 = arith.addf %150, %151 : vector<4x8x8xf32>
    %153 = vector.broadcast %148 : vector<4x8x1xf32> to vector<4x8x8xf32>
    %154 = arith.divf %152, %153 : vector<4x8x8xf32>
    "tpu.trace_start"() <{level = 10 : i32, message = "hqd,hdD->hqD"}> : () -> ()
    %cst_51 = arith.constant dense<0.000000e+00> : vector<4x8x32xf32>
    %155 = tpu.matmul %154, %53, %cst_51 {dimension_numbers = #tpu.dot_dimension_numbers<[2], [1], [1], [2], [0, 0, 0, 1, 1, 2], [0], [0]>} : vector<4x8x8xf32>, vector<4x8x32xf32>, vector<4x8x32xf32> -> vector<4x8x32xf32>
    "tpu.trace_stop"() : () -> ()
    %cst_52 = arith.constant dense<0.000000e+00> : vector<8x32xf32>
    %156 = vector.multi_reduction <add>, %155, %cst_52 [0] : vector<4x8x32xf32> to vector<8x32xf32>
    %157 = tpu.concatenate %96, %156 in 0 : vector<8x32xf32>, vector<8x32xf32> -> vector<16x32xf32>
    %158 = vector.shape_cast %55 : vector<32xf32> to vector<1x32xf32>
    %159 = vector.broadcast %158 : vector<1x32xf32> to vector<16x32xf32>
    %160 = arith.addf %157, %159 : vector<16x32xf32>
    %161 = arith.addf %1, %160 : vector<16x32xf32>
    %c0_53 = arith.constant 0 : index
    %c0_54 = arith.constant 0 : index
    %162 = vector.load %arg8[%c0_53, %c0_54] : memref<1x32xf32, #tpu.memory_space<vmem>>, vector<1x32xf32>
    %163 = vector.shape_cast %162 : vector<1x32xf32> to vector<32xf32>
    %c0_55 = arith.constant 0 : index
    %c0_56 = arith.constant 0 : index
    %164 = vector.load %arg9[%c0_55, %c0_56] : memref<1x32xf32, #tpu.memory_space<vmem>>, vector<1x32xf32>
    %165 = vector.shape_cast %164 : vector<1x32xf32> to vector<32xf32>
    %cst_57 = arith.constant dense<0.000000e+00> : vector<16xf32>
    %166 = vector.multi_reduction <add>, %161, %cst_57 [1] : vector<16x32xf32> to vector<16xf32>
    %167 = vector.shape_cast %166 : vector<16xf32> to vector<16x1xf32>
    %cst_58 = arith.constant 3.200000e+01 : f32
    %168 = vector.broadcast %cst_58 : f32 to vector<16x1xf32>
    %169 = arith.divf %167, %168 : vector<16x1xf32>
    %170 = vector.broadcast %169 : vector<16x1xf32> to vector<16x32xf32>
    %171 = arith.subf %161, %170 : vector<16x32xf32>
    %172 = arith.mulf %171, %171 : vector<16x32xf32>
    %cst_59 = arith.constant dense<0.000000e+00> : vector<16xf32>
    %173 = vector.multi_reduction <add>, %172, %cst_59 [1] : vector<16x32xf32> to vector<16xf32>
    %174 = vector.shape_cast %173 : vector<16xf32> to vector<16x1xf32>
    %cst_60 = arith.constant 3.100000e+01 : f32
    %175 = vector.broadcast %cst_60 : f32 to vector<16x1xf32>
    %176 = arith.divf %174, %175 : vector<16x1xf32>
    %177 = math.sqrt %176 : vector<16x1xf32>
    %178 = vector.broadcast %169 : vector<16x1xf32> to vector<16x32xf32>
    %179 = arith.subf %161, %178 : vector<16x32xf32>
    %cst_61 = arith.constant 1.000000e-07 : f32
    %180 = vector.broadcast %cst_61 : f32 to vector<16x1xf32>
    %181 = arith.addf %177, %180 : vector<16x1xf32>
    %182 = vector.broadcast %181 : vector<16x1xf32> to vector<16x32xf32>
    %183 = arith.divf %179, %182 : vector<16x32xf32>
    %184 = vector.shape_cast %163 : vector<32xf32> to vector<1x32xf32>
    %185 = vector.broadcast %184 : vector<1x32xf32> to vector<16x32xf32>
    %186 = arith.mulf %185, %183 : vector<16x32xf32>
    %187 = vector.shape_cast %165 : vector<32xf32> to vector<1x32xf32>
    %188 = vector.broadcast %187 : vector<1x32xf32> to vector<16x32xf32>
    %189 = arith.addf %186, %188 : vector<16x32xf32>
    %cst_62 = arith.constant 0.000000e+00 : f32
    %190 = vector.broadcast %cst_62 : f32 to vector<16x32xf32>
    %c0_63 = arith.constant 0 : index
    %c0_64 = arith.constant 0 : index
    %191 = vector.load %arg10[%c0_63, %c0_64] : memref<32x128xf32, #tpu.memory_space<vmem>>, vector<32x128xf32>
    %cst_65 = arith.constant dense<0.000000e+00> : vector<16x128xf32>
    %192 = tpu.matmul %189, %191, %cst_65 {dimension_numbers = #tpu.dot_dimension_numbers<[1], [0], [0], [1], [0, 0, 1, 1], [], []>} : vector<16x32xf32>, vector<32x128xf32>, vector<16x128xf32> -> vector<16x128xf32>
    %c0_66 = arith.constant 0 : index
    %c0_67 = arith.constant 0 : index
    %193 = vector.load %arg11[%c0_66, %c0_67] : memref<1x128xf32, #tpu.memory_space<vmem>>, vector<1x128xf32>
    %194 = vector.shape_cast %193 : vector<1x128xf32> to vector<128xf32>
    %195 = vector.shape_cast %194 : vector<128xf32> to vector<1x128xf32>
    %196 = vector.broadcast %195 : vector<1x128xf32> to vector<16x128xf32>
    %197 = arith.addf %192, %196 : vector<16x128xf32>
    %cst_68 = arith.constant 5.000000e-01 : f32
    %198 = vector.broadcast %cst_68 : f32 to vector<16x128xf32>
    %199 = arith.mulf %198, %197 : vector<16x128xf32>
    %cst_69 = arith.constant 0.707106769 : f32
    %200 = vector.broadcast %cst_69 : f32 to vector<16x128xf32>
    %201 = arith.mulf %197, %200 : vector<16x128xf32>
    %202 = math.erf %201 : vector<16x128xf32>
    %cst_70 = arith.constant 1.000000e+00 : f32
    %203 = vector.broadcast %cst_70 : f32 to vector<16x128xf32>
    %204 = arith.addf %203, %202 : vector<16x128xf32>
    %205 = arith.mulf %199, %204 : vector<16x128xf32>
    %c0_71 = arith.constant 0 : index
    %c0_72 = arith.constant 0 : index
    %206 = vector.load %arg12[%c0_71, %c0_72] : memref<128x32xf32, #tpu.memory_space<vmem>>, vector<128x32xf32>
    %cst_73 = arith.constant dense<0.000000e+00> : vector<16x32xf32>
    %207 = tpu.matmul %205, %206, %cst_73 {dimension_numbers = #tpu.dot_dimension_numbers<[1], [0], [0], [1], [0, 0, 1, 1], [], []>} : vector<16x128xf32>, vector<128x32xf32>, vector<16x32xf32> -> vector<16x32xf32>
    %208 = arith.addf %190, %207 : vector<16x32xf32>
    %209 = arith.addf %161, %208 : vector<16x32xf32>
    %c0_74 = arith.constant 0 : index
    %c0_75 = arith.constant 0 : index
    %210 = vector.load %arg13[%c0_74, %c0_75] : memref<1x32xf32, #tpu.memory_space<vmem>>, vector<1x32xf32>
    %211 = vector.shape_cast %210 : vector<1x32xf32> to vector<32xf32>
    %212 = vector.shape_cast %211 : vector<32xf32> to vector<1x32xf32>
    %213 = vector.broadcast %212 : vector<1x32xf32> to vector<16x32xf32>
    %214 = arith.addf %209, %213 : vector<16x32xf32>
    %c0_76 = arith.constant 0 : index
    %c0_77 = arith.constant 0 : index
    %c0_78 = arith.constant 0 : index
    %215 = vector.load %arg14[%c0_76, %c0_77, %c0_78] : memref<1x16x32xf32, #tpu.memory_space<vmem>>, vector<1x16x32xf32>
    %216 = vector.shape_cast %215 : vector<1x16x32xf32> to vector<16x32xf32>
    %217 = vector.shape_cast %214 : vector<16x32xf32> to vector<1x16x32xf32>
    tpu.vector_store %arg14[%c0_76, %c0_77, %c0_78], %217 {strides = array<i32>} : memref<1x16x32xf32, #tpu.memory_space<vmem>>, vector<1x16x32xf32>,
    return
  }
  func.func @transform_0(%arg0: i32) -> (i32, i32, i32) {
    %c0_i32 = arith.constant 0 : i32
    %c0_i32_0 = arith.constant 0 : i32
    %c0_i32_1 = arith.constant 0 : i32
    return %arg0, %c0_i32, %c0_i32_0 : i32, i32, i32
  }
  func.func @transform_1(%arg0: i32) -> (i32, i32) {
    %c0_i32 = arith.constant 0 : i32
    %c0_i32_0 = arith.constant 0 : i32
    %c0_i32_1 = arith.constant 0 : i32
    return %c0_i32, %c0_i32_0 : i32, i32
  }
  func.func @transform_2(%arg0: i32) -> (i32, i32) {
    %c0_i32 = arith.constant 0 : i32
    %c0_i32_0 = arith.constant 0 : i32
    %c0_i32_1 = arith.constant 0 : i32
    return %c0_i32, %c0_i32_0 : i32, i32
  }
  func.func @transform_3(%arg0: i32) -> (i32, i32) {
    %c0_i32 = arith.constant 0 : i32
    %c0_i32_0 = arith.constant 0 : i32
    %c0_i32_1 = arith.constant 0 : i32
    return %c0_i32, %c0_i32_0 : i32, i32
  }
  func.func @transform_4(%arg0: i32) -> (i32, i32) {
    %c0_i32 = arith.constant 0 : i32
    %c0_i32_0 = arith.constant 0 : i32
    %c0_i32_1 = arith.constant 0 : i32
    return %c0_i32, %c0_i32_0 : i32, i32
  }
  func.func @transform_5(%arg0: i32) -> (i32, i32) {
    %c0_i32 = arith.constant 0 : i32
    %c0_i32_0 = arith.constant 0 : i32
    %c0_i32_1 = arith.constant 0 : i32
    return %c0_i32, %c0_i32_0 : i32, i32
  }
  func.func @transform_6(%arg0: i32) -> (i32, i32) {
    %c0_i32 = arith.constant 0 : i32
    %c0_i32_0 = arith.constant 0 : i32
    %c0_i32_1 = arith.constant 0 : i32
    return %c0_i32, %c0_i32_0 : i32, i32
  }
  func.func @transform_7(%arg0: i32) -> (i32, i32) {
    %c0_i32 = arith.constant 0 : i32
    %c0_i32_0 = arith.constant 0 : i32
    %c0_i32_1 = arith.constant 0 : i32
    return %c0_i32, %c0_i32_0 : i32, i32
  }
  func.func @transform_8(%arg0: i32) -> (i32, i32) {
    %c0_i32 = arith.constant 0 : i32
    %c0_i32_0 = arith.constant 0 : i32
    %c0_i32_1 = arith.constant 0 : i32
    return %c0_i32, %c0_i32_0 : i32, i32
  }
  func.func @transform_9(%arg0: i32) -> (i32, i32) {
    %c0_i32 = arith.constant 0 : i32
    %c0_i32_0 = arith.constant 0 : i32
    %c0_i32_1 = arith.constant 0 : i32
    return %c0_i32, %c0_i32_0 : i32, i32
  }
  func.func @transform_10(%arg0: i32) -> (i32, i32) {
    %c0_i32 = arith.constant 0 : i32
    %c0_i32_0 = arith.constant 0 : i32
    %c0_i32_1 = arith.constant 0 : i32
    return %c0_i32, %c0_i32_0 : i32, i32
  }
  func.func @transform_11(%arg0: i32) -> (i32, i32) {
    %c0_i32 = arith.constant 0 : i32
    %c0_i32_0 = arith.constant 0 : i32
    %c0_i32_1 = arith.constant 0 : i32
    return %c0_i32, %c0_i32_0 : i32, i32
  }
  func.func @transform_12(%arg0: i32) -> (i32, i32) {
    %c0_i32 = arith.constant 0 : i32
    %c0_i32_0 = arith.constant 0 : i32
    %c0_i32_1 = arith.constant 0 : i32
    return %c0_i32, %c0_i32_0 : i32, i32
  }
  func.func @transform_13(%arg0: i32) -> (i32, i32, i32) {
    %c0_i32 = arith.constant 0 : i32
    %c0_i32_0 = arith.constant 0 : i32
    %c0_i32_1 = arith.constant 0 : i32
    return %arg0, %c0_i32, %c0_i32_0 : i32, i32, i32
  }
  func.func @transform_14(%arg0: i32) -> (i32, i32, i32) {
    %c0_i32 = arith.constant 0 : i32
    %c0_i32_0 = arith.constant 0 : i32
    %c0_i32_1 = arith.constant 0 : i32
    return %arg0, %c0_i32, %c0_i32_0 : i32, i32, i32
  }
  func.func @transform_15(%arg0: i32) -> (i32, i32, i32) {
    %c0_i32 = arith.constant 0 : i32
    %c0_i32_0 = arith.constant 0 : i32
    %c0_i32_1 = arith.constant 0 : i32
    return %arg0, %c0_i32, %c0_i32_0 : i32, i32, i32
  }
}

</mosaic_0001>

<llo_original>
// kernel: tpu_custom_call.1
$region0: #{tpu_custom_call.1}
  #allocation0 [shape = 'u32[]', space=smem, size = 0x4, offset = 0x4, fixed_abs, tag = 'smem constant byte address 0x4 - core index']
  #allocation1 [shape = 'u32[144,128]{1,0:T(1,128)}', space=vmem, size = 0x12000, scoped, tag = 'internal scratch']
  %s0 = inlined_call_operand.vmem [shape: f32[2,16,32], index: 0, kind: input, shape index: {}]
  %s1 = inlined_call_operand.vmem [shape: f32[1,32], index: 1, kind: input, shape index: {}]
  %s2 = inlined_call_operand.vmem [shape: f32[1,32], index: 2, kind: input, shape index: {}]
  %s3 = inlined_call_operand.vmem [shape: f32[32,96], index: 3, kind: input, shape index: {}]
  %s4 = inlined_call_operand.vmem [shape: f32[1,96], index: 4, kind: input, shape index: {}]
  %s5 = inlined_call_operand.vmem [shape: f32[32,32], index: 5, kind: input, shape index: {}]
  %s6 = inlined_call_operand.vmem [shape: f32[1,32], index: 6, kind: input, shape index: {}]
  %s7 = inlined_call_operand.vmem [shape: f32[1,32], index: 7, kind: input, shape index: {}]
  %s8 = inlined_call_operand.vmem [shape: f32[1,32], index: 8, kind: input, shape index: {}]
  %s9 = inlined_call_operand.vmem [shape: f32[32,128], index: 9, kind: input, shape index: {}]
  %s10 = inlined_call_operand.vmem [shape: f32[1,128], index: 10, kind: input, shape index: {}]
  %s11 = inlined_call_operand.vmem [shape: f32[128,32], index: 11, kind: input, shape index: {}]
  %s12 = inlined_call_operand.vmem [shape: f32[1,32], index: 12, kind: input, shape index: {}]
  %s13 = inlined_call_operand.hbm [shape: f32[2,16,32], index: 13, kind: output, shape index: {0}]
  %s14 = inlined_call_operand.hbm [shape: f32[2,16,32], index: 14, kind: output, shape index: {1}]
  %s15 = inlined_call_operand.hbm [shape: f32[2,16,32], index: 15, kind: output, shape index: {2}]
  %16 = xla_tuple %s13, %s14, %s15
  %s17 = sld [smem:[#allocation0]]
  $region101: #{tpu_custom_call.1} parent=0
    _
  %s19 = ssub.s32 1, %s17
  %s20 = scalar_select 0, %s19, %s17
  $region1: #{tpu_custom_call.1} parent=0
    #allocation2 [shape = 'u8[16384]{0}', space=vmem, size = 0x4000, scoped, tag = 'output window, operand 0']
    #allocation3 [shape = 's32[2]{0}', space=sflag, size = 0x8, scoped, tag = 'scoped memory for tpu_custom_call.1']
    #allocation4 [shape = 'u8[16384]{0}', space=vmem, size = 0x4000, scoped, tag = 'output window, operand 1']
    #allocation5 [shape = 's32[2]{0}', space=sflag, size = 0x8, scoped, tag = 'scoped memory for tpu_custom_call.1']
    #allocation6 [shape = 'u8[16384]{0}', space=vmem, size = 0x4000, scoped, tag = 'output window, operand 2']
    %21 = vsyncpa [#allocation3], 0
    %s22 = scalar_lea.sflag [#allocation3], 1
    %23 = vsyncpa %s22, 0
    %24 = vsyncpa [#allocation5], 0
    %s25 = scalar_lea.sflag [#allocation5], 1
    %26 = vsyncpa %s25, 0
    loop: start=0, step=1, limit=4
    $region2: #{tpu_custom_call.1} parent=1 // loop_pre_header
      _
    $region3: #{tpu_custom_call.1} parent=1 // loop_header
      %s28 = sphi 0, %s32
      %p29 = scmp.ge.s32.totalorder %s28, 4
      %s38 = sphi 0, %s40
      %s41 = sphi 0, %s38
      %s42 = sphi 0, %s41
      %s58 = sphi 0, %s42
      %s62 = sphi 0, %s62
      %s64 = sphi 0, %s62
      %s65 = sphi 0, %s64
      %s79 = sphi 0, %s65
      %s83 = sphi 0, %s83
      %s85 = sphi 0, %s83
      %s86 = sphi 0, %s85
      %s100 = sphi 0, %s86
      %s104 = sphi 0, %s104
      %s106 = sphi 0, %s104
      %s107 = sphi 0, %s106
      %s121 = sphi 0, %s107
      %s125 = sphi 0, %s125
      %s127 = sphi 0, %s125
      %s128 = sphi 0, %s127
      %s142 = sphi 0, %s128
      %s146 = sphi 0, %s146
      %s148 = sphi 0, %s146
      %s149 = sphi 0, %s148
      %s163 = sphi 0, %s149
      %s167 = sphi 0, %s167
      %s169 = sphi 0, %s167
      %s170 = sphi 0, %s169
      %s184 = sphi 0, %s170
      %s188 = sphi 0, %s188
      %s190 = sphi 0, %s188
      %s191 = sphi 0, %s190
      %s205 = sphi 0, %s191
      %s209 = sphi 0, %s209
      %s211 = sphi 0, %s209
      %s212 = sphi 0, %s211
      %s226 = sphi 0, %s212
      %s230 = sphi 0, %s230
      %s232 = sphi 0, %s230
      %s233 = sphi 0, %s232
      %s247 = sphi 0, %s233
      %s251 = sphi 0, %s251
      %s253 = sphi 0, %s251
      %s254 = sphi 0, %s253
      %s268 = sphi 0, %s254
      %s272 = sphi 0, %s272
      %s274 = sphi 0, %s272
      %s275 = sphi 0, %s274
      %s289 = sphi 0, %s275
      %s293 = sphi 0, %s293
      %s295 = sphi 0, %s293
      %s296 = sphi 0, %s295
      %s310 = sphi 0, %s296
      %s316 = sphi 0, %s318
      %s319 = sphi 0, %s316
      %s320 = sphi 0, %s319
      %s336 = sphi 0, %s320
      %s342 = sphi 0, %s344
      %s345 = sphi 0, %s342
      %s346 = sphi 0, %s345
      %s362 = sphi 0, %s346
      %s368 = sphi 0, %s370
      %s371 = sphi 0, %s368
      %s372 = sphi 0, %s371
      %s388 = sphi 0, %s372
    $region4: #{tpu_custom_call.1} parent=1 // loop_header_branch
      %31 = sbr.rel (%p29) target = $region8
    $region5: #{tpu_custom_call.1} parent=1 // loop_body
      %s33 = ssub.s32 %s28, 1
      %s34 = ssub.s32 %s28, 2
      %s35 = sadd.s32 %s28, 1
      %s36 = ssub.s32 %s28, %s35
      %p37 = scmp.eq.s32.totalorder %s36, 0
      %s39 = sadd.s32 %s38, 1
      %s40 = scalar_select %p37, %s38, %s39
      %p43 = pneg %p37
      %p44 = scmp.eq.s32.totalorder %s28, 1
      %p45 = por %p43, %p44
      %p46 = scmp.ne.s32.totalorder %s38, %s41
      %p47 = scmp.eq.s32.totalorder %s28, 0
      %p48 = por %p46, %p47
      %p49 = scmp.ne.s32.totalorder %s38, %s41
      %p50 = scmp.eq.s32.totalorder %s33, 1
      %p51 = por %p49, %p50
      %p52 = scmp.ne.s32.totalorder %s41, %s42
      %p53 = scmp.eq.s32.totalorder %s33, 0
      %p54 = por %p52, %p53
      %p55 = scmp.ne.s32.totalorder %s41, %s42
      %p56 = scmp.eq.s32.totalorder %s34, 1
      %p57 = por %p55, %p56
      %p59 = scmp.ne.s32.totalorder %s42, %s58
      %p60 = scmp.eq.s32.totalorder %s34, 0
      %p61 = por %p59, %p60
      %s63 = sadd.s32 %s62, 1
      %p66 = scmp.eq.s32.totalorder %s28, 1
      %p67 = scmp.ne.s32.totalorder %s62, %s64
      %p68 = scmp.eq.s32.totalorder %s28, 0
      %p69 = por %p67, %p68
      %p70 = scmp.ne.s32.totalorder %s62, %s64
      %p71 = scmp.eq.s32.totalorder %s33, 1
      %p72 = por %p70, %p71
      %p73 = scmp.ne.s32.totalorder %s64, %s65
      %p74 = scmp.eq.s32.totalorder %s33, 0
      %p75 = por %p73, %p74
      %p76 = scmp.ne.s32.totalorder %s64, %s65
      %p77 = scmp.eq.s32.totalorder %s34, 1
      %p78 = por %p76, %p77
      %p80 = scmp.ne.s32.totalorder %s65, %s79
      %p81 = scmp.eq.s32.totalorder %s34, 0
      %p82 = por %p80, %p81
      %s84 = sadd.s32 %s83, 1
      %p87 = scmp.eq.s32.totalorder %s28, 1
      %p88 = scmp.ne.s32.totalorder %s83, %s85
      %p89 = scmp.eq.s32.totalorder %s28, 0
      %p90 = por %p88, %p89
      %p91 = scmp.ne.s32.totalorder %s83, %s85
      %p92 = scmp.eq.s32.totalorder %s33, 1
      %p93 = por %p91, %p92
      %p94 = scmp.ne.s32.totalorder %s85, %s86
      %p95 = scmp.eq.s32.totalorder %s33, 0
      %p96 = por %p94, %p95
      %p97 = scmp.ne.s32.totalorder %s85, %s86
      %p98 = scmp.eq.s32.totalorder %s34, 1
      %p99 = por %p97, %p98
      %p101 = scmp.ne.s32.totalorder %s86, %s100
      %p102 = scmp.eq.s32.totalorder %s34, 0
      %p103 = por %p101, %p102
      %s105 = sadd.s32 %s104, 1
      %p108 = scmp.eq.s32.totalorder %s28, 1
      %p109 = scmp.ne.s32.totalorder %s104, %s106
      %p110 = scmp.eq.s32.totalorder %s28, 0
      %p111 = por %p109, %p110
      %p112 = scmp.ne.s32.totalorder %s104, %s106
      %p113 = scmp.eq.s32.totalorder %s33, 1
      %p114 = por %p112, %p113
      %p115 = scmp.ne.s32.totalorder %s106, %s107
      %p116 = scmp.eq.s32.totalorder %s33, 0
      %p117 = por %p115, %p116
      %p118 = scmp.ne.s32.totalorder %s106, %s107
      %p119 = scmp.eq.s32.totalorder %s34, 1
      %p120 = por %p118, %p119
      %p122 = scmp.ne.s32.totalorder %s107, %s121
      %p123 = scmp.eq.s32.totalorder %s34, 0
      %p124 = por %p122, %p123
      %s126 = sadd.s32 %s125, 1
      %p129 = scmp.eq.s32.totalorder %s28, 1
      %p130 = scmp.ne.s32.totalorder %s125, %s127
      %p131 = scmp.eq.s32.totalorder %s28, 0
      %p132 = por %p130, %p131
      %p133 = scmp.ne.s32.totalorder %s125, %s127
      %p134 = scmp.eq.s32.totalorder %s33, 1
      %p135 = por %p133, %p134
      %p136 = scmp.ne.s32.totalorder %s127, %s128
      %p137 = scmp.eq.s32.totalorder %s33, 0
      %p138 = por %p136, %p137
      %p139 = scmp.ne.s32.totalorder %s127, %s128
      %p140 = scmp.eq.s32.totalorder %s34, 1
      %p141 = por %p139, %p140
      %p143 = scmp.ne.s32.totalorder %s128, %s142
      %p144 = scmp.eq.s32.totalorder %s34, 0
      %p145 = por %p143, %p144
      %s147 = sadd.s32 %s146, 1
      %p150 = scmp.eq.s32.totalorder %s28, 1
      %p151 = scmp.ne.s32.totalorder %s146, %s148
      %p152 = scmp.eq.s32.totalorder %s28, 0
      %p153 = por %p151, %p152
      %p154 = scmp.ne.s32.totalorder %s146, %s148
      %p155 = scmp.eq.s32.totalorder %s33, 1
      %p156 = por %p154, %p155
      %p157 = scmp.ne.s32.totalorder %s148, %s149
      %p158 = scmp.eq.s32.totalorder %s33, 0
      %p159 = por %p157, %p158
      %p160 = scmp.ne.s32.totalorder %s148, %s149
      %p161 = scmp.eq.s32.totalorder %s34, 1
      %p162 = por %p160, %p161
      %p164 = scmp.ne.s32.totalorder %s149, %s163
      %p165 = scmp.eq.s32.totalorder %s34, 0
      %p166 = por %p164, %p165
      %s168 = sadd.s32 %s167, 1
      %p171 = scmp.eq.s32.totalorder %s28, 1
      %p172 = scmp.ne.s32.totalorder %s167, %s169
      %p173 = scmp.eq.s32.totalorder %s28, 0
      %p174 = por %p172, %p173
      %p175 = scmp.ne.s32.totalorder %s167, %s169
      %p176 = scmp.eq.s32.totalorder %s33, 1
      %p177 = por %p175, %p176
      %p178 = scmp.ne.s32.totalorder %s169, %s170
      %p179 = scmp.eq.s32.totalorder %s33, 0
      %p180 = por %p178, %p179
      %p181 = scmp.ne.s32.totalorder %s169, %s170
      %p182 = scmp.eq.s32.totalorder %s34, 1
      %p183 = por %p181, %p182
      %p185 = scmp.ne.s32.totalorder %s170, %s184
      %p186 = scmp.eq.s32.totalorder %s34, 0
      %p187 = por %p185, %p186
      %s189 = sadd.s32 %s188, 1
      %p192 = scmp.eq.s32.totalorder %s28, 1
      %p193 = scmp.ne.s32.totalorder %s188, %s190
      %p194 = scmp.eq.s32.totalorder %s28, 0
      %p195 = por %p193, %p194
      %p196 = scmp.ne.s32.totalorder %s188, %s190
      %p197 = scmp.eq.s32.totalorder %s33, 1
      %p198 = por %p196, %p197
      %p199 = scmp.ne.s32.totalorder %s190, %s191
      %p200 = scmp.eq.s32.totalorder %s33, 0
      %p201 = por %p199, %p200
      %p202 = scmp.ne.s32.totalorder %s190, %s191
      %p203 = scmp.eq.s32.totalorder %s34, 1
      %p204 = por %p202, %p203
      %p206 = scmp.ne.s32.totalorder %s191, %s205
      %p207 = scmp.eq.s32.totalorder %s34, 0
      %p208 = por %p206, %p207
      %s210 = sadd.s32 %s209, 1
      %p213 = scmp.eq.s32.totalorder %s28, 1
      %p214 = scmp.ne.s32.totalorder %s209, %s211
      %p215 = scmp.eq.s32.totalorder %s28, 0
      %p216 = por %p214, %p215
      %p217 = scmp.ne.s32.totalorder %s209, %s211
      %p218 = scmp.eq.s32.totalorder %s33, 1
      %p219 = por %p217, %p218
      %p220 = scmp.ne.s32.totalorder %s211, %s212
      %p221 = scmp.eq.s32.totalorder %s33, 0
      %p222 = por %p220, %p221
      %p223 = scmp.ne.s32.totalorder %s211, %s212
      %p224 = scmp.eq.s32.totalorder %s34, 1
      %p225 = por %p223, %p224
      %p227 = scmp.ne.s32.totalorder %s212, %s226
      %p228 = scmp.eq.s32.totalorder %s34, 0
      %p229 = por %p227, %p228
      %s231 = sadd.s32 %s230, 1
      %p234 = scmp.eq.s32.totalorder %s28, 1
      %p235 = scmp.ne.s32.totalorder %s230, %s232
      %p236 = scmp.eq.s32.totalorder %s28, 0
      %p237 = por %p235, %p236
      %p238 = scmp.ne.s32.totalorder %s230, %s232
      %p239 = scmp.eq.s32.totalorder %s33, 1
      %p240 = por %p238, %p239
      %p241 = scmp.ne.s32.totalorder %s232, %s233
      %p242 = scmp.eq.s32.totalorder %s33, 0
      %p243 = por %p241, %p242
      %p244 = scmp.ne.s32.totalorder %s232, %s233
      %p245 = scmp.eq.s32.totalorder %s34, 1
      %p246 = por %p244, %p245
      %p248 = scmp.ne.s32.totalorder %s233, %s247
      %p249 = scmp.eq.s32.totalorder %s34, 0
      %p250 = por %p248, %p249
      %s252 = sadd.s32 %s251, 1
      %p255 = scmp.eq.s32.totalorder %s28, 1
      %p256 = scmp.ne.s32.totalorder %s251, %s253
      %p257 = scmp.eq.s32.totalorder %s28, 0
      %p258 = por %p256, %p257
      %p259 = scmp.ne.s32.totalorder %s251, %s253
      %p260 = scmp.eq.s32.totalorder %s33, 1
      %p261 = por %p259, %p260
      %p262 = scmp.ne.s32.totalorder %s253, %s254
      %p263 = scmp.eq.s32.totalorder %s33, 0
      %p264 = por %p262, %p263
      %p265 = scmp.ne.s32.totalorder %s253, %s254
      %p266 = scmp.eq.s32.totalorder %s34, 1
      %p267 = por %p265, %p266
      %p269 = scmp.ne.s32.totalorder %s254, %s268
      %p270 = scmp.eq.s32.totalorder %s34, 0
      %p271 = por %p269, %p270
      %s273 = sadd.s32 %s272, 1
      %p276 = scmp.eq.s32.totalorder %s28, 1
      %p277 = scmp.ne.s32.totalorder %s272, %s274
      %p278 = scmp.eq.s32.totalorder %s28, 0
      %p279 = por %p277, %p278
      %p280 = scmp.ne.s32.totalorder %s272, %s274
      %p281 = scmp.eq.s32.totalorder %s33, 1
      %p282 = por %p280, %p281
      %p283 = scmp.ne.s32.totalorder %s274, %s275
      %p284 = scmp.eq.s32.totalorder %s33, 0
      %p285 = por %p283, %p284
      %p286 = scmp.ne.s32.totalorder %s274, %s275
      %p287 = scmp.eq.s32.totalorder %s34, 1
      %p288 = por %p286, %p287
      %p290 = scmp.ne.s32.totalorder %s275, %s289
      %p291 = scmp.eq.s32.totalorder %s34, 0
      %p292 = por %p290, %p291
      %s294 = sadd.s32 %s293, 1
      %p297 = scmp.eq.s32.totalorder %s28, 1
      %p298 = scmp.ne.s32.totalorder %s293, %s295
      %p299 = scmp.eq.s32.totalorder %s28, 0
      %p300 = por %p298, %p299
      %p301 = scmp.ne.s32.totalorder %s293, %s295
      %p302 = scmp.eq.s32.totalorder %s33, 1
      %p303 = por %p301, %p302
      %p304 = scmp.ne.s32.totalorder %s295, %s296
      %p305 = scmp.eq.s32.totalorder %s33, 0
      %p306 = por %p304, %p305
      %p307 = scmp.ne.s32.totalorder %s295, %s296
      %p308 = scmp.eq.s32.totalorder %s34, 1
      %p309 = por %p307, %p308
      %p311 = scmp.ne.s32.totalorder %s296, %s310
      %p312 = scmp.eq.s32.totalorder %s34, 0
      %p313 = por %p311, %p312
      %s314 = ssub.s32 %s28, %s35
      %p315 = scmp.eq.s32.totalorder %s314, 0
      %s317 = sadd.s32 %s316, 1
      %s318 = scalar_select %p315, %s316, %s317
      %p321 = pneg %p315
      %p322 = scmp.eq.s32.totalorder %s28, 1
      %p323 = por %p321, %p322
      %p324 = scmp.ne.s32.totalorder %s316, %s319
      %p325 = scmp.eq.s32.totalorder %s28, 0
      %p326 = por %p324, %p325
      %p327 = scmp.ne.s32.totalorder %s316, %s319
      %p328 = scmp.eq.s32.totalorder %s33, 1
      %p329 = por %p327, %p328
      %p330 = scmp.ne.s32.totalorder %s319, %s320
      %p331 = scmp.eq.s32.totalorder %s33, 0
      %p332 = por %p330, %p331
      %p333 = scmp.ne.s32.totalorder %s319, %s320
      %p334 = scmp.eq.s32.totalorder %s34, 1
      %p335 = por %p333, %p334
      %p337 = scmp.ne.s32.totalorder %s320, %s336
      %p338 = scmp.eq.s32.totalorder %s34, 0
      %p339 = por %p337, %p338
      %s340 = ssub.s32 %s28, %s35
      %p341 = scmp.eq.s32.totalorder %s340, 0
      %s343 = sadd.s32 %s342, 1
      %s344 = scalar_select %p341, %s342, %s343
      %p347 = pneg %p341
      %p348 = scmp.eq.s32.totalorder %s28, 1
      %p349 = por %p347, %p348
      %p350 = scmp.ne.s32.totalorder %s342, %s345
      %p351 = scmp.eq.s32.totalorder %s28, 0
      %p352 = por %p350, %p351
      %p353 = scmp.ne.s32.totalorder %s342, %s345
      %p354 = scmp.eq.s32.totalorder %s33, 1
      %p355 = por %p353, %p354
      %p356 = scmp.ne.s32.totalorder %s345, %s346
      %p357 = scmp.eq.s32.totalorder %s33, 0
      %p358 = por %p356, %p357
      %p359 = scmp.ne.s32.totalorder %s345, %s346
      %p360 = scmp.eq.s32.totalorder %s34, 1
      %p361 = por %p359, %p360
      %p363 = scmp.ne.s32.totalorder %s346, %s362
      %p364 = scmp.eq.s32.totalorder %s34, 0
      %p365 = por %p363, %p364
      %s366 = ssub.s32 %s28, %s35
      %p367 = scmp.eq.s32.totalorder %s366, 0
      %s369 = sadd.s32 %s368, 1
      %s370 = scalar_select %p367, %s368, %s369
      %p373 = pneg %p367
      %p374 = scmp.eq.s32.totalorder %s28, 1
      %p375 = por %p373, %p374
      %p376 = scmp.ne.s32.totalorder %s368, %s371
      %p377 = scmp.eq.s32.totalorder %s28, 0
      %p378 = por %p376, %p377
      %p379 = scmp.ne.s32.totalorder %s368, %s371
      %p380 = scmp.eq.s32.totalorder %s33, 1
      %p381 = por %p379, %p380
      %p382 = scmp.ne.s32.totalorder %s371, %s372
      %p383 = scmp.eq.s32.totalorder %s33, 0
      %p384 = por %p382, %p383
      %p385 = scmp.ne.s32.totalorder %s371, %s372
      %p386 = scmp.eq.s32.totalorder %s34, 1
      %p387 = por %p385, %p386
      %p389 = scmp.ne.s32.totalorder %s372, %s388
      %p390 = scmp.eq.s32.totalorder %s34, 0
      %p391 = por %p389, %p390
      %p392 = scmp.le.s32.totalorder 1, %s28
      %p393 = scmp.lt.s32.totalorder %s28, 3
      %p394 = pnand %p392, %p393
      %p395 = pneg %p394
      // Predicated region
      $region9: #{tpu_custom_call.1} parent=5 // pred_check
        _
      $region10: #{tpu_custom_call.1} parent=5 // pred_check_branch
        %397 = sbr.rel (%p394) target = $region12
      $region11: #{tpu_custom_call.1} parent=5 // pred_region
        %s398 = ssub.s32 %s28, 1
        // Predicated region
        $region13: #{tpu_custom_call.1} parent=11 // pred_check
          %p399 = pneg %p75
        $region14: #{tpu_custom_call.1} parent=11 // pred_check_branch
          %401 = sbr.rel (%p399) target = $region16
        $region15: #{tpu_custom_call.1} parent=11 // pred_region
          _
        $region16: #{tpu_custom_call.1} parent=11 // pred_fallthru
          _
        // Predicated region
        $region17: #{tpu_custom_call.1} parent=11 // pred_check
          %p402 = pneg %p96
        $region18: #{tpu_custom_call.1} parent=11 // pred_check_branch
          %404 = sbr.rel (%p402) target = $region20
        $region19: #{tpu_custom_call.1} parent=11 // pred_region
          _
        $region20: #{tpu_custom_call.1} parent=11 // pred_fallthru
          _
        // Predicated region
        $region21: #{tpu_custom_call.1} parent=11 // pred_check
          %p405 = pneg %p117
        $region22: #{tpu_custom_call.1} parent=11 // pred_check_branch
          %407 = sbr.rel (%p405) target = $region24
        $region23: #{tpu_custom_call.1} parent=11 // pred_region
          _
        $region24: #{tpu_custom_call.1} parent=11 // pred_fallthru
          _
        // Predicated region
        $region25: #{tpu_custom_call.1} parent=11 // pred_check
          %p408 = pneg %p138
        $region26: #{tpu_custom_call.1} parent=11 // pred_check_branch
          %410 = sbr.rel (%p408) target = $region28
        $region27: #{tpu_custom_call.1} parent=11 // pred_region
          _
        $region28: #{tpu_custom_call.1} parent=11 // pred_fallthru
          _
        // Predicated region
        $region29: #{tpu_custom_call.1} parent=11 // pred_check
          %p411 = pneg %p159
        $region30: #{tpu_custom_call.1} parent=11 // pred_check_branch
          %413 = sbr.rel (%p411) target = $region32
        $region31: #{tpu_custom_call.1} parent=11 // pred_region
          _
        $region32: #{tpu_custom_call.1} parent=11 // pred_fallthru
          _
        // Predicated region
        $region33: #{tpu_custom_call.1} parent=11 // pred_check
          %p414 = pneg %p180
        $region34: #{tpu_custom_call.1} parent=11 // pred_check_branch
          %416 = sbr.rel (%p414) target = $region36
        $region35: #{tpu_custom_call.1} parent=11 // pred_region
          _
        $region36: #{tpu_custom_call.1} parent=11 // pred_fallthru
          _
        // Predicated region
        $region37: #{tpu_custom_call.1} parent=11 // pred_check
          %p417 = pneg %p201
        $region38: #{tpu_custom_call.1} parent=11 // pred_check_branch
          %419 = sbr.rel (%p417) target = $region40
        $region39: #{tpu_custom_call.1} parent=11 // pred_region
          _
        $region40: #{tpu_custom_call.1} parent=11 // pred_fallthru
          _
        // Predicated region
        $region41: #{tpu_custom_call.1} parent=11 // pred_check
          %p420 = pneg %p222
        $region42: #{tpu_custom_call.1} parent=11 // pred_check_branch
          %422 = sbr.rel (%p420) target = $region44
        $region43: #{tpu_custom_call.1} parent=11 // pred_region
          _
        $region44: #{tpu_custom_call.1} parent=11 // pred_fallthru
          _
        // Predicated region
        $region45: #{tpu_custom_call.1} parent=11 // pred_check
          %p423 = pneg %p243
        $region46: #{tpu_custom_call.1} parent=11 // pred_check_branch
          %425 = sbr.rel (%p423) target = $region48
        $region47: #{tpu_custom_call.1} parent=11 // pred_region
          _
        $region48: #{tpu_custom_call.1} parent=11 // pred_fallthru
          _
        // Predicated region
        $region49: #{tpu_custom_call.1} parent=11 // pred_check
          %p426 = pneg %p264
        $region50: #{tpu_custom_call.1} parent=11 // pred_check_branch
          %428 = sbr.rel (%p426) target = $region52
        $region51: #{tpu_custom_call.1} parent=11 // pred_region
          _
        $region52: #{tpu_custom_call.1} parent=11 // pred_fallthru
          _
        // Predicated region
        $region53: #{tpu_custom_call.1} parent=11 // pred_check
          %p429 = pneg %p285
        $region54: #{tpu_custom_call.1} parent=11 // pred_check_branch
          %431 = sbr.rel (%p429) target = $region56
        $region55: #{tpu_custom_call.1} parent=11 // pred_region
          _
        $region56: #{tpu_custom_call.1} parent=11 // pred_fallthru
          _
        // Predicated region
        $region57: #{tpu_custom_call.1} parent=11 // pred_check
          %p432 = pneg %p306
        $region58: #{tpu_custom_call.1} parent=11 // pred_check_branch
          %434 = sbr.rel (%p432) target = $region60
        $region59: #{tpu_custom_call.1} parent=11 // pred_region
          _
        $region60: #{tpu_custom_call.1} parent=11 // pred_fallthru
          _
      $region12: #{tpu_custom_call.1} parent=5 // pred_fallthru
        _
      %p435 = scmp.lt.s32.totalorder %s28, 2
      // Predicated region
      $region61: #{tpu_custom_call.1} parent=5 // pred_check
        %p436 = pneg %p435
      $region62: #{tpu_custom_call.1} parent=5 // pred_check_branch
        %438 = sbr.rel (%p436) target = $region64
      $region63: #{tpu_custom_call.1} parent=5 // pred_region
        // Predicated region
        $region65: #{tpu_custom_call.1} parent=63 // pred_check
          %p439 = pneg %p48
        $region66: #{tpu_custom_call.1} parent=63 // pred_check_branch
          %441 = sbr.rel (%p439) target = $region68
        $region67: #{tpu_custom_call.1} parent=63 // pred_region
          %p442 = scmp.lt.s32.totalorder %s28, 1
          %s443 = scalar_select %p442, %s28, 1
          %s444 = smul.addr %s443, 2
          %s445 = smul.addr %s444, 8
          %s446 = scalar_lea.vmem %s0, %s445
        $region68: #{tpu_custom_call.1} parent=63 // pred_fallthru
          _
      $region64: #{tpu_custom_call.1} parent=5 // pred_fallthru
        _
      %p447 = scmp.le.s32.totalorder 1, %s28
      %p448 = scmp.lt.s32.totalorder %s28, 3
      %p449 = pnand %p447, %p448
      %p450 = pneg %p449
      // Predicated region
      $region69: #{tpu_custom_call.1} parent=5 // pred_check
        _
      $region70: #{tpu_custom_call.1} parent=5 // pred_check_branch
        %452 = sbr.rel (%p449) target = $region72
      $region71: #{tpu_custom_call.1} parent=5 // pred_region
        %s453 = ssub.s32 %s28, 1
        %p454 = scmp.lt.s32.totalorder %s33, 1
        %s455 = scalar_select %p454, %s33, 1
        %s456 = smul.addr %s455, 2
        %s457 = smul.addr %s456, 8
        %s458 = scalar_lea.vmem %s0, %s457
        %p459 = pneg %p54
        %p460 = pneg %p51
        %p461 = pneg %p75
        %p462 = pneg %p72
        %p463 = pneg %p96
        %p464 = pneg %p93
        %p465 = pneg %p117
        %p466 = pneg %p114
        %p467 = pneg %p138
        %p468 = pneg %p135
        %p469 = pneg %p159
        %p470 = pneg %p156
        %p471 = pneg %p180
        %p472 = pneg %p177
        %p473 = pneg %p201
        %p474 = pneg %p198
        %p475 = pneg %p222
        %p476 = pneg %p219
        %p477 = pneg %p243
        %p478 = pneg %p240
        %p479 = pneg %p264
        %p480 = pneg %p261
        %p481 = pneg %p285
        %p482 = pneg %p282
        %p483 = pneg %p306
        %p484 = pneg %p303
        %p485 = pneg %p332
        %p486 = pneg %p329
        %s487 = sand.u32 %s319, 1
        %s488 = scalar_lea.sflag [#allocation3], %s487
        %s489 = sand.u32 %s319, 1
        %s490 = smul.addr %s489, 16
        %s491 = scalar_lea.vmem [#allocation2], %s490
        %p492 = pneg %p358
        %p493 = pneg %p355
        %s494 = sand.u32 %s33, 1
        %s495 = scalar_lea.sflag [#allocation5], %s494
        %s496 = sand.u32 %s345, 1
        %s497 = smul.addr %s496, 16
        %s498 = scalar_lea.vmem [#allocation4], %s497
        %p499 = pneg %p384
        %p500 = pneg %p381
        %s501 = sand.u32 %s33, 1
        %s502 = scalar_lea.sflag [#allocation5], %s501
        %s503 = sand.u32 %s371, 1
        %s504 = smul.addr %s503, 16
        %s505 = scalar_lea.vmem [#allocation6], %s504
        %p506 = scmp.lt.s32.totalorder %s33, 1
        %s507 = scalar_select %p506, %s33, 1
        %s508 = smul.addr %s507, 2
        %s509 = smul.addr %s508, 8
        %s510 = scalar_lea.vmem %s0, %s509
        %v511 = vld [vmem:[%s510] sm:$0xff]
        %v512 = vld [vmem:[%s510 + $0x8] sm:$0xff]
        %v513 = vld [vmem:[%s1] sm:$0x1]
        %v514 = vld [vmem:[%s2] sm:$0x1]
        %vm515 = vcmask 261120
        %v516 = vsel %vm515, %v511, 0.0
        %517 = vadd.xlane.f32.xlu0 %v516
        %v518 = vpop.xlane.xlu0 %517
        %v519 = vsel %vm515, %v512, 0.0
        %520 = vadd.xlane.f32.xlu0 %v519
        %v521 = vpop.xlane.xlu0 %520
        %v522 = vrcp.pop 32.0
        %v523 = vmul.f32 %v518, %v522
        %v524 = vmul.f32 %v521, %v522
        %v525 = vsub.f32 %v511, %v523
        %v526 = vsub.f32 %v512, %v524
        %v527 = vmul.f32 %v525, %v525
        %v528 = vmul.f32 %v526, %v526
        %v529 = vsel %vm515, %v527, 0.0
        %530 = vadd.xlane.f32.xlu0 %v529
        %v531 = vpop.xlane.xlu0 %530
        %v532 = vsel %vm515, %v528, 0.0
        %533 = vadd.xlane.f32.xlu0 %v532
        %v534 = vpop.xlane.xlu0 %533
        %v535 = vrcp.pop 31.0
        %v536 = vmul.f32 %v531, %v535
        %v537 = vmul.f32 %v534, %v535
        %v538 = vrsqrt.pop %v536
        %v539 = vmul.f32 %v536, %v538
        %vm540 = vcmp.eq.f32.partialorder %v536, inf
        %v541 = vsel %vm540, %v536, %v539
        %vm542 = vcmp.eq.f32.partialorder %v536, 0.0
        %v543 = vand.u32 %v536, 2147483648
        %v544 = vsel %vm542, %v543, %v541
        %v545 = vrsqrt.pop %v537
        %v546 = vmul.f32 %v537, %v545
        %vm547 = vcmp.eq.f32.partialorder %v537, inf
        %v548 = vsel %vm547, %v537, %v546
        %vm549 = vcmp.eq.f32.partialorder %v537, 0.0
        %v550 = vand.u32 %v537, 2147483648
        %v551 = vsel %vm549, %v550, %v548
        %v552 = vadd.f32 %v544, 1e-07
        %v553 = vadd.f32 %v551, 1e-07
        %v554 = vrcp.pop %v552
        %v555 = vmul.f32 %v525, %v554
        %v556 = vrcp.pop %v553
        %v557 = vmul.f32 %v526, %v556
        %v559 = vlaneseq
        %v560 = vshrl.u32 %v559, 7
        %v561 = vsub.s32 0, %v560
        %v562 = vrot.slane %v513, %v561
        %v564 = vmul.f32 %v562, %v555
        %v565 = vmul.f32 %v562, %v557
        %v567 = vlaneseq
        %v568 = vshrl.u32 %v567, 7
        %v569 = vsub.s32 0, %v568
        %v570 = vrot.slane %v514, %v569
        %v572 = vadd.f32 %v564, %v570
        %v573 = vadd.f32 %v565, %v570
        %v574 = vld [vmem:[%s3] sm:$0xff]
        %v575 = vld [vmem:[%s3 + $0x8] sm:$0xff]
        %v576 = vld [vmem:[%s3 + $0x10] sm:$0xff]
        %v577 = vld [vmem:[%s3 + $0x18] sm:$0xff]
        %v578 = vld [vmem:[%s4] sm:$0x1]
        %v580 = vlaneseq
        %v581 = vshrl.u32 %v580, 7
        %v582 = vsub.s32 0, %v581
        %v583 = vrot.slane %v578, %v582
        %v586 = vsel %vm515, %v572, 0
        %v589 = vsel %vm515, %v573, 0
        %591 = vmatprep.subr.mxu0 0.0
        %592 = vmatpush1.msra.mxu0 0.0
        %593 = vmatprep.subr.mxu0 0.0
        %594 = vmatpush1.msra.mxu0 0.0
        %595 = vmatprep.subr.mxu0 0.0
        %596 = vmatpush1.msra.mxu0 0.0
        %597 = vmatprep.subr.mxu0 0.0
        %598 = vmatpush1.msra.mxu0 0.0
        %599 = vmatprep.subr.mxu0 0.0
        %600 = vmatpush1.msra.mxu0 0.0
        %601 = vmatprep.subr.mxu0 0.0
        %602 = vmatpush1.msra.mxu0 0.0
        %603 = vmatprep.subr.mxu0 0.0
        %604 = vmatpush1.msra.mxu0 0.0
        %605 = vmatprep.subr.mxu0 0.0
        %606 = vmatpush1.msra.mxu0 0.0
        %607 = vmatprep.subr.mxu0 0.0
        %608 = vmatpush1.msra.mxu0 0.0
        %609 = vmatprep.subr.mxu0 0.0
        %610 = vmatpush1.msra.mxu0 0.0
        %611 = vmatprep.subr.mxu0 0.0
        %612 = vmatpush1.msra.mxu0 0.0
        %613 = vmatprep.subr.mxu0 0.0
        %614 = vmatpush1.msra.mxu0 0.0
        %615 = vmatprep.subr.mxu0 0.0
        %616 = vmatpush1.msra.mxu0 %v577
        %617 = vmatprep.subr.mxu0 0.0
        %618 = vmatpush1.msra.mxu0 %v576
        %619 = vmatprep.subr.mxu0 0.0
        %620 = vmatpush1.msra.mxu0 %v575
        %621 = vmatprep.subr.mxu0 0.0
        %622 = vmatpush1.msra.mxu0 %v574
        %623 = vmatprep.subr.mxu0 0.0
        %624 = vmatpush2.msra.mxu0 0.0
        %625 = vmatprep.subr.mxu0 0.0
        %626 = vmatpush2.msra.mxu0 0.0
        %627 = vmatprep.subr.mxu0 0.0
        %628 = vmatpush2.msra.mxu0 0.0
        %629 = vmatprep.subr.mxu0 0.0
        %630 = vmatpush2.msra.mxu0 0.0
        %631 = vmatprep.subr.mxu0 0.0
        %632 = vmatpush2.msra.mxu0 0.0
        %633 = vmatprep.subr.mxu0 0.0
        %634 = vmatpush2.msra.mxu0 0.0
        %635 = vmatprep.subr.mxu0 0.0
        %636 = vmatpush2.msra.mxu0 0.0
        %637 = vmatprep.subr.mxu0 0.0
        %638 = vmatpush2.msra.mxu0 0.0
        %639 = vmatprep.subr.mxu0 0.0
        %640 = vmatpush2.msra.mxu0 0.0
        %641 = vmatprep.subr.mxu0 0.0
        %642 = vmatpush2.msra.mxu0 0.0
        %643 = vmatprep.subr.mxu0 0.0
        %644 = vmatpush2.msra.mxu0 0.0
        %645 = vmatprep.subr.mxu0 0.0
        %646 = vmatpush2.msra.mxu0 0.0
        %647 = vmatprep.subr.mxu0 0.0
        %648 = vmatpush2.msra.mxu0 0.0
        %649 = vmatprep.subr.mxu0 0.0
        %650 = vmatpush2.msra.mxu0 0.0
        %651 = vmatprep.subr.mxu0 0.0
        %652 = vmatpush2.msra.mxu0 0.0
        %653 = vmatprep.subr.mxu0 0.0
        %654 = vmatpush2.msra.mxu0 0.0
        %655 = vmatprep.mubr.f32.mxu0 0.0
        %656 = vmatmul.mubr.f32.gmra.mxu0 %v586
        %v657 = vpop.f32.mrf.mxu0
        %v658 = vadd.f32 %v583, %v657
        %v659 = vpop.f32.mrf.mxu0
        %660 = vmatprep.mubr.f32.mxu0 0.0
        %661 = vmatmul.mubr.f32.gmra.mxu0 %v589
        %v662 = vpop.f32.mrf.mxu0
        %v663 = vadd.f32 %v583, %v662
        %v664 = vpop.f32.mrf.mxu0
        %665 = vdwg.mxu0
        %668 = vrot.lane.b32.xlu0 %v658, 96
        %v669 = vpop.permute.xlu0 %668
        %670 = vrot.lane.b32.xlu0 %v663, 96
        %v671 = vpop.permute.xlu0 %670
        %674 = vst.msk [vmem:[%s498] sm:$0xff] %vm515, %v669
        %675 = vst.msk [vmem:[%s498 + $0x8] sm:$0xff] %vm515, %v671
        %676 = vrot.lane.b32.xlu0 %v658, 64
        %v677 = vpop.permute.xlu0 %676
        %678 = vrot.lane.b32.xlu0 %v663, 64
        %v679 = vpop.permute.xlu0 %678
        %682 = vst.msk [vmem:[%s505] sm:$0xff] %vm515, %v677
        %683 = vst.msk [vmem:[%s505 + $0x8] sm:$0xff] %vm515, %v679
        %684 = vrot.lane.b32.xlu0 %v658, 120
        %v685 = vpop.permute.xlu0 %684
        %686 = vrot.lane.b32.xlu0 %v663, 120
        %v687 = vpop.permute.xlu0 %686
        %690 = vrot.lane.b32.xlu0 %v658, 112
        %v691 = vpop.permute.xlu0 %690
        %692 = vrot.lane.b32.xlu0 %v663, 112
        %v693 = vpop.permute.xlu0 %692
        %696 = vrot.lane.b32.xlu0 %v658, 104
        %v697 = vpop.permute.xlu0 %696
        %698 = vrot.lane.b32.xlu0 %v663, 104
        %v699 = vpop.permute.xlu0 %698
        %v702 = vcombine.low %v658, %v691
        %v703 = vcombine.high %v658, %v691
        %v705 = vunpack.c.l.s4 1983009808
        %v706 = vunpack.c.0.s8 %v705
        %v707 = vlaneseq
        %v708 = vshrl.u32 %v707, 7
        %v709 = vsub.s32 %v706, %v708
        %v710 = vrot.slane %v702, %v709
        %v712 = vunpack.c.l.s4 1983009808
        %v713 = vunpack.c.0.s8 %v712
        %v714 = vlaneseq
        %v715 = vshrl.u32 %v714, 7
        %v716 = vsub.s32 %v713, %v715
        %v717 = vrot.slane %v703, %v716
        %v718 = vcombine.low %v685, %v697
        %v719 = vcombine.high %v685, %v697
        %v721 = vunpack.c.l.s4 1983009808
        %v722 = vunpack.c.0.s8 %v721
        %v723 = vlaneseq
        %v724 = vshrl.u32 %v723, 7
        %v725 = vsub.s32 %v722, %v724
        %v726 = vrot.slane %v718, %v725
        %v728 = vunpack.c.l.s4 1983009808
        %v729 = vunpack.c.0.s8 %v728
        %v730 = vlaneseq
        %v731 = vshrl.u32 %v730, 7
        %v732 = vsub.s32 %v729, %v731
        %v733 = vrot.slane %v719, %v732
        %v734 = vcombine.low %v710, %v726
        %v735 = vcombine.high %v710, %v726
        %v737 = vunpack.c.l.s4 1934713408
        %v738 = vunpack.c.0.s8 %v737
        %v739 = vlaneseq
        %v740 = vshrl.u32 %v739, 7
        %v741 = vsub.s32 %v738, %v740
        %v742 = vrot.slane %v734, %v741
        %v744 = vunpack.c.l.s4 1934713408
        %v745 = vunpack.c.0.s8 %v744
        %v746 = vlaneseq
        %v747 = vshrl.u32 %v746, 7
        %v748 = vsub.s32 %v745, %v747
        %v749 = vrot.slane %v735, %v748
        %v750 = vcombine.low %v717, %v733
        %v751 = vcombine.high %v717, %v733
        %v753 = vunpack.c.l.s4 1934713408
        %v754 = vunpack.c.0.s8 %v753
        %v755 = vlaneseq
        %v756 = vshrl.u32 %v755, 7
        %v757 = vsub.s32 %v754, %v756
        %v758 = vrot.slane %v750, %v757
        %v760 = vunpack.c.l.s4 1934713408
        %v761 = vunpack.c.0.s8 %v760
        %v762 = vlaneseq
        %v763 = vshrl.u32 %v762, 7
        %v764 = vsub.s32 %v761, %v763
        %v765 = vrot.slane %v751, %v764
        %v766 = vcombine.high %v742, 0.0
        %v767 = vcombine.high %v749, 0.0
        %v768 = vcombine.high %v758, 0.0
        %v769 = vcombine.high %v765, 0.0
        %v770 = vcombine.low %v663, %v693
        %v771 = vcombine.high %v663, %v693
        %v773 = vunpack.c.l.s4 1983009808
        %v774 = vunpack.c.0.s8 %v773
        %v775 = vlaneseq
        %v776 = vshrl.u32 %v775, 7
        %v777 = vsub.s32 %v774, %v776
        %v778 = vrot.slane %v770, %v777
        %v780 = vunpack.c.l.s4 1983009808
        %v781 = vunpack.c.0.s8 %v780
        %v782 = vlaneseq
        %v783 = vshrl.u32 %v782, 7
        %v784 = vsub.s32 %v781, %v783
        %v785 = vrot.slane %v771, %v784
        %v786 = vcombine.low %v687, %v699
        %v787 = vcombine.high %v687, %v699
        %v789 = vunpack.c.l.s4 1983009808
        %v790 = vunpack.c.0.s8 %v789
        %v791 = vlaneseq
        %v792 = vshrl.u32 %v791, 7
        %v793 = vsub.s32 %v790, %v792
        %v794 = vrot.slane %v786, %v793
        %v796 = vunpack.c.l.s4 1983009808
        %v797 = vunpack.c.0.s8 %v796
        %v798 = vlaneseq
        %v799 = vshrl.u32 %v798, 7
        %v800 = vsub.s32 %v797, %v799
        %v801 = vrot.slane %v787, %v800
        %v802 = vcombine.low %v778, %v794
        %v803 = vcombine.high %v778, %v794
        %v805 = vunpack.c.l.s4 1934713408
        %v806 = vunpack.c.0.s8 %v805
        %v807 = vlaneseq
        %v808 = vshrl.u32 %v807, 7
        %v809 = vsub.s32 %v806, %v808
        %v810 = vrot.slane %v802, %v809
        %v812 = vunpack.c.l.s4 1934713408
        %v813 = vunpack.c.0.s8 %v812
        %v814 = vlaneseq
        %v815 = vshrl.u32 %v814, 7
        %v816 = vsub.s32 %v813, %v815
        %v817 = vrot.slane %v803, %v816
        %v818 = vcombine.low %v785, %v801
        %v819 = vcombine.high %v785, %v801
        %v821 = vunpack.c.l.s4 1934713408
        %v822 = vunpack.c.0.s8 %v821
        %v823 = vlaneseq
        %v824 = vshrl.u32 %v823, 7
        %v825 = vsub.s32 %v822, %v824
        %v826 = vrot.slane %v818, %v825
        %v828 = vunpack.c.l.s4 1934713408
        %v829 = vunpack.c.0.s8 %v828
        %v830 = vlaneseq
        %v831 = vshrl.u32 %v830, 7
        %v832 = vsub.s32 %v829, %v831
        %v833 = vrot.slane %v819, %v832
        %v834 = vcombine.high %v810, 0.0
        %v835 = vcombine.high %v817, 0.0
        %v836 = vcombine.high %v826, 0.0
        %v837 = vcombine.high %v833, 0.0
        %v838 = vcombine.low %v742, %v749
        %v840 = vunpack.c.l.s4 1983009808
        %v841 = vunpack.c.0.s8 %v840
        %v842 = vlaneseq
        %v843 = vshrl.u32 %v842, 7
        %v844 = vsub.s32 %v841, %v843
        %v845 = vrot.slane %v838, %v844
        %v846 = vcombine.low %v766, %v767
        %v848 = vunpack.c.l.s4 1983009808
        %v849 = vunpack.c.0.s8 %v848
        %v850 = vlaneseq
        %v851 = vshrl.u32 %v850, 7
        %v852 = vsub.s32 %v849, %v851
        %v853 = vrot.slane %v846, %v852
        %v854 = vcombine.low %v758, %v765
        %v856 = vunpack.c.l.s4 1983009808
        %v857 = vunpack.c.0.s8 %v856
        %v858 = vlaneseq
        %v859 = vshrl.u32 %v858, 7
        %v860 = vsub.s32 %v857, %v859
        %v861 = vrot.slane %v854, %v860
        %v862 = vcombine.low %v768, %v769
        %v864 = vunpack.c.l.s4 1983009808
        %v865 = vunpack.c.0.s8 %v864
        %v866 = vlaneseq
        %v867 = vshrl.u32 %v866, 7
        %v868 = vsub.s32 %v865, %v867
        %v869 = vrot.slane %v862, %v868
        %v870 = vcombine.low %v845, %v853
        %v871 = vcombine.high %v845, %v853
        %v873 = vunpack.c.l.s4 1934713408
        %v874 = vunpack.c.0.s8 %v873
        %v875 = vlaneseq
        %v876 = vshrl.u32 %v875, 7
        %v877 = vsub.s32 %v874, %v876
        %v878 = vrot.slane %v870, %v877
        %v880 = vunpack.c.l.s4 1934713408
        %v881 = vunpack.c.0.s8 %v880
        %v882 = vlaneseq
        %v883 = vshrl.u32 %v882, 7
        %v884 = vsub.s32 %v881, %v883
        %v885 = vrot.slane %v871, %v884
        %v886 = vcombine.low %v861, %v869
        %v887 = vcombine.high %v861, %v869
        %v889 = vunpack.c.l.s4 1934713408
        %v890 = vunpack.c.0.s8 %v889
        %v891 = vlaneseq
        %v892 = vshrl.u32 %v891, 7
        %v893 = vsub.s32 %v890, %v892
        %v894 = vrot.slane %v886, %v893
        %v896 = vunpack.c.l.s4 1934713408
        %v897 = vunpack.c.0.s8 %v896
        %v898 = vlaneseq
        %v899 = vshrl.u32 %v898, 7
        %v900 = vsub.s32 %v897, %v899
        %v901 = vrot.slane %v887, %v900
        %v902 = vcombine.low %v878, %v894
        %v903 = vcombine.high %v878, %v894
        %v904 = vcombine.low %v885, %v901
        %v905 = vcombine.high %v885, %v901
        %v906 = vcombine.low %v810, %v817
        %v908 = vunpack.c.l.s4 1983009808
        %v909 = vunpack.c.0.s8 %v908
        %v910 = vlaneseq
        %v911 = vshrl.u32 %v910, 7
        %v912 = vsub.s32 %v909, %v911
        %v913 = vrot.slane %v906, %v912
        %v914 = vcombine.low %v834, %v835
        %v916 = vunpack.c.l.s4 1983009808
        %v917 = vunpack.c.0.s8 %v916
        %v918 = vlaneseq
        %v919 = vshrl.u32 %v918, 7
        %v920 = vsub.s32 %v917, %v919
        %v921 = vrot.slane %v914, %v920
        %v922 = vcombine.low %v826, %v833
        %v924 = vunpack.c.l.s4 1983009808
        %v925 = vunpack.c.0.s8 %v924
        %v926 = vlaneseq
        %v927 = vshrl.u32 %v926, 7
        %v928 = vsub.s32 %v925, %v927
        %v929 = vrot.slane %v922, %v928
        %v930 = vcombine.low %v836, %v837
        %v932 = vunpack.c.l.s4 1983009808
        %v933 = vunpack.c.0.s8 %v932
        %v934 = vlaneseq
        %v935 = vshrl.u32 %v934, 7
        %v936 = vsub.s32 %v933, %v935
        %v937 = vrot.slane %v930, %v936
        %v938 = vcombine.low %v913, %v921
        %v939 = vcombine.high %v913, %v921
        %v941 = vunpack.c.l.s4 1934713408
        %v942 = vunpack.c.0.s8 %v941
        %v943 = vlaneseq
        %v944 = vshrl.u32 %v943, 7
        %v945 = vsub.s32 %v942, %v944
        %v946 = vrot.slane %v938, %v945
        %v948 = vunpack.c.l.s4 1934713408
        %v949 = vunpack.c.0.s8 %v948
        %v950 = vlaneseq
        %v951 = vshrl.u32 %v950, 7
        %v952 = vsub.s32 %v949, %v951
        %v953 = vrot.slane %v939, %v952
        %v954 = vcombine.low %v929, %v937
        %v955 = vcombine.high %v929, %v937
        %v957 = vunpack.c.l.s4 1934713408
        %v958 = vunpack.c.0.s8 %v957
        %v959 = vlaneseq
        %v960 = vshrl.u32 %v959, 7
        %v961 = vsub.s32 %v958, %v960
        %v962 = vrot.slane %v954, %v961
        %v964 = vunpack.c.l.s4 1934713408
        %v965 = vunpack.c.0.s8 %v964
        %v966 = vlaneseq
        %v967 = vshrl.u32 %v966, 7
        %v968 = vsub.s32 %v965, %v967
        %v969 = vrot.slane %v955, %v968
        %v970 = vcombine.low %v946, %v962
        %v971 = vcombine.high %v946, %v962
        %v972 = vcombine.low %v953, %v969
        %v973 = vcombine.high %v953, %v969
        %974 = vrot.lane.b32.xlu0 %v685, 96
        %v975 = vpop.permute.xlu0 %974
        %976 = vrot.lane.b32.xlu0 %v687, 96
        %v977 = vpop.permute.xlu0 %976
        %978 = vrot.lane.b32.xlu0 %v691, 96
        %v979 = vpop.permute.xlu0 %978
        %980 = vrot.lane.b32.xlu0 %v693, 96
        %v981 = vpop.permute.xlu0 %980
        %982 = vrot.lane.b32.xlu0 %v697, 96
        %v983 = vpop.permute.xlu0 %982
        %984 = vrot.lane.b32.xlu0 %v699, 96
        %v985 = vpop.permute.xlu0 %984
        %v992 = vcombine.low %v669, %v979
        %v993 = vcombine.high %v669, %v979
        %v995 = vunpack.c.l.s4 1983009808
        %v996 = vunpack.c.0.s8 %v995
        %v997 = vlaneseq
        %v998 = vshrl.u32 %v997, 7
        %v999 = vsub.s32 %v996, %v998
        %v1000 = vrot.slane %v992, %v999
        %v1002 = vunpack.c.l.s4 1983009808
        %v1003 = vunpack.c.0.s8 %v1002
        %v1004 = vlaneseq
        %v1005 = vshrl.u32 %v1004, 7
        %v1006 = vsub.s32 %v1003, %v1005
        %v1007 = vrot.slane %v993, %v1006
        %v1008 = vcombine.low %v975, %v983
        %v1009 = vcombine.high %v975, %v983
        %v1011 = vunpack.c.l.s4 1983009808
        %v1012 = vunpack.c.0.s8 %v1011
        %v1013 = vlaneseq
        %v1014 = vshrl.u32 %v1013, 7
        %v1015 = vsub.s32 %v1012, %v1014
        %v1016 = vrot.slane %v1008, %v1015
        %v1018 = vunpack.c.l.s4 1983009808
        %v1019 = vunpack.c.0.s8 %v1018
        %v1020 = vlaneseq
        %v1021 = vshrl.u32 %v1020, 7
        %v1022 = vsub.s32 %v1019, %v1021
        %v1023 = vrot.slane %v1009, %v1022
        %v1024 = vcombine.low %v1000, %v1016
        %v1025 = vcombine.high %v1000, %v1016
        %v1027 = vunpack.c.l.s4 1934713408
        %v1028 = vunpack.c.0.s8 %v1027
        %v1029 = vlaneseq
        %v1030 = vshrl.u32 %v1029, 7
        %v1031 = vsub.s32 %v1028, %v1030
        %v1032 = vrot.slane %v1024, %v1031
        %v1034 = vunpack.c.l.s4 1934713408
        %v1035 = vunpack.c.0.s8 %v1034
        %v1036 = vlaneseq
        %v1037 = vshrl.u32 %v1036, 7
        %v1038 = vsub.s32 %v1035, %v1037
        %v1039 = vrot.slane %v1025, %v1038
        %v1040 = vcombine.low %v1007, %v1023
        %v1041 = vcombine.high %v1007, %v1023
        %v1043 = vunpack.c.l.s4 1934713408
        %v1044 = vunpack.c.0.s8 %v1043
        %v1045 = vlaneseq
        %v1046 = vshrl.u32 %v1045, 7
        %v1047 = vsub.s32 %v1044, %v1046
        %v1048 = vrot.slane %v1040, %v1047
        %v1050 = vunpack.c.l.s4 1934713408
        %v1051 = vunpack.c.0.s8 %v1050
        %v1052 = vlaneseq
        %v1053 = vshrl.u32 %v1052, 7
        %v1054 = vsub.s32 %v1051, %v1053
        %v1055 = vrot.slane %v1041, %v1054
        %v1056 = vcombine.high %v1032, 0.0
        %v1057 = vcombine.high %v1039, 0.0
        %v1058 = vcombine.high %v1048, 0.0
        %v1059 = vcombine.high %v1055, 0.0
        %v1060 = vcombine.low %v671, %v981
        %v1061 = vcombine.high %v671, %v981
        %v1063 = vunpack.c.l.s4 1983009808
        %v1064 = vunpack.c.0.s8 %v1063
        %v1065 = vlaneseq
        %v1066 = vshrl.u32 %v1065, 7
        %v1067 = vsub.s32 %v1064, %v1066
        %v1068 = vrot.slane %v1060, %v1067
        %v1070 = vunpack.c.l.s4 1983009808
        %v1071 = vunpack.c.0.s8 %v1070
        %v1072 = vlaneseq
        %v1073 = vshrl.u32 %v1072, 7
        %v1074 = vsub.s32 %v1071, %v1073
        %v1075 = vrot.slane %v1061, %v1074
        %v1076 = vcombine.low %v977, %v985
        %v1077 = vcombine.high %v977, %v985
        %v1079 = vunpack.c.l.s4 1983009808
        %v1080 = vunpack.c.0.s8 %v1079
        %v1081 = vlaneseq
        %v1082 = vshrl.u32 %v1081, 7
        %v1083 = vsub.s32 %v1080, %v1082
        %v1084 = vrot.slane %v1076, %v1083
        %v1086 = vunpack.c.l.s4 1983009808
        %v1087 = vunpack.c.0.s8 %v1086
        %v1088 = vlaneseq
        %v1089 = vshrl.u32 %v1088, 7
        %v1090 = vsub.s32 %v1087, %v1089
        %v1091 = vrot.slane %v1077, %v1090
        %v1092 = vcombine.low %v1068, %v1084
        %v1093 = vcombine.high %v1068, %v1084
        %v1095 = vunpack.c.l.s4 1934713408
        %v1096 = vunpack.c.0.s8 %v1095
        %v1097 = vlaneseq
        %v1098 = vshrl.u32 %v1097, 7
        %v1099 = vsub.s32 %v1096, %v1098
        %v1100 = vrot.slane %v1092, %v1099
        %v1102 = vunpack.c.l.s4 1934713408
        %v1103 = vunpack.c.0.s8 %v1102
        %v1104 = vlaneseq
        %v1105 = vshrl.u32 %v1104, 7
        %v1106 = vsub.s32 %v1103, %v1105
        %v1107 = vrot.slane %v1093, %v1106
        %v1108 = vcombine.low %v1075, %v1091
        %v1109 = vcombine.high %v1075, %v1091
        %v1111 = vunpack.c.l.s4 1934713408
        %v1112 = vunpack.c.0.s8 %v1111
        %v1113 = vlaneseq
        %v1114 = vshrl.u32 %v1113, 7
        %v1115 = vsub.s32 %v1112, %v1114
        %v1116 = vrot.slane %v1108, %v1115
        %v1118 = vunpack.c.l.s4 1934713408
        %v1119 = vunpack.c.0.s8 %v1118
        %v1120 = vlaneseq
        %v1121 = vshrl.u32 %v1120, 7
        %v1122 = vsub.s32 %v1119, %v1121
        %v1123 = vrot.slane %v1109, %v1122
        %v1124 = vcombine.high %v1100, 0.0
        %v1125 = vcombine.high %v1107, 0.0
        %v1126 = vcombine.high %v1116, 0.0
        %v1127 = vcombine.high %v1123, 0.0
        %v1128 = vcombine.low %v1032, %v1039
        %v1130 = vunpack.c.l.s4 1983009808
        %v1131 = vunpack.c.0.s8 %v1130
        %v1132 = vlaneseq
        %v1133 = vshrl.u32 %v1132, 7
        %v1134 = vsub.s32 %v1131, %v1133
        %v1135 = vrot.slane %v1128, %v1134
        %v1136 = vcombine.low %v1056, %v1057
        %v1138 = vunpack.c.l.s4 1983009808
        %v1139 = vunpack.c.0.s8 %v1138
        %v1140 = vlaneseq
        %v1141 = vshrl.u32 %v1140, 7
        %v1142 = vsub.s32 %v1139, %v1141
        %v1143 = vrot.slane %v1136, %v1142
        %v1144 = vcombine.low %v1048, %v1055
        %v1146 = vunpack.c.l.s4 1983009808
        %v1147 = vunpack.c.0.s8 %v1146
        %v1148 = vlaneseq
        %v1149 = vshrl.u32 %v1148, 7
        %v1150 = vsub.s32 %v1147, %v1149
        %v1151 = vrot.slane %v1144, %v1150
        %v1152 = vcombine.low %v1058, %v1059
        %v1154 = vunpack.c.l.s4 1983009808
        %v1155 = vunpack.c.0.s8 %v1154
        %v1156 = vlaneseq
        %v1157 = vshrl.u32 %v1156, 7
        %v1158 = vsub.s32 %v1155, %v1157
        %v1159 = vrot.slane %v1152, %v1158
        %v1160 = vcombine.low %v1135, %v1143
        %v1161 = vcombine.high %v1135, %v1143
        %v1163 = vunpack.c.l.s4 1934713408
        %v1164 = vunpack.c.0.s8 %v1163
        %v1165 = vlaneseq
        %v1166 = vshrl.u32 %v1165, 7
        %v1167 = vsub.s32 %v1164, %v1166
        %v1168 = vrot.slane %v1160, %v1167
        %v1170 = vunpack.c.l.s4 1934713408
        %v1171 = vunpack.c.0.s8 %v1170
        %v1172 = vlaneseq
        %v1173 = vshrl.u32 %v1172, 7
        %v1174 = vsub.s32 %v1171, %v1173
        %v1175 = vrot.slane %v1161, %v1174
        %v1176 = vcombine.low %v1151, %v1159
        %v1177 = vcombine.high %v1151, %v1159
        %v1179 = vunpack.c.l.s4 1934713408
        %v1180 = vunpack.c.0.s8 %v1179
        %v1181 = vlaneseq
        %v1182 = vshrl.u32 %v1181, 7
        %v1183 = vsub.s32 %v1180, %v1182
        %v1184 = vrot.slane %v1176, %v1183
        %v1186 = vunpack.c.l.s4 1934713408
        %v1187 = vunpack.c.0.s8 %v1186
        %v1188 = vlaneseq
        %v1189 = vshrl.u32 %v1188, 7
        %v1190 = vsub.s32 %v1187, %v1189
        %v1191 = vrot.slane %v1177, %v1190
        %v1192 = vcombine.low %v1168, %v1184
        %v1193 = vcombine.high %v1168, %v1184
        %v1194 = vcombine.low %v1175, %v1191
        %v1195 = vcombine.high %v1175, %v1191
        %v1196 = vcombine.low %v1100, %v1107
        %v1198 = vunpack.c.l.s4 1983009808
        %v1199 = vunpack.c.0.s8 %v1198
        %v1200 = vlaneseq
        %v1201 = vshrl.u32 %v1200, 7
        %v1202 = vsub.s32 %v1199, %v1201
        %v1203 = vrot.slane %v1196, %v1202
        %v1204 = vcombine.low %v1124, %v1125
        %v1206 = vunpack.c.l.s4 1983009808
        %v1207 = vunpack.c.0.s8 %v1206
        %v1208 = vlaneseq
        %v1209 = vshrl.u32 %v1208, 7
        %v1210 = vsub.s32 %v1207, %v1209
        %v1211 = vrot.slane %v1204, %v1210
        %v1212 = vcombine.low %v1116, %v1123
        %v1214 = vunpack.c.l.s4 1983009808
        %v1215 = vunpack.c.0.s8 %v1214
        %v1216 = vlaneseq
        %v1217 = vshrl.u32 %v1216, 7
        %v1218 = vsub.s32 %v1215, %v1217
        %v1219 = vrot.slane %v1212, %v1218
        %v1220 = vcombine.low %v1126, %v1127
        %v1222 = vunpack.c.l.s4 1983009808
        %v1223 = vunpack.c.0.s8 %v1222
        %v1224 = vlaneseq
        %v1225 = vshrl.u32 %v1224, 7
        %v1226 = vsub.s32 %v1223, %v1225
        %v1227 = vrot.slane %v1220, %v1226
        %v1228 = vcombine.low %v1203, %v1211
        %v1229 = vcombine.high %v1203, %v1211
        %v1231 = vunpack.c.l.s4 1934713408
        %v1232 = vunpack.c.0.s8 %v1231
        %v1233 = vlaneseq
        %v1234 = vshrl.u32 %v1233, 7
        %v1235 = vsub.s32 %v1232, %v1234
        %v1236 = vrot.slane %v1228, %v1235
        %v1238 = vunpack.c.l.s4 1934713408
        %v1239 = vunpack.c.0.s8 %v1238
        %v1240 = vlaneseq
        %v1241 = vshrl.u32 %v1240, 7
        %v1242 = vsub.s32 %v1239, %v1241
        %v1243 = vrot.slane %v1229, %v1242
        %v1244 = vcombine.low %v1219, %v1227
        %v1245 = vcombine.high %v1219, %v1227
        %v1247 = vunpack.c.l.s4 1934713408
        %v1248 = vunpack.c.0.s8 %v1247
        %v1249 = vlaneseq
        %v1250 = vshrl.u32 %v1249, 7
        %v1251 = vsub.s32 %v1248, %v1250
        %v1252 = vrot.slane %v1244, %v1251
        %v1254 = vunpack.c.l.s4 1934713408
        %v1255 = vunpack.c.0.s8 %v1254
        %v1256 = vlaneseq
        %v1257 = vshrl.u32 %v1256, 7
        %v1258 = vsub.s32 %v1255, %v1257
        %v1259 = vrot.slane %v1245, %v1258
        %v1260 = vcombine.low %v1236, %v1252
        %v1261 = vcombine.high %v1236, %v1252
        %v1262 = vcombine.low %v1243, %v1259
        %v1263 = vcombine.high %v1243, %v1259
        %1264 = vrot.lane.b32.xlu0 %v685, 64
        %v1265 = vpop.permute.xlu0 %1264
        %1266 = vrot.lane.b32.xlu0 %v687, 64
        %v1267 = vpop.permute.xlu0 %1266
        %1268 = vrot.lane.b32.xlu0 %v691, 64
        %v1269 = vpop.permute.xlu0 %1268
        %1270 = vrot.lane.b32.xlu0 %v693, 64
        %v1271 = vpop.permute.xlu0 %1270
        %1272 = vrot.lane.b32.xlu0 %v697, 64
        %v1273 = vpop.permute.xlu0 %1272
        %1274 = vrot.lane.b32.xlu0 %v699, 64
        %v1275 = vpop.permute.xlu0 %1274
        %v1282 = vcombine.low %v677, %v1269
        %v1283 = vcombine.high %v677, %v1269
        %v1285 = vunpack.c.l.s4 1983009808
        %v1286 = vunpack.c.0.s8 %v1285
        %v1287 = vlaneseq
        %v1288 = vshrl.u32 %v1287, 7
        %v1289 = vsub.s32 %v1286, %v1288
        %v1290 = vrot.slane %v1282, %v1289
        %v1292 = vunpack.c.l.s4 1983009808
        %v1293 = vunpack.c.0.s8 %v1292
        %v1294 = vlaneseq
        %v1295 = vshrl.u32 %v1294, 7
        %v1296 = vsub.s32 %v1293, %v1295
        %v1297 = vrot.slane %v1283, %v1296
        %v1298 = vcombine.low %v1265, %v1273
        %v1299 = vcombine.high %v1265, %v1273
        %v1301 = vunpack.c.l.s4 1983009808
        %v1302 = vunpack.c.0.s8 %v1301
        %v1303 = vlaneseq
        %v1304 = vshrl.u32 %v1303, 7
        %v1305 = vsub.s32 %v1302, %v1304
        %v1306 = vrot.slane %v1298, %v1305
        %v1308 = vunpack.c.l.s4 1983009808
        %v1309 = vunpack.c.0.s8 %v1308
        %v1310 = vlaneseq
        %v1311 = vshrl.u32 %v1310, 7
        %v1312 = vsub.s32 %v1309, %v1311
        %v1313 = vrot.slane %v1299, %v1312
        %v1314 = vcombine.low %v1290, %v1306
        %v1315 = vcombine.high %v1290, %v1306
        %v1317 = vunpack.c.l.s4 1934713408
        %v1318 = vunpack.c.0.s8 %v1317
        %v1319 = vlaneseq
        %v1320 = vshrl.u32 %v1319, 7
        %v1321 = vsub.s32 %v1318, %v1320
        %v1322 = vrot.slane %v1314, %v1321
        %v1324 = vunpack.c.l.s4 1934713408
        %v1325 = vunpack.c.0.s8 %v1324
        %v1326 = vlaneseq
        %v1327 = vshrl.u32 %v1326, 7
        %v1328 = vsub.s32 %v1325, %v1327
        %v1329 = vrot.slane %v1315, %v1328
        %v1330 = vcombine.low %v1297, %v1313
        %v1331 = vcombine.high %v1297, %v1313
        %v1333 = vunpack.c.l.s4 1934713408
        %v1334 = vunpack.c.0.s8 %v1333
        %v1335 = vlaneseq
        %v1336 = vshrl.u32 %v1335, 7
        %v1337 = vsub.s32 %v1334, %v1336
        %v1338 = vrot.slane %v1330, %v1337
        %v1340 = vunpack.c.l.s4 1934713408
        %v1341 = vunpack.c.0.s8 %v1340
        %v1342 = vlaneseq
        %v1343 = vshrl.u32 %v1342, 7
        %v1344 = vsub.s32 %v1341, %v1343
        %v1345 = vrot.slane %v1331, %v1344
        %v1346 = vcombine.high %v1322, 0.0
        %v1347 = vcombine.high %v1329, 0.0
        %v1348 = vcombine.high %v1338, 0.0
        %v1349 = vcombine.high %v1345, 0.0
        %v1350 = vcombine.low %v679, %v1271
        %v1351 = vcombine.high %v679, %v1271
        %v1353 = vunpack.c.l.s4 1983009808
        %v1354 = vunpack.c.0.s8 %v1353
        %v1355 = vlaneseq
        %v1356 = vshrl.u32 %v1355, 7
        %v1357 = vsub.s32 %v1354, %v1356
        %v1358 = vrot.slane %v1350, %v1357
        %v1360 = vunpack.c.l.s4 1983009808
        %v1361 = vunpack.c.0.s8 %v1360
        %v1362 = vlaneseq
        %v1363 = vshrl.u32 %v1362, 7
        %v1364 = vsub.s32 %v1361, %v1363
        %v1365 = vrot.slane %v1351, %v1364
        %v1366 = vcombine.low %v1267, %v1275
        %v1367 = vcombine.high %v1267, %v1275
        %v1369 = vunpack.c.l.s4 1983009808
        %v1370 = vunpack.c.0.s8 %v1369
        %v1371 = vlaneseq
        %v1372 = vshrl.u32 %v1371, 7
        %v1373 = vsub.s32 %v1370, %v1372
        %v1374 = vrot.slane %v1366, %v1373
        %v1376 = vunpack.c.l.s4 1983009808
        %v1377 = vunpack.c.0.s8 %v1376
        %v1378 = vlaneseq
        %v1379 = vshrl.u32 %v1378, 7
        %v1380 = vsub.s32 %v1377, %v1379
        %v1381 = vrot.slane %v1367, %v1380
        %v1382 = vcombine.low %v1358, %v1374
        %v1383 = vcombine.high %v1358, %v1374
        %v1385 = vunpack.c.l.s4 1934713408
        %v1386 = vunpack.c.0.s8 %v1385
        %v1387 = vlaneseq
        %v1388 = vshrl.u32 %v1387, 7
        %v1389 = vsub.s32 %v1386, %v1388
        %v1390 = vrot.slane %v1382, %v1389
        %v1392 = vunpack.c.l.s4 1934713408
        %v1393 = vunpack.c.0.s8 %v1392
        %v1394 = vlaneseq
        %v1395 = vshrl.u32 %v1394, 7
        %v1396 = vsub.s32 %v1393, %v1395
        %v1397 = vrot.slane %v1383, %v1396
        %v1398 = vcombine.low %v1365, %v1381
        %v1399 = vcombine.high %v1365, %v1381
        %v1401 = vunpack.c.l.s4 1934713408
        %v1402 = vunpack.c.0.s8 %v1401
        %v1403 = vlaneseq
        %v1404 = vshrl.u32 %v1403, 7
        %v1405 = vsub.s32 %v1402, %v1404
        %v1406 = vrot.slane %v1398, %v1405
        %v1408 = vunpack.c.l.s4 1934713408
        %v1409 = vunpack.c.0.s8 %v1408
        %v1410 = vlaneseq
        %v1411 = vshrl.u32 %v1410, 7
        %v1412 = vsub.s32 %v1409, %v1411
        %v1413 = vrot.slane %v1399, %v1412
        %v1414 = vcombine.high %v1390, 0.0
        %v1415 = vcombine.high %v1397, 0.0
        %v1416 = vcombine.high %v1406, 0.0
        %v1417 = vcombine.high %v1413, 0.0
        %v1418 = vcombine.low %v1322, %v1329
        %v1420 = vunpack.c.l.s4 1983009808
        %v1421 = vunpack.c.0.s8 %v1420
        %v1422 = vlaneseq
        %v1423 = vshrl.u32 %v1422, 7
        %v1424 = vsub.s32 %v1421, %v1423
        %v1425 = vrot.slane %v1418, %v1424
        %v1426 = vcombine.low %v1346, %v1347
        %v1428 = vunpack.c.l.s4 1983009808
        %v1429 = vunpack.c.0.s8 %v1428
        %v1430 = vlaneseq
        %v1431 = vshrl.u32 %v1430, 7
        %v1432 = vsub.s32 %v1429, %v1431
        %v1433 = vrot.slane %v1426, %v1432
        %v1434 = vcombine.low %v1338, %v1345
        %v1436 = vunpack.c.l.s4 1983009808
        %v1437 = vunpack.c.0.s8 %v1436
        %v1438 = vlaneseq
        %v1439 = vshrl.u32 %v1438, 7
        %v1440 = vsub.s32 %v1437, %v1439
        %v1441 = vrot.slane %v1434, %v1440
        %v1442 = vcombine.low %v1348, %v1349
        %v1444 = vunpack.c.l.s4 1983009808
        %v1445 = vunpack.c.0.s8 %v1444
        %v1446 = vlaneseq
        %v1447 = vshrl.u32 %v1446, 7
        %v1448 = vsub.s32 %v1445, %v1447
        %v1449 = vrot.slane %v1442, %v1448
        %v1450 = vcombine.low %v1425, %v1433
        %v1451 = vcombine.high %v1425, %v1433
        %v1453 = vunpack.c.l.s4 1934713408
        %v1454 = vunpack.c.0.s8 %v1453
        %v1455 = vlaneseq
        %v1456 = vshrl.u32 %v1455, 7
        %v1457 = vsub.s32 %v1454, %v1456
        %v1458 = vrot.slane %v1450, %v1457
        %v1460 = vunpack.c.l.s4 1934713408
        %v1461 = vunpack.c.0.s8 %v1460
        %v1462 = vlaneseq
        %v1463 = vshrl.u32 %v1462, 7
        %v1464 = vsub.s32 %v1461, %v1463
        %v1465 = vrot.slane %v1451, %v1464
        %v1466 = vcombine.low %v1441, %v1449
        %v1467 = vcombine.high %v1441, %v1449
        %v1469 = vunpack.c.l.s4 1934713408
        %v1470 = vunpack.c.0.s8 %v1469
        %v1471 = vlaneseq
        %v1472 = vshrl.u32 %v1471, 7
        %v1473 = vsub.s32 %v1470, %v1472
        %v1474 = vrot.slane %v1466, %v1473
        %v1476 = vunpack.c.l.s4 1934713408
        %v1477 = vunpack.c.0.s8 %v1476
        %v1478 = vlaneseq
        %v1479 = vshrl.u32 %v1478, 7
        %v1480 = vsub.s32 %v1477, %v1479
        %v1481 = vrot.slane %v1467, %v1480
        %v1482 = vcombine.low %v1458, %v1474
        %v1483 = vcombine.high %v1458, %v1474
        %v1484 = vcombine.low %v1465, %v1481
        %v1485 = vcombine.high %v1465, %v1481
        %v1486 = vcombine.low %v1390, %v1397
        %v1488 = vunpack.c.l.s4 1983009808
        %v1489 = vunpack.c.0.s8 %v1488
        %v1490 = vlaneseq
        %v1491 = vshrl.u32 %v1490, 7
        %v1492 = vsub.s32 %v1489, %v1491
        %v1493 = vrot.slane %v1486, %v1492
        %v1494 = vcombine.low %v1414, %v1415
        %v1496 = vunpack.c.l.s4 1983009808
        %v1497 = vunpack.c.0.s8 %v1496
        %v1498 = vlaneseq
        %v1499 = vshrl.u32 %v1498, 7
        %v1500 = vsub.s32 %v1497, %v1499
        %v1501 = vrot.slane %v1494, %v1500
        %v1502 = vcombine.low %v1406, %v1413
        %v1504 = vunpack.c.l.s4 1983009808
        %v1505 = vunpack.c.0.s8 %v1504
        %v1506 = vlaneseq
        %v1507 = vshrl.u32 %v1506, 7
        %v1508 = vsub.s32 %v1505, %v1507
        %v1509 = vrot.slane %v1502, %v1508
        %v1510 = vcombine.low %v1416, %v1417
        %v1512 = vunpack.c.l.s4 1983009808
        %v1513 = vunpack.c.0.s8 %v1512
        %v1514 = vlaneseq
        %v1515 = vshrl.u32 %v1514, 7
        %v1516 = vsub.s32 %v1513, %v1515
        %v1517 = vrot.slane %v1510, %v1516
        %v1518 = vcombine.low %v1493, %v1501
        %v1519 = vcombine.high %v1493, %v1501
        %v1521 = vunpack.c.l.s4 1934713408
        %v1522 = vunpack.c.0.s8 %v1521
        %v1523 = vlaneseq
        %v1524 = vshrl.u32 %v1523, 7
        %v1525 = vsub.s32 %v1522, %v1524
        %v1526 = vrot.slane %v1518, %v1525
        %v1528 = vunpack.c.l.s4 1934713408
        %v1529 = vunpack.c.0.s8 %v1528
        %v1530 = vlaneseq
        %v1531 = vshrl.u32 %v1530, 7
        %v1532 = vsub.s32 %v1529, %v1531
        %v1533 = vrot.slane %v1519, %v1532
        %v1534 = vcombine.low %v1509, %v1517
        %v1535 = vcombine.high %v1509, %v1517
        %v1537 = vunpack.c.l.s4 1934713408
        %v1538 = vunpack.c.0.s8 %v1537
        %v1539 = vlaneseq
        %v1540 = vshrl.u32 %v1539, 7
        %v1541 = vsub.s32 %v1538, %v1540
        %v1542 = vrot.slane %v1534, %v1541
        %v1544 = vunpack.c.l.s4 1934713408
        %v1545 = vunpack.c.0.s8 %v1544
        %v1546 = vlaneseq
        %v1547 = vshrl.u32 %v1546, 7
        %v1548 = vsub.s32 %v1545, %v1547
        %v1549 = vrot.slane %v1535, %v1548
        %v1550 = vcombine.low %v1526, %v1542
        %v1551 = vcombine.high %v1526, %v1542
        %v1552 = vcombine.low %v1533, %v1549
        %v1553 = vcombine.high %v1533, %v1549
        %v1554 = vld [vmem:[%s5] sm:$0xff]
        %v1555 = vld [vmem:[%s5 + $0x8] sm:$0xff]
        %v1556 = vld [vmem:[%s5 + $0x10] sm:$0xff]
        %v1557 = vld [vmem:[%s5 + $0x18] sm:$0xff]
        %v1558 = vld [vmem:[%s6] sm:$0x1]
        %v1559 = vmul.f32 %v902, 0.35355338
        %v1560 = vmul.f32 %v903, 0.35355338
        %v1561 = vmul.f32 %v904, 0.35355338
        %v1562 = vmul.f32 %v905, 0.35355338
        %vm1563 = vcmask 64512
        %v1565 = vsel %vm1563, %v1559, 0
        %v1568 = vsel %vm1563, %v1192, 0
        %1570 = vmatprep.subr.mxu0 0.0
        %1571 = vmatpush1.xpose.msra.mxu0 0.0
        %1572 = vmatprep.subr.mxu0 0.0
        %1573 = vmatpush1.xpose.msra.mxu0 0.0
        %1574 = vmatprep.subr.mxu0 0.0
        %1575 = vmatpush1.xpose.msra.mxu0 0.0
        %1576 = vmatprep.subr.mxu0 0.0
        %1577 = vmatpush1.xpose.msra.mxu0 0.0
        %1578 = vmatprep.subr.mxu0 0.0
        %1579 = vmatpush1.xpose.msra.mxu0 0.0
        %1580 = vmatprep.subr.mxu0 0.0
        %1581 = vmatpush1.xpose.msra.mxu0 0.0
        %1582 = vmatprep.subr.mxu0 0.0
        %1583 = vmatpush1.xpose.msra.mxu0 0.0
        %1584 = vmatprep.subr.mxu0 0.0
        %1585 = vmatpush1.xpose.msra.mxu0 0.0
        %1586 = vmatprep.subr.mxu0 0.0
        %1587 = vmatpush1.xpose.msra.mxu0 0.0
        %1588 = vmatprep.subr.mxu0 0.0
        %1589 = vmatpush1.xpose.msra.mxu0 0.0
        %1590 = vmatprep.subr.mxu0 0.0
        %1591 = vmatpush1.xpose.msra.mxu0 0.0
        %1592 = vmatprep.subr.mxu0 0.0
        %1593 = vmatpush1.xpose.msra.mxu0 0.0
        %1594 = vmatprep.subr.mxu0 0.0
        %1595 = vmatpush1.xpose.msra.mxu0 0.0
        %1596 = vmatprep.subr.mxu0 0.0
        %1597 = vmatpush1.xpose.msra.mxu0 0.0
        %1598 = vmatprep.subr.mxu0 0.0
        %1599 = vmatpush1.xpose.msra.mxu0 0.0
        %1600 = vmatprep.subr.mxu0 0.0
        %1601 = vmatpush1.xpose.msra.mxu0 %v1568
        %1602 = vmatprep.subr.mxu0 0.0
        %1603 = vmatpush2.xpose.msra.mxu0 0.0
        %1604 = vmatprep.subr.mxu0 0.0
        %1605 = vmatpush2.xpose.msra.mxu0 0.0
        %1606 = vmatprep.subr.mxu0 0.0
        %1607 = vmatpush2.xpose.msra.mxu0 0.0
        %1608 = vmatprep.subr.mxu0 0.0
        %1609 = vmatpush2.xpose.msra.mxu0 0.0
        %1610 = vmatprep.subr.mxu0 0.0
        %1611 = vmatpush2.xpose.msra.mxu0 0.0
        %1612 = vmatprep.subr.mxu0 0.0
        %1613 = vmatpush2.xpose.msra.mxu0 0.0
        %1614 = vmatprep.subr.mxu0 0.0
        %1615 = vmatpush2.xpose.msra.mxu0 0.0
        %1616 = vmatprep.subr.mxu0 0.0
        %1617 = vmatpush2.xpose.msra.mxu0 0.0
        %1618 = vmatprep.subr.mxu0 0.0
        %1619 = vmatpush2.xpose.msra.mxu0 0.0
        %1620 = vmatprep.subr.mxu0 0.0
        %1621 = vmatpush2.xpose.msra.mxu0 0.0
        %1622 = vmatprep.subr.mxu0 0.0
        %1623 = vmatpush2.xpose.msra.mxu0 0.0
        %1624 = vmatprep.subr.mxu0 0.0
        %1625 = vmatpush2.xpose.msra.mxu0 0.0
        %1626 = vmatprep.subr.mxu0 0.0
        %1627 = vmatpush2.xpose.msra.mxu0 0.0
        %1628 = vmatprep.subr.mxu0 0.0
        %1629 = vmatpush2.xpose.msra.mxu0 0.0
        %1630 = vmatprep.subr.mxu0 0.0
        %1631 = vmatpush2.xpose.msra.mxu0 0.0
        %1632 = vmatprep.subr.mxu0 0.0
        %1633 = vmatpush2.xpose.msra.mxu0 0.0
        %1634 = vmatprep.mubr.f32.mxu0 0.0
        %1635 = vmatmul.mubr.f32.gmra.mxu0 %v1565
        %v1636 = vpop.f32.mrf.mxu0
        %v1637 = vadd.f32 0.0, %v1636
        %v1638 = vpop.f32.mrf.mxu0
        %1639 = vdwg.mxu0
        %v1641 = vsel %vm1563, %v1560, 0
        %v1644 = vsel %vm1563, %v1193, 0
        %1646 = vmatprep.subr.mxu0 0.0
        %1647 = vmatpush1.xpose.msra.mxu0 0.0
        %1648 = vmatprep.subr.mxu0 0.0
        %1649 = vmatpush1.xpose.msra.mxu0 0.0
        %1650 = vmatprep.subr.mxu0 0.0
        %1651 = vmatpush1.xpose.msra.mxu0 0.0
        %1652 = vmatprep.subr.mxu0 0.0
        %1653 = vmatpush1.xpose.msra.mxu0 0.0
        %1654 = vmatprep.subr.mxu0 0.0
        %1655 = vmatpush1.xpose.msra.mxu0 0.0
        %1656 = vmatprep.subr.mxu0 0.0
        %1657 = vmatpush1.xpose.msra.mxu0 0.0
        %1658 = vmatprep.subr.mxu0 0.0
        %1659 = vmatpush1.xpose.msra.mxu0 0.0
        %1660 = vmatprep.subr.mxu0 0.0
        %1661 = vmatpush1.xpose.msra.mxu0 0.0
        %1662 = vmatprep.subr.mxu0 0.0
        %1663 = vmatpush1.xpose.msra.mxu0 0.0
        %1664 = vmatprep.subr.mxu0 0.0
        %1665 = vmatpush1.xpose.msra.mxu0 0.0
        %1666 = vmatprep.subr.mxu0 0.0
        %1667 = vmatpush1.xpose.msra.mxu0 0.0
        %1668 = vmatprep.subr.mxu0 0.0
        %1669 = vmatpush1.xpose.msra.mxu0 0.0
        %1670 = vmatprep.subr.mxu0 0.0
        %1671 = vmatpush1.xpose.msra.mxu0 0.0
        %1672 = vmatprep.subr.mxu0 0.0
        %1673 = vmatpush1.xpose.msra.mxu0 0.0
        %1674 = vmatprep.subr.mxu0 0.0
        %1675 = vmatpush1.xpose.msra.mxu0 0.0
        %1676 = vmatprep.subr.mxu0 0.0
        %1677 = vmatpush1.xpose.msra.mxu0 %v1644
        %1678 = vmatprep.subr.mxu0 0.0
        %1679 = vmatpush2.xpose.msra.mxu0 0.0
        %1680 = vmatprep.subr.mxu0 0.0
        %1681 = vmatpush2.xpose.msra.mxu0 0.0
        %1682 = vmatprep.subr.mxu0 0.0
        %1683 = vmatpush2.xpose.msra.mxu0 0.0
        %1684 = vmatprep.subr.mxu0 0.0
        %1685 = vmatpush2.xpose.msra.mxu0 0.0
        %1686 = vmatprep.subr.mxu0 0.0
        %1687 = vmatpush2.xpose.msra.mxu0 0.0
        %1688 = vmatprep.subr.mxu0 0.0
        %1689 = vmatpush2.xpose.msra.mxu0 0.0
        %1690 = vmatprep.subr.mxu0 0.0
        %1691 = vmatpush2.xpose.msra.mxu0 0.0
        %1692 = vmatprep.subr.mxu0 0.0
        %1693 = vmatpush2.xpose.msra.mxu0 0.0
        %1694 = vmatprep.subr.mxu0 0.0
        %1695 = vmatpush2.xpose.msra.mxu0 0.0
        %1696 = vmatprep.subr.mxu0 0.0
        %1697 = vmatpush2.xpose.msra.mxu0 0.0
        %1698 = vmatprep.subr.mxu0 0.0
        %1699 = vmatpush2.xpose.msra.mxu0 0.0
        %1700 = vmatprep.subr.mxu0 0.0
        %1701 = vmatpush2.xpose.msra.mxu0 0.0
        %1702 = vmatprep.subr.mxu0 0.0
        %1703 = vmatpush2.xpose.msra.mxu0 0.0
        %1704 = vmatprep.subr.mxu0 0.0
        %1705 = vmatpush2.xpose.msra.mxu0 0.0
        %1706 = vmatprep.subr.mxu0 0.0
        %1707 = vmatpush2.xpose.msra.mxu0 0.0
        %1708 = vmatprep.subr.mxu0 0.0
        %1709 = vmatpush2.xpose.msra.mxu0 0.0
        %1710 = vmatprep.mubr.f32.mxu0 0.0
        %1711 = vmatmul.mubr.f32.gmra.mxu0 %v1641
        %v1712 = vpop.f32.mrf.mxu0
        %v1713 = vadd.f32 0.0, %v1712
        %v1714 = vpop.f32.mrf.mxu0
        %1715 = vdwg.mxu0
        %v1717 = vsel %vm1563, %v1561, 0
        %v1720 = vsel %vm1563, %v1194, 0
        %1722 = vmatprep.subr.mxu0 0.0
        %1723 = vmatpush1.xpose.msra.mxu0 0.0
        %1724 = vmatprep.subr.mxu0 0.0
        %1725 = vmatpush1.xpose.msra.mxu0 0.0
        %1726 = vmatprep.subr.mxu0 0.0
        %1727 = vmatpush1.xpose.msra.mxu0 0.0
        %1728 = vmatprep.subr.mxu0 0.0
        %1729 = vmatpush1.xpose.msra.mxu0 0.0
        %1730 = vmatprep.subr.mxu0 0.0
        %1731 = vmatpush1.xpose.msra.mxu0 0.0
        %1732 = vmatprep.subr.mxu0 0.0
        %1733 = vmatpush1.xpose.msra.mxu0 0.0
        %1734 = vmatprep.subr.mxu0 0.0
        %1735 = vmatpush1.xpose.msra.mxu0 0.0
        %1736 = vmatprep.subr.mxu0 0.0
        %1737 = vmatpush1.xpose.msra.mxu0 0.0
        %1738 = vmatprep.subr.mxu0 0.0
        %1739 = vmatpush1.xpose.msra.mxu0 0.0
        %1740 = vmatprep.subr.mxu0 0.0
        %1741 = vmatpush1.xpose.msra.mxu0 0.0
        %1742 = vmatprep.subr.mxu0 0.0
        %1743 = vmatpush1.xpose.msra.mxu0 0.0
        %1744 = vmatprep.subr.mxu0 0.0
        %1745 = vmatpush1.xpose.msra.mxu0 0.0
        %1746 = vmatprep.subr.mxu0 0.0
        %1747 = vmatpush1.xpose.msra.mxu0 0.0
        %1748 = vmatprep.subr.mxu0 0.0
        %1749 = vmatpush1.xpose.msra.mxu0 0.0
        %1750 = vmatprep.subr.mxu0 0.0
        %1751 = vmatpush1.xpose.msra.mxu0 0.0
        %1752 = vmatprep.subr.mxu0 0.0
        %1753 = vmatpush1.xpose.msra.mxu0 %v1720
        %1754 = vmatprep.subr.mxu0 0.0
        %1755 = vmatpush2.xpose.msra.mxu0 0.0
        %1756 = vmatprep.subr.mxu0 0.0
        %1757 = vmatpush2.xpose.msra.mxu0 0.0
        %1758 = vmatprep.subr.mxu0 0.0
        %1759 = vmatpush2.xpose.msra.mxu0 0.0
        %1760 = vmatprep.subr.mxu0 0.0
        %1761 = vmatpush2.xpose.msra.mxu0 0.0
        %1762 = vmatprep.subr.mxu0 0.0
        %1763 = vmatpush2.xpose.msra.mxu0 0.0
        %1764 = vmatprep.subr.mxu0 0.0
        %1765 = vmatpush2.xpose.msra.mxu0 0.0
        %1766 = vmatprep.subr.mxu0 0.0
        %1767 = vmatpush2.xpose.msra.mxu0 0.0
        %1768 = vmatprep.subr.mxu0 0.0
        %1769 = vmatpush2.xpose.msra.mxu0 0.0
        %1770 = vmatprep.subr.mxu0 0.0
        %1771 = vmatpush2.xpose.msra.mxu0 0.0
        %1772 = vmatprep.subr.mxu0 0.0
        %1773 = vmatpush2.xpose.msra.mxu0 0.0
        %1774 = vmatprep.subr.mxu0 0.0
        %1775 = vmatpush2.xpose.msra.mxu0 0.0
        %1776 = vmatprep.subr.mxu0 0.0
        %1777 = vmatpush2.xpose.msra.mxu0 0.0
        %1778 = vmatprep.subr.mxu0 0.0
        %1779 = vmatpush2.xpose.msra.mxu0 0.0
        %1780 = vmatprep.subr.mxu0 0.0
        %1781 = vmatpush2.xpose.msra.mxu0 0.0
        %1782 = vmatprep.subr.mxu0 0.0
        %1783 = vmatpush2.xpose.msra.mxu0 0.0
        %1784 = vmatprep.subr.mxu0 0.0
        %1785 = vmatpush2.xpose.msra.mxu0 0.0
        %1786 = vmatprep.mubr.f32.mxu0 0.0
        %1787 = vmatmul.mubr.f32.gmra.mxu0 %v1717
        %v1788 = vpop.f32.mrf.mxu0
        %v1789 = vadd.f32 0.0, %v1788
        %v1790 = vpop.f32.mrf.mxu0
        %1791 = vdwg.mxu0
        %v1793 = vsel %vm1563, %v1562, 0
        %v1796 = vsel %vm1563, %v1195, 0
        %1798 = vmatprep.subr.mxu0 0.0
        %1799 = vmatpush1.xpose.msra.mxu0 0.0
        %1800 = vmatprep.subr.mxu0 0.0
        %1801 = vmatpush1.xpose.msra.mxu0 0.0
        %1802 = vmatprep.subr.mxu0 0.0
        %1803 = vmatpush1.xpose.msra.mxu0 0.0
        %1804 = vmatprep.subr.mxu0 0.0
        %1805 = vmatpush1.xpose.msra.mxu0 0.0
        %1806 = vmatprep.subr.mxu0 0.0
        %1807 = vmatpush1.xpose.msra.mxu0 0.0
        %1808 = vmatprep.subr.mxu0 0.0
        %1809 = vmatpush1.xpose.msra.mxu0 0.0
        %1810 = vmatprep.subr.mxu0 0.0
        %1811 = vmatpush1.xpose.msra.mxu0 0.0
        %1812 = vmatprep.subr.mxu0 0.0
        %1813 = vmatpush1.xpose.msra.mxu0 0.0
        %1814 = vmatprep.subr.mxu0 0.0
        %1815 = vmatpush1.xpose.msra.mxu0 0.0
        %1816 = vmatprep.subr.mxu0 0.0
        %1817 = vmatpush1.xpose.msra.mxu0 0.0
        %1818 = vmatprep.subr.mxu0 0.0
        %1819 = vmatpush1.xpose.msra.mxu0 0.0
        %1820 = vmatprep.subr.mxu0 0.0
        %1821 = vmatpush1.xpose.msra.mxu0 0.0
        %1822 = vmatprep.subr.mxu0 0.0
        %1823 = vmatpush1.xpose.msra.mxu0 0.0
        %1824 = vmatprep.subr.mxu0 0.0
        %1825 = vmatpush1.xpose.msra.mxu0 0.0
        %1826 = vmatprep.subr.mxu0 0.0
        %1827 = vmatpush1.xpose.msra.mxu0 0.0
        %1828 = vmatprep.subr.mxu0 0.0
        %1829 = vmatpush1.xpose.msra.mxu0 %v1796
        %1830 = vmatprep.subr.mxu0 0.0
        %1831 = vmatpush2.xpose.msra.mxu0 0.0
        %1832 = vmatprep.subr.mxu0 0.0
        %1833 = vmatpush2.xpose.msra.mxu0 0.0
        %1834 = vmatprep.subr.mxu0 0.0
        %1835 = vmatpush2.xpose.msra.mxu0 0.0
        %1836 = vmatprep.subr.mxu0 0.0
        %1837 = vmatpush2.xpose.msra.mxu0 0.0
        %1838 = vmatprep.subr.mxu0 0.0
        %1839 = vmatpush2.xpose.msra.mxu0 0.0
        %1840 = vmatprep.subr.mxu0 0.0
        %1841 = vmatpush2.xpose.msra.mxu0 0.0
        %1842 = vmatprep.subr.mxu0 0.0
        %1843 = vmatpush2.xpose.msra.mxu0 0.0
        %1844 = vmatprep.subr.mxu0 0.0
        %1845 = vmatpush2.xpose.msra.mxu0 0.0
        %1846 = vmatprep.subr.mxu0 0.0
        %1847 = vmatpush2.xpose.msra.mxu0 0.0
        %1848 = vmatprep.subr.mxu0 0.0
        %1849 = vmatpush2.xpose.msra.mxu0 0.0
        %1850 = vmatprep.subr.mxu0 0.0
        %1851 = vmatpush2.xpose.msra.mxu0 0.0
        %1852 = vmatprep.subr.mxu0 0.0
        %1853 = vmatpush2.xpose.msra.mxu0 0.0
        %1854 = vmatprep.subr.mxu0 0.0
        %1855 = vmatpush2.xpose.msra.mxu0 0.0
        %1856 = vmatprep.subr.mxu0 0.0
        %1857 = vmatpush2.xpose.msra.mxu0 0.0
        %1858 = vmatprep.subr.mxu0 0.0
        %1859 = vmatpush2.xpose.msra.mxu0 0.0
        %1860 = vmatprep.subr.mxu0 0.0
        %1861 = vmatpush2.xpose.msra.mxu0 0.0
        %1862 = vmatprep.mubr.f32.mxu0 0.0
        %1863 = vmatmul.mubr.f32.gmra.mxu0 %v1793
        %v1864 = vpop.f32.mrf.mxu0
        %v1865 = vadd.f32 0.0, %v1864
        %v1866 = vpop.f32.mrf.mxu0
        %1867 = vdwg.mxu0
        %v1868 = vlaneseq
        %v1869 = vshrl.u32 %v1868, 7
        %v1870 = vlaneseq
        %v1871 = vand.u32 %v1870, 127
        %vm1872 = vcmp.ge.s32.totalorder %v1869, %v1871
        %v1873 = vsel %vm1872, 1, 0
        %vm1874 = vcmp.eq.s32.totalorder %v1873, 1
        %v1875 = vsel %vm1874, %v1637, -1e+09
        %v1876 = vsel %vm1874, %v1713, -1e+09
        %v1877 = vsel %vm1874, %v1789, -1e+09
        %v1878 = vsel %vm1874, %v1865, -1e+09
        %v1879 = vsel %vm1563, %v1875, -inf
        %1880 = vmax.xlane.f32.xlu0 %v1879
        %v1881 = vpop.xlane.xlu0 %1880
        %v1882 = vsel %vm1563, %v1876, -inf
        %1883 = vmax.xlane.f32.xlu0 %v1882
        %v1884 = vpop.xlane.xlu0 %1883
        %v1885 = vsel %vm1563, %v1877, -inf
        %1886 = vmax.xlane.f32.xlu0 %v1885
        %v1887 = vpop.xlane.xlu0 %1886
        %v1888 = vsel %vm1563, %v1878, -inf
        %1889 = vmax.xlane.f32.xlu0 %v1888
        %v1890 = vpop.xlane.xlu0 %1889
        %v1891 = vsub.f32 -inf, %v1881
        %v1892 = vsub.f32 -inf, %v1884
        %v1893 = vsub.f32 -inf, %v1887
        %v1894 = vsub.f32 -inf, %v1890
        %v1895 = vmul.f32 %v1891, 1.442695
        %v1896 = vpow.pop %v1895
        %v1897 = vmul.f32 %v1892, 1.442695
        %v1898 = vpow.pop %v1897
        %v1899 = vmul.f32 %v1893, 1.442695
        %v1900 = vpow.pop %v1899
        %v1901 = vmul.f32 %v1894, 1.442695
        %v1902 = vpow.pop %v1901
        %v1903 = vsub.f32 %v1875, %v1881
        %v1904 = vsub.f32 %v1876, %v1884
        %v1905 = vsub.f32 %v1877, %v1887
        %v1906 = vsub.f32 %v1878, %v1890
        %v1907 = vmul.f32 %v1903, 1.442695
        %v1908 = vpow.pop %v1907
        %v1909 = vmul.f32 %v1904, 1.442695
        %v1910 = vpow.pop %v1909
        %v1911 = vmul.f32 %v1905, 1.442695
        %v1912 = vpow.pop %v1911
        %v1913 = vmul.f32 %v1906, 1.442695
        %v1914 = vpow.pop %v1913
        %v1915 = vmul.f32 %v1896, 0.0
        %v1916 = vmul.f32 %v1898, 0.0
        %v1917 = vmul.f32 %v1900, 0.0
        %v1918 = vmul.f32 %v1902, 0.0
        %v1919 = vsel %vm1563, %v1908, 0.0
        %1920 = vadd.xlane.f32.xlu0 %v1919
        %v1921 = vpop.xlane.xlu0 %1920
        %v1922 = vsel %vm1563, %v1910, 0.0
        %1923 = vadd.xlane.f32.xlu0 %v1922
        %v1924 = vpop.xlane.xlu0 %1923
        %v1925 = vsel %vm1563, %v1912, 0.0
        %1926 = vadd.xlane.f32.xlu0 %v1925
        %v1927 = vpop.xlane.xlu0 %1926
        %v1928 = vsel %vm1563, %v1914, 0.0
        %1929 = vadd.xlane.f32.xlu0 %v1928
        %v1930 = vpop.xlane.xlu0 %1929
        %v1931 = vadd.f32 %v1915, %v1921
        %v1932 = vadd.f32 %v1916, %v1924
        %v1933 = vadd.f32 %v1917, %v1927
        %v1934 = vadd.f32 %v1918, %v1930
        %v1936 = vsel %vm1563, %v1908, 0
        %1938 = vmatprep.subr.mxu0 0.0
        %1939 = vmatpush1.msra.mxu0 0.0
        %1940 = vmatprep.subr.mxu0 0.0
        %1941 = vmatpush1.msra.mxu0 0.0
        %1942 = vmatprep.subr.mxu0 0.0
        %1943 = vmatpush1.msra.mxu0 0.0
        %1944 = vmatprep.subr.mxu0 0.0
        %1945 = vmatpush1.msra.mxu0 0.0
        %1946 = vmatprep.subr.mxu0 0.0
        %1947 = vmatpush1.msra.mxu0 0.0
        %1948 = vmatprep.subr.mxu0 0.0
        %1949 = vmatpush1.msra.mxu0 0.0
        %1950 = vmatprep.subr.mxu0 0.0
        %1951 = vmatpush1.msra.mxu0 0.0
        %1952 = vmatprep.subr.mxu0 0.0
        %1953 = vmatpush1.msra.mxu0 0.0
        %1954 = vmatprep.subr.mxu0 0.0
        %1955 = vmatpush1.msra.mxu0 0.0
        %1956 = vmatprep.subr.mxu0 0.0
        %1957 = vmatpush1.msra.mxu0 0.0
        %1958 = vmatprep.subr.mxu0 0.0
        %1959 = vmatpush1.msra.mxu0 0.0
        %1960 = vmatprep.subr.mxu0 0.0
        %1961 = vmatpush1.msra.mxu0 0.0
        %1962 = vmatprep.subr.mxu0 0.0
        %1963 = vmatpush1.msra.mxu0 0.0
        %1964 = vmatprep.subr.mxu0 0.0
        %1965 = vmatpush1.msra.mxu0 0.0
        %1966 = vmatprep.subr.mxu0 0.0
        %1967 = vmatpush1.msra.mxu0 0.0
        %1968 = vmatprep.subr.mxu0 0.0
        %1969 = vmatpush1.msra.mxu0 %v1482
        %1970 = vmatprep.subr.mxu0 0.0
        %1971 = vmatpush2.msra.mxu0 0.0
        %1972 = vmatprep.subr.mxu0 0.0
        %1973 = vmatpush2.msra.mxu0 0.0
        %1974 = vmatprep.subr.mxu0 0.0
        %1975 = vmatpush2.msra.mxu0 0.0
        %1976 = vmatprep.subr.mxu0 0.0
        %1977 = vmatpush2.msra.mxu0 0.0
        %1978 = vmatprep.subr.mxu0 0.0
        %1979 = vmatpush2.msra.mxu0 0.0
        %1980 = vmatprep.subr.mxu0 0.0
        %1981 = vmatpush2.msra.mxu0 0.0
        %1982 = vmatprep.subr.mxu0 0.0
        %1983 = vmatpush2.msra.mxu0 0.0
        %1984 = vmatprep.subr.mxu0 0.0
        %1985 = vmatpush2.msra.mxu0 0.0
        %1986 = vmatprep.subr.mxu0 0.0
        %1987 = vmatpush2.msra.mxu0 0.0
        %1988 = vmatprep.subr.mxu0 0.0
        %1989 = vmatpush2.msra.mxu0 0.0
        %1990 = vmatprep.subr.mxu0 0.0
        %1991 = vmatpush2.msra.mxu0 0.0
        %1992 = vmatprep.subr.mxu0 0.0
        %1993 = vmatpush2.msra.mxu0 0.0
        %1994 = vmatprep.subr.mxu0 0.0
        %1995 = vmatpush2.msra.mxu0 0.0
        %1996 = vmatprep.subr.mxu0 0.0
        %1997 = vmatpush2.msra.mxu0 0.0
        %1998 = vmatprep.subr.mxu0 0.0
        %1999 = vmatpush2.msra.mxu0 0.0
        %2000 = vmatprep.subr.mxu0 0.0
        %2001 = vmatpush2.msra.mxu0 0.0
        %2002 = vmatprep.mubr.f32.mxu0 0.0
        %2003 = vmatmul.mubr.f32.gmra.mxu0 %v1936
        %v2004 = vpop.f32.mrf.mxu0
        %v2005 = vadd.f32 0.0, %v2004
        %v2006 = vpop.f32.mrf.mxu0
        %2007 = vdwg.mxu0
        %v2009 = vsel %vm1563, %v1910, 0
        %2011 = vmatprep.subr.mxu0 0.0
        %2012 = vmatpush1.msra.mxu0 0.0
        %2013 = vmatprep.subr.mxu0 0.0
        %2014 = vmatpush1.msra.mxu0 0.0
        %2015 = vmatprep.subr.mxu0 0.0
        %2016 = vmatpush1.msra.mxu0 0.0
        %2017 = vmatprep.subr.mxu0 0.0
        %2018 = vmatpush1.msra.mxu0 0.0
        %2019 = vmatprep.subr.mxu0 0.0
        %2020 = vmatpush1.msra.mxu0 0.0
        %2021 = vmatprep.subr.mxu0 0.0
        %2022 = vmatpush1.msra.mxu0 0.0
        %2023 = vmatprep.subr.mxu0 0.0
        %2024 = vmatpush1.msra.mxu0 0.0
        %2025 = vmatprep.subr.mxu0 0.0
        %2026 = vmatpush1.msra.mxu0 0.0
        %2027 = vmatprep.subr.mxu0 0.0
        %2028 = vmatpush1.msra.mxu0 0.0
        %2029 = vmatprep.subr.mxu0 0.0
        %2030 = vmatpush1.msra.mxu0 0.0
        %2031 = vmatprep.subr.mxu0 0.0
        %2032 = vmatpush1.msra.mxu0 0.0
        %2033 = vmatprep.subr.mxu0 0.0
        %2034 = vmatpush1.msra.mxu0 0.0
        %2035 = vmatprep.subr.mxu0 0.0
        %2036 = vmatpush1.msra.mxu0 0.0
        %2037 = vmatprep.subr.mxu0 0.0
        %2038 = vmatpush1.msra.mxu0 0.0
        %2039 = vmatprep.subr.mxu0 0.0
        %2040 = vmatpush1.msra.mxu0 0.0
        %2041 = vmatprep.subr.mxu0 0.0
        %2042 = vmatpush1.msra.mxu0 %v1483
        %2043 = vmatprep.subr.mxu0 0.0
        %2044 = vmatpush2.msra.mxu0 0.0
        %2045 = vmatprep.subr.mxu0 0.0
        %2046 = vmatpush2.msra.mxu0 0.0
        %2047 = vmatprep.subr.mxu0 0.0
        %2048 = vmatpush2.msra.mxu0 0.0
        %2049 = vmatprep.subr.mxu0 0.0
        %2050 = vmatpush2.msra.mxu0 0.0
        %2051 = vmatprep.subr.mxu0 0.0
        %2052 = vmatpush2.msra.mxu0 0.0
        %2053 = vmatprep.subr.mxu0 0.0
        %2054 = vmatpush2.msra.mxu0 0.0
        %2055 = vmatprep.subr.mxu0 0.0
        %2056 = vmatpush2.msra.mxu0 0.0
        %2057 = vmatprep.subr.mxu0 0.0
        %2058 = vmatpush2.msra.mxu0 0.0
        %2059 = vmatprep.subr.mxu0 0.0
        %2060 = vmatpush2.msra.mxu0 0.0
        %2061 = vmatprep.subr.mxu0 0.0
        %2062 = vmatpush2.msra.mxu0 0.0
        %2063 = vmatprep.subr.mxu0 0.0
        %2064 = vmatpush2.msra.mxu0 0.0
        %2065 = vmatprep.subr.mxu0 0.0
        %2066 = vmatpush2.msra.mxu0 0.0
        %2067 = vmatprep.subr.mxu0 0.0
        %2068 = vmatpush2.msra.mxu0 0.0
        %2069 = vmatprep.subr.mxu0 0.0
        %2070 = vmatpush2.msra.mxu0 0.0
        %2071 = vmatprep.subr.mxu0 0.0
        %2072 = vmatpush2.msra.mxu0 0.0
        %2073 = vmatprep.subr.mxu0 0.0
        %2074 = vmatpush2.msra.mxu0 0.0
        %2075 = vmatprep.mubr.f32.mxu0 0.0
        %2076 = vmatmul.mubr.f32.gmra.mxu0 %v2009
        %v2077 = vpop.f32.mrf.mxu0
        %v2078 = vadd.f32 0.0, %v2077
        %v2079 = vpop.f32.mrf.mxu0
        %2080 = vdwg.mxu0
        %v2082 = vsel %vm1563, %v1912, 0
        %2084 = vmatprep.subr.mxu0 0.0
        %2085 = vmatpush1.msra.mxu0 0.0
        %2086 = vmatprep.subr.mxu0 0.0
        %2087 = vmatpush1.msra.mxu0 0.0
        %2088 = vmatprep.subr.mxu0 0.0
        %2089 = vmatpush1.msra.mxu0 0.0
        %2090 = vmatprep.subr.mxu0 0.0
        %2091 = vmatpush1.msra.mxu0 0.0
        %2092 = vmatprep.subr.mxu0 0.0
        %2093 = vmatpush1.msra.mxu0 0.0
        %2094 = vmatprep.subr.mxu0 0.0
        %2095 = vmatpush1.msra.mxu0 0.0
        %2096 = vmatprep.subr.mxu0 0.0
        %2097 = vmatpush1.msra.mxu0 0.0
        %2098 = vmatprep.subr.mxu0 0.0
        %2099 = vmatpush1.msra.mxu0 0.0
        %2100 = vmatprep.subr.mxu0 0.0
        %2101 = vmatpush1.msra.mxu0 0.0
        %2102 = vmatprep.subr.mxu0 0.0
        %2103 = vmatpush1.msra.mxu0 0.0
        %2104 = vmatprep.subr.mxu0 0.0
        %2105 = vmatpush1.msra.mxu0 0.0
        %2106 = vmatprep.subr.mxu0 0.0
        %2107 = vmatpush1.msra.mxu0 0.0
        %2108 = vmatprep.subr.mxu0 0.0
        %2109 = vmatpush1.msra.mxu0 0.0
        %2110 = vmatprep.subr.mxu0 0.0
        %2111 = vmatpush1.msra.mxu0 0.0
        %2112 = vmatprep.subr.mxu0 0.0
        %2113 = vmatpush1.msra.mxu0 0.0
        %2114 = vmatprep.subr.mxu0 0.0
        %2115 = vmatpush1.msra.mxu0 %v1484
        %2116 = vmatprep.subr.mxu0 0.0
        %2117 = vmatpush2.msra.mxu0 0.0
        %2118 = vmatprep.subr.mxu0 0.0
        %2119 = vmatpush2.msra.mxu0 0.0
        %2120 = vmatprep.subr.mxu0 0.0
        %2121 = vmatpush2.msra.mxu0 0.0
        %2122 = vmatprep.subr.mxu0 0.0
        %2123 = vmatpush2.msra.mxu0 0.0
        %2124 = vmatprep.subr.mxu0 0.0
        %2125 = vmatpush2.msra.mxu0 0.0
        %2126 = vmatprep.subr.mxu0 0.0
        %2127 = vmatpush2.msra.mxu0 0.0
        %2128 = vmatprep.subr.mxu0 0.0
        %2129 = vmatpush2.msra.mxu0 0.0
        %2130 = vmatprep.subr.mxu0 0.0
        %2131 = vmatpush2.msra.mxu0 0.0
        %2132 = vmatprep.subr.mxu0 0.0
        %2133 = vmatpush2.msra.mxu0 0.0
        %2134 = vmatprep.subr.mxu0 0.0
        %2135 = vmatpush2.msra.mxu0 0.0
        %2136 = vmatprep.subr.mxu0 0.0
        %2137 = vmatpush2.msra.mxu0 0.0
        %2138 = vmatprep.subr.mxu0 0.0
        %2139 = vmatpush2.msra.mxu0 0.0
        %2140 = vmatprep.subr.mxu0 0.0
        %2141 = vmatpush2.msra.mxu0 0.0
        %2142 = vmatprep.subr.mxu0 0.0
        %2143 = vmatpush2.msra.mxu0 0.0
        %2144 = vmatprep.subr.mxu0 0.0
        %2145 = vmatpush2.msra.mxu0 0.0
        %2146 = vmatprep.subr.mxu0 0.0
        %2147 = vmatpush2.msra.mxu0 0.0
        %2148 = vmatprep.mubr.f32.mxu0 0.0
        %2149 = vmatmul.mubr.f32.gmra.mxu0 %v2082
        %v2150 = vpop.f32.mrf.mxu0
        %v2151 = vadd.f32 0.0, %v2150
        %v2152 = vpop.f32.mrf.mxu0
        %2153 = vdwg.mxu0
        %v2155 = vsel %vm1563, %v1914, 0
        %2157 = vmatprep.subr.mxu0 0.0
        %2158 = vmatpush1.msra.mxu0 0.0
        %2159 = vmatprep.subr.mxu0 0.0
        %2160 = vmatpush1.msra.mxu0 0.0
        %2161 = vmatprep.subr.mxu0 0.0
        %2162 = vmatpush1.msra.mxu0 0.0
        %2163 = vmatprep.subr.mxu0 0.0
        %2164 = vmatpush1.msra.mxu0 0.0
        %2165 = vmatprep.subr.mxu0 0.0
        %2166 = vmatpush1.msra.mxu0 0.0
        %2167 = vmatprep.subr.mxu0 0.0
        %2168 = vmatpush1.msra.mxu0 0.0
        %2169 = vmatprep.subr.mxu0 0.0
        %2170 = vmatpush1.msra.mxu0 0.0
        %2171 = vmatprep.subr.mxu0 0.0
        %2172 = vmatpush1.msra.mxu0 0.0
        %2173 = vmatprep.subr.mxu0 0.0
        %2174 = vmatpush1.msra.mxu0 0.0
        %2175 = vmatprep.subr.mxu0 0.0
        %2176 = vmatpush1.msra.mxu0 0.0
        %2177 = vmatprep.subr.mxu0 0.0
        %2178 = vmatpush1.msra.mxu0 0.0
        %2179 = vmatprep.subr.mxu0 0.0
        %2180 = vmatpush1.msra.mxu0 0.0
        %2181 = vmatprep.subr.mxu0 0.0
        %2182 = vmatpush1.msra.mxu0 0.0
        %2183 = vmatprep.subr.mxu0 0.0
        %2184 = vmatpush1.msra.mxu0 0.0
        %2185 = vmatprep.subr.mxu0 0.0
        %2186 = vmatpush1.msra.mxu0 0.0
        %2187 = vmatprep.subr.mxu0 0.0
        %2188 = vmatpush1.msra.mxu0 %v1485
        %2189 = vmatprep.subr.mxu0 0.0
        %2190 = vmatpush2.msra.mxu0 0.0
        %2191 = vmatprep.subr.mxu0 0.0
        %2192 = vmatpush2.msra.mxu0 0.0
        %2193 = vmatprep.subr.mxu0 0.0
        %2194 = vmatpush2.msra.mxu0 0.0
        %2195 = vmatprep.subr.mxu0 0.0
        %2196 = vmatpush2.msra.mxu0 0.0
        %2197 = vmatprep.subr.mxu0 0.0
        %2198 = vmatpush2.msra.mxu0 0.0
        %2199 = vmatprep.subr.mxu0 0.0
        %2200 = vmatpush2.msra.mxu0 0.0
        %2201 = vmatprep.subr.mxu0 0.0
        %2202 = vmatpush2.msra.mxu0 0.0
        %2203 = vmatprep.subr.mxu0 0.0
        %2204 = vmatpush2.msra.mxu0 0.0
        %2205 = vmatprep.subr.mxu0 0.0
        %2206 = vmatpush2.msra.mxu0 0.0
        %2207 = vmatprep.subr.mxu0 0.0
        %2208 = vmatpush2.msra.mxu0 0.0
        %2209 = vmatprep.subr.mxu0 0.0
        %2210 = vmatpush2.msra.mxu0 0.0
        %2211 = vmatprep.subr.mxu0 0.0
        %2212 = vmatpush2.msra.mxu0 0.0
        %2213 = vmatprep.subr.mxu0 0.0
        %2214 = vmatpush2.msra.mxu0 0.0
        %2215 = vmatprep.subr.mxu0 0.0
        %2216 = vmatpush2.msra.mxu0 0.0
        %2217 = vmatprep.subr.mxu0 0.0
        %2218 = vmatpush2.msra.mxu0 0.0
        %2219 = vmatprep.subr.mxu0 0.0
        %2220 = vmatpush2.msra.mxu0 0.0
        %2221 = vmatprep.mubr.f32.mxu0 0.0
        %2222 = vmatmul.mubr.f32.gmra.mxu0 %v2155
        %v2223 = vpop.f32.mrf.mxu0
        %v2224 = vadd.f32 0.0, %v2223
        %v2225 = vpop.f32.mrf.mxu0
        %2226 = vdwg.mxu0
        %v2227 = vadd.f32 %v1915, %v2005
        %v2228 = vadd.f32 %v1916, %v2078
        %v2229 = vadd.f32 %v1917, %v2151
        %v2230 = vadd.f32 %v1918, %v2224
        %v2231 = vrcp.pop %v1931
        %v2232 = vmul.f32 %v2227, %v2231
        %v2233 = vrcp.pop %v1932
        %v2234 = vmul.f32 %v2228, %v2233
        %v2235 = vrcp.pop %v1933
        %v2236 = vmul.f32 %v2229, %v2235
        %v2237 = vrcp.pop %v1934
        %v2238 = vmul.f32 %v2230, %v2237
        %v2240 = vsel %vm1563, %v2232, 0
        %2242 = vmatprep.subr.mxu0 0.0
        %2243 = vmatpush1.msra.mxu0 0.0
        %2244 = vmatprep.subr.mxu0 0.0
        %2245 = vmatpush1.msra.mxu0 0.0
        %2246 = vmatprep.subr.mxu0 0.0
        %2247 = vmatpush1.msra.mxu0 0.0
        %2248 = vmatprep.subr.mxu0 0.0
        %2249 = vmatpush1.msra.mxu0 0.0
        %2250 = vmatprep.subr.mxu0 0.0
        %2251 = vmatpush1.msra.mxu0 0.0
        %2252 = vmatprep.subr.mxu0 0.0
        %2253 = vmatpush1.msra.mxu0 0.0
        %2254 = vmatprep.subr.mxu0 0.0
        %2255 = vmatpush1.msra.mxu0 0.0
        %2256 = vmatprep.subr.mxu0 0.0
        %2257 = vmatpush1.msra.mxu0 0.0
        %2258 = vmatprep.subr.mxu0 0.0
        %2259 = vmatpush1.msra.mxu0 0.0
        %2260 = vmatprep.subr.mxu0 0.0
        %2261 = vmatpush1.msra.mxu0 0.0
        %2262 = vmatprep.subr.mxu0 0.0
        %2263 = vmatpush1.msra.mxu0 0.0
        %2264 = vmatprep.subr.mxu0 0.0
        %2265 = vmatpush1.msra.mxu0 0.0
        %2266 = vmatprep.subr.mxu0 0.0
        %2267 = vmatpush1.msra.mxu0 0.0
        %2268 = vmatprep.subr.mxu0 0.0
        %2269 = vmatpush1.msra.mxu0 0.0
        %2270 = vmatprep.subr.mxu0 0.0
        %2271 = vmatpush1.msra.mxu0 0.0
        %2272 = vmatprep.subr.mxu0 0.0
        %2273 = vmatpush1.msra.mxu0 %v1554
        %2274 = vmatprep.subr.mxu0 0.0
        %2275 = vmatpush2.msra.mxu0 0.0
        %2276 = vmatprep.subr.mxu0 0.0
        %2277 = vmatpush2.msra.mxu0 0.0
        %2278 = vmatprep.subr.mxu0 0.0
        %2279 = vmatpush2.msra.mxu0 0.0
        %2280 = vmatprep.subr.mxu0 0.0
        %2281 = vmatpush2.msra.mxu0 0.0
        %2282 = vmatprep.subr.mxu0 0.0
        %2283 = vmatpush2.msra.mxu0 0.0
        %2284 = vmatprep.subr.mxu0 0.0
        %2285 = vmatpush2.msra.mxu0 0.0
        %2286 = vmatprep.subr.mxu0 0.0
        %2287 = vmatpush2.msra.mxu0 0.0
        %2288 = vmatprep.subr.mxu0 0.0
        %2289 = vmatpush2.msra.mxu0 0.0
        %2290 = vmatprep.subr.mxu0 0.0
        %2291 = vmatpush2.msra.mxu0 0.0
        %2292 = vmatprep.subr.mxu0 0.0
        %2293 = vmatpush2.msra.mxu0 0.0
        %2294 = vmatprep.subr.mxu0 0.0
        %2295 = vmatpush2.msra.mxu0 0.0
        %2296 = vmatprep.subr.mxu0 0.0
        %2297 = vmatpush2.msra.mxu0 0.0
        %2298 = vmatprep.subr.mxu0 0.0
        %2299 = vmatpush2.msra.mxu0 0.0
        %2300 = vmatprep.subr.mxu0 0.0
        %2301 = vmatpush2.msra.mxu0 0.0
        %2302 = vmatprep.subr.mxu0 0.0
        %2303 = vmatpush2.msra.mxu0 0.0
        %2304 = vmatprep.subr.mxu0 0.0
        %2305 = vmatpush2.msra.mxu0 0.0
        %2306 = vmatprep.mubr.f32.mxu0 0.0
        %2307 = vmatmul.mubr.f32.gmra.mxu0 %v2240
        %v2308 = vpop.f32.mrf.mxu0
        %v2309 = vadd.f32 0.0, %v2308
        %v2310 = vpop.f32.mrf.mxu0
        %2311 = vdwg.mxu0
        %v2313 = vsel %vm1563, %v2234, 0
        %2315 = vmatprep.subr.mxu0 0.0
        %2316 = vmatpush1.msra.mxu0 0.0
        %2317 = vmatprep.subr.mxu0 0.0
        %2318 = vmatpush1.msra.mxu0 0.0
        %2319 = vmatprep.subr.mxu0 0.0
        %2320 = vmatpush1.msra.mxu0 0.0
        %2321 = vmatprep.subr.mxu0 0.0
        %2322 = vmatpush1.msra.mxu0 0.0
        %2323 = vmatprep.subr.mxu0 0.0
        %2324 = vmatpush1.msra.mxu0 0.0
        %2325 = vmatprep.subr.mxu0 0.0
        %2326 = vmatpush1.msra.mxu0 0.0
        %2327 = vmatprep.subr.mxu0 0.0
        %2328 = vmatpush1.msra.mxu0 0.0
        %2329 = vmatprep.subr.mxu0 0.0
        %2330 = vmatpush1.msra.mxu0 0.0
        %2331 = vmatprep.subr.mxu0 0.0
        %2332 = vmatpush1.msra.mxu0 0.0
        %2333 = vmatprep.subr.mxu0 0.0
        %2334 = vmatpush1.msra.mxu0 0.0
        %2335 = vmatprep.subr.mxu0 0.0
        %2336 = vmatpush1.msra.mxu0 0.0
        %2337 = vmatprep.subr.mxu0 0.0
        %2338 = vmatpush1.msra.mxu0 0.0
        %2339 = vmatprep.subr.mxu0 0.0
        %2340 = vmatpush1.msra.mxu0 0.0
        %2341 = vmatprep.subr.mxu0 0.0
        %2342 = vmatpush1.msra.mxu0 0.0
        %2343 = vmatprep.subr.mxu0 0.0
        %2344 = vmatpush1.msra.mxu0 0.0
        %2345 = vmatprep.subr.mxu0 0.0
        %2346 = vmatpush1.msra.mxu0 %v1555
        %2347 = vmatprep.subr.mxu0 0.0
        %2348 = vmatpush2.msra.mxu0 0.0
        %2349 = vmatprep.subr.mxu0 0.0
        %2350 = vmatpush2.msra.mxu0 0.0
        %2351 = vmatprep.subr.mxu0 0.0
        %2352 = vmatpush2.msra.mxu0 0.0
        %2353 = vmatprep.subr.mxu0 0.0
        %2354 = vmatpush2.msra.mxu0 0.0
        %2355 = vmatprep.subr.mxu0 0.0
        %2356 = vmatpush2.msra.mxu0 0.0
        %2357 = vmatprep.subr.mxu0 0.0
        %2358 = vmatpush2.msra.mxu0 0.0
        %2359 = vmatprep.subr.mxu0 0.0
        %2360 = vmatpush2.msra.mxu0 0.0
        %2361 = vmatprep.subr.mxu0 0.0
        %2362 = vmatpush2.msra.mxu0 0.0
        %2363 = vmatprep.subr.mxu0 0.0
        %2364 = vmatpush2.msra.mxu0 0.0
        %2365 = vmatprep.subr.mxu0 0.0
        %2366 = vmatpush2.msra.mxu0 0.0
        %2367 = vmatprep.subr.mxu0 0.0
        %2368 = vmatpush2.msra.mxu0 0.0
        %2369 = vmatprep.subr.mxu0 0.0
        %2370 = vmatpush2.msra.mxu0 0.0
        %2371 = vmatprep.subr.mxu0 0.0
        %2372 = vmatpush2.msra.mxu0 0.0
        %2373 = vmatprep.subr.mxu0 0.0
        %2374 = vmatpush2.msra.mxu0 0.0
        %2375 = vmatprep.subr.mxu0 0.0
        %2376 = vmatpush2.msra.mxu0 0.0
        %2377 = vmatprep.subr.mxu0 0.0
        %2378 = vmatpush2.msra.mxu0 0.0
        %2379 = vmatprep.mubr.f32.mxu0 0.0
        %2380 = vmatmul.mubr.f32.gmra.mxu0 %v2313
        %v2381 = vpop.f32.mrf.mxu0
        %v2382 = vadd.f32 0.0, %v2381
        %v2383 = vpop.f32.mrf.mxu0
        %2384 = vdwg.mxu0
        %v2386 = vsel %vm1563, %v2236, 0
        %2388 = vmatprep.subr.mxu0 0.0
        %2389 = vmatpush1.msra.mxu0 0.0
        %2390 = vmatprep.subr.mxu0 0.0
        %2391 = vmatpush1.msra.mxu0 0.0
        %2392 = vmatprep.subr.mxu0 0.0
        %2393 = vmatpush1.msra.mxu0 0.0
        %2394 = vmatprep.subr.mxu0 0.0
        %2395 = vmatpush1.msra.mxu0 0.0
        %2396 = vmatprep.subr.mxu0 0.0
        %2397 = vmatpush1.msra.mxu0 0.0
        %2398 = vmatprep.subr.mxu0 0.0
        %2399 = vmatpush1.msra.mxu0 0.0
        %2400 = vmatprep.subr.mxu0 0.0
        %2401 = vmatpush1.msra.mxu0 0.0
        %2402 = vmatprep.subr.mxu0 0.0
        %2403 = vmatpush1.msra.mxu0 0.0
        %2404 = vmatprep.subr.mxu0 0.0
        %2405 = vmatpush1.msra.mxu0 0.0
        %2406 = vmatprep.subr.mxu0 0.0
        %2407 = vmatpush1.msra.mxu0 0.0
        %2408 = vmatprep.subr.mxu0 0.0
        %2409 = vmatpush1.msra.mxu0 0.0
        %2410 = vmatprep.subr.mxu0 0.0
        %2411 = vmatpush1.msra.mxu0 0.0
        %2412 = vmatprep.subr.mxu0 0.0
        %2413 = vmatpush1.msra.mxu0 0.0
        %2414 = vmatprep.subr.mxu0 0.0
        %2415 = vmatpush1.msra.mxu0 0.0
        %2416 = vmatprep.subr.mxu0 0.0
        %2417 = vmatpush1.msra.mxu0 0.0
        %2418 = vmatprep.subr.mxu0 0.0
        %2419 = vmatpush1.msra.mxu0 %v1556
        %2420 = vmatprep.subr.mxu0 0.0
        %2421 = vmatpush2.msra.mxu0 0.0
        %2422 = vmatprep.subr.mxu0 0.0
        %2423 = vmatpush2.msra.mxu0 0.0
        %2424 = vmatprep.subr.mxu0 0.0
        %2425 = vmatpush2.msra.mxu0 0.0
        %2426 = vmatprep.subr.mxu0 0.0
        %2427 = vmatpush2.msra.mxu0 0.0
        %2428 = vmatprep.subr.mxu0 0.0
        %2429 = vmatpush2.msra.mxu0 0.0
        %2430 = vmatprep.subr.mxu0 0.0
        %2431 = vmatpush2.msra.mxu0 0.0
        %2432 = vmatprep.subr.mxu0 0.0
        %2433 = vmatpush2.msra.mxu0 0.0
        %2434 = vmatprep.subr.mxu0 0.0
        %2435 = vmatpush2.msra.mxu0 0.0
        %2436 = vmatprep.subr.mxu0 0.0
        %2437 = vmatpush2.msra.mxu0 0.0
        %2438 = vmatprep.subr.mxu0 0.0
        %2439 = vmatpush2.msra.mxu0 0.0
        %2440 = vmatprep.subr.mxu0 0.0
        %2441 = vmatpush2.msra.mxu0 0.0
        %2442 = vmatprep.subr.mxu0 0.0
        %2443 = vmatpush2.msra.mxu0 0.0
        %2444 = vmatprep.subr.mxu0 0.0
        %2445 = vmatpush2.msra.mxu0 0.0
        %2446 = vmatprep.subr.mxu0 0.0
        %2447 = vmatpush2.msra.mxu0 0.0
        %2448 = vmatprep.subr.mxu0 0.0
        %2449 = vmatpush2.msra.mxu0 0.0
        %2450 = vmatprep.subr.mxu0 0.0
        %2451 = vmatpush2.msra.mxu0 0.0
        %2452 = vmatprep.mubr.f32.mxu0 0.0
        %2453 = vmatmul.mubr.f32.gmra.mxu0 %v2386
        %v2454 = vpop.f32.mrf.mxu0
        %v2455 = vadd.f32 0.0, %v2454
        %v2456 = vpop.f32.mrf.mxu0
        %2457 = vdwg.mxu0
        %v2459 = vsel %vm1563, %v2238, 0
        %2461 = vmatprep.subr.mxu0 0.0
        %2462 = vmatpush1.msra.mxu0 0.0
        %2463 = vmatprep.subr.mxu0 0.0
        %2464 = vmatpush1.msra.mxu0 0.0
        %2465 = vmatprep.subr.mxu0 0.0
        %2466 = vmatpush1.msra.mxu0 0.0
        %2467 = vmatprep.subr.mxu0 0.0
        %2468 = vmatpush1.msra.mxu0 0.0
        %2469 = vmatprep.subr.mxu0 0.0
        %2470 = vmatpush1.msra.mxu0 0.0
        %2471 = vmatprep.subr.mxu0 0.0
        %2472 = vmatpush1.msra.mxu0 0.0
        %2473 = vmatprep.subr.mxu0 0.0
        %2474 = vmatpush1.msra.mxu0 0.0
        %2475 = vmatprep.subr.mxu0 0.0
        %2476 = vmatpush1.msra.mxu0 0.0
        %2477 = vmatprep.subr.mxu0 0.0
        %2478 = vmatpush1.msra.mxu0 0.0
        %2479 = vmatprep.subr.mxu0 0.0
        %2480 = vmatpush1.msra.mxu0 0.0
        %2481 = vmatprep.subr.mxu0 0.0
        %2482 = vmatpush1.msra.mxu0 0.0
        %2483 = vmatprep.subr.mxu0 0.0
        %2484 = vmatpush1.msra.mxu0 0.0
        %2485 = vmatprep.subr.mxu0 0.0
        %2486 = vmatpush1.msra.mxu0 0.0
        %2487 = vmatprep.subr.mxu0 0.0
        %2488 = vmatpush1.msra.mxu0 0.0
        %2489 = vmatprep.subr.mxu0 0.0
        %2490 = vmatpush1.msra.mxu0 0.0
        %2491 = vmatprep.subr.mxu0 0.0
        %2492 = vmatpush1.msra.mxu0 %v1557
        %2493 = vmatprep.subr.mxu0 0.0
        %2494 = vmatpush2.msra.mxu0 0.0
        %2495 = vmatprep.subr.mxu0 0.0
        %2496 = vmatpush2.msra.mxu0 0.0
        %2497 = vmatprep.subr.mxu0 0.0
        %2498 = vmatpush2.msra.mxu0 0.0
        %2499 = vmatprep.subr.mxu0 0.0
        %2500 = vmatpush2.msra.mxu0 0.0
        %2501 = vmatprep.subr.mxu0 0.0
        %2502 = vmatpush2.msra.mxu0 0.0
        %2503 = vmatprep.subr.mxu0 0.0
        %2504 = vmatpush2.msra.mxu0 0.0
        %2505 = vmatprep.subr.mxu0 0.0
        %2506 = vmatpush2.msra.mxu0 0.0
        %2507 = vmatprep.subr.mxu0 0.0
        %2508 = vmatpush2.msra.mxu0 0.0
        %2509 = vmatprep.subr.mxu0 0.0
        %2510 = vmatpush2.msra.mxu0 0.0
        %2511 = vmatprep.subr.mxu0 0.0
        %2512 = vmatpush2.msra.mxu0 0.0
        %2513 = vmatprep.subr.mxu0 0.0
        %2514 = vmatpush2.msra.mxu0 0.0
        %2515 = vmatprep.subr.mxu0 0.0
        %2516 = vmatpush2.msra.mxu0 0.0
        %2517 = vmatprep.subr.mxu0 0.0
        %2518 = vmatpush2.msra.mxu0 0.0
        %2519 = vmatprep.subr.mxu0 0.0
        %2520 = vmatpush2.msra.mxu0 0.0
        %2521 = vmatprep.subr.mxu0 0.0
        %2522 = vmatpush2.msra.mxu0 0.0
        %2523 = vmatprep.subr.mxu0 0.0
        %2524 = vmatpush2.msra.mxu0 0.0
        %2525 = vmatprep.mubr.f32.mxu0 0.0
        %2526 = vmatmul.mubr.f32.gmra.mxu0 %v2459
        %v2527 = vpop.f32.mrf.mxu0
        %v2528 = vadd.f32 0.0, %v2527
        %v2529 = vpop.f32.mrf.mxu0
        %2530 = vdwg.mxu0
        %v2531 = vsel %vm515, %v2309, 0.0
        %v2532 = vsel %vm515, %v2382, 0.0
        %v2533 = vadd.f32 %v2531, %v2532
        %v2534 = vsel %vm515, %v2455, 0.0
        %v2535 = vadd.f32 %v2533, %v2534
        %v2536 = vsel %vm515, %v2528, 0.0
        %v2537 = vadd.f32 %v2535, %v2536
        %v2538 = vmul.f32 %v970, 0.35355338
        %v2539 = vmul.f32 %v971, 0.35355338
        %v2540 = vmul.f32 %v972, 0.35355338
        %v2541 = vmul.f32 %v973, 0.35355338
        %v2543 = vsel %vm1563, %v2538, 0
        %2545 = vmatprep.subr.mxu0 0.0
        %2546 = vmatpush1.xpose.msra.mxu0 0.0
        %2547 = vmatprep.subr.mxu0 0.0
        %2548 = vmatpush1.xpose.msra.mxu0 0.0
        %2549 = vmatprep.subr.mxu0 0.0
        %2550 = vmatpush1.xpose.msra.mxu0 0.0
        %2551 = vmatprep.subr.mxu0 0.0
        %2552 = vmatpush1.xpose.msra.mxu0 0.0
        %2553 = vmatprep.subr.mxu0 0.0
        %2554 = vmatpush1.xpose.msra.mxu0 0.0
        %2555 = vmatprep.subr.mxu0 0.0
        %2556 = vmatpush1.xpose.msra.mxu0 0.0
        %2557 = vmatprep.subr.mxu0 0.0
        %2558 = vmatpush1.xpose.msra.mxu0 0.0
        %2559 = vmatprep.subr.mxu0 0.0
        %2560 = vmatpush1.xpose.msra.mxu0 0.0
        %2561 = vmatprep.subr.mxu0 0.0
        %2562 = vmatpush1.xpose.msra.mxu0 0.0
        %2563 = vmatprep.subr.mxu0 0.0
        %2564 = vmatpush1.xpose.msra.mxu0 0.0
        %2565 = vmatprep.subr.mxu0 0.0
        %2566 = vmatpush1.xpose.msra.mxu0 0.0
        %2567 = vmatprep.subr.mxu0 0.0
        %2568 = vmatpush1.xpose.msra.mxu0 0.0
        %2569 = vmatprep.subr.mxu0 0.0
        %2570 = vmatpush1.xpose.msra.mxu0 0.0
        %2571 = vmatprep.subr.mxu0 0.0
        %2572 = vmatpush1.xpose.msra.mxu0 0.0
        %2573 = vmatprep.subr.mxu0 0.0
        %2574 = vmatpush1.xpose.msra.mxu0 0.0
        %2575 = vmatprep.subr.mxu0 0.0
        %2576 = vmatpush1.xpose.msra.mxu0 %v1568
        %2577 = vmatprep.subr.mxu0 0.0
        %2578 = vmatpush2.xpose.msra.mxu0 0.0
        %2579 = vmatprep.subr.mxu0 0.0
        %2580 = vmatpush2.xpose.msra.mxu0 0.0
        %2581 = vmatprep.subr.mxu0 0.0
        %2582 = vmatpush2.xpose.msra.mxu0 0.0
        %2583 = vmatprep.subr.mxu0 0.0
        %2584 = vmatpush2.xpose.msra.mxu0 0.0
        %2585 = vmatprep.subr.mxu0 0.0
        %2586 = vmatpush2.xpose.msra.mxu0 0.0
        %2587 = vmatprep.subr.mxu0 0.0
        %2588 = vmatpush2.xpose.msra.mxu0 0.0
        %2589 = vmatprep.subr.mxu0 0.0
        %2590 = vmatpush2.xpose.msra.mxu0 0.0
        %2591 = vmatprep.subr.mxu0 0.0
        %2592 = vmatpush2.xpose.msra.mxu0 0.0
        %2593 = vmatprep.subr.mxu0 0.0
        %2594 = vmatpush2.xpose.msra.mxu0 0.0
        %2595 = vmatprep.subr.mxu0 0.0
        %2596 = vmatpush2.xpose.msra.mxu0 0.0
        %2597 = vmatprep.subr.mxu0 0.0
        %2598 = vmatpush2.xpose.msra.mxu0 0.0
        %2599 = vmatprep.subr.mxu0 0.0
        %2600 = vmatpush2.xpose.msra.mxu0 0.0
        %2601 = vmatprep.subr.mxu0 0.0
        %2602 = vmatpush2.xpose.msra.mxu0 0.0
        %2603 = vmatprep.subr.mxu0 0.0
        %2604 = vmatpush2.xpose.msra.mxu0 0.0
        %2605 = vmatprep.subr.mxu0 0.0
        %2606 = vmatpush2.xpose.msra.mxu0 0.0
        %2607 = vmatprep.subr.mxu0 0.0
        %2608 = vmatpush2.xpose.msra.mxu0 0.0
        %2609 = vmatprep.mubr.f32.mxu0 0.0
        %2610 = vmatmul.mubr.f32.gmra.mxu0 %v2543
        %v2611 = vpop.f32.mrf.mxu0
        %v2612 = vadd.f32 0.0, %v2611
        %v2613 = vpop.f32.mrf.mxu0
        %2614 = vdwg.mxu0
        %v2616 = vsel %vm1563, %v2539, 0
        %2618 = vmatprep.subr.mxu0 0.0
        %2619 = vmatpush1.xpose.msra.mxu0 0.0
        %2620 = vmatprep.subr.mxu0 0.0
        %2621 = vmatpush1.xpose.msra.mxu0 0.0
        %2622 = vmatprep.subr.mxu0 0.0
        %2623 = vmatpush1.xpose.msra.mxu0 0.0
        %2624 = vmatprep.subr.mxu0 0.0
        %2625 = vmatpush1.xpose.msra.mxu0 0.0
        %2626 = vmatprep.subr.mxu0 0.0
        %2627 = vmatpush1.xpose.msra.mxu0 0.0
        %2628 = vmatprep.subr.mxu0 0.0
        %2629 = vmatpush1.xpose.msra.mxu0 0.0
        %2630 = vmatprep.subr.mxu0 0.0
        %2631 = vmatpush1.xpose.msra.mxu0 0.0
        %2632 = vmatprep.subr.mxu0 0.0
        %2633 = vmatpush1.xpose.msra.mxu0 0.0
        %2634 = vmatprep.subr.mxu0 0.0
        %2635 = vmatpush1.xpose.msra.mxu0 0.0
        %2636 = vmatprep.subr.mxu0 0.0
        %2637 = vmatpush1.xpose.msra.mxu0 0.0
        %2638 = vmatprep.subr.mxu0 0.0
        %2639 = vmatpush1.xpose.msra.mxu0 0.0
        %2640 = vmatprep.subr.mxu0 0.0
        %2641 = vmatpush1.xpose.msra.mxu0 0.0
        %2642 = vmatprep.subr.mxu0 0.0
        %2643 = vmatpush1.xpose.msra.mxu0 0.0
        %2644 = vmatprep.subr.mxu0 0.0
        %2645 = vmatpush1.xpose.msra.mxu0 0.0
        %2646 = vmatprep.subr.mxu0 0.0
        %2647 = vmatpush1.xpose.msra.mxu0 0.0
        %2648 = vmatprep.subr.mxu0 0.0
        %2649 = vmatpush1.xpose.msra.mxu0 %v1644
        %2650 = vmatprep.subr.mxu0 0.0
        %2651 = vmatpush2.xpose.msra.mxu0 0.0
        %2652 = vmatprep.subr.mxu0 0.0
        %2653 = vmatpush2.xpose.msra.mxu0 0.0
        %2654 = vmatprep.subr.mxu0 0.0
        %2655 = vmatpush2.xpose.msra.mxu0 0.0
        %2656 = vmatprep.subr.mxu0 0.0
        %2657 = vmatpush2.xpose.msra.mxu0 0.0
        %2658 = vmatprep.subr.mxu0 0.0
        %2659 = vmatpush2.xpose.msra.mxu0 0.0
        %2660 = vmatprep.subr.mxu0 0.0
        %2661 = vmatpush2.xpose.msra.mxu0 0.0
        %2662 = vmatprep.subr.mxu0 0.0
        %2663 = vmatpush2.xpose.msra.mxu0 0.0
        %2664 = vmatprep.subr.mxu0 0.0
        %2665 = vmatpush2.xpose.msra.mxu0 0.0
        %2666 = vmatprep.subr.mxu0 0.0
        %2667 = vmatpush2.xpose.msra.mxu0 0.0
        %2668 = vmatprep.subr.mxu0 0.0
        %2669 = vmatpush2.xpose.msra.mxu0 0.0
        %2670 = vmatprep.subr.mxu0 0.0
        %2671 = vmatpush2.xpose.msra.mxu0 0.0
        %2672 = vmatprep.subr.mxu0 0.0
        %2673 = vmatpush2.xpose.msra.mxu0 0.0
        %2674 = vmatprep.subr.mxu0 0.0
        %2675 = vmatpush2.xpose.msra.mxu0 0.0
        %2676 = vmatprep.subr.mxu0 0.0
        %2677 = vmatpush2.xpose.msra.mxu0 0.0
        %2678 = vmatprep.subr.mxu0 0.0
        %2679 = vmatpush2.xpose.msra.mxu0 0.0
        %2680 = vmatprep.subr.mxu0 0.0
        %2681 = vmatpush2.xpose.msra.mxu0 0.0
        %2682 = vmatprep.mubr.f32.mxu0 0.0
        %2683 = vmatmul.mubr.f32.gmra.mxu0 %v2616
        %v2684 = vpop.f32.mrf.mxu0
        %v2685 = vadd.f32 0.0, %v2684
        %v2686 = vpop.f32.mrf.mxu0
        %2687 = vdwg.mxu0
        %v2689 = vsel %vm1563, %v2540, 0
        %2691 = vmatprep.subr.mxu0 0.0
        %2692 = vmatpush1.xpose.msra.mxu0 0.0
        %2693 = vmatprep.subr.mxu0 0.0
        %2694 = vmatpush1.xpose.msra.mxu0 0.0
        %2695 = vmatprep.subr.mxu0 0.0
        %2696 = vmatpush1.xpose.msra.mxu0 0.0
        %2697 = vmatprep.subr.mxu0 0.0
        %2698 = vmatpush1.xpose.msra.mxu0 0.0
        %2699 = vmatprep.subr.mxu0 0.0
        %2700 = vmatpush1.xpose.msra.mxu0 0.0
        %2701 = vmatprep.subr.mxu0 0.0
        %2702 = vmatpush1.xpose.msra.mxu0 0.0
        %2703 = vmatprep.subr.mxu0 0.0
        %2704 = vmatpush1.xpose.msra.mxu0 0.0
        %2705 = vmatprep.subr.mxu0 0.0
        %2706 = vmatpush1.xpose.msra.mxu0 0.0
        %2707 = vmatprep.subr.mxu0 0.0
        %2708 = vmatpush1.xpose.msra.mxu0 0.0
        %2709 = vmatprep.subr.mxu0 0.0
        %2710 = vmatpush1.xpose.msra.mxu0 0.0
        %2711 = vmatprep.subr.mxu0 0.0
        %2712 = vmatpush1.xpose.msra.mxu0 0.0
        %2713 = vmatprep.subr.mxu0 0.0
        %2714 = vmatpush1.xpose.msra.mxu0 0.0
        %2715 = vmatprep.subr.mxu0 0.0
        %2716 = vmatpush1.xpose.msra.mxu0 0.0
        %2717 = vmatprep.subr.mxu0 0.0
        %2718 = vmatpush1.xpose.msra.mxu0 0.0
        %2719 = vmatprep.subr.mxu0 0.0
        %2720 = vmatpush1.xpose.msra.mxu0 0.0
        %2721 = vmatprep.subr.mxu0 0.0
        %2722 = vmatpush1.xpose.msra.mxu0 %v1720
        %2723 = vmatprep.subr.mxu0 0.0
        %2724 = vmatpush2.xpose.msra.mxu0 0.0
        %2725 = vmatprep.subr.mxu0 0.0
        %2726 = vmatpush2.xpose.msra.mxu0 0.0
        %2727 = vmatprep.subr.mxu0 0.0
        %2728 = vmatpush2.xpose.msra.mxu0 0.0
        %2729 = vmatprep.subr.mxu0 0.0
        %2730 = vmatpush2.xpose.msra.mxu0 0.0
        %2731 = vmatprep.subr.mxu0 0.0
        %2732 = vmatpush2.xpose.msra.mxu0 0.0
        %2733 = vmatprep.subr.mxu0 0.0
        %2734 = vmatpush2.xpose.msra.mxu0 0.0
        %2735 = vmatprep.subr.mxu0 0.0
        %2736 = vmatpush2.xpose.msra.mxu0 0.0
        %2737 = vmatprep.subr.mxu0 0.0
        %2738 = vmatpush2.xpose.msra.mxu0 0.0
        %2739 = vmatprep.subr.mxu0 0.0
        %2740 = vmatpush2.xpose.msra.mxu0 0.0
        %2741 = vmatprep.subr.mxu0 0.0
        %2742 = vmatpush2.xpose.msra.mxu0 0.0
        %2743 = vmatprep.subr.mxu0 0.0
        %2744 = vmatpush2.xpose.msra.mxu0 0.0
        %2745 = vmatprep.subr.mxu0 0.0
        %2746 = vmatpush2.xpose.msra.mxu0 0.0
        %2747 = vmatprep.subr.mxu0 0.0
        %2748 = vmatpush2.xpose.msra.mxu0 0.0
        %2749 = vmatprep.subr.mxu0 0.0
        %2750 = vmatpush2.xpose.msra.mxu0 0.0
        %2751 = vmatprep.subr.mxu0 0.0
        %2752 = vmatpush2.xpose.msra.mxu0 0.0
        %2753 = vmatprep.subr.mxu0 0.0
        %2754 = vmatpush2.xpose.msra.mxu0 0.0
        %2755 = vmatprep.mubr.f32.mxu0 0.0
        %2756 = vmatmul.mubr.f32.gmra.mxu0 %v2689
        %v2757 = vpop.f32.mrf.mxu0
        %v2758 = vadd.f32 0.0, %v2757
        %v2759 = vpop.f32.mrf.mxu0
        %2760 = vdwg.mxu0
        %v2762 = vsel %vm1563, %v2541, 0
        %2764 = vmatprep.subr.mxu0 0.0
        %2765 = vmatpush1.xpose.msra.mxu0 0.0
        %2766 = vmatprep.subr.mxu0 0.0
        %2767 = vmatpush1.xpose.msra.mxu0 0.0
        %2768 = vmatprep.subr.mxu0 0.0
        %2769 = vmatpush1.xpose.msra.mxu0 0.0
        %2770 = vmatprep.subr.mxu0 0.0
        %2771 = vmatpush1.xpose.msra.mxu0 0.0
        %2772 = vmatprep.subr.mxu0 0.0
        %2773 = vmatpush1.xpose.msra.mxu0 0.0
        %2774 = vmatprep.subr.mxu0 0.0
        %2775 = vmatpush1.xpose.msra.mxu0 0.0
        %2776 = vmatprep.subr.mxu0 0.0
        %2777 = vmatpush1.xpose.msra.mxu0 0.0
        %2778 = vmatprep.subr.mxu0 0.0
        %2779 = vmatpush1.xpose.msra.mxu0 0.0
        %2780 = vmatprep.subr.mxu0 0.0
        %2781 = vmatpush1.xpose.msra.mxu0 0.0
        %2782 = vmatprep.subr.mxu0 0.0
        %2783 = vmatpush1.xpose.msra.mxu0 0.0
        %2784 = vmatprep.subr.mxu0 0.0
        %2785 = vmatpush1.xpose.msra.mxu0 0.0
        %2786 = vmatprep.subr.mxu0 0.0
        %2787 = vmatpush1.xpose.msra.mxu0 0.0
        %2788 = vmatprep.subr.mxu0 0.0
        %2789 = vmatpush1.xpose.msra.mxu0 0.0
        %2790 = vmatprep.subr.mxu0 0.0
        %2791 = vmatpush1.xpose.msra.mxu0 0.0
        %2792 = vmatprep.subr.mxu0 0.0
        %2793 = vmatpush1.xpose.msra.mxu0 0.0
        %2794 = vmatprep.subr.mxu0 0.0
        %2795 = vmatpush1.xpose.msra.mxu0 %v1796
        %2796 = vmatprep.subr.mxu0 0.0
        %2797 = vmatpush2.xpose.msra.mxu0 0.0
        %2798 = vmatprep.subr.mxu0 0.0
        %2799 = vmatpush2.xpose.msra.mxu0 0.0
        %2800 = vmatprep.subr.mxu0 0.0
        %2801 = vmatpush2.xpose.msra.mxu0 0.0
        %2802 = vmatprep.subr.mxu0 0.0
        %2803 = vmatpush2.xpose.msra.mxu0 0.0
        %2804 = vmatprep.subr.mxu0 0.0
        %2805 = vmatpush2.xpose.msra.mxu0 0.0
        %2806 = vmatprep.subr.mxu0 0.0
        %2807 = vmatpush2.xpose.msra.mxu0 0.0
        %2808 = vmatprep.subr.mxu0 0.0
        %2809 = vmatpush2.xpose.msra.mxu0 0.0
        %2810 = vmatprep.subr.mxu0 0.0
        %2811 = vmatpush2.xpose.msra.mxu0 0.0
        %2812 = vmatprep.subr.mxu0 0.0
        %2813 = vmatpush2.xpose.msra.mxu0 0.0
        %2814 = vmatprep.subr.mxu0 0.0
        %2815 = vmatpush2.xpose.msra.mxu0 0.0
        %2816 = vmatprep.subr.mxu0 0.0
        %2817 = vmatpush2.xpose.msra.mxu0 0.0
        %2818 = vmatprep.subr.mxu0 0.0
        %2819 = vmatpush2.xpose.msra.mxu0 0.0
        %2820 = vmatprep.subr.mxu0 0.0
        %2821 = vmatpush2.xpose.msra.mxu0 0.0
        %2822 = vmatprep.subr.mxu0 0.0
        %2823 = vmatpush2.xpose.msra.mxu0 0.0
        %2824 = vmatprep.subr.mxu0 0.0
        %2825 = vmatpush2.xpose.msra.mxu0 0.0
        %2826 = vmatprep.subr.mxu0 0.0
        %2827 = vmatpush2.xpose.msra.mxu0 0.0
        %2828 = vmatprep.mubr.f32.mxu0 0.0
        %2829 = vmatmul.mubr.f32.gmra.mxu0 %v2762
        %v2830 = vpop.f32.mrf.mxu0
        %v2831 = vadd.f32 0.0, %v2830
        %v2832 = vpop.f32.mrf.mxu0
        %2833 = vdwg.mxu0
        %v2834 = vsel %vm1563, %v2612, -inf
        %2835 = vmax.xlane.f32.xlu0 %v2834
        %v2836 = vpop.xlane.xlu0 %2835
        %v2837 = vsel %vm1563, %v2685, -inf
        %2838 = vmax.xlane.f32.xlu0 %v2837
        %v2839 = vpop.xlane.xlu0 %2838
        %v2840 = vsel %vm1563, %v2758, -inf
        %2841 = vmax.xlane.f32.xlu0 %v2840
        %v2842 = vpop.xlane.xlu0 %2841
        %v2843 = vsel %vm1563, %v2831, -inf
        %2844 = vmax.xlane.f32.xlu0 %v2843
        %v2845 = vpop.xlane.xlu0 %2844
        %v2846 = vsub.f32 -inf, %v2836
        %v2847 = vsub.f32 -inf, %v2839
        %v2848 = vsub.f32 -inf, %v2842
        %v2849 = vsub.f32 -inf, %v2845
        %v2850 = vmul.f32 %v2846, 1.442695
        %v2851 = vpow.pop %v2850
        %v2852 = vmul.f32 %v2847, 1.442695
        %v2853 = vpow.pop %v2852
        %v2854 = vmul.f32 %v2848, 1.442695
        %v2855 = vpow.pop %v2854
        %v2856 = vmul.f32 %v2849, 1.442695
        %v2857 = vpow.pop %v2856
        %v2858 = vsub.f32 %v2612, %v2836
        %v2859 = vsub.f32 %v2685, %v2839
        %v2860 = vsub.f32 %v2758, %v2842
        %v2861 = vsub.f32 %v2831, %v2845
        %v2862 = vmul.f32 %v2858, 1.442695
        %v2863 = vpow.pop %v2862
        %v2864 = vmul.f32 %v2859, 1.442695
        %v2865 = vpow.pop %v2864
        %v2866 = vmul.f32 %v2860, 1.442695
        %v2867 = vpow.pop %v2866
        %v2868 = vmul.f32 %v2861, 1.442695
        %v2869 = vpow.pop %v2868
        %v2870 = vmul.f32 %v2851, 0.0
        %v2871 = vmul.f32 %v2853, 0.0
        %v2872 = vmul.f32 %v2855, 0.0
        %v2873 = vmul.f32 %v2857, 0.0
        %v2874 = vsel %vm1563, %v2863, 0.0
        %2875 = vadd.xlane.f32.xlu0 %v2874
        %v2876 = vpop.xlane.xlu0 %2875
        %v2877 = vsel %vm1563, %v2865, 0.0
        %2878 = vadd.xlane.f32.xlu0 %v2877
        %v2879 = vpop.xlane.xlu0 %2878
        %v2880 = vsel %vm1563, %v2867, 0.0
        %2881 = vadd.xlane.f32.xlu0 %v2880
        %v2882 = vpop.xlane.xlu0 %2881
        %v2883 = vsel %vm1563, %v2869, 0.0
        %2884 = vadd.xlane.f32.xlu0 %v2883
        %v2885 = vpop.xlane.xlu0 %2884
        %v2886 = vadd.f32 %v2870, %v2876
        %v2887 = vadd.f32 %v2871, %v2879
        %v2888 = vadd.f32 %v2872, %v2882
        %v2889 = vadd.f32 %v2873, %v2885
        %v2891 = vsel %vm1563, %v2863, 0
        %2893 = vmatprep.subr.mxu0 0.0
        %2894 = vmatpush1.msra.mxu0 0.0
        %2895 = vmatprep.subr.mxu0 0.0
        %2896 = vmatpush1.msra.mxu0 0.0
        %2897 = vmatprep.subr.mxu0 0.0
        %2898 = vmatpush1.msra.mxu0 0.0
        %2899 = vmatprep.subr.mxu0 0.0
        %2900 = vmatpush1.msra.mxu0 0.0
        %2901 = vmatprep.subr.mxu0 0.0
        %2902 = vmatpush1.msra.mxu0 0.0
        %2903 = vmatprep.subr.mxu0 0.0
        %2904 = vmatpush1.msra.mxu0 0.0
        %2905 = vmatprep.subr.mxu0 0.0
        %2906 = vmatpush1.msra.mxu0 0.0
        %2907 = vmatprep.subr.mxu0 0.0
        %2908 = vmatpush1.msra.mxu0 0.0
        %2909 = vmatprep.subr.mxu0 0.0
        %2910 = vmatpush1.msra.mxu0 0.0
        %2911 = vmatprep.subr.mxu0 0.0
        %2912 = vmatpush1.msra.mxu0 0.0
        %2913 = vmatprep.subr.mxu0 0.0
        %2914 = vmatpush1.msra.mxu0 0.0
        %2915 = vmatprep.subr.mxu0 0.0
        %2916 = vmatpush1.msra.mxu0 0.0
        %2917 = vmatprep.subr.mxu0 0.0
        %2918 = vmatpush1.msra.mxu0 0.0
        %2919 = vmatprep.subr.mxu0 0.0
        %2920 = vmatpush1.msra.mxu0 0.0
        %2921 = vmatprep.subr.mxu0 0.0
        %2922 = vmatpush1.msra.mxu0 0.0
        %2923 = vmatprep.subr.mxu0 0.0
        %2924 = vmatpush1.msra.mxu0 %v1482
        %2925 = vmatprep.subr.mxu0 0.0
        %2926 = vmatpush2.msra.mxu0 0.0
        %2927 = vmatprep.subr.mxu0 0.0
        %2928 = vmatpush2.msra.mxu0 0.0
        %2929 = vmatprep.subr.mxu0 0.0
        %2930 = vmatpush2.msra.mxu0 0.0
        %2931 = vmatprep.subr.mxu0 0.0
        %2932 = vmatpush2.msra.mxu0 0.0
        %2933 = vmatprep.subr.mxu0 0.0
        %2934 = vmatpush2.msra.mxu0 0.0
        %2935 = vmatprep.subr.mxu0 0.0
        %2936 = vmatpush2.msra.mxu0 0.0
        %2937 = vmatprep.subr.mxu0 0.0
        %2938 = vmatpush2.msra.mxu0 0.0
        %2939 = vmatprep.subr.mxu0 0.0
        %2940 = vmatpush2.msra.mxu0 0.0
        %2941 = vmatprep.subr.mxu0 0.0
        %2942 = vmatpush2.msra.mxu0 0.0
        %2943 = vmatprep.subr.mxu0 0.0
        %2944 = vmatpush2.msra.mxu0 0.0
        %2945 = vmatprep.subr.mxu0 0.0
        %2946 = vmatpush2.msra.mxu0 0.0
        %2947 = vmatprep.subr.mxu0 0.0
        %2948 = vmatpush2.msra.mxu0 0.0
        %2949 = vmatprep.subr.mxu0 0.0
        %2950 = vmatpush2.msra.mxu0 0.0
        %2951 = vmatprep.subr.mxu0 0.0
        %2952 = vmatpush2.msra.mxu0 0.0
        %2953 = vmatprep.subr.mxu0 0.0
        %2954 = vmatpush2.msra.mxu0 0.0
        %2955 = vmatprep.subr.mxu0 0.0
        %2956 = vmatpush2.msra.mxu0 0.0
        %2957 = vmatprep.mubr.f32.mxu0 0.0
        %2958 = vmatmul.mubr.f32.gmra.mxu0 %v2891
        %v2959 = vpop.f32.mrf.mxu0
        %v2960 = vadd.f32 0.0, %v2959
        %v2961 = vpop.f32.mrf.mxu0
        %2962 = vdwg.mxu0
        %v2964 = vsel %vm1563, %v2865, 0
        %2966 = vmatprep.subr.mxu0 0.0
        %2967 = vmatpush1.msra.mxu0 0.0
        %2968 = vmatprep.subr.mxu0 0.0
        %2969 = vmatpush1.msra.mxu0 0.0
        %2970 = vmatprep.subr.mxu0 0.0
        %2971 = vmatpush1.msra.mxu0 0.0
        %2972 = vmatprep.subr.mxu0 0.0
        %2973 = vmatpush1.msra.mxu0 0.0
        %2974 = vmatprep.subr.mxu0 0.0
        %2975 = vmatpush1.msra.mxu0 0.0
        %2976 = vmatprep.subr.mxu0 0.0
        %2977 = vmatpush1.msra.mxu0 0.0
        %2978 = vmatprep.subr.mxu0 0.0
        %2979 = vmatpush1.msra.mxu0 0.0
        %2980 = vmatprep.subr.mxu0 0.0
        %2981 = vmatpush1.msra.mxu0 0.0
        %2982 = vmatprep.subr.mxu0 0.0
        %2983 = vmatpush1.msra.mxu0 0.0
        %2984 = vmatprep.subr.mxu0 0.0
        %2985 = vmatpush1.msra.mxu0 0.0
        %2986 = vmatprep.subr.mxu0 0.0
        %2987 = vmatpush1.msra.mxu0 0.0
        %2988 = vmatprep.subr.mxu0 0.0
        %2989 = vmatpush1.msra.mxu0 0.0
        %2990 = vmatprep.subr.mxu0 0.0
        %2991 = vmatpush1.msra.mxu0 0.0
        %2992 = vmatprep.subr.mxu0 0.0
        %2993 = vmatpush1.msra.mxu0 0.0
        %2994 = vmatprep.subr.mxu0 0.0
        %2995 = vmatpush1.msra.mxu0 0.0
        %2996 = vmatprep.subr.mxu0 0.0
        %2997 = vmatpush1.msra.mxu0 %v1483
        %2998 = vmatprep.subr.mxu0 0.0
        %2999 = vmatpush2.msra.mxu0 0.0
        %3000 = vmatprep.subr.mxu0 0.0
        %3001 = vmatpush2.msra.mxu0 0.0
        %3002 = vmatprep.subr.mxu0 0.0
        %3003 = vmatpush2.msra.mxu0 0.0
        %3004 = vmatprep.subr.mxu0 0.0
        %3005 = vmatpush2.msra.mxu0 0.0
        %3006 = vmatprep.subr.mxu0 0.0
        %3007 = vmatpush2.msra.mxu0 0.0
        %3008 = vmatprep.subr.mxu0 0.0
        %3009 = vmatpush2.msra.mxu0 0.0
        %3010 = vmatprep.subr.mxu0 0.0
        %3011 = vmatpush2.msra.mxu0 0.0
        %3012 = vmatprep.subr.mxu0 0.0
        %3013 = vmatpush2.msra.mxu0 0.0
        %3014 = vmatprep.subr.mxu0 0.0
        %3015 = vmatpush2.msra.mxu0 0.0
        %3016 = vmatprep.subr.mxu0 0.0
        %3017 = vmatpush2.msra.mxu0 0.0
        %3018 = vmatprep.subr.mxu0 0.0
        %3019 = vmatpush2.msra.mxu0 0.0
        %3020 = vmatprep.subr.mxu0 0.0
        %3021 = vmatpush2.msra.mxu0 0.0
        %3022 = vmatprep.subr.mxu0 0.0
        %3023 = vmatpush2.msra.mxu0 0.0
        %3024 = vmatprep.subr.mxu0 0.0
        %3025 = vmatpush2.msra.mxu0 0.0
        %3026 = vmatprep.subr.mxu0 0.0
        %3027 = vmatpush2.msra.mxu0 0.0
        %3028 = vmatprep.subr.mxu0 0.0
        %3029 = vmatpush2.msra.mxu0 0.0
        %3030 = vmatprep.mubr.f32.mxu0 0.0
        %3031 = vmatmul.mubr.f32.gmra.mxu0 %v2964
        %v3032 = vpop.f32.mrf.mxu0
        %v3033 = vadd.f32 0.0, %v3032
        %v3034 = vpop.f32.mrf.mxu0
        %3035 = vdwg.mxu0
        %v3037 = vsel %vm1563, %v2867, 0
        %3039 = vmatprep.subr.mxu0 0.0
        %3040 = vmatpush1.msra.mxu0 0.0
        %3041 = vmatprep.subr.mxu0 0.0
        %3042 = vmatpush1.msra.mxu0 0.0
        %3043 = vmatprep.subr.mxu0 0.0
        %3044 = vmatpush1.msra.mxu0 0.0
        %3045 = vmatprep.subr.mxu0 0.0
        %3046 = vmatpush1.msra.mxu0 0.0
        %3047 = vmatprep.subr.mxu0 0.0
        %3048 = vmatpush1.msra.mxu0 0.0
        %3049 = vmatprep.subr.mxu0 0.0
        %3050 = vmatpush1.msra.mxu0 0.0
        %3051 = vmatprep.subr.mxu0 0.0
        %3052 = vmatpush1.msra.mxu0 0.0
        %3053 = vmatprep.subr.mxu0 0.0
        %3054 = vmatpush1.msra.mxu0 0.0
        %3055 = vmatprep.subr.mxu0 0.0
        %3056 = vmatpush1.msra.mxu0 0.0
        %3057 = vmatprep.subr.mxu0 0.0
        %3058 = vmatpush1.msra.mxu0 0.0
        %3059 = vmatprep.subr.mxu0 0.0
        %3060 = vmatpush1.msra.mxu0 0.0
        %3061 = vmatprep.subr.mxu0 0.0
        %3062 = vmatpush1.msra.mxu0 0.0
        %3063 = vmatprep.subr.mxu0 0.0
        %3064 = vmatpush1.msra.mxu0 0.0
        %3065 = vmatprep.subr.mxu0 0.0
        %3066 = vmatpush1.msra.mxu0 0.0
        %3067 = vmatprep.subr.mxu0 0.0
        %3068 = vmatpush1.msra.mxu0 0.0
        %3069 = vmatprep.subr.mxu0 0.0
        %3070 = vmatpush1.msra.mxu0 %v1484
        %3071 = vmatprep.subr.mxu0 0.0
        %3072 = vmatpush2.msra.mxu0 0.0
        %3073 = vmatprep.subr.mxu0 0.0
        %3074 = vmatpush2.msra.mxu0 0.0
        %3075 = vmatprep.subr.mxu0 0.0
        %3076 = vmatpush2.msra.mxu0 0.0
        %3077 = vmatprep.subr.mxu0 0.0
        %3078 = vmatpush2.msra.mxu0 0.0
        %3079 = vmatprep.subr.mxu0 0.0
        %3080 = vmatpush2.msra.mxu0 0.0
        %3081 = vmatprep.subr.mxu0 0.0
        %3082 = vmatpush2.msra.mxu0 0.0
        %3083 = vmatprep.subr.mxu0 0.0
        %3084 = vmatpush2.msra.mxu0 0.0
        %3085 = vmatprep.subr.mxu0 0.0
        %3086 = vmatpush2.msra.mxu0 0.0
        %3087 = vmatprep.subr.mxu0 0.0
        %3088 = vmatpush2.msra.mxu0 0.0
        %3089 = vmatprep.subr.mxu0 0.0
        %3090 = vmatpush2.msra.mxu0 0.0
        %3091 = vmatprep.subr.mxu0 0.0
        %3092 = vmatpush2.msra.mxu0 0.0
        %3093 = vmatprep.subr.mxu0 0.0
        %3094 = vmatpush2.msra.mxu0 0.0
        %3095 = vmatprep.subr.mxu0 0.0
        %3096 = vmatpush2.msra.mxu0 0.0
        %3097 = vmatprep.subr.mxu0 0.0
        %3098 = vmatpush2.msra.mxu0 0.0
        %3099 = vmatprep.subr.mxu0 0.0
        %3100 = vmatpush2.msra.mxu0 0.0
        %3101 = vmatprep.subr.mxu0 0.0
        %3102 = vmatpush2.msra.mxu0 0.0
        %3103 = vmatprep.mubr.f32.mxu0 0.0
        %3104 = vmatmul.mubr.f32.gmra.mxu0 %v3037
        %v3105 = vpop.f32.mrf.mxu0
        %v3106 = vadd.f32 0.0, %v3105
        %v3107 = vpop.f32.mrf.mxu0
        %3108 = vdwg.mxu0
        %v3110 = vsel %vm1563, %v2869, 0
        %3112 = vmatprep.subr.mxu0 0.0
        %3113 = vmatpush1.msra.mxu0 0.0
        %3114 = vmatprep.subr.mxu0 0.0
        %3115 = vmatpush1.msra.mxu0 0.0
        %3116 = vmatprep.subr.mxu0 0.0
        %3117 = vmatpush1.msra.mxu0 0.0
        %3118 = vmatprep.subr.mxu0 0.0
        %3119 = vmatpush1.msra.mxu0 0.0
        %3120 = vmatprep.subr.mxu0 0.0
        %3121 = vmatpush1.msra.mxu0 0.0
        %3122 = vmatprep.subr.mxu0 0.0
        %3123 = vmatpush1.msra.mxu0 0.0
        %3124 = vmatprep.subr.mxu0 0.0
        %3125 = vmatpush1.msra.mxu0 0.0
        %3126 = vmatprep.subr.mxu0 0.0
        %3127 = vmatpush1.msra.mxu0 0.0
        %3128 = vmatprep.subr.mxu0 0.0
        %3129 = vmatpush1.msra.mxu0 0.0
        %3130 = vmatprep.subr.mxu0 0.0
        %3131 = vmatpush1.msra.mxu0 0.0
        %3132 = vmatprep.subr.mxu0 0.0
        %3133 = vmatpush1.msra.mxu0 0.0
        %3134 = vmatprep.subr.mxu0 0.0
        %3135 = vmatpush1.msra.mxu0 0.0
        %3136 = vmatprep.subr.mxu0 0.0
        %3137 = vmatpush1.msra.mxu0 0.0
        %3138 = vmatprep.subr.mxu0 0.0
        %3139 = vmatpush1.msra.mxu0 0.0
        %3140 = vmatprep.subr.mxu0 0.0
        %3141 = vmatpush1.msra.mxu0 0.0
        %3142 = vmatprep.subr.mxu0 0.0
        %3143 = vmatpush1.msra.mxu0 %v1485
        %3144 = vmatprep.subr.mxu0 0.0
        %3145 = vmatpush2.msra.mxu0 0.0
        %3146 = vmatprep.subr.mxu0 0.0
        %3147 = vmatpush2.msra.mxu0 0.0
        %3148 = vmatprep.subr.mxu0 0.0
        %3149 = vmatpush2.msra.mxu0 0.0
        %3150 = vmatprep.subr.mxu0 0.0
        %3151 = vmatpush2.msra.mxu0 0.0
        %3152 = vmatprep.subr.mxu0 0.0
        %3153 = vmatpush2.msra.mxu0 0.0
        %3154 = vmatprep.subr.mxu0 0.0
        %3155 = vmatpush2.msra.mxu0 0.0
        %3156 = vmatprep.subr.mxu0 0.0
        %3157 = vmatpush2.msra.mxu0 0.0
        %3158 = vmatprep.subr.mxu0 0.0
        %3159 = vmatpush2.msra.mxu0 0.0
        %3160 = vmatprep.subr.mxu0 0.0
        %3161 = vmatpush2.msra.mxu0 0.0
        %3162 = vmatprep.subr.mxu0 0.0
        %3163 = vmatpush2.msra.mxu0 0.0
        %3164 = vmatprep.subr.mxu0 0.0
        %3165 = vmatpush2.msra.mxu0 0.0
        %3166 = vmatprep.subr.mxu0 0.0
        %3167 = vmatpush2.msra.mxu0 0.0
        %3168 = vmatprep.subr.mxu0 0.0
        %3169 = vmatpush2.msra.mxu0 0.0
        %3170 = vmatprep.subr.mxu0 0.0
        %3171 = vmatpush2.msra.mxu0 0.0
        %3172 = vmatprep.subr.mxu0 0.0
        %3173 = vmatpush2.msra.mxu0 0.0
        %3174 = vmatprep.subr.mxu0 0.0
        %3175 = vmatpush2.msra.mxu0 0.0
        %3176 = vmatprep.mubr.f32.mxu0 0.0
        %3177 = vmatmul.mubr.f32.gmra.mxu0 %v3110
        %v3178 = vpop.f32.mrf.mxu0
        %v3179 = vadd.f32 0.0, %v3178
        %v3180 = vpop.f32.mrf.mxu0
        %3181 = vdwg.mxu0
        %v3182 = vadd.f32 %v2870, %v2960
        %v3183 = vadd.f32 %v2871, %v3033
        %v3184 = vadd.f32 %v2872, %v3106
        %v3185 = vadd.f32 %v2873, %v3179
        %v3187 = vsel %vm1563, %v1260, 0
        %3189 = vmatprep.subr.mxu0 0.0
        %3190 = vmatpush1.xpose.msra.mxu0 0.0
        %3191 = vmatprep.subr.mxu0 0.0
        %3192 = vmatpush1.xpose.msra.mxu0 0.0
        %3193 = vmatprep.subr.mxu0 0.0
        %3194 = vmatpush1.xpose.msra.mxu0 0.0
        %3195 = vmatprep.subr.mxu0 0.0
        %3196 = vmatpush1.xpose.msra.mxu0 0.0
        %3197 = vmatprep.subr.mxu0 0.0
        %3198 = vmatpush1.xpose.msra.mxu0 0.0
        %3199 = vmatprep.subr.mxu0 0.0
        %3200 = vmatpush1.xpose.msra.mxu0 0.0
        %3201 = vmatprep.subr.mxu0 0.0
        %3202 = vmatpush1.xpose.msra.mxu0 0.0
        %3203 = vmatprep.subr.mxu0 0.0
        %3204 = vmatpush1.xpose.msra.mxu0 0.0
        %3205 = vmatprep.subr.mxu0 0.0
        %3206 = vmatpush1.xpose.msra.mxu0 0.0
        %3207 = vmatprep.subr.mxu0 0.0
        %3208 = vmatpush1.xpose.msra.mxu0 0.0
        %3209 = vmatprep.subr.mxu0 0.0
        %3210 = vmatpush1.xpose.msra.mxu0 0.0
        %3211 = vmatprep.subr.mxu0 0.0
        %3212 = vmatpush1.xpose.msra.mxu0 0.0
        %3213 = vmatprep.subr.mxu0 0.0
        %3214 = vmatpush1.xpose.msra.mxu0 0.0
        %3215 = vmatprep.subr.mxu0 0.0
        %3216 = vmatpush1.xpose.msra.mxu0 0.0
        %3217 = vmatprep.subr.mxu0 0.0
        %3218 = vmatpush1.xpose.msra.mxu0 0.0
        %3219 = vmatprep.subr.mxu0 0.0
        %3220 = vmatpush1.xpose.msra.mxu0 %v3187
        %3221 = vmatprep.subr.mxu0 0.0
        %3222 = vmatpush2.xpose.msra.mxu0 0.0
        %3223 = vmatprep.subr.mxu0 0.0
        %3224 = vmatpush2.xpose.msra.mxu0 0.0
        %3225 = vmatprep.subr.mxu0 0.0
        %3226 = vmatpush2.xpose.msra.mxu0 0.0
        %3227 = vmatprep.subr.mxu0 0.0
        %3228 = vmatpush2.xpose.msra.mxu0 0.0
        %3229 = vmatprep.subr.mxu0 0.0
        %3230 = vmatpush2.xpose.msra.mxu0 0.0
        %3231 = vmatprep.subr.mxu0 0.0
        %3232 = vmatpush2.xpose.msra.mxu0 0.0
        %3233 = vmatprep.subr.mxu0 0.0
        %3234 = vmatpush2.xpose.msra.mxu0 0.0
        %3235 = vmatprep.subr.mxu0 0.0
        %3236 = vmatpush2.xpose.msra.mxu0 0.0
        %3237 = vmatprep.subr.mxu0 0.0
        %3238 = vmatpush2.xpose.msra.mxu0 0.0
        %3239 = vmatprep.subr.mxu0 0.0
        %3240 = vmatpush2.xpose.msra.mxu0 0.0
        %3241 = vmatprep.subr.mxu0 0.0
        %3242 = vmatpush2.xpose.msra.mxu0 0.0
        %3243 = vmatprep.subr.mxu0 0.0
        %3244 = vmatpush2.xpose.msra.mxu0 0.0
        %3245 = vmatprep.subr.mxu0 0.0
        %3246 = vmatpush2.xpose.msra.mxu0 0.0
        %3247 = vmatprep.subr.mxu0 0.0
        %3248 = vmatpush2.xpose.msra.mxu0 0.0
        %3249 = vmatprep.subr.mxu0 0.0
        %3250 = vmatpush2.xpose.msra.mxu0 0.0
        %3251 = vmatprep.subr.mxu0 0.0
        %3252 = vmatpush2.xpose.msra.mxu0 0.0
        %3253 = vmatprep.mubr.f32.mxu0 0.0
        %3254 = vmatmul.mubr.f32.gmra.mxu0 %v2543
        %v3255 = vpop.f32.mrf.mxu0
        %v3256 = vadd.f32 0.0, %v3255
        %v3257 = vpop.f32.mrf.mxu0
        %3258 = vdwg.mxu0
        %v3260 = vsel %vm1563, %v1261, 0
        %3262 = vmatprep.subr.mxu0 0.0
        %3263 = vmatpush1.xpose.msra.mxu0 0.0
        %3264 = vmatprep.subr.mxu0 0.0
        %3265 = vmatpush1.xpose.msra.mxu0 0.0
        %3266 = vmatprep.subr.mxu0 0.0
        %3267 = vmatpush1.xpose.msra.mxu0 0.0
        %3268 = vmatprep.subr.mxu0 0.0
        %3269 = vmatpush1.xpose.msra.mxu0 0.0
        %3270 = vmatprep.subr.mxu0 0.0
        %3271 = vmatpush1.xpose.msra.mxu0 0.0
        %3272 = vmatprep.subr.mxu0 0.0
        %3273 = vmatpush1.xpose.msra.mxu0 0.0
        %3274 = vmatprep.subr.mxu0 0.0
        %3275 = vmatpush1.xpose.msra.mxu0 0.0
        %3276 = vmatprep.subr.mxu0 0.0
        %3277 = vmatpush1.xpose.msra.mxu0 0.0
        %3278 = vmatprep.subr.mxu0 0.0
        %3279 = vmatpush1.xpose.msra.mxu0 0.0
        %3280 = vmatprep.subr.mxu0 0.0
        %3281 = vmatpush1.xpose.msra.mxu0 0.0
        %3282 = vmatprep.subr.mxu0 0.0
        %3283 = vmatpush1.xpose.msra.mxu0 0.0
        %3284 = vmatprep.subr.mxu0 0.0
        %3285 = vmatpush1.xpose.msra.mxu0 0.0
        %3286 = vmatprep.subr.mxu0 0.0
        %3287 = vmatpush1.xpose.msra.mxu0 0.0
        %3288 = vmatprep.subr.mxu0 0.0
        %3289 = vmatpush1.xpose.msra.mxu0 0.0
        %3290 = vmatprep.subr.mxu0 0.0
        %3291 = vmatpush1.xpose.msra.mxu0 0.0
        %3292 = vmatprep.subr.mxu0 0.0
        %3293 = vmatpush1.xpose.msra.mxu0 %v3260
        %3294 = vmatprep.subr.mxu0 0.0
        %3295 = vmatpush2.xpose.msra.mxu0 0.0
        %3296 = vmatprep.subr.mxu0 0.0
        %3297 = vmatpush2.xpose.msra.mxu0 0.0
        %3298 = vmatprep.subr.mxu0 0.0
        %3299 = vmatpush2.xpose.msra.mxu0 0.0
        %3300 = vmatprep.subr.mxu0 0.0
        %3301 = vmatpush2.xpose.msra.mxu0 0.0
        %3302 = vmatprep.subr.mxu0 0.0
        %3303 = vmatpush2.xpose.msra.mxu0 0.0
        %3304 = vmatprep.subr.mxu0 0.0
        %3305 = vmatpush2.xpose.msra.mxu0 0.0
        %3306 = vmatprep.subr.mxu0 0.0
        %3307 = vmatpush2.xpose.msra.mxu0 0.0
        %3308 = vmatprep.subr.mxu0 0.0
        %3309 = vmatpush2.xpose.msra.mxu0 0.0
        %3310 = vmatprep.subr.mxu0 0.0
        %3311 = vmatpush2.xpose.msra.mxu0 0.0
        %3312 = vmatprep.subr.mxu0 0.0
        %3313 = vmatpush2.xpose.msra.mxu0 0.0
        %3314 = vmatprep.subr.mxu0 0.0
        %3315 = vmatpush2.xpose.msra.mxu0 0.0
        %3316 = vmatprep.subr.mxu0 0.0
        %3317 = vmatpush2.xpose.msra.mxu0 0.0
        %3318 = vmatprep.subr.mxu0 0.0
        %3319 = vmatpush2.xpose.msra.mxu0 0.0
        %3320 = vmatprep.subr.mxu0 0.0
        %3321 = vmatpush2.xpose.msra.mxu0 0.0
        %3322 = vmatprep.subr.mxu0 0.0
        %3323 = vmatpush2.xpose.msra.mxu0 0.0
        %3324 = vmatprep.subr.mxu0 0.0
        %3325 = vmatpush2.xpose.msra.mxu0 0.0
        %3326 = vmatprep.mubr.f32.mxu0 0.0
        %3327 = vmatmul.mubr.f32.gmra.mxu0 %v2616
        %v3328 = vpop.f32.mrf.mxu0
        %v3329 = vadd.f32 0.0, %v3328
        %v3330 = vpop.f32.mrf.mxu0
        %3331 = vdwg.mxu0
        %v3333 = vsel %vm1563, %v1262, 0
        %3335 = vmatprep.subr.mxu0 0.0
        %3336 = vmatpush1.xpose.msra.mxu0 0.0
        %3337 = vmatprep.subr.mxu0 0.0
        %3338 = vmatpush1.xpose.msra.mxu0 0.0
        %3339 = vmatprep.subr.mxu0 0.0
        %3340 = vmatpush1.xpose.msra.mxu0 0.0
        %3341 = vmatprep.subr.mxu0 0.0
        %3342 = vmatpush1.xpose.msra.mxu0 0.0
        %3343 = vmatprep.subr.mxu0 0.0
        %3344 = vmatpush1.xpose.msra.mxu0 0.0
        %3345 = vmatprep.subr.mxu0 0.0
        %3346 = vmatpush1.xpose.msra.mxu0 0.0
        %3347 = vmatprep.subr.mxu0 0.0
        %3348 = vmatpush1.xpose.msra.mxu0 0.0
        %3349 = vmatprep.subr.mxu0 0.0
        %3350 = vmatpush1.xpose.msra.mxu0 0.0
        %3351 = vmatprep.subr.mxu0 0.0
        %3352 = vmatpush1.xpose.msra.mxu0 0.0
        %3353 = vmatprep.subr.mxu0 0.0
        %3354 = vmatpush1.xpose.msra.mxu0 0.0
        %3355 = vmatprep.subr.mxu0 0.0
        %3356 = vmatpush1.xpose.msra.mxu0 0.0
        %3357 = vmatprep.subr.mxu0 0.0
        %3358 = vmatpush1.xpose.msra.mxu0 0.0
        %3359 = vmatprep.subr.mxu0 0.0
        %3360 = vmatpush1.xpose.msra.mxu0 0.0
        %3361 = vmatprep.subr.mxu0 0.0
        %3362 = vmatpush1.xpose.msra.mxu0 0.0
        %3363 = vmatprep.subr.mxu0 0.0
        %3364 = vmatpush1.xpose.msra.mxu0 0.0
        %3365 = vmatprep.subr.mxu0 0.0
        %3366 = vmatpush1.xpose.msra.mxu0 %v3333
        %3367 = vmatprep.subr.mxu0 0.0
        %3368 = vmatpush2.xpose.msra.mxu0 0.0
        %3369 = vmatprep.subr.mxu0 0.0
        %3370 = vmatpush2.xpose.msra.mxu0 0.0
        %3371 = vmatprep.subr.mxu0 0.0
        %3372 = vmatpush2.xpose.msra.mxu0 0.0
        %3373 = vmatprep.subr.mxu0 0.0
        %3374 = vmatpush2.xpose.msra.mxu0 0.0
        %3375 = vmatprep.subr.mxu0 0.0
        %3376 = vmatpush2.xpose.msra.mxu0 0.0
        %3377 = vmatprep.subr.mxu0 0.0
        %3378 = vmatpush2.xpose.msra.mxu0 0.0
        %3379 = vmatprep.subr.mxu0 0.0
        %3380 = vmatpush2.xpose.msra.mxu0 0.0
        %3381 = vmatprep.subr.mxu0 0.0
        %3382 = vmatpush2.xpose.msra.mxu0 0.0
        %3383 = vmatprep.subr.mxu0 0.0
        %3384 = vmatpush2.xpose.msra.mxu0 0.0
        %3385 = vmatprep.subr.mxu0 0.0
        %3386 = vmatpush2.xpose.msra.mxu0 0.0
        %3387 = vmatprep.subr.mxu0 0.0
        %3388 = vmatpush2.xpose.msra.mxu0 0.0
        %3389 = vmatprep.subr.mxu0 0.0
        %3390 = vmatpush2.xpose.msra.mxu0 0.0
        %3391 = vmatprep.subr.mxu0 0.0
        %3392 = vmatpush2.xpose.msra.mxu0 0.0
        %3393 = vmatprep.subr.mxu0 0.0
        %3394 = vmatpush2.xpose.msra.mxu0 0.0
        %3395 = vmatprep.subr.mxu0 0.0
        %3396 = vmatpush2.xpose.msra.mxu0 0.0
        %3397 = vmatprep.subr.mxu0 0.0
        %3398 = vmatpush2.xpose.msra.mxu0 0.0
        %3399 = vmatprep.mubr.f32.mxu0 0.0
        %3400 = vmatmul.mubr.f32.gmra.mxu0 %v2689
        %v3401 = vpop.f32.mrf.mxu0
        %v3402 = vadd.f32 0.0, %v3401
        %v3403 = vpop.f32.mrf.mxu0
        %3404 = vdwg.mxu0
        %v3406 = vsel %vm1563, %v1263, 0
        %3408 = vmatprep.subr.mxu0 0.0
        %3409 = vmatpush1.xpose.msra.mxu0 0.0
        %3410 = vmatprep.subr.mxu0 0.0
        %3411 = vmatpush1.xpose.msra.mxu0 0.0
        %3412 = vmatprep.subr.mxu0 0.0
        %3413 = vmatpush1.xpose.msra.mxu0 0.0
        %3414 = vmatprep.subr.mxu0 0.0
        %3415 = vmatpush1.xpose.msra.mxu0 0.0
        %3416 = vmatprep.subr.mxu0 0.0
        %3417 = vmatpush1.xpose.msra.mxu0 0.0
        %3418 = vmatprep.subr.mxu0 0.0
        %3419 = vmatpush1.xpose.msra.mxu0 0.0
        %3420 = vmatprep.subr.mxu0 0.0
        %3421 = vmatpush1.xpose.msra.mxu0 0.0
        %3422 = vmatprep.subr.mxu0 0.0
        %3423 = vmatpush1.xpose.msra.mxu0 0.0
        %3424 = vmatprep.subr.mxu0 0.0
        %3425 = vmatpush1.xpose.msra.mxu0 0.0
        %3426 = vmatprep.subr.mxu0 0.0
        %3427 = vmatpush1.xpose.msra.mxu0 0.0
        %3428 = vmatprep.subr.mxu0 0.0
        %3429 = vmatpush1.xpose.msra.mxu0 0.0
        %3430 = vmatprep.subr.mxu0 0.0
        %3431 = vmatpush1.xpose.msra.mxu0 0.0
        %3432 = vmatprep.subr.mxu0 0.0
        %3433 = vmatpush1.xpose.msra.mxu0 0.0
        %3434 = vmatprep.subr.mxu0 0.0
        %3435 = vmatpush1.xpose.msra.mxu0 0.0
        %3436 = vmatprep.subr.mxu0 0.0
        %3437 = vmatpush1.xpose.msra.mxu0 0.0
        %3438 = vmatprep.subr.mxu0 0.0
        %3439 = vmatpush1.xpose.msra.mxu0 %v3406
        %3440 = vmatprep.subr.mxu0 0.0
        %3441 = vmatpush2.xpose.msra.mxu0 0.0
        %3442 = vmatprep.subr.mxu0 0.0
        %3443 = vmatpush2.xpose.msra.mxu0 0.0
        %3444 = vmatprep.subr.mxu0 0.0
        %3445 = vmatpush2.xpose.msra.mxu0 0.0
        %3446 = vmatprep.subr.mxu0 0.0
        %3447 = vmatpush2.xpose.msra.mxu0 0.0
        %3448 = vmatprep.subr.mxu0 0.0
        %3449 = vmatpush2.xpose.msra.mxu0 0.0
        %3450 = vmatprep.subr.mxu0 0.0
        %3451 = vmatpush2.xpose.msra.mxu0 0.0
        %3452 = vmatprep.subr.mxu0 0.0
        %3453 = vmatpush2.xpose.msra.mxu0 0.0
        %3454 = vmatprep.subr.mxu0 0.0
        %3455 = vmatpush2.xpose.msra.mxu0 0.0
        %3456 = vmatprep.subr.mxu0 0.0
        %3457 = vmatpush2.xpose.msra.mxu0 0.0
        %3458 = vmatprep.subr.mxu0 0.0
        %3459 = vmatpush2.xpose.msra.mxu0 0.0
        %3460 = vmatprep.subr.mxu0 0.0
        %3461 = vmatpush2.xpose.msra.mxu0 0.0
        %3462 = vmatprep.subr.mxu0 0.0
        %3463 = vmatpush2.xpose.msra.mxu0 0.0
        %3464 = vmatprep.subr.mxu0 0.0
        %3465 = vmatpush2.xpose.msra.mxu0 0.0
        %3466 = vmatprep.subr.mxu0 0.0
        %3467 = vmatpush2.xpose.msra.mxu0 0.0
        %3468 = vmatprep.subr.mxu0 0.0
        %3469 = vmatpush2.xpose.msra.mxu0 0.0
        %3470 = vmatprep.subr.mxu0 0.0
        %3471 = vmatpush2.xpose.msra.mxu0 0.0
        %3472 = vmatprep.mubr.f32.mxu0 0.0
        %3473 = vmatmul.mubr.f32.gmra.mxu0 %v2762
        %v3474 = vpop.f32.mrf.mxu0
        %v3475 = vadd.f32 0.0, %v3474
        %v3476 = vpop.f32.mrf.mxu0
        %3477 = vdwg.mxu0
        %v3478 = vadd.s32 %v1869, 8
        %v3479 = vadd.s32 %v1871, 8
        %vm3480 = vcmp.ge.s32.totalorder %v3478, %v3479
        %v3481 = vsel %vm3480, 1, 0
        %vm3482 = vcmp.eq.s32.totalorder %v3481, 1
        %v3483 = vsel %vm3482, %v3256, -1e+09
        %v3484 = vsel %vm3482, %v3329, -1e+09
        %v3485 = vsel %vm3482, %v3402, -1e+09
        %v3486 = vsel %vm3482, %v3475, -1e+09
        %v3487 = vsel %vm1563, %v3483, -inf
        %3488 = vmax.xlane.f32.xlu0 %v3487
        %v3489 = vpop.xlane.xlu0 %3488
        %v3490 = vsel %vm1563, %v3484, -inf
        %3491 = vmax.xlane.f32.xlu0 %v3490
        %v3492 = vpop.xlane.xlu0 %3491
        %v3493 = vsel %vm1563, %v3485, -inf
        %3494 = vmax.xlane.f32.xlu0 %v3493
        %v3495 = vpop.xlane.xlu0 %3494
        %v3496 = vsel %vm1563, %v3486, -inf
        %3497 = vmax.xlane.f32.xlu0 %v3496
        %v3498 = vpop.xlane.xlu0 %3497
        %v3499 = vmax.f32 %v2836, %v3489
        %v3500 = vmax.f32 %v2839, %v3492
        %v3501 = vmax.f32 %v2842, %v3495
        %v3502 = vmax.f32 %v2845, %v3498
        %v3503 = vsub.f32 %v2836, %v3499
        %v3504 = vsub.f32 %v2839, %v3500
        %v3505 = vsub.f32 %v2842, %v3501
        %v3506 = vsub.f32 %v2845, %v3502
        %v3507 = vmul.f32 %v3503, 1.442695
        %v3508 = vpow.pop %v3507
        %v3509 = vmul.f32 %v3504, 1.442695
        %v3510 = vpow.pop %v3509
        %v3511 = vmul.f32 %v3505, 1.442695
        %v3512 = vpow.pop %v3511
        %v3513 = vmul.f32 %v3506, 1.442695
        %v3514 = vpow.pop %v3513
        %v3515 = vsub.f32 %v3483, %v3499
        %v3516 = vsub.f32 %v3484, %v3500
        %v3517 = vsub.f32 %v3485, %v3501
        %v3518 = vsub.f32 %v3486, %v3502
        %v3519 = vmul.f32 %v3515, 1.442695
        %v3520 = vpow.pop %v3519
        %v3521 = vmul.f32 %v3516, 1.442695
        %v3522 = vpow.pop %v3521
        %v3523 = vmul.f32 %v3517, 1.442695
        %v3524 = vpow.pop %v3523
        %v3525 = vmul.f32 %v3518, 1.442695
        %v3526 = vpow.pop %v3525
        %v3527 = vmul.f32 %v3508, %v2886
        %v3528 = vmul.f32 %v3510, %v2887
        %v3529 = vmul.f32 %v3512, %v2888
        %v3530 = vmul.f32 %v3514, %v2889
        %v3531 = vsel %vm1563, %v3520, 0.0
        %3532 = vadd.xlane.f32.xlu0 %v3531
        %v3533 = vpop.xlane.xlu0 %3532
        %v3534 = vsel %vm1563, %v3522, 0.0
        %3535 = vadd.xlane.f32.xlu0 %v3534
        %v3536 = vpop.xlane.xlu0 %3535
        %v3537 = vsel %vm1563, %v3524, 0.0
        %3538 = vadd.xlane.f32.xlu0 %v3537
        %v3539 = vpop.xlane.xlu0 %3538
        %v3540 = vsel %vm1563, %v3526, 0.0
        %3541 = vadd.xlane.f32.xlu0 %v3540
        %v3542 = vpop.xlane.xlu0 %3541
        %v3543 = vadd.f32 %v3527, %v3533
        %v3544 = vadd.f32 %v3528, %v3536
        %v3545 = vadd.f32 %v3529, %v3539
        %v3546 = vadd.f32 %v3530, %v3542
        %v3547 = vmul.f32 %v3508, %v3182
        %v3548 = vmul.f32 %v3510, %v3183
        %v3549 = vmul.f32 %v3512, %v3184
        %v3550 = vmul.f32 %v3514, %v3185
        %v3552 = vsel %vm1563, %v3520, 0
        %3554 = vmatprep.subr.mxu0 0.0
        %3555 = vmatpush1.msra.mxu0 0.0
        %3556 = vmatprep.subr.mxu0 0.0
        %3557 = vmatpush1.msra.mxu0 0.0
        %3558 = vmatprep.subr.mxu0 0.0
        %3559 = vmatpush1.msra.mxu0 0.0
        %3560 = vmatprep.subr.mxu0 0.0
        %3561 = vmatpush1.msra.mxu0 0.0
        %3562 = vmatprep.subr.mxu0 0.0
        %3563 = vmatpush1.msra.mxu0 0.0
        %3564 = vmatprep.subr.mxu0 0.0
        %3565 = vmatpush1.msra.mxu0 0.0
        %3566 = vmatprep.subr.mxu0 0.0
        %3567 = vmatpush1.msra.mxu0 0.0
        %3568 = vmatprep.subr.mxu0 0.0
        %3569 = vmatpush1.msra.mxu0 0.0
        %3570 = vmatprep.subr.mxu0 0.0
        %3571 = vmatpush1.msra.mxu0 0.0
        %3572 = vmatprep.subr.mxu0 0.0
        %3573 = vmatpush1.msra.mxu0 0.0
        %3574 = vmatprep.subr.mxu0 0.0
        %3575 = vmatpush1.msra.mxu0 0.0
        %3576 = vmatprep.subr.mxu0 0.0
        %3577 = vmatpush1.msra.mxu0 0.0
        %3578 = vmatprep.subr.mxu0 0.0
        %3579 = vmatpush1.msra.mxu0 0.0
        %3580 = vmatprep.subr.mxu0 0.0
        %3581 = vmatpush1.msra.mxu0 0.0
        %3582 = vmatprep.subr.mxu0 0.0
        %3583 = vmatpush1.msra.mxu0 0.0
        %3584 = vmatprep.subr.mxu0 0.0
        %3585 = vmatpush1.msra.mxu0 %v1550
        %3586 = vmatprep.subr.mxu0 0.0
        %3587 = vmatpush2.msra.mxu0 0.0
        %3588 = vmatprep.subr.mxu0 0.0
        %3589 = vmatpush2.msra.mxu0 0.0
        %3590 = vmatprep.subr.mxu0 0.0
        %3591 = vmatpush2.msra.mxu0 0.0
        %3592 = vmatprep.subr.mxu0 0.0
        %3593 = vmatpush2.msra.mxu0 0.0
        %3594 = vmatprep.subr.mxu0 0.0
        %3595 = vmatpush2.msra.mxu0 0.0
        %3596 = vmatprep.subr.mxu0 0.0
        %3597 = vmatpush2.msra.mxu0 0.0
        %3598 = vmatprep.subr.mxu0 0.0
        %3599 = vmatpush2.msra.mxu0 0.0
        %3600 = vmatprep.subr.mxu0 0.0
        %3601 = vmatpush2.msra.mxu0 0.0
        %3602 = vmatprep.subr.mxu0 0.0
        %3603 = vmatpush2.msra.mxu0 0.0
        %3604 = vmatprep.subr.mxu0 0.0
        %3605 = vmatpush2.msra.mxu0 0.0
        %3606 = vmatprep.subr.mxu0 0.0
        %3607 = vmatpush2.msra.mxu0 0.0
        %3608 = vmatprep.subr.mxu0 0.0
        %3609 = vmatpush2.msra.mxu0 0.0
        %3610 = vmatprep.subr.mxu0 0.0
        %3611 = vmatpush2.msra.mxu0 0.0
        %3612 = vmatprep.subr.mxu0 0.0
        %3613 = vmatpush2.msra.mxu0 0.0
        %3614 = vmatprep.subr.mxu0 0.0
        %3615 = vmatpush2.msra.mxu0 0.0
        %3616 = vmatprep.subr.mxu0 0.0
        %3617 = vmatpush2.msra.mxu0 0.0
        %3618 = vmatprep.mubr.f32.mxu0 0.0
        %3619 = vmatmul.mubr.f32.gmra.mxu0 %v3552
        %v3620 = vpop.f32.mrf.mxu0
        %v3621 = vadd.f32 0.0, %v3620
        %v3622 = vpop.f32.mrf.mxu0
        %3623 = vdwg.mxu0
        %v3625 = vsel %vm1563, %v3522, 0
        %3627 = vmatprep.subr.mxu0 0.0
        %3628 = vmatpush1.msra.mxu0 0.0
        %3629 = vmatprep.subr.mxu0 0.0
        %3630 = vmatpush1.msra.mxu0 0.0
        %3631 = vmatprep.subr.mxu0 0.0
        %3632 = vmatpush1.msra.mxu0 0.0
        %3633 = vmatprep.subr.mxu0 0.0
        %3634 = vmatpush1.msra.mxu0 0.0
        %3635 = vmatprep.subr.mxu0 0.0
        %3636 = vmatpush1.msra.mxu0 0.0
        %3637 = vmatprep.subr.mxu0 0.0
        %3638 = vmatpush1.msra.mxu0 0.0
        %3639 = vmatprep.subr.mxu0 0.0
        %3640 = vmatpush1.msra.mxu0 0.0
        %3641 = vmatprep.subr.mxu0 0.0
        %3642 = vmatpush1.msra.mxu0 0.0
        %3643 = vmatprep.subr.mxu0 0.0
        %3644 = vmatpush1.msra.mxu0 0.0
        %3645 = vmatprep.subr.mxu0 0.0
        %3646 = vmatpush1.msra.mxu0 0.0
        %3647 = vmatprep.subr.mxu0 0.0
        %3648 = vmatpush1.msra.mxu0 0.0
        %3649 = vmatprep.subr.mxu0 0.0
        %3650 = vmatpush1.msra.mxu0 0.0
        %3651 = vmatprep.subr.mxu0 0.0
        %3652 = vmatpush1.msra.mxu0 0.0
        %3653 = vmatprep.subr.mxu0 0.0
        %3654 = vmatpush1.msra.mxu0 0.0
        %3655 = vmatprep.subr.mxu0 0.0
        %3656 = vmatpush1.msra.mxu0 0.0
        %3657 = vmatprep.subr.mxu0 0.0
        %3658 = vmatpush1.msra.mxu0 %v1551
        %3659 = vmatprep.subr.mxu0 0.0
        %3660 = vmatpush2.msra.mxu0 0.0
        %3661 = vmatprep.subr.mxu0 0.0
        %3662 = vmatpush2.msra.mxu0 0.0
        %3663 = vmatprep.subr.mxu0 0.0
        %3664 = vmatpush2.msra.mxu0 0.0
        %3665 = vmatprep.subr.mxu0 0.0
        %3666 = vmatpush2.msra.mxu0 0.0
        %3667 = vmatprep.subr.mxu0 0.0
        %3668 = vmatpush2.msra.mxu0 0.0
        %3669 = vmatprep.subr.mxu0 0.0
        %3670 = vmatpush2.msra.mxu0 0.0
        %3671 = vmatprep.subr.mxu0 0.0
        %3672 = vmatpush2.msra.mxu0 0.0
        %3673 = vmatprep.subr.mxu0 0.0
        %3674 = vmatpush2.msra.mxu0 0.0
        %3675 = vmatprep.subr.mxu0 0.0
        %3676 = vmatpush2.msra.mxu0 0.0
        %3677 = vmatprep.subr.mxu0 0.0
        %3678 = vmatpush2.msra.mxu0 0.0
        %3679 = vmatprep.subr.mxu0 0.0
        %3680 = vmatpush2.msra.mxu0 0.0
        %3681 = vmatprep.subr.mxu0 0.0
        %3682 = vmatpush2.msra.mxu0 0.0
        %3683 = vmatprep.subr.mxu0 0.0
        %3684 = vmatpush2.msra.mxu0 0.0
        %3685 = vmatprep.subr.mxu0 0.0
        %3686 = vmatpush2.msra.mxu0 0.0
        %3687 = vmatprep.subr.mxu0 0.0
        %3688 = vmatpush2.msra.mxu0 0.0
        %3689 = vmatprep.subr.mxu0 0.0
        %3690 = vmatpush2.msra.mxu0 0.0
        %3691 = vmatprep.mubr.f32.mxu0 0.0
        %3692 = vmatmul.mubr.f32.gmra.mxu0 %v3625
        %v3693 = vpop.f32.mrf.mxu0
        %v3694 = vadd.f32 0.0, %v3693
        %v3695 = vpop.f32.mrf.mxu0
        %3696 = vdwg.mxu0
        %v3698 = vsel %vm1563, %v3524, 0
        %3700 = vmatprep.subr.mxu0 0.0
        %3701 = vmatpush1.msra.mxu0 0.0
        %3702 = vmatprep.subr.mxu0 0.0
        %3703 = vmatpush1.msra.mxu0 0.0
        %3704 = vmatprep.subr.mxu0 0.0
        %3705 = vmatpush1.msra.mxu0 0.0
        %3706 = vmatprep.subr.mxu0 0.0
        %3707 = vmatpush1.msra.mxu0 0.0
        %3708 = vmatprep.subr.mxu0 0.0
        %3709 = vmatpush1.msra.mxu0 0.0
        %3710 = vmatprep.subr.mxu0 0.0
        %3711 = vmatpush1.msra.mxu0 0.0
        %3712 = vmatprep.subr.mxu0 0.0
        %3713 = vmatpush1.msra.mxu0 0.0
        %3714 = vmatprep.subr.mxu0 0.0
        %3715 = vmatpush1.msra.mxu0 0.0
        %3716 = vmatprep.subr.mxu0 0.0
        %3717 = vmatpush1.msra.mxu0 0.0
        %3718 = vmatprep.subr.mxu0 0.0
        %3719 = vmatpush1.msra.mxu0 0.0
        %3720 = vmatprep.subr.mxu0 0.0
        %3721 = vmatpush1.msra.mxu0 0.0
        %3722 = vmatprep.subr.mxu0 0.0
        %3723 = vmatpush1.msra.mxu0 0.0
        %3724 = vmatprep.subr.mxu0 0.0
        %3725 = vmatpush1.msra.mxu0 0.0
        %3726 = vmatprep.subr.mxu0 0.0
        %3727 = vmatpush1.msra.mxu0 0.0
        %3728 = vmatprep.subr.mxu0 0.0
        %3729 = vmatpush1.msra.mxu0 0.0
        %3730 = vmatprep.subr.mxu0 0.0
        %3731 = vmatpush1.msra.mxu0 %v1552
        %3732 = vmatprep.subr.mxu0 0.0
        %3733 = vmatpush2.msra.mxu0 0.0
        %3734 = vmatprep.subr.mxu0 0.0
        %3735 = vmatpush2.msra.mxu0 0.0
        %3736 = vmatprep.subr.mxu0 0.0
        %3737 = vmatpush2.msra.mxu0 0.0
        %3738 = vmatprep.subr.mxu0 0.0
        %3739 = vmatpush2.msra.mxu0 0.0
        %3740 = vmatprep.subr.mxu0 0.0
        %3741 = vmatpush2.msra.mxu0 0.0
        %3742 = vmatprep.subr.mxu0 0.0
        %3743 = vmatpush2.msra.mxu0 0.0
        %3744 = vmatprep.subr.mxu0 0.0
        %3745 = vmatpush2.msra.mxu0 0.0
        %3746 = vmatprep.subr.mxu0 0.0
        %3747 = vmatpush2.msra.mxu0 0.0
        %3748 = vmatprep.subr.mxu0 0.0
        %3749 = vmatpush2.msra.mxu0 0.0
        %3750 = vmatprep.subr.mxu0 0.0
        %3751 = vmatpush2.msra.mxu0 0.0
        %3752 = vmatprep.subr.mxu0 0.0
        %3753 = vmatpush2.msra.mxu0 0.0
        %3754 = vmatprep.subr.mxu0 0.0
        %3755 = vmatpush2.msra.mxu0 0.0
        %3756 = vmatprep.subr.mxu0 0.0
        %3757 = vmatpush2.msra.mxu0 0.0
        %3758 = vmatprep.subr.mxu0 0.0
        %3759 = vmatpush2.msra.mxu0 0.0
        %3760 = vmatprep.subr.mxu0 0.0
        %3761 = vmatpush2.msra.mxu0 0.0
        %3762 = vmatprep.subr.mxu0 0.0
        %3763 = vmatpush2.msra.mxu0 0.0
        %3764 = vmatprep.mubr.f32.mxu0 0.0
        %3765 = vmatmul.mubr.f32.gmra.mxu0 %v3698
        %v3766 = vpop.f32.mrf.mxu0
        %v3767 = vadd.f32 0.0, %v3766
        %v3768 = vpop.f32.mrf.mxu0
        %3769 = vdwg.mxu0
        %v3771 = vsel %vm1563, %v3526, 0
        %3773 = vmatprep.subr.mxu0 0.0
        %3774 = vmatpush1.msra.mxu0 0.0
        %3775 = vmatprep.subr.mxu0 0.0
        %3776 = vmatpush1.msra.mxu0 0.0
        %3777 = vmatprep.subr.mxu0 0.0
        %3778 = vmatpush1.msra.mxu0 0.0
        %3779 = vmatprep.subr.mxu0 0.0
        %3780 = vmatpush1.msra.mxu0 0.0
        %3781 = vmatprep.subr.mxu0 0.0
        %3782 = vmatpush1.msra.mxu0 0.0
        %3783 = vmatprep.subr.mxu0 0.0
        %3784 = vmatpush1.msra.mxu0 0.0
        %3785 = vmatprep.subr.mxu0 0.0
        %3786 = vmatpush1.msra.mxu0 0.0
        %3787 = vmatprep.subr.mxu0 0.0
        %3788 = vmatpush1.msra.mxu0 0.0
        %3789 = vmatprep.subr.mxu0 0.0
        %3790 = vmatpush1.msra.mxu0 0.0
        %3791 = vmatprep.subr.mxu0 0.0
        %3792 = vmatpush1.msra.mxu0 0.0
        %3793 = vmatprep.subr.mxu0 0.0
        %3794 = vmatpush1.msra.mxu0 0.0
        %3795 = vmatprep.subr.mxu0 0.0
        %3796 = vmatpush1.msra.mxu0 0.0
        %3797 = vmatprep.subr.mxu0 0.0
        %3798 = vmatpush1.msra.mxu0 0.0
        %3799 = vmatprep.subr.mxu0 0.0
        %3800 = vmatpush1.msra.mxu0 0.0
        %3801 = vmatprep.subr.mxu0 0.0
        %3802 = vmatpush1.msra.mxu0 0.0
        %3803 = vmatprep.subr.mxu0 0.0
        %3804 = vmatpush1.msra.mxu0 %v1553
        %3805 = vmatprep.subr.mxu0 0.0
        %3806 = vmatpush2.msra.mxu0 0.0
        %3807 = vmatprep.subr.mxu0 0.0
        %3808 = vmatpush2.msra.mxu0 0.0
        %3809 = vmatprep.subr.mxu0 0.0
        %3810 = vmatpush2.msra.mxu0 0.0
        %3811 = vmatprep.subr.mxu0 0.0
        %3812 = vmatpush2.msra.mxu0 0.0
        %3813 = vmatprep.subr.mxu0 0.0
        %3814 = vmatpush2.msra.mxu0 0.0
        %3815 = vmatprep.subr.mxu0 0.0
        %3816 = vmatpush2.msra.mxu0 0.0
        %3817 = vmatprep.subr.mxu0 0.0
        %3818 = vmatpush2.msra.mxu0 0.0
        %3819 = vmatprep.subr.mxu0 0.0
        %3820 = vmatpush2.msra.mxu0 0.0
        %3821 = vmatprep.subr.mxu0 0.0
        %3822 = vmatpush2.msra.mxu0 0.0
        %3823 = vmatprep.subr.mxu0 0.0
        %3824 = vmatpush2.msra.mxu0 0.0
        %3825 = vmatprep.subr.mxu0 0.0
        %3826 = vmatpush2.msra.mxu0 0.0
        %3827 = vmatprep.subr.mxu0 0.0
        %3828 = vmatpush2.msra.mxu0 0.0
        %3829 = vmatprep.subr.mxu0 0.0
        %3830 = vmatpush2.msra.mxu0 0.0
        %3831 = vmatprep.subr.mxu0 0.0
        %3832 = vmatpush2.msra.mxu0 0.0
        %3833 = vmatprep.subr.mxu0 0.0
        %3834 = vmatpush2.msra.mxu0 0.0
        %3835 = vmatprep.subr.mxu0 0.0
        %3836 = vmatpush2.msra.mxu0 0.0
        %3837 = vmatprep.mubr.f32.mxu0 0.0
        %3838 = vmatmul.mubr.f32.gmra.mxu0 %v3771
        %v3839 = vpop.f32.mrf.mxu0
        %v3840 = vadd.f32 0.0, %v3839
        %v3841 = vpop.f32.mrf.mxu0
        %3842 = vdwg.mxu0
        %v3843 = vadd.f32 %v3547, %v3621
        %v3844 = vadd.f32 %v3548, %v3694
        %v3845 = vadd.f32 %v3549, %v3767
        %v3846 = vadd.f32 %v3550, %v3840
        %v3847 = vrcp.pop %v3543
        %v3848 = vmul.f32 %v3843, %v3847
        %v3849 = vrcp.pop %v3544
        %v3850 = vmul.f32 %v3844, %v3849
        %v3851 = vrcp.pop %v3545
        %v3852 = vmul.f32 %v3845, %v3851
        %v3853 = vrcp.pop %v3546
        %v3854 = vmul.f32 %v3846, %v3853
        %v3856 = vsel %vm1563, %v3848, 0
        %3858 = vmatprep.subr.mxu0 0.0
        %3859 = vmatpush1.msra.mxu0 0.0
        %3860 = vmatprep.subr.mxu0 0.0
        %3861 = vmatpush1.msra.mxu0 0.0
        %3862 = vmatprep.subr.mxu0 0.0
        %3863 = vmatpush1.msra.mxu0 0.0
        %3864 = vmatprep.subr.mxu0 0.0
        %3865 = vmatpush1.msra.mxu0 0.0
        %3866 = vmatprep.subr.mxu0 0.0
        %3867 = vmatpush1.msra.mxu0 0.0
        %3868 = vmatprep.subr.mxu0 0.0
        %3869 = vmatpush1.msra.mxu0 0.0
        %3870 = vmatprep.subr.mxu0 0.0
        %3871 = vmatpush1.msra.mxu0 0.0
        %3872 = vmatprep.subr.mxu0 0.0
        %3873 = vmatpush1.msra.mxu0 0.0
        %3874 = vmatprep.subr.mxu0 0.0
        %3875 = vmatpush1.msra.mxu0 0.0
        %3876 = vmatprep.subr.mxu0 0.0
        %3877 = vmatpush1.msra.mxu0 0.0
        %3878 = vmatprep.subr.mxu0 0.0
        %3879 = vmatpush1.msra.mxu0 0.0
        %3880 = vmatprep.subr.mxu0 0.0
        %3881 = vmatpush1.msra.mxu0 0.0
        %3882 = vmatprep.subr.mxu0 0.0
        %3883 = vmatpush1.msra.mxu0 0.0
        %3884 = vmatprep.subr.mxu0 0.0
        %3885 = vmatpush1.msra.mxu0 0.0
        %3886 = vmatprep.subr.mxu0 0.0
        %3887 = vmatpush1.msra.mxu0 0.0
        %3888 = vmatprep.subr.mxu0 0.0
        %3889 = vmatpush1.msra.mxu0 %v1554
        %3890 = vmatprep.subr.mxu0 0.0
        %3891 = vmatpush2.msra.mxu0 0.0
        %3892 = vmatprep.subr.mxu0 0.0
        %3893 = vmatpush2.msra.mxu0 0.0
        %3894 = vmatprep.subr.mxu0 0.0
        %3895 = vmatpush2.msra.mxu0 0.0
        %3896 = vmatprep.subr.mxu0 0.0
        %3897 = vmatpush2.msra.mxu0 0.0
        %3898 = vmatprep.subr.mxu0 0.0
        %3899 = vmatpush2.msra.mxu0 0.0
        %3900 = vmatprep.subr.mxu0 0.0
        %3901 = vmatpush2.msra.mxu0 0.0
        %3902 = vmatprep.subr.mxu0 0.0
        %3903 = vmatpush2.msra.mxu0 0.0
        %3904 = vmatprep.subr.mxu0 0.0
        %3905 = vmatpush2.msra.mxu0 0.0
        %3906 = vmatprep.subr.mxu0 0.0
        %3907 = vmatpush2.msra.mxu0 0.0
        %3908 = vmatprep.subr.mxu0 0.0
        %3909 = vmatpush2.msra.mxu0 0.0
        %3910 = vmatprep.subr.mxu0 0.0
        %3911 = vmatpush2.msra.mxu0 0.0
        %3912 = vmatprep.subr.mxu0 0.0
        %3913 = vmatpush2.msra.mxu0 0.0
        %3914 = vmatprep.subr.mxu0 0.0
        %3915 = vmatpush2.msra.mxu0 0.0
        %3916 = vmatprep.subr.mxu0 0.0
        %3917 = vmatpush2.msra.mxu0 0.0
        %3918 = vmatprep.subr.mxu0 0.0
        %3919 = vmatpush2.msra.mxu0 0.0
        %3920 = vmatprep.subr.mxu0 0.0
        %3921 = vmatpush2.msra.mxu0 0.0
        %3922 = vmatprep.mubr.f32.mxu0 0.0
        %3923 = vmatmul.mubr.f32.gmra.mxu0 %v3856
        %v3924 = vpop.f32.mrf.mxu0
        %v3925 = vadd.f32 0.0, %v3924
        %v3926 = vpop.f32.mrf.mxu0
        %3927 = vdwg.mxu0
        %v3929 = vsel %vm1563, %v3850, 0
        %3931 = vmatprep.subr.mxu0 0.0
        %3932 = vmatpush1.msra.mxu0 0.0
        %3933 = vmatprep.subr.mxu0 0.0
        %3934 = vmatpush1.msra.mxu0 0.0
        %3935 = vmatprep.subr.mxu0 0.0
        %3936 = vmatpush1.msra.mxu0 0.0
        %3937 = vmatprep.subr.mxu0 0.0
        %3938 = vmatpush1.msra.mxu0 0.0
        %3939 = vmatprep.subr.mxu0 0.0
        %3940 = vmatpush1.msra.mxu0 0.0
        %3941 = vmatprep.subr.mxu0 0.0
        %3942 = vmatpush1.msra.mxu0 0.0
        %3943 = vmatprep.subr.mxu0 0.0
        %3944 = vmatpush1.msra.mxu0 0.0
        %3945 = vmatprep.subr.mxu0 0.0
        %3946 = vmatpush1.msra.mxu0 0.0
        %3947 = vmatprep.subr.mxu0 0.0
        %3948 = vmatpush1.msra.mxu0 0.0
        %3949 = vmatprep.subr.mxu0 0.0
        %3950 = vmatpush1.msra.mxu0 0.0
        %3951 = vmatprep.subr.mxu0 0.0
        %3952 = vmatpush1.msra.mxu0 0.0
        %3953 = vmatprep.subr.mxu0 0.0
        %3954 = vmatpush1.msra.mxu0 0.0
        %3955 = vmatprep.subr.mxu0 0.0
        %3956 = vmatpush1.msra.mxu0 0.0
        %3957 = vmatprep.subr.mxu0 0.0
        %3958 = vmatpush1.msra.mxu0 0.0
        %3959 = vmatprep.subr.mxu0 0.0
        %3960 = vmatpush1.msra.mxu0 0.0
        %3961 = vmatprep.subr.mxu0 0.0
        %3962 = vmatpush1.msra.mxu0 %v1555
        %3963 = vmatprep.subr.mxu0 0.0
        %3964 = vmatpush2.msra.mxu0 0.0
        %3965 = vmatprep.subr.mxu0 0.0
        %3966 = vmatpush2.msra.mxu0 0.0
        %3967 = vmatprep.subr.mxu0 0.0
        %3968 = vmatpush2.msra.mxu0 0.0
        %3969 = vmatprep.subr.mxu0 0.0
        %3970 = vmatpush2.msra.mxu0 0.0
        %3971 = vmatprep.subr.mxu0 0.0
        %3972 = vmatpush2.msra.mxu0 0.0
        %3973 = vmatprep.subr.mxu0 0.0
        %3974 = vmatpush2.msra.mxu0 0.0
        %3975 = vmatprep.subr.mxu0 0.0
        %3976 = vmatpush2.msra.mxu0 0.0
        %3977 = vmatprep.subr.mxu0 0.0
        %3978 = vmatpush2.msra.mxu0 0.0
        %3979 = vmatprep.subr.mxu0 0.0
        %3980 = vmatpush2.msra.mxu0 0.0
        %3981 = vmatprep.subr.mxu0 0.0
        %3982 = vmatpush2.msra.mxu0 0.0
        %3983 = vmatprep.subr.mxu0 0.0
        %3984 = vmatpush2.msra.mxu0 0.0
        %3985 = vmatprep.subr.mxu0 0.0
        %3986 = vmatpush2.msra.mxu0 0.0
        %3987 = vmatprep.subr.mxu0 0.0
        %3988 = vmatpush2.msra.mxu0 0.0
        %3989 = vmatprep.subr.mxu0 0.0
        %3990 = vmatpush2.msra.mxu0 0.0
        %3991 = vmatprep.subr.mxu0 0.0
        %3992 = vmatpush2.msra.mxu0 0.0
        %3993 = vmatprep.subr.mxu0 0.0
        %3994 = vmatpush2.msra.mxu0 0.0
        %3995 = vmatprep.mubr.f32.mxu0 0.0
        %3996 = vmatmul.mubr.f32.gmra.mxu0 %v3929
        %v3997 = vpop.f32.mrf.mxu0
        %v3998 = vadd.f32 0.0, %v3997
        %v3999 = vpop.f32.mrf.mxu0
        %4000 = vdwg.mxu0
        %v4002 = vsel %vm1563, %v3852, 0
        %4004 = vmatprep.subr.mxu0 0.0
        %4005 = vmatpush1.msra.mxu0 0.0
        %4006 = vmatprep.subr.mxu0 0.0
        %4007 = vmatpush1.msra.mxu0 0.0
        %4008 = vmatprep.subr.mxu0 0.0
        %4009 = vmatpush1.msra.mxu0 0.0
        %4010 = vmatprep.subr.mxu0 0.0
        %4011 = vmatpush1.msra.mxu0 0.0
        %4012 = vmatprep.subr.mxu0 0.0
        %4013 = vmatpush1.msra.mxu0 0.0
        %4014 = vmatprep.subr.mxu0 0.0
        %4015 = vmatpush1.msra.mxu0 0.0
        %4016 = vmatprep.subr.mxu0 0.0
        %4017 = vmatpush1.msra.mxu0 0.0
        %4018 = vmatprep.subr.mxu0 0.0
        %4019 = vmatpush1.msra.mxu0 0.0
        %4020 = vmatprep.subr.mxu0 0.0
        %4021 = vmatpush1.msra.mxu0 0.0
        %4022 = vmatprep.subr.mxu0 0.0
        %4023 = vmatpush1.msra.mxu0 0.0
        %4024 = vmatprep.subr.mxu0 0.0
        %4025 = vmatpush1.msra.mxu0 0.0
        %4026 = vmatprep.subr.mxu0 0.0
        %4027 = vmatpush1.msra.mxu0 0.0
        %4028 = vmatprep.subr.mxu0 0.0
        %4029 = vmatpush1.msra.mxu0 0.0
        %4030 = vmatprep.subr.mxu0 0.0
        %4031 = vmatpush1.msra.mxu0 0.0
        %4032 = vmatprep.subr.mxu0 0.0
        %4033 = vmatpush1.msra.mxu0 0.0
        %4034 = vmatprep.subr.mxu0 0.0
        %4035 = vmatpush1.msra.mxu0 %v1556
        %4036 = vmatprep.subr.mxu0 0.0
        %4037 = vmatpush2.msra.mxu0 0.0
        %4038 = vmatprep.subr.mxu0 0.0
        %4039 = vmatpush2.msra.mxu0 0.0
        %4040 = vmatprep.subr.mxu0 0.0
        %4041 = vmatpush2.msra.mxu0 0.0
        %4042 = vmatprep.subr.mxu0 0.0
        %4043 = vmatpush2.msra.mxu0 0.0
        %4044 = vmatprep.subr.mxu0 0.0
        %4045 = vmatpush2.msra.mxu0 0.0
        %4046 = vmatprep.subr.mxu0 0.0
        %4047 = vmatpush2.msra.mxu0 0.0
        %4048 = vmatprep.subr.mxu0 0.0
        %4049 = vmatpush2.msra.mxu0 0.0
        %4050 = vmatprep.subr.mxu0 0.0
        %4051 = vmatpush2.msra.mxu0 0.0
        %4052 = vmatprep.subr.mxu0 0.0
        %4053 = vmatpush2.msra.mxu0 0.0
        %4054 = vmatprep.subr.mxu0 0.0
        %4055 = vmatpush2.msra.mxu0 0.0
        %4056 = vmatprep.subr.mxu0 0.0
        %4057 = vmatpush2.msra.mxu0 0.0
        %4058 = vmatprep.subr.mxu0 0.0
        %4059 = vmatpush2.msra.mxu0 0.0
        %4060 = vmatprep.subr.mxu0 0.0
        %4061 = vmatpush2.msra.mxu0 0.0
        %4062 = vmatprep.subr.mxu0 0.0
        %4063 = vmatpush2.msra.mxu0 0.0
        %4064 = vmatprep.subr.mxu0 0.0
        %4065 = vmatpush2.msra.mxu0 0.0
        %4066 = vmatprep.subr.mxu0 0.0
        %4067 = vmatpush2.msra.mxu0 0.0
        %4068 = vmatprep.mubr.f32.mxu0 0.0
        %4069 = vmatmul.mubr.f32.gmra.mxu0 %v4002
        %v4070 = vpop.f32.mrf.mxu0
        %v4071 = vadd.f32 0.0, %v4070
        %v4072 = vpop.f32.mrf.mxu0
        %4073 = vdwg.mxu0
        %v4075 = vsel %vm1563, %v3854, 0
        %4077 = vmatprep.subr.mxu0 0.0
        %4078 = vmatpush1.msra.mxu0 0.0
        %4079 = vmatprep.subr.mxu0 0.0
        %4080 = vmatpush1.msra.mxu0 0.0
        %4081 = vmatprep.subr.mxu0 0.0
        %4082 = vmatpush1.msra.mxu0 0.0
        %4083 = vmatprep.subr.mxu0 0.0
        %4084 = vmatpush1.msra.mxu0 0.0
        %4085 = vmatprep.subr.mxu0 0.0
        %4086 = vmatpush1.msra.mxu0 0.0
        %4087 = vmatprep.subr.mxu0 0.0
        %4088 = vmatpush1.msra.mxu0 0.0
        %4089 = vmatprep.subr.mxu0 0.0
        %4090 = vmatpush1.msra.mxu0 0.0
        %4091 = vmatprep.subr.mxu0 0.0
        %4092 = vmatpush1.msra.mxu0 0.0
        %4093 = vmatprep.subr.mxu0 0.0
        %4094 = vmatpush1.msra.mxu0 0.0
        %4095 = vmatprep.subr.mxu0 0.0
        %4096 = vmatpush1.msra.mxu0 0.0
        %4097 = vmatprep.subr.mxu0 0.0
        %4098 = vmatpush1.msra.mxu0 0.0
        %4099 = vmatprep.subr.mxu0 0.0
        %4100 = vmatpush1.msra.mxu0 0.0
        %4101 = vmatprep.subr.mxu0 0.0
        %4102 = vmatpush1.msra.mxu0 0.0
        %4103 = vmatprep.subr.mxu0 0.0
        %4104 = vmatpush1.msra.mxu0 0.0
        %4105 = vmatprep.subr.mxu0 0.0
        %4106 = vmatpush1.msra.mxu0 0.0
        %4107 = vmatprep.subr.mxu0 0.0
        %4108 = vmatpush1.msra.mxu0 %v1557
        %4109 = vmatprep.subr.mxu0 0.0
        %4110 = vmatpush2.msra.mxu0 0.0
        %4111 = vmatprep.subr.mxu0 0.0
        %4112 = vmatpush2.msra.mxu0 0.0
        %4113 = vmatprep.subr.mxu0 0.0
        %4114 = vmatpush2.msra.mxu0 0.0
        %4115 = vmatprep.subr.mxu0 0.0
        %4116 = vmatpush2.msra.mxu0 0.0
        %4117 = vmatprep.subr.mxu0 0.0
        %4118 = vmatpush2.msra.mxu0 0.0
        %4119 = vmatprep.subr.mxu0 0.0
        %4120 = vmatpush2.msra.mxu0 0.0
        %4121 = vmatprep.subr.mxu0 0.0
        %4122 = vmatpush2.msra.mxu0 0.0
        %4123 = vmatprep.subr.mxu0 0.0
        %4124 = vmatpush2.msra.mxu0 0.0
        %4125 = vmatprep.subr.mxu0 0.0
        %4126 = vmatpush2.msra.mxu0 0.0
        %4127 = vmatprep.subr.mxu0 0.0
        %4128 = vmatpush2.msra.mxu0 0.0
        %4129 = vmatprep.subr.mxu0 0.0
        %4130 = vmatpush2.msra.mxu0 0.0
        %4131 = vmatprep.subr.mxu0 0.0
        %4132 = vmatpush2.msra.mxu0 0.0
        %4133 = vmatprep.subr.mxu0 0.0
        %4134 = vmatpush2.msra.mxu0 0.0
        %4135 = vmatprep.subr.mxu0 0.0
        %4136 = vmatpush2.msra.mxu0 0.0
        %4137 = vmatprep.subr.mxu0 0.0
        %4138 = vmatpush2.msra.mxu0 0.0
        %4139 = vmatprep.subr.mxu0 0.0
        %4140 = vmatpush2.msra.mxu0 0.0
        %4141 = vmatprep.mubr.f32.mxu0 0.0
        %4142 = vmatmul.mubr.f32.gmra.mxu0 %v4075
        %v4143 = vpop.f32.mrf.mxu0
        %v4144 = vadd.f32 0.0, %v4143
        %v4145 = vpop.f32.mrf.mxu0
        %4146 = vdwg.mxu0
        %v4147 = vsel %vm515, %v3925, 0.0
        %v4148 = vsel %vm515, %v3998, 0.0
        %v4149 = vadd.f32 %v4147, %v4148
        %v4150 = vsel %vm515, %v4071, 0.0
        %v4151 = vadd.f32 %v4149, %v4150
        %v4152 = vsel %vm515, %v4144, 0.0
        %v4153 = vadd.f32 %v4151, %v4152
        %v4155 = vlaneseq
        %v4156 = vshrl.u32 %v4155, 7
        %v4157 = vsub.s32 0, %v4156
        %v4158 = vrot.slane %v1558, %v4157
        %v4160 = vadd.f32 %v2537, %v4158
        %v4161 = vadd.f32 %v4153, %v4158
        %v4162 = vadd.f32 %v511, %v4160
        %v4163 = vadd.f32 %v512, %v4161
        %v4164 = vld [vmem:[%s7] sm:$0x1]
        %v4165 = vld [vmem:[%s8] sm:$0x1]
        %v4166 = vsel %vm515, %v4162, 0.0
        %4167 = vadd.xlane.f32.xlu0 %v4166
        %v4168 = vpop.xlane.xlu0 %4167
        %v4169 = vsel %vm515, %v4163, 0.0
        %4170 = vadd.xlane.f32.xlu0 %v4169
        %v4171 = vpop.xlane.xlu0 %4170
        %v4172 = vmul.f32 %v4168, %v522
        %v4173 = vmul.f32 %v4171, %v522
        %v4174 = vsub.f32 %v4162, %v4172
        %v4175 = vsub.f32 %v4163, %v4173
        %v4176 = vmul.f32 %v4174, %v4174
        %v4177 = vmul.f32 %v4175, %v4175
        %v4178 = vsel %vm515, %v4176, 0.0
        %4179 = vadd.xlane.f32.xlu0 %v4178
        %v4180 = vpop.xlane.xlu0 %4179
        %v4181 = vsel %vm515, %v4177, 0.0
        %4182 = vadd.xlane.f32.xlu0 %v4181
        %v4183 = vpop.xlane.xlu0 %4182
        %v4184 = vmul.f32 %v4180, %v535
        %v4185 = vmul.f32 %v4183, %v535
        %v4186 = vrsqrt.pop %v4184
        %v4187 = vmul.f32 %v4184, %v4186
        %vm4188 = vcmp.eq.f32.partialorder %v4184, inf
        %v4189 = vsel %vm4188, %v4184, %v4187
        %vm4190 = vcmp.eq.f32.partialorder %v4184, 0.0
        %v4191 = vand.u32 %v4184, 2147483648
        %v4192 = vsel %vm4190, %v4191, %v4189
        %v4193 = vrsqrt.pop %v4185
        %v4194 = vmul.f32 %v4185, %v4193
        %vm4195 = vcmp.eq.f32.partialorder %v4185, inf
        %v4196 = vsel %vm4195, %v4185, %v4194
        %vm4197 = vcmp.eq.f32.partialorder %v4185, 0.0
        %v4198 = vand.u32 %v4185, 2147483648
        %v4199 = vsel %vm4197, %v4198, %v4196
        %v4200 = vadd.f32 %v4192, 1e-07
        %v4201 = vadd.f32 %v4199, 1e-07
        %v4202 = vrcp.pop %v4200
        %v4203 = vmul.f32 %v4174, %v4202
        %v4204 = vrcp.pop %v4201
        %v4205 = vmul.f32 %v4175, %v4204
        %v4207 = vlaneseq
        %v4208 = vshrl.u32 %v4207, 7
        %v4209 = vsub.s32 0, %v4208
        %v4210 = vrot.slane %v4164, %v4209
        %v4212 = vmul.f32 %v4210, %v4203
        %v4213 = vmul.f32 %v4210, %v4205
        %v4215 = vlaneseq
        %v4216 = vshrl.u32 %v4215, 7
        %v4217 = vsub.s32 0, %v4216
        %v4218 = vrot.slane %v4165, %v4217
        %v4220 = vadd.f32 %v4212, %v4218
        %v4221 = vadd.f32 %v4213, %v4218
        %v4222 = vld [vmem:[%s9] sm:$0xff]
        %v4223 = vld [vmem:[%s9 + $0x8] sm:$0xff]
        %v4224 = vld [vmem:[%s9 + $0x10] sm:$0xff]
        %v4225 = vld [vmem:[%s9 + $0x18] sm:$0xff]
        %v4226 = vld [vmem:[%s10] sm:$0x1]
        %v4228 = vlaneseq
        %v4229 = vshrl.u32 %v4228, 7
        %v4230 = vsub.s32 0, %v4229
        %v4231 = vrot.slane %v4226, %v4230
        %v4234 = vsel %vm515, %v4220, 0
        %v4237 = vsel %vm515, %v4221, 0
        %4239 = vmatprep.subr.mxu0 0.0
        %4240 = vmatpush1.msra.mxu0 0.0
        %4241 = vmatprep.subr.mxu0 0.0
        %4242 = vmatpush1.msra.mxu0 0.0
        %4243 = vmatprep.subr.mxu0 0.0
        %4244 = vmatpush1.msra.mxu0 0.0
        %4245 = vmatprep.subr.mxu0 0.0
        %4246 = vmatpush1.msra.mxu0 0.0
        %4247 = vmatprep.subr.mxu0 0.0
        %4248 = vmatpush1.msra.mxu0 0.0
        %4249 = vmatprep.subr.mxu0 0.0
        %4250 = vmatpush1.msra.mxu0 0.0
        %4251 = vmatprep.subr.mxu0 0.0
        %4252 = vmatpush1.msra.mxu0 0.0
        %4253 = vmatprep.subr.mxu0 0.0
        %4254 = vmatpush1.msra.mxu0 0.0
        %4255 = vmatprep.subr.mxu0 0.0
        %4256 = vmatpush1.msra.mxu0 0.0
        %4257 = vmatprep.subr.mxu0 0.0
        %4258 = vmatpush1.msra.mxu0 0.0
        %4259 = vmatprep.subr.mxu0 0.0
        %4260 = vmatpush1.msra.mxu0 0.0
        %4261 = vmatprep.subr.mxu0 0.0
        %4262 = vmatpush1.msra.mxu0 0.0
        %4263 = vmatprep.subr.mxu0 0.0
        %4264 = vmatpush1.msra.mxu0 %v4225
        %4265 = vmatprep.subr.mxu0 0.0
        %4266 = vmatpush1.msra.mxu0 %v4224
        %4267 = vmatprep.subr.mxu0 0.0
        %4268 = vmatpush1.msra.mxu0 %v4223
        %4269 = vmatprep.subr.mxu0 0.0
        %4270 = vmatpush1.msra.mxu0 %v4222
        %4271 = vmatprep.subr.mxu0 0.0
        %4272 = vmatpush2.msra.mxu0 0.0
        %4273 = vmatprep.subr.mxu0 0.0
        %4274 = vmatpush2.msra.mxu0 0.0
        %4275 = vmatprep.subr.mxu0 0.0
        %4276 = vmatpush2.msra.mxu0 0.0
        %4277 = vmatprep.subr.mxu0 0.0
        %4278 = vmatpush2.msra.mxu0 0.0
        %4279 = vmatprep.subr.mxu0 0.0
        %4280 = vmatpush2.msra.mxu0 0.0
        %4281 = vmatprep.subr.mxu0 0.0
        %4282 = vmatpush2.msra.mxu0 0.0
        %4283 = vmatprep.subr.mxu0 0.0
        %4284 = vmatpush2.msra.mxu0 0.0
        %4285 = vmatprep.subr.mxu0 0.0
        %4286 = vmatpush2.msra.mxu0 0.0
        %4287 = vmatprep.subr.mxu0 0.0
        %4288 = vmatpush2.msra.mxu0 0.0
        %4289 = vmatprep.subr.mxu0 0.0
        %4290 = vmatpush2.msra.mxu0 0.0
        %4291 = vmatprep.subr.mxu0 0.0
        %4292 = vmatpush2.msra.mxu0 0.0
        %4293 = vmatprep.subr.mxu0 0.0
        %4294 = vmatpush2.msra.mxu0 0.0
        %4295 = vmatprep.subr.mxu0 0.0
        %4296 = vmatpush2.msra.mxu0 0.0
        %4297 = vmatprep.subr.mxu0 0.0
        %4298 = vmatpush2.msra.mxu0 0.0
        %4299 = vmatprep.subr.mxu0 0.0
        %4300 = vmatpush2.msra.mxu0 0.0
        %4301 = vmatprep.subr.mxu0 0.0
        %4302 = vmatpush2.msra.mxu0 0.0
        %4303 = vmatprep.mubr.f32.mxu0 0.0
        %4304 = vmatmul.mubr.f32.gmra.mxu0 %v4234
        %v4305 = vpop.f32.mrf.mxu0
        %v4306 = vadd.f32 %v4231, %v4305
        %v4307 = vpop.f32.mrf.mxu0
        %4308 = vmatprep.mubr.f32.mxu0 0.0
        %4309 = vmatmul.mubr.f32.gmra.mxu0 %v4237
        %v4310 = vpop.f32.mrf.mxu0
        %v4311 = vadd.f32 %v4231, %v4310
        %v4312 = vpop.f32.mrf.mxu0
        %4313 = vdwg.mxu0
        %v4314 = vmul.f32 %v4306, 0.5
        %v4315 = vmul.f32 %v4311, 0.5
        %v4316 = vmul.f32 %v4306, 0.70710677
        %v4317 = vmul.f32 %v4311, 0.70710677
        %v4318 = verf.f32.pop %v4316
        %v4319 = verf.f32.pop %v4317
        %v4320 = vadd.f32 %v4318, 1.0
        %v4321 = vadd.f32 %v4319, 1.0
        %v4322 = vmul.f32 %v4314, %v4320
        %v4323 = vmul.f32 %v4315, %v4321
        %v4324 = vld [vmem:[%s11] sm:$0xff]
        %v4325 = vld [vmem:[%s11 + $0x8] sm:$0xff]
        %v4326 = vld [vmem:[%s11 + $0x10] sm:$0xff]
        %v4327 = vld [vmem:[%s11 + $0x18] sm:$0xff]
        %v4328 = vld [vmem:[%s11 + $0x20] sm:$0xff]
        %v4329 = vld [vmem:[%s11 + $0x28] sm:$0xff]
        %v4330 = vld [vmem:[%s11 + $0x30] sm:$0xff]
        %v4331 = vld [vmem:[%s11 + $0x38] sm:$0xff]
        %v4332 = vld [vmem:[%s11 + $0x40] sm:$0xff]
        %v4333 = vld [vmem:[%s11 + $0x48] sm:$0xff]
        %v4334 = vld [vmem:[%s11 + $0x50] sm:$0xff]
        %v4335 = vld [vmem:[%s11 + $0x58] sm:$0xff]
        %v4336 = vld [vmem:[%s11 + $0x60] sm:$0xff]
        %v4337 = vld [vmem:[%s11 + $0x68] sm:$0xff]
        %v4338 = vld [vmem:[%s11 + $0x70] sm:$0xff]
        %v4339 = vld [vmem:[%s11 + $0x78] sm:$0xff]
        %4340 = vmatprep.subr.mxu0 0.0
        %4341 = vmatpush1.msra.mxu0 %v4339
        %4342 = vmatprep.subr.mxu0 0.0
        %4343 = vmatpush1.msra.mxu0 %v4338
        %4344 = vmatprep.subr.mxu0 0.0
        %4345 = vmatpush1.msra.mxu0 %v4337
        %4346 = vmatprep.subr.mxu0 0.0
        %4347 = vmatpush1.msra.mxu0 %v4336
        %4348 = vmatprep.subr.mxu0 0.0
        %4349 = vmatpush1.msra.mxu0 %v4335
        %4350 = vmatprep.subr.mxu0 0.0
        %4351 = vmatpush1.msra.mxu0 %v4334
        %4352 = vmatprep.subr.mxu0 0.0
        %4353 = vmatpush1.msra.mxu0 %v4333
        %4354 = vmatprep.subr.mxu0 0.0
        %4355 = vmatpush1.msra.mxu0 %v4332
        %4356 = vmatprep.subr.mxu0 0.0
        %4357 = vmatpush1.msra.mxu0 %v4331
        %4358 = vmatprep.subr.mxu0 0.0
        %4359 = vmatpush1.msra.mxu0 %v4330
        %4360 = vmatprep.subr.mxu0 0.0
        %4361 = vmatpush1.msra.mxu0 %v4329
        %4362 = vmatprep.subr.mxu0 0.0
        %4363 = vmatpush1.msra.mxu0 %v4328
        %4364 = vmatprep.subr.mxu0 0.0
        %4365 = vmatpush1.msra.mxu0 %v4327
        %4366 = vmatprep.subr.mxu0 0.0
        %4367 = vmatpush1.msra.mxu0 %v4326
        %4368 = vmatprep.subr.mxu0 0.0
        %4369 = vmatpush1.msra.mxu0 %v4325
        %4370 = vmatprep.subr.mxu0 0.0
        %4371 = vmatpush1.msra.mxu0 %v4324
        %4372 = vmatprep.subr.mxu0 0.0
        %4373 = vmatpush2.msra.mxu0 0.0
        %4374 = vmatprep.subr.mxu0 0.0
        %4375 = vmatpush2.msra.mxu0 0.0
        %4376 = vmatprep.subr.mxu0 0.0
        %4377 = vmatpush2.msra.mxu0 0.0
        %4378 = vmatprep.subr.mxu0 0.0
        %4379 = vmatpush2.msra.mxu0 0.0
        %4380 = vmatprep.subr.mxu0 0.0
        %4381 = vmatpush2.msra.mxu0 0.0
        %4382 = vmatprep.subr.mxu0 0.0
        %4383 = vmatpush2.msra.mxu0 0.0
        %4384 = vmatprep.subr.mxu0 0.0
        %4385 = vmatpush2.msra.mxu0 0.0
        %4386 = vmatprep.subr.mxu0 0.0
        %4387 = vmatpush2.msra.mxu0 0.0
        %4388 = vmatprep.subr.mxu0 0.0
        %4389 = vmatpush2.msra.mxu0 0.0
        %4390 = vmatprep.subr.mxu0 0.0
        %4391 = vmatpush2.msra.mxu0 0.0
        %4392 = vmatprep.subr.mxu0 0.0
        %4393 = vmatpush2.msra.mxu0 0.0
        %4394 = vmatprep.subr.mxu0 0.0
        %4395 = vmatpush2.msra.mxu0 0.0
        %4396 = vmatprep.subr.mxu0 0.0
        %4397 = vmatpush2.msra.mxu0 0.0
        %4398 = vmatprep.subr.mxu0 0.0
        %4399 = vmatpush2.msra.mxu0 0.0
        %4400 = vmatprep.subr.mxu0 0.0
        %4401 = vmatpush2.msra.mxu0 0.0
        %4402 = vmatprep.subr.mxu0 0.0
        %4403 = vmatpush2.msra.mxu0 0.0
        %4404 = vmatprep.mubr.f32.mxu0 0.0
        %4405 = vmatmul.mubr.f32.gmra.mxu0 %v4322
        %v4406 = vpop.f32.mrf.mxu0
        %v4407 = vadd.f32 0.0, %v4406
        %v4408 = vpop.f32.mrf.mxu0
        %4409 = vmatprep.mubr.f32.mxu0 0.0
        %4410 = vmatmul.mubr.f32.gmra.mxu0 %v4323
        %v4411 = vpop.f32.mrf.mxu0
        %v4412 = vadd.f32 0.0, %v4411
        %v4413 = vpop.f32.mrf.mxu0
        %4414 = vdwg.mxu0
        %v4415 = vadd.f32 %v4162, %v4407
        %v4416 = vadd.f32 %v4163, %v4412
        %v4417 = vld [vmem:[%s12] sm:$0x1]
        %v4419 = vlaneseq
        %v4420 = vshrl.u32 %v4419, 7
        %v4421 = vsub.s32 0, %v4420
        %v4422 = vrot.slane %v4417, %v4421
        %v4424 = vadd.f32 %v4415, %v4422
        %v4425 = vadd.f32 %v4416, %v4422
        %4426 = vst.msk [vmem:[%s491] sm:$0xff] %vm515, %v4424
        %4427 = vst.msk [vmem:[%s491 + $0x8] sm:$0xff] %vm515, %v4425
        %s4428 = sand.u32 %s319, 1
        %s4429 = scalar_lea.sflag [#allocation3], %s4428
        %s4430 = sand.u32 %s319, 1
        %s4431 = smul.addr %s4430, 16
        %s4432 = scalar_lea.vmem [#allocation2], %s4431
        %s4433 = sand.u32 %s33, 1
        %s4434 = scalar_lea.sflag [#allocation5], %s4433
        %s4435 = sand.u32 %s345, 1
        %s4436 = smul.addr %s4435, 16
        %s4437 = scalar_lea.vmem [#allocation4], %s4436
        %s4438 = sand.u32 %s33, 1
        %s4439 = scalar_lea.sflag [#allocation5], %s4438
        %s4440 = sand.u32 %s371, 1
        %s4441 = smul.addr %s4440, 16
        %s4442 = scalar_lea.vmem [#allocation6], %s4441
        // Predicated region
        $region73: #{tpu_custom_call.1} parent=71 // pred_check
          %p4443 = pneg %p329
        $region74: #{tpu_custom_call.1} parent=71 // pred_check_branch
          %4445 = sbr.rel (%p4443) target = $region76
        $region75: #{tpu_custom_call.1} parent=71 // pred_region
          %s4447 = ssub.s32 256, 256
          %4448 = vsyncadd %s4429, %s4447
          %s4449 = smul.addr %s33, 2
          %s4450 = smul.addr %s4449, 128
          %s4451 = scalar_lea.hbm %s13, %s4450
          %s4452 = sshll.u32 %s4432, 4
          %s4453 = int_to_ptr.vmem [resolvable:$true] %s4452
          %4458 = dma.vmem_to_hbm [thread:$0]  %s4453, 256, %s4451, %s4429, 128, 128, 8
        $region76: #{tpu_custom_call.1} parent=71 // pred_fallthru
          _
        // Predicated region
        $region77: #{tpu_custom_call.1} parent=71 // pred_check
          %p4459 = pneg %p355
        $region78: #{tpu_custom_call.1} parent=71 // pred_check_branch
          %4461 = sbr.rel (%p4459) target = $region80
        $region79: #{tpu_custom_call.1} parent=71 // pred_region
          %s4463 = ssub.s32 256, 256
          %4464 = vsyncadd %s4434, %s4463
          %s4465 = smul.addr %s33, 2
          %s4466 = smul.addr %s4465, 128
          %s4467 = scalar_lea.hbm %s14, %s4466
          %s4468 = sshll.u32 %s4437, 4
          %s4469 = int_to_ptr.vmem [resolvable:$true] %s4468
          %4474 = dma.vmem_to_hbm [thread:$0]  %s4469, 256, %s4467, %s4434, 128, 128, 8
        $region80: #{tpu_custom_call.1} parent=71 // pred_fallthru
          _
        // Predicated region
        $region81: #{tpu_custom_call.1} parent=71 // pred_check
          %p4475 = pneg %p381
        $region82: #{tpu_custom_call.1} parent=71 // pred_check_branch
          %4477 = sbr.rel (%p4475) target = $region84
        $region83: #{tpu_custom_call.1} parent=71 // pred_region
          %s4479 = ssub.s32 256, 256
          %4480 = vsyncadd %s4439, %s4479
          %s4481 = smul.addr %s33, 2
          %s4482 = smul.addr %s4481, 128
          %s4483 = scalar_lea.hbm %s15, %s4482
          %s4484 = sshll.u32 %s4442, 4
          %s4485 = int_to_ptr.vmem [resolvable:$true] %s4484
          %4490 = dma.vmem_to_hbm [thread:$0]  %s4485, 256, %s4483, %s4439, 128, 128, 8
        $region84: #{tpu_custom_call.1} parent=71 // pred_fallthru
          _
      $region72: #{tpu_custom_call.1} parent=5 // pred_fallthru
        _
      %p4491 = scmp.le.s32.totalorder 2, %s28
      // Predicated region
      $region85: #{tpu_custom_call.1} parent=5 // pred_check
        %p4492 = pneg %p4491
      $region86: #{tpu_custom_call.1} parent=5 // pred_check_branch
        %4494 = sbr.rel (%p4492) target = $region88
      $region87: #{tpu_custom_call.1} parent=5 // pred_region
        %s4495 = ssub.s32 %s28, 2
        // Predicated region
        $region89: #{tpu_custom_call.1} parent=87 // pred_check
          %p4496 = pneg %p335
        $region90: #{tpu_custom_call.1} parent=87 // pred_check_branch
          %4498 = sbr.rel (%p4496) target = $region92
        $region91: #{tpu_custom_call.1} parent=87 // pred_region
          %s4499 = sand.u32 %s320, 1
          %s4500 = scalar_lea.sflag [#allocation3], %s4499
          %s4501 = sand.u32 %s320, 1
          %s4502 = smul.addr %s4501, 16
          %s4503 = scalar_lea.vmem [#allocation2], %s4502
          %4504 = dma.done %s4500, 256
        $region92: #{tpu_custom_call.1} parent=87 // pred_fallthru
          _
        // Predicated region
        $region93: #{tpu_custom_call.1} parent=87 // pred_check
          %p4505 = pneg %p361
        $region94: #{tpu_custom_call.1} parent=87 // pred_check_branch
          %4507 = sbr.rel (%p4505) target = $region96
        $region95: #{tpu_custom_call.1} parent=87 // pred_region
          %s4508 = sand.u32 %s34, 1
          %s4509 = scalar_lea.sflag [#allocation5], %s4508
          %s4510 = sand.u32 %s346, 1
          %s4511 = smul.addr %s4510, 16
          %s4512 = scalar_lea.vmem [#allocation4], %s4511
          %4513 = dma.done %s4509, 256
        $region96: #{tpu_custom_call.1} parent=87 // pred_fallthru
          _
        // Predicated region
        $region97: #{tpu_custom_call.1} parent=87 // pred_check
          %p4514 = pneg %p387
        $region98: #{tpu_custom_call.1} parent=87 // pred_check_branch
          %4516 = sbr.rel (%p4514) target = $region100
        $region99: #{tpu_custom_call.1} parent=87 // pred_region
          %s4517 = sand.u32 %s34, 1
          %s4518 = scalar_lea.sflag [#allocation5], %s4517
          %s4519 = sand.u32 %s372, 1
          %s4520 = smul.addr %s4519, 16
          %s4521 = scalar_lea.vmem [#allocation6], %s4520
          %4522 = dma.done %s4518, 256
        $region100: #{tpu_custom_call.1} parent=87 // pred_fallthru
          _
      $region88: #{tpu_custom_call.1} parent=5 // pred_fallthru
        _
    $region6: #{tpu_custom_call.1} parent=1 // loop_footer
      %s32 = sadd.s32 1, %s28
    $region7: #{tpu_custom_call.1} parent=1 // loop_footer_branch
      %27 = sbr.rel target = $region3
    $region8: #{tpu_custom_call.1} parent=1 // loop_exit
      _
    %4523 = vsyncpa [#allocation3], 1
    %s4524 = scalar_lea.sflag [#allocation3], 1
    %4525 = vsyncpa %s4524, 1
    %4526 = vsyncpa [#allocation5], 1
    %s4527 = scalar_lea.sflag [#allocation5], 1
    %4528 = vsyncpa %s4527, 1

// kernel: tpu_custom_call.1
$region0: #{tpu_custom_call.1}
  #allocation0 [shape = 'u32[]', space=smem, size = 0x4, offset = 0x4, fixed_abs, tag = 'smem constant byte address 0x4 - core index']
  #allocation1 [shape = 'u32[144,128]{1,0:T(1,128)}', space=vmem, size = 0x12000, scoped, tag = 'internal scratch']
  %s0 = inlined_call_operand.vmem [shape: f32[2,16,32], index: 0, kind: input, shape index: {}]
  %s1 = inlined_call_operand.vmem [shape: f32[1,32], index: 1, kind: input, shape index: {}]
  %s2 = inlined_call_operand.vmem [shape: f32[1,32], index: 2, kind: input, shape index: {}]
  %s3 = inlined_call_operand.vmem [shape: f32[32,96], index: 3, kind: input, shape index: {}]
  %s4 = inlined_call_operand.vmem [shape: f32[1,96], index: 4, kind: input, shape index: {}]
  %s5 = inlined_call_operand.vmem [shape: f32[32,32], index: 5, kind: input, shape index: {}]
  %s6 = inlined_call_operand.vmem [shape: f32[1,32], index: 6, kind: input, shape index: {}]
  %s7 = inlined_call_operand.vmem [shape: f32[1,32], index: 7, kind: input, shape index: {}]
  %s8 = inlined_call_operand.vmem [shape: f32[1,32], index: 8, kind: input, shape index: {}]
  %s9 = inlined_call_operand.vmem [shape: f32[32,128], index: 9, kind: input, shape index: {}]
  %s10 = inlined_call_operand.vmem [shape: f32[1,128], index: 10, kind: input, shape index: {}]
  %s11 = inlined_call_operand.vmem [shape: f32[128,32], index: 11, kind: input, shape index: {}]
  %s12 = inlined_call_operand.vmem [shape: f32[1,32], index: 12, kind: input, shape index: {}]
  %s13 = inlined_call_operand.hbm [shape: f32[2,16,32], index: 13, kind: output, shape index: {0}]
  %s14 = inlined_call_operand.hbm [shape: f32[2,16,32], index: 14, kind: output, shape index: {1}]
  %s15 = inlined_call_operand.hbm [shape: f32[2,16,32], index: 15, kind: output, shape index: {2}]
  %16 = xla_tuple %s13, %s14, %s15
  %s17 = sld [smem:[#allocation0]]
  $region101: #{tpu_custom_call.1} parent=0
    _
  %s19 = ssub.s32 1, %s17
  %s20 = scalar_select 0, %s19, %s17
  $region1: #{tpu_custom_call.1} parent=0
    #allocation2 [shape = 'u8[16384]{0}', space=vmem, size = 0x4000, scoped, tag = 'output window, operand 0']
    #allocation3 [shape = 's32[2]{0}', space=sflag, size = 0x8, scoped, tag = 'scoped memory for tpu_custom_call.1']
    #allocation4 [shape = 'u8[16384]{0}', space=vmem, size = 0x4000, scoped, tag = 'output window, operand 1']
    #allocation5 [shape = 's32[2]{0}', space=sflag, size = 0x8, scoped, tag = 'scoped memory for tpu_custom_call.1']
    #allocation6 [shape = 'u8[16384]{0}', space=vmem, size = 0x4000, scoped, tag = 'output window, operand 2']
    %21 = vsyncpa [#allocation3], 0
    %s22 = scalar_lea.sflag [#allocation3], 1
    %23 = vsyncpa %s22, 0
    %24 = vsyncpa [#allocation5], 0
    %s25 = scalar_lea.sflag [#allocation5], 1
    %26 = vsyncpa %s25, 0
    loop: start=0, step=1, limit=4
    $region2: #{tpu_custom_call.1} parent=1 // loop_pre_header
      _
    $region3: #{tpu_custom_call.1} parent=1 // loop_header
      %s28 = sphi 0, %s32
      %p29 = scmp.ge.s32.totalorder %s28, 4
      %s38 = sphi 0, %s40
      %s41 = sphi 0, %s38
      %s42 = sphi 0, %s41
      %s58 = sphi 0, %s42
      %s62 = sphi 0, %s62
      %s64 = sphi 0, %s62
      %s65 = sphi 0, %s64
      %s79 = sphi 0, %s65
      %s83 = sphi 0, %s83
      %s85 = sphi 0, %s83
      %s86 = sphi 0, %s85
      %s100 = sphi 0, %s86
      %s104 = sphi 0, %s104
      %s106 = sphi 0, %s104
      %s107 = sphi 0, %s106
      %s121 = sphi 0, %s107
      %s125 = sphi 0, %s125
      %s127 = sphi 0, %s125
      %s128 = sphi 0, %s127
      %s142 = sphi 0, %s128
      %s146 = sphi 0, %s146
      %s148 = sphi 0, %s146
      %s149 = sphi 0, %s148
      %s163 = sphi 0, %s149
      %s167 = sphi 0, %s167
      %s169 = sphi 0, %s167
      %s170 = sphi 0, %s169
      %s184 = sphi 0, %s170
      %s188 = sphi 0, %s188
      %s190 = sphi 0, %s188
      %s191 = sphi 0, %s190
      %s205 = sphi 0, %s191
      %s209 = sphi 0, %s209
      %s211 = sphi 0, %s209
      %s212 = sphi 0, %s211
      %s226 = sphi 0, %s212
      %s230 = sphi 0, %s230
      %s232 = sphi 0, %s230
      %s233 = sphi 0, %s232
      %s247 = sphi 0, %s233
      %s251 = sphi 0, %s251
      %s253 = sphi 0, %s251
      %s254 = sphi 0, %s253
      %s268 = sphi 0, %s254
      %s272 = sphi 0, %s272
      %s274 = sphi 0, %s272
      %s275 = sphi 0, %s274
      %s289 = sphi 0, %s275
      %s293 = sphi 0, %s293
      %s295 = sphi 0, %s293
      %s296 = sphi 0, %s295
      %s310 = sphi 0, %s296
      %s316 = sphi 0, %s318
      %s319 = sphi 0, %s316
      %s320 = sphi 0, %s319
      %s336 = sphi 0, %s320
      %s342 = sphi 0, %s344
      %s345 = sphi 0, %s342
      %s346 = sphi 0, %s345
      %s362 = sphi 0, %s346
      %s368 = sphi 0, %s370
      %s371 = sphi 0, %s368
      %s372 = sphi 0, %s371
      %s388 = sphi 0, %s372
    $region4: #{tpu_custom_call.1} parent=1 // loop_header_branch
      %31 = sbr.rel (%p29) target = $region8
    $region5: #{tpu_custom_call.1} parent=1 // loop_body
      %s33 = ssub.s32 %s28, 1
      %s34 = ssub.s32 %s28, 2
      %s35 = sadd.s32 %s28, 1
      %s36 = ssub.s32 %s28, %s35
      %p37 = scmp.eq.s32.totalorder %s36, 0
      %s39 = sadd.s32 %s38, 1
      %s40 = scalar_select %p37, %s38, %s39
      %p43 = pneg %p37
      %p44 = scmp.eq.s32.totalorder %s28, 1
      %p45 = por %p43, %p44
      %p46 = scmp.ne.s32.totalorder %s38, %s41
      %p47 = scmp.eq.s32.totalorder %s28, 0
      %p48 = por %p46, %p47
      %p49 = scmp.ne.s32.totalorder %s38, %s41
      %p50 = scmp.eq.s32.totalorder %s33, 1
      %p51 = por %p49, %p50
      %p52 = scmp.ne.s32.totalorder %s41, %s42
      %p53 = scmp.eq.s32.totalorder %s33, 0
      %p54 = por %p52, %p53
      %p55 = scmp.ne.s32.totalorder %s41, %s42
      %p56 = scmp.eq.s32.totalorder %s34, 1
      %p57 = por %p55, %p56
      %p59 = scmp.ne.s32.totalorder %s42, %s58
      %p60 = scmp.eq.s32.totalorder %s34, 0
      %p61 = por %p59, %p60
      %s63 = sadd.s32 %s62, 1
      %p66 = scmp.eq.s32.totalorder %s28, 1
      %p67 = scmp.ne.s32.totalorder %s62, %s64
      %p68 = scmp.eq.s32.totalorder %s28, 0
      %p69 = por %p67, %p68
      %p70 = scmp.ne.s32.totalorder %s62, %s64
      %p71 = scmp.eq.s32.totalorder %s33, 1
      %p72 = por %p70, %p71
      %p73 = scmp.ne.s32.totalorder %s64, %s65
      %p74 = scmp.eq.s32.totalorder %s33, 0
      %p75 = por %p73, %p74
      %p76 = scmp.ne.s32.totalorder %s64, %s65
      %p77 = scmp.eq.s32.totalorder %s34, 1
      %p78 = por %p76, %p77
      %p80 = scmp.ne.s32.totalorder %s65, %s79
      %p81 = scmp.eq.s32.totalorder %s34, 0
      %p82 = por %p80, %p81
      %s84 = sadd.s32 %s83, 1
      %p87 = scmp.eq.s32.totalorder %s28, 1
      %p88 = scmp.ne.s32.totalorder %s83, %s85
      %p89 = scmp.eq.s32.totalorder %s28, 0
      %p90 = por %p88, %p89
      %p91 = scmp.ne.s32.totalorder %s83, %s85
      %p92 = scmp.eq.s32.totalorder %s33, 1
      %p93 = por %p91, %p92
      %p94 = scmp.ne.s32.totalorder %s85, %s86
      %p95 = scmp.eq.s32.totalorder %s33, 0
      %p96 = por %p94, %p95
      %p97 = scmp.ne.s32.totalorder %s85, %s86
      %p98 = scmp.eq.s32.totalorder %s34, 1
      %p99 = por %p97, %p98
      %p101 = scmp.ne.s32.totalorder %s86, %s100
      %p102 = scmp.eq.s32.totalorder %s34, 0
      %p103 = por %p101, %p102
      %s105 = sadd.s32 %s104, 1
      %p108 = scmp.eq.s32.totalorder %s28, 1
      %p109 = scmp.ne.s32.totalorder %s104, %s106
      %p110 = scmp.eq.s32.totalorder %s28, 0
      %p111 = por %p109, %p110
      %p112 = scmp.ne.s32.totalorder %s104, %s106
      %p113 = scmp.eq.s32.totalorder %s33, 1
      %p114 = por %p112, %p113
      %p115 = scmp.ne.s32.totalorder %s106, %s107
      %p116 = scmp.eq.s32.totalorder %s33, 0
      %p117 = por %p115, %p116
      %p118 = scmp.ne.s32.totalorder %s106, %s107
      %p119 = scmp.eq.s32.totalorder %s34, 1
      %p120 = por %p118, %p119
      %p122 = scmp.ne.s32.totalorder %s107, %s121
      %p123 = scmp.eq.s32.totalorder %s34, 0
      %p124 = por %p122, %p123
      %s126 = sadd.s32 %s125, 1
      %p129 = scmp.eq.s32.totalorder %s28, 1
      %p130 = scmp.ne.s32.totalorder %s125, %s127
      %p131 = scmp.eq.s32.totalorder %s28, 0
      %p132 = por %p130, %p131
      %p133 = scmp.ne.s32.totalorder %s125, %s127
      %p134 = scmp.eq.s32.totalorder %s33, 1
      %p135 = por %p133, %p134
      %p136 = scmp.ne.s32.totalorder %s127, %s128
      %p137 = scmp.eq.s32.totalorder %s33, 0
      %p138 = por %p136, %p137
      %p139 = scmp.ne.s32.totalorder %s127, %s128
      %p140 = scmp.eq.s32.totalorder %s34, 1
      %p141 = por %p139, %p140
      %p143 = scmp.ne.s32.totalorder %s128, %s142
      %p144 = scmp.eq.s32.totalorder %s34, 0
      %p145 = por %p143, %p144
      %s147 = sadd.s32 %s146, 1
      %p150 = scmp.eq.s32.totalorder %s28, 1
      %p151 = scmp.ne.s32.totalorder %s146, %s148
      %p152 = scmp.eq.s32.totalorder %s28, 0
      %p153 = por %p151, %p152
      %p154 = scmp.ne.s32.totalorder %s146, %s148
      %p155 = scmp.eq.s32.totalorder %s33, 1
      %p156 = por %p154, %p155
      %p157 = scmp.ne.s32.totalorder %s148, %s149
      %p158 = scmp.eq.s32.totalorder %s33, 0
      %p159 = por %p157, %p158
      %p160 = scmp.ne.s32.totalorder %s148, %s149
      %p161 = scmp.eq.s32.totalorder %s34, 1
      %p162 = por %p160, %p161
      %p164 = scmp.ne.s32.totalorder %s149, %s163
      %p165 = scmp.eq.s32.totalorder %s34, 0
      %p166 = por %p164, %p165
      %s168 = sadd.s32 %s167, 1
      %p171 = scmp.eq.s32.totalorder %s28, 1
      %p172 = scmp.ne.s32.totalorder %s167, %s169
      %p173 = scmp.eq.s32.totalorder %s28, 0
      %p174 = por %p172, %p173
      %p175 = scmp.ne.s32.totalorder %s167, %s169
      %p176 = scmp.eq.s32.totalorder %s33, 1
      %p177 = por %p175, %p176
      %p178 = scmp.ne.s32.totalorder %s169, %s170
      %p179 = scmp.eq.s32.totalorder %s33, 0
      %p180 = por %p178, %p179
      %p181 = scmp.ne.s32.totalorder %s169, %s170
      %p182 = scmp.eq.s32.totalorder %s34, 1
      %p183 = por %p181, %p182
      %p185 = scmp.ne.s32.totalorder %s170, %s184
      %p186 = scmp.eq.s32.totalorder %s34, 0
      %p187 = por %p185, %p186
      %s189 = sadd.s32 %s188, 1
      %p192 = scmp.eq.s32.totalorder %s28, 1
      %p193 = scmp.ne.s32.totalorder %s188, %s190
      %p194 = scmp.eq.s32.totalorder %s28, 0
      %p195 = por %p193, %p194
      %p196 = scmp.ne.s32.totalorder %s188, %s190
      %p197 = scmp.eq.s32.totalorder %s33, 1
      %p198 = por %p196, %p197
      %p199 = scmp.ne.s32.totalorder %s190, %s191
      %p200 = scmp.eq.s32.totalorder %s33, 0
      %p201 = por %p199, %p200
      %p202 = scmp.ne.s32.totalorder %s190, %s191
      %p203 = scmp.eq.s32.totalorder %s34, 1
      %p204 = por %p202, %p203
      %p206 = scmp.ne.s32.totalorder %s191, %s205
      %p207 = scmp.eq.s32.totalorder %s34, 0
      %p208 = por %p206, %p207
      %s210 = sadd.s32 %s209, 1
      %p213 = scmp.eq.s32.totalorder %s28, 1
      %p214 = scmp.ne.s32.totalorder %s209, %s211
      %p215 = scmp.eq.s32.totalorder %s28, 0
      %p216 = por %p214, %p215
      %p217 = scmp.ne.s32.totalorder %s209, %s211
      %p218 = scmp.eq.s32.totalorder %s33, 1
      %p219 = por %p217, %p218
      %p220 = scmp.ne.s32.totalorder %s211, %s212
      %p221 = scmp.eq.s32.totalorder %s33, 0
      %p222 = por %p220, %p221
      %p223 = scmp.ne.s32.totalorder %s211, %s212
      %p224 = scmp.eq.s32.totalorder %s34, 1
      %p225 = por %p223, %p224
      %p227 = scmp.ne.s32.totalorder %s212, %s226
      %p228 = scmp.eq.s32.totalorder %s34, 0
      %p229 = por %p227, %p228
      %s231 = sadd.s32 %s230, 1
      %p234 = scmp.eq.s32.totalorder %s28, 1
      %p235 = scmp.ne.s32.totalorder %s230, %s232
      %p236 = scmp.eq.s32.totalorder %s28, 0
      %p237 = por %p235, %p236
      %p238 = scmp.ne.s32.totalorder %s230, %s232
      %p239 = scmp.eq.s32.totalorder %s33, 1
      %p240 = por %p238, %p239
      %p241 = scmp.ne.s32.totalorder %s232, %s233
      %p242 = scmp.eq.s32.totalorder %s33, 0
      %p243 = por %p241, %p242
      %p244 = scmp.ne.s32.totalorder %s232, %s233
      %p245 = scmp.eq.s32.totalorder %s34, 1
      %p246 = por %p244, %p245
      %p248 = scmp.ne.s32.totalorder %s233, %s247
      %p249 = scmp.eq.s32.totalorder %s34, 0
      %p250 = por %p248, %p249
      %s252 = sadd.s32 %s251, 1
      %p255 = scmp.eq.s32.totalorder %s28, 1
      %p256 = scmp.ne.s32.totalorder %s251, %s253
      %p257 = scmp.eq.s32.totalorder %s28, 0
      %p258 = por %p256, %p257
      %p259 = scmp.ne.s32.totalorder %s251, %s253
      %p260 = scmp.eq.s32.totalorder %s33, 1
      %p261 = por %p259, %p260
      %p262 = scmp.ne.s32.totalorder %s253, %s254
      %p263 = scmp.eq.s32.totalorder %s33, 0
      %p264 = por %p262, %p263
      %p265 = scmp.ne.s32.totalorder %s253, %s254
      %p266 = scmp.eq.s32.totalorder %s34, 1
      %p267 = por %p265, %p266
      %p269 = scmp.ne.s32.totalorder %s254, %s268
      %p270 = scmp.eq.s32.totalorder %s34, 0
      %p271 = por %p269, %p270
      %s273 = sadd.s32 %s272, 1
      %p276 = scmp.eq.s32.totalorder %s28, 1
      %p277 = scmp.ne.s32.totalorder %s272, %s274
      %p278 = scmp.eq.s32.totalorder %s28, 0
      %p279 = por %p277, %p278
      %p280 = scmp.ne.s32.totalorder %s272, %s274
      %p281 = scmp.eq.s32.totalorder %s33, 1
      %p282 = por %p280, %p281
      %p283 = scmp.ne.s32.totalorder %s274, %s275
      %p284 = scmp.eq.s32.totalorder %s33, 0
      %p285 = por %p283, %p284
      %p286 = scmp.ne.s32.totalorder %s274, %s275
      %p287 = scmp.eq.s32.totalorder %s34, 1
      %p288 = por %p286, %p287
      %p290 = scmp.ne.s32.totalorder %s275, %s289
      %p291 = scmp.eq.s32.totalorder %s34, 0
      %p292 = por %p290, %p291
      %s294 = sadd.s32 %s293, 1
      %p297 = scmp.eq.s32.totalorder %s28, 1
      %p298 = scmp.ne.s32.totalorder %s293, %s295
      %p299 = scmp.eq.s32.totalorder %s28, 0
      %p300 = por %p298, %p299
      %p301 = scmp.ne.s32.totalorder %s293, %s295
      %p302 = scmp.eq.s32.totalorder %s33, 1
      %p303 = por %p301, %p302
      %p304 = scmp.ne.s32.totalorder %s295, %s296
      %p305 = scmp.eq.s32.totalorder %s33, 0
      %p306 = por %p304, %p305
      %p307 = scmp.ne.s32.totalorder %s295, %s296
      %p308 = scmp.eq.s32.totalorder %s34, 1
      %p309 = por %p307, %p308
      %p311 = scmp.ne.s32.totalorder %s296, %s310
      %p312 = scmp.eq.s32.totalorder %s34, 0
      %p313 = por %p311, %p312
      %s314 = ssub.s32 %s28, %s35
      %p315 = scmp.eq.s32.totalorder %s314, 0
      %s317 = sadd.s32 %s316, 1
      %s318 = scalar_select %p315, %s316, %s317
      %p321 = pneg %p315
      %p322 = scmp.eq.s32.totalorder %s28, 1
      %p323 = por %p321, %p322
      %p324 = scmp.ne.s32.totalorder %s316, %s319
      %p325 = scmp.eq.s32.totalorder %s28, 0
      %p326 = por %p324, %p325
      %p327 = scmp.ne.s32.totalorder %s316, %s319
      %p328 = scmp.eq.s32.totalorder %s33, 1
      %p329 = por %p327, %p328
      %p330 = scmp.ne.s32.totalorder %s319, %s320
      %p331 = scmp.eq.s32.totalorder %s33, 0
      %p332 = por %p330, %p331
      %p333 = scmp.ne.s32.totalorder %s319, %s320
      %p334 = scmp.eq.s32.totalorder %s34, 1
      %p335 = por %p333, %p334
      %p337 = scmp.ne.s32.totalorder %s320, %s336
      %p338 = scmp.eq.s32.totalorder %s34, 0
      %p339 = por %p337, %p338
      %s340 = ssub.s32 %s28, %s35
      %p341 = scmp.eq.s32.totalorder %s340, 0
      %s343 = sadd.s32 %s342, 1
      %s344 = scalar_select %p341, %s342, %s343
      %p347 = pneg %p341
      %p348 = scmp.eq.s32.totalorder %s28, 1
      %p349 = por %p347, %p348
      %p350 = scmp.ne.s32.totalorder %s342, %s345
      %p351 = scmp.eq.s32.totalorder %s28, 0
      %p352 = por %p350, %p351
      %p353 = scmp.ne.s32.totalorder %s342, %s345
      %p354 = scmp.eq.s32.totalorder %s33, 1
      %p355 = por %p353, %p354
      %p356 = scmp.ne.s32.totalorder %s345, %s346
      %p357 = scmp.eq.s32.totalorder %s33, 0
      %p358 = por %p356, %p357
      %p359 = scmp.ne.s32.totalorder %s345, %s346
      %p360 = scmp.eq.s32.totalorder %s34, 1
      %p361 = por %p359, %p360
      %p363 = scmp.ne.s32.totalorder %s346, %s362
      %p364 = scmp.eq.s32.totalorder %s34, 0
      %p365 = por %p363, %p364
      %s366 = ssub.s32 %s28, %s35
      %p367 = scmp.eq.s32.totalorder %s366, 0
      %s369 = sadd.s32 %s368, 1
      %s370 = scalar_select %p367, %s368, %s369
      %p373 = pneg %p367
      %p374 = scmp.eq.s32.totalorder %s28, 1
      %p375 = por %p373, %p374
      %p376 = scmp.ne.s32.totalorder %s368, %s371
      %p377 = scmp.eq.s32.totalorder %s28, 0
      %p378 = por %p376, %p377
      %p379 = scmp.ne.s32.totalorder %s368, %s371
      %p380 = scmp.eq.s32.totalorder %s33, 1
      %p381 = por %p379, %p380
      %p382 = scmp.ne.s32.totalorder %s371, %s372
      %p383 = scmp.eq.s32.totalorder %s33, 0
      %p384 = por %p382, %p383
      %p385 = scmp.ne.s32.totalorder %s371, %s372
      %p386 = scmp.eq.s32.totalorder %s34, 1
      %p387 = por %p385, %p386
      %p389 = scmp.ne.s32.totalorder %s372, %s388
      %p390 = scmp.eq.s32.totalorder %s34, 0
      %p391 = por %p389, %p390
      %p392 = scmp.le.s32.totalorder 1, %s28
      %p393 = scmp.lt.s32.totalorder %s28, 3
      %p394 = pnand %p392, %p393
      %p395 = pneg %p394
      // Predicated region
      $region9: #{tpu_custom_call.1} parent=5 // pred_check
        _
      $region10: #{tpu_custom_call.1} parent=5 // pred_check_branch
        %397 = sbr.rel (%p394) target = $region12
      $region11: #{tpu_custom_call.1} parent=5 // pred_region
        %s398 = ssub.s32 %s28, 1
        // Predicated region
        $region13: #{tpu_custom_call.1} parent=11 // pred_check
          %p399 = pneg %p75
        $region14: #{tpu_custom_call.1} parent=11 // pred_check_branch
          %401 = sbr.rel (%p399) target = $region16
        $region15: #{tpu_custom_call.1} parent=11 // pred_region
          _
        $region16: #{tpu_custom_call.1} parent=11 // pred_fallthru
          _
        // Predicated region
        $region17: #{tpu_custom_call.1} parent=11 // pred_check
          %p402 = pneg %p96
        $region18: #{tpu_custom_call.1} parent=11 // pred_check_branch
          %404 = sbr.rel (%p402) target = $region20
        $region19: #{tpu_custom_call.1} parent=11 // pred_region
          _
        $region20: #{tpu_custom_call.1} parent=11 // pred_fallthru
          _
        // Predicated region
        $region21: #{tpu_custom_call.1} parent=11 // pred_check
          %p405 = pneg %p117
        $region22: #{tpu_custom_call.1} parent=11 // pred_check_branch
          %407 = sbr.rel (%p405) target = $region24
        $region23: #{tpu_custom_call.1} parent=11 // pred_region
          _
        $region24: #{tpu_custom_call.1} parent=11 // pred_fallthru
          _
        // Predicated region
        $region25: #{tpu_custom_call.1} parent=11 // pred_check
          %p408 = pneg %p138
        $region26: #{tpu_custom_call.1} parent=11 // pred_check_branch
          %410 = sbr.rel (%p408) target = $region28
        $region27: #{tpu_custom_call.1} parent=11 // pred_region
          _
        $region28: #{tpu_custom_call.1} parent=11 // pred_fallthru
          _
        // Predicated region
        $region29: #{tpu_custom_call.1} parent=11 // pred_check
          %p411 = pneg %p159
        $region30: #{tpu_custom_call.1} parent=11 // pred_check_branch
          %413 = sbr.rel (%p411) target = $region32
        $region31: #{tpu_custom_call.1} parent=11 // pred_region
          _
        $region32: #{tpu_custom_call.1} parent=11 // pred_fallthru
          _
        // Predicated region
        $region33: #{tpu_custom_call.1} parent=11 // pred_check
          %p414 = pneg %p180
        $region34: #{tpu_custom_call.1} parent=11 // pred_check_branch
          %416 = sbr.rel (%p414) target = $region36
        $region35: #{tpu_custom_call.1} parent=11 // pred_region
          _
        $region36: #{tpu_custom_call.1} parent=11 // pred_fallthru
          _
        // Predicated region
        $region37: #{tpu_custom_call.1} parent=11 // pred_check
          %p417 = pneg %p201
        $region38: #{tpu_custom_call.1} parent=11 // pred_check_branch
          %419 = sbr.rel (%p417) target = $region40
        $region39: #{tpu_custom_call.1} parent=11 // pred_region
          _
        $region40: #{tpu_custom_call.1} parent=11 // pred_fallthru
          _
        // Predicated region
        $region41: #{tpu_custom_call.1} parent=11 // pred_check
          %p420 = pneg %p222
        $region42: #{tpu_custom_call.1} parent=11 // pred_check_branch
          %422 = sbr.rel (%p420) target = $region44
        $region43: #{tpu_custom_call.1} parent=11 // pred_region
          _
        $region44: #{tpu_custom_call.1} parent=11 // pred_fallthru
          _
        // Predicated region
        $region45: #{tpu_custom_call.1} parent=11 // pred_check
          %p423 = pneg %p243
        $region46: #{tpu_custom_call.1} parent=11 // pred_check_branch
          %425 = sbr.rel (%p423) target = $region48
        $region47: #{tpu_custom_call.1} parent=11 // pred_region
          _
        $region48: #{tpu_custom_call.1} parent=11 // pred_fallthru
          _
        // Predicated region
        $region49: #{tpu_custom_call.1} parent=11 // pred_check
          %p426 = pneg %p264
        $region50: #{tpu_custom_call.1} parent=11 // pred_check_branch
          %428 = sbr.rel (%p426) target = $region52
        $region51: #{tpu_custom_call.1} parent=11 // pred_region
          _
        $region52: #{tpu_custom_call.1} parent=11 // pred_fallthru
          _
        // Predicated region
        $region53: #{tpu_custom_call.1} parent=11 // pred_check
          %p429 = pneg %p285
        $region54: #{tpu_custom_call.1} parent=11 // pred_check_branch
          %431 = sbr.rel (%p429) target = $region56
        $region55: #{tpu_custom_call.1} parent=11 // pred_region
          _
        $region56: #{tpu_custom_call.1} parent=11 // pred_fallthru
          _
        // Predicated region
        $region57: #{tpu_custom_call.1} parent=11 // pred_check
          %p432 = pneg %p306
        $region58: #{tpu_custom_call.1} parent=11 // pred_check_branch
          %434 = sbr.rel (%p432) target = $region60
        $region59: #{tpu_custom_call.1} parent=11 // pred_region
          _
        $region60: #{tpu_custom_call.1} parent=11 // pred_fallthru
          _
      $region12: #{tpu_custom_call.1} parent=5 // pred_fallthru
        _
      %p435 = scmp.lt.s32.totalorder %s28, 2
      // Predicated region
      $region61: #{tpu_custom_call.1} parent=5 // pred_check
        %p436 = pneg %p435
      $region62: #{tpu_custom_call.1} parent=5 // pred_check_branch
        %438 = sbr.rel (%p436) target = $region64
      $region63: #{tpu_custom_call.1} parent=5 // pred_region
        // Predicated region
        $region65: #{tpu_custom_call.1} parent=63 // pred_check
          %p439 = pneg %p48
        $region66: #{tpu_custom_call.1} parent=63 // pred_check_branch
          %441 = sbr.rel (%p439) target = $region68
        $region67: #{tpu_custom_call.1} parent=63 // pred_region
          %p442 = scmp.lt.s32.totalorder %s28, 1
          %s443 = scalar_select %p442, %s28, 1
          %s444 = smul.addr %s443, 2
          %s445 = smul.addr %s444, 8
          %s446 = scalar_lea.vmem %s0, %s445
        $region68: #{tpu_custom_call.1} parent=63 // pred_fallthru
          _
      $region64: #{tpu_custom_call.1} parent=5 // pred_fallthru
        _
      %p447 = scmp.le.s32.totalorder 1, %s28
      %p448 = scmp.lt.s32.totalorder %s28, 3
      %p449 = pnand %p447, %p448
      %p450 = pneg %p449
      // Predicated region
      $region69: #{tpu_custom_call.1} parent=5 // pred_check
        _
      $region70: #{tpu_custom_call.1} parent=5 // pred_check_branch
        %452 = sbr.rel (%p449) target = $region72
      $region71: #{tpu_custom_call.1} parent=5 // pred_region
        %s453 = ssub.s32 %s28, 1
        %p454 = scmp.lt.s32.totalorder %s33, 1
        %s455 = scalar_select %p454, %s33, 1
        %s456 = smul.addr %s455, 2
        %s457 = smul.addr %s456, 8
        %s458 = scalar_lea.vmem %s0, %s457
        %p459 = pneg %p54
        %p460 = pneg %p51
        %p461 = pneg %p75
        %p462 = pneg %p72
        %p463 = pneg %p96
        %p464 = pneg %p93
        %p465 = pneg %p117
        %p466 = pneg %p114
        %p467 = pneg %p138
        %p468 = pneg %p135
        %p469 = pneg %p159
        %p470 = pneg %p156
        %p471 = pneg %p180
        %p472 = pneg %p177
        %p473 = pneg %p201
        %p474 = pneg %p198
        %p475 = pneg %p222
        %p476 = pneg %p219
        %p477 = pneg %p243
        %p478 = pneg %p240
        %p479 = pneg %p264
        %p480 = pneg %p261
        %p481 = pneg %p285
        %p482 = pneg %p282
        %p483 = pneg %p306
        %p484 = pneg %p303
        %p485 = pneg %p332
        %p486 = pneg %p329
        %s487 = sand.u32 %s319, 1
        %s488 = scalar_lea.sflag [#allocation3], %s487
        %s489 = sand.u32 %s319, 1
        %s490 = smul.addr %s489, 16
        %s491 = scalar_lea.vmem [#allocation2], %s490
        %p492 = pneg %p358
        %p493 = pneg %p355
        %s494 = sand.u32 %s33, 1
        %s495 = scalar_lea.sflag [#allocation5], %s494
        %s496 = sand.u32 %s345, 1
        %s497 = smul.addr %s496, 16
        %s498 = scalar_lea.vmem [#allocation4], %s497
        %p499 = pneg %p384
        %p500 = pneg %p381
        %s501 = sand.u32 %s33, 1
        %s502 = scalar_lea.sflag [#allocation5], %s501
        %s503 = sand.u32 %s371, 1
        %s504 = smul.addr %s503, 16
        %s505 = scalar_lea.vmem [#allocation6], %s504
        %p506 = scmp.lt.s32.totalorder %s33, 1
        %s507 = scalar_select %p506, %s33, 1
        %s508 = smul.addr %s507, 2
        %s509 = smul.addr %s508, 8
        %s510 = scalar_lea.vmem %s0, %s509
        %v511 = vld [vmem:[%s510] sm:$0xff]
        %v512 = vld [vmem:[%s510 + $0x8] sm:$0xff]
        %v513 = vld [vmem:[%s1] sm:$0x1]
        %v514 = vld [vmem:[%s2] sm:$0x1]
        %vm515 = vcmask 261120
        %v516 = vsel %vm515, %v511, 0.0
        %517 = vadd.xlane.f32.xlu0 %v516
        %v518 = vpop.xlane.xlu0 %517
        %v519 = vsel %vm515, %v512, 0.0
        %520 = vadd.xlane.f32.xlu0 %v519
        %v521 = vpop.xlane.xlu0 %520
        %v522 = vrcp.pop 32.0
        %v523 = vmul.f32 %v518, %v522
        %v524 = vmul.f32 %v521, %v522
        %v525 = vsub.f32 %v511, %v523
        %v526 = vsub.f32 %v512, %v524
        %v527 = vmul.f32 %v525, %v525
        %v528 = vmul.f32 %v526, %v526
        %v529 = vsel %vm515, %v527, 0.0
        %530 = vadd.xlane.f32.xlu0 %v529
        %v531 = vpop.xlane.xlu0 %530
        %v532 = vsel %vm515, %v528, 0.0
        %533 = vadd.xlane.f32.xlu0 %v532
        %v534 = vpop.xlane.xlu0 %533
        %v535 = vrcp.pop 31.0
        %v536 = vmul.f32 %v531, %v535
        %v537 = vmul.f32 %v534, %v535
        %v538 = vrsqrt.pop %v536
        %v539 = vmul.f32 %v536, %v538
        %vm540 = vcmp.eq.f32.partialorder %v536, inf
        %v541 = vsel %vm540, %v536, %v539
        %vm542 = vcmp.eq.f32.partialorder %v536, 0.0
        %v543 = vand.u32 %v536, 2147483648
        %v544 = vsel %vm542, %v543, %v541
        %v545 = vrsqrt.pop %v537
        %v546 = vmul.f32 %v537, %v545
        %vm547 = vcmp.eq.f32.partialorder %v537, inf
        %v548 = vsel %vm547, %v537, %v546
        %vm549 = vcmp.eq.f32.partialorder %v537, 0.0
        %v550 = vand.u32 %v537, 2147483648
        %v551 = vsel %vm549, %v550, %v548
        %v552 = vadd.f32 %v544, 1e-07
        %v553 = vadd.f32 %v551, 1e-07
        %v554 = vrcp.pop %v552
        %v555 = vmul.f32 %v525, %v554
        %v556 = vrcp.pop %v553
        %v557 = vmul.f32 %v526, %v556
        %v559 = vlaneseq
        %v560 = vshrl.u32 %v559, 7
        %v561 = vsub.s32 0, %v560
        %v562 = vrot.slane %v513, %v561
        %v564 = vmul.f32 %v562, %v555
        %v565 = vmul.f32 %v562, %v557
        %v567 = vlaneseq
        %v568 = vshrl.u32 %v567, 7
        %v569 = vsub.s32 0, %v568
        %v570 = vrot.slane %v514, %v569
        %v572 = vadd.f32 %v564, %v570
        %v573 = vadd.f32 %v565, %v570
        %v574 = vld [vmem:[%s3] sm:$0xff]
        %v575 = vld [vmem:[%s3 + $0x8] sm:$0xff]
        %v576 = vld [vmem:[%s3 + $0x10] sm:$0xff]
        %v577 = vld [vmem:[%s3 + $0x18] sm:$0xff]
        %v578 = vld [vmem:[%s4] sm:$0x1]
        %v580 = vlaneseq
        %v581 = vshrl.u32 %v580, 7
        %v582 = vsub.s32 0, %v581
        %v583 = vrot.slane %v578, %v582
        %v586 = vsel %vm515, %v572, 0
        %v589 = vsel %vm515, %v573, 0
        %591 = vmatprep.subr.mxu0 0.0
        %592 = vmatpush1.msra.mxu0 0.0
        %593 = vmatprep.subr.mxu0 0.0
        %594 = vmatpush1.msra.mxu0 0.0
        %595 = vmatprep.subr.mxu0 0.0
        %596 = vmatpush1.msra.mxu0 0.0
        %597 = vmatprep.subr.mxu0 0.0
        %598 = vmatpush1.msra.mxu0 0.0
        %599 = vmatprep.subr.mxu0 0.0
        %600 = vmatpush1.msra.mxu0 0.0
        %601 = vmatprep.subr.mxu0 0.0
        %602 = vmatpush1.msra.mxu0 0.0
        %603 = vmatprep.subr.mxu0 0.0
        %604 = vmatpush1.msra.mxu0 0.0
        %605 = vmatprep.subr.mxu0 0.0
        %606 = vmatpush1.msra.mxu0 0.0
        %607 = vmatprep.subr.mxu0 0.0
        %608 = vmatpush1.msra.mxu0 0.0
        %609 = vmatprep.subr.mxu0 0.0
        %610 = vmatpush1.msra.mxu0 0.0
        %611 = vmatprep.subr.mxu0 0.0
        %612 = vmatpush1.msra.mxu0 0.0
        %613 = vmatprep.subr.mxu0 0.0
        %614 = vmatpush1.msra.mxu0 0.0
        %615 = vmatprep.subr.mxu0 0.0
        %616 = vmatpush1.msra.mxu0 %v577
        %617 = vmatprep.subr.mxu0 0.0
        %618 = vmatpush1.msra.mxu0 %v576
        %619 = vmatprep.subr.mxu0 0.0
        %620 = vmatpush1.msra.mxu0 %v575
        %621 = vmatprep.subr.mxu0 0.0
        %622 = vmatpush1.msra.mxu0 %v574
        %623 = vmatprep.subr.mxu0 0.0
        %624 = vmatpush2.msra.mxu0 0.0
        %625 = vmatprep.subr.mxu0 0.0
        %626 = vmatpush2.msra.mxu0 0.0
        %627 = vmatprep.subr.mxu0 0.0
        %628 = vmatpush2.msra.mxu0 0.0
        %629 = vmatprep.subr.mxu0 0.0
        %630 = vmatpush2.msra.mxu0 0.0
        %631 = vmatprep.subr.mxu0 0.0
        %632 = vmatpush2.msra.mxu0 0.0
        %633 = vmatprep.subr.mxu0 0.0
        %634 = vmatpush2.msra.mxu0 0.0
        %635 = vmatprep.subr.mxu0 0.0
        %636 = vmatpush2.msra.mxu0 0.0
        %637 = vmatprep.subr.mxu0 0.0
        %638 = vmatpush2.msra.mxu0 0.0
        %639 = vmatprep.subr.mxu0 0.0
        %640 = vmatpush2.msra.mxu0 0.0
        %641 = vmatprep.subr.mxu0 0.0
        %642 = vmatpush2.msra.mxu0 0.0
        %643 = vmatprep.subr.mxu0 0.0
        %644 = vmatpush2.msra.mxu0 0.0
        %645 = vmatprep.subr.mxu0 0.0
        %646 = vmatpush2.msra.mxu0 0.0
        %647 = vmatprep.subr.mxu0 0.0
        %648 = vmatpush2.msra.mxu0 0.0
        %649 = vmatprep.subr.mxu0 0.0
        %650 = vmatpush2.msra.mxu0 0.0
        %651 = vmatprep.subr.mxu0 0.0
        %652 = vmatpush2.msra.mxu0 0.0
        %653 = vmatprep.subr.mxu0 0.0
        %654 = vmatpush2.msra.mxu0 0.0
        %655 = vmatprep.mubr.f32.mxu0 0.0
        %656 = vmatmul.mubr.f32.gmra.mxu0 %v586
        %v657 = vpop.f32.mrf.mxu0
        %v658 = vadd.f32 %v583, %v657
        %v659 = vpop.f32.mrf.mxu0
        %660 = vmatprep.mubr.f32.mxu0 0.0
        %661 = vmatmul.mubr.f32.gmra.mxu0 %v589
        %v662 = vpop.f32.mrf.mxu0
        %v663 = vadd.f32 %v583, %v662
        %v664 = vpop.f32.mrf.mxu0
        %665 = vdwg.mxu0
        %668 = vrot.lane.b32.xlu0 %v658, 96
        %v669 = vpop.permute.xlu0 %668
        %670 = vrot.lane.b32.xlu0 %v663, 96
        %v671 = vpop.permute.xlu0 %670
        %674 = vst.msk [vmem:[%s498] sm:$0xff] %vm515, %v669
        %675 = vst.msk [vmem:[%s498 + $0x8] sm:$0xff] %vm515, %v671
        %676 = vrot.lane.b32.xlu0 %v658, 64
        %v677 = vpop.permute.xlu0 %676
        %678 = vrot.lane.b32.xlu0 %v663, 64
        %v679 = vpop.permute.xlu0 %678
        %682 = vst.msk [vmem:[%s505] sm:$0xff] %vm515, %v677
        %683 = vst.msk [vmem:[%s505 + $0x8] sm:$0xff] %vm515, %v679
        %684 = vrot.lane.b32.xlu0 %v658, 120
        %v685 = vpop.permute.xlu0 %684
        %686 = vrot.lane.b32.xlu0 %v663, 120
        %v687 = vpop.permute.xlu0 %686
        %690 = vrot.lane.b32.xlu0 %v658, 112
        %v691 = vpop.permute.xlu0 %690
        %692 = vrot.lane.b32.xlu0 %v663, 112
        %v693 = vpop.permute.xlu0 %692
        %696 = vrot.lane.b32.xlu0 %v658, 104
        %v697 = vpop.permute.xlu0 %696
        %698 = vrot.lane.b32.xlu0 %v663, 104
        %v699 = vpop.permute.xlu0 %698
        %v702 = vcombine.low %v658, %v691
        %v703 = vcombine.high %v658, %v691
        %v705 = vunpack.c.l.s4 1983009808
        %v706 = vunpack.c.0.s8 %v705
        %v707 = vlaneseq
        %v708 = vshrl.u32 %v707, 7
        %v709 = vsub.s32 %v706, %v708
        %v710 = vrot.slane %v702, %v709
        %v712 = vunpack.c.l.s4 1983009808
        %v713 = vunpack.c.0.s8 %v712
        %v714 = vlaneseq
        %v715 = vshrl.u32 %v714, 7
        %v716 = vsub.s32 %v713, %v715
        %v717 = vrot.slane %v703, %v716
        %v718 = vcombine.low %v685, %v697
        %v719 = vcombine.high %v685, %v697
        %v721 = vunpack.c.l.s4 1983009808
        %v722 = vunpack.c.0.s8 %v721
        %v723 = vlaneseq
        %v724 = vshrl.u32 %v723, 7
        %v725 = vsub.s32 %v722, %v724
        %v726 = vrot.slane %v718, %v725
        %v728 = vunpack.c.l.s4 1983009808
        %v729 = vunpack.c.0.s8 %v728
        %v730 = vlaneseq
        %v731 = vshrl.u32 %v730, 7
        %v732 = vsub.s32 %v729, %v731
        %v733 = vrot.slane %v719, %v732
        %v734 = vcombine.low %v710, %v726
        %v735 = vcombine.high %v710, %v726
        %v737 = vunpack.c.l.s4 1934713408
        %v738 = vunpack.c.0.s8 %v737
        %v739 = vlaneseq
        %v740 = vshrl.u32 %v739, 7
        %v741 = vsub.s32 %v738, %v740
        %v742 = vrot.slane %v734, %v741
        %v744 = vunpack.c.l.s4 1934713408
        %v745 = vunpack.c.0.s8 %v744
        %v746 = vlaneseq
        %v747 = vshrl.u32 %v746, 7
        %v748 = vsub.s32 %v745, %v747
        %v749 = vrot.slane %v735, %v748
        %v750 = vcombine.low %v717, %v733
        %v751 = vcombine.high %v717, %v733
        %v753 = vunpack.c.l.s4 1934713408
        %v754 = vunpack.c.0.s8 %v753
        %v755 = vlaneseq
        %v756 = vshrl.u32 %v755, 7
        %v757 = vsub.s32 %v754, %v756
        %v758 = vrot.slane %v750, %v757
        %v760 = vunpack.c.l.s4 1934713408
        %v761 = vunpack.c.0.s8 %v760
        %v762 = vlaneseq
        %v763 = vshrl.u32 %v762, 7
        %v764 = vsub.s32 %v761, %v763
        %v765 = vrot.slane %v751, %v764
        %v766 = vcombine.high %v742, 0.0
        %v767 = vcombine.high %v749, 0.0
        %v768 = vcombine.high %v758, 0.0
        %v769 = vcombine.high %v765, 0.0
        %v770 = vcombine.low %v663, %v693
        %v771 = vcombine.high %v663, %v693
        %v773 = vunpack.c.l.s4 1983009808
        %v774 = vunpack.c.0.s8 %v773
        %v775 = vlaneseq
        %v776 = vshrl.u32 %v775, 7
        %v777 = vsub.s32 %v774, %v776
        %v778 = vrot.slane %v770, %v777
        %v780 = vunpack.c.l.s4 1983009808
        %v781 = vunpack.c.0.s8 %v780
        %v782 = vlaneseq
        %v783 = vshrl.u32 %v782, 7
        %v784 = vsub.s32 %v781, %v783
        %v785 = vrot.slane %v771, %v784
        %v786 = vcombine.low %v687, %v699
        %v787 = vcombine.high %v687, %v699
        %v789 = vunpack.c.l.s4 1983009808
        %v790 = vunpack.c.0.s8 %v789
        %v791 = vlaneseq
        %v792 = vshrl.u32 %v791, 7
        %v793 = vsub.s32 %v790, %v792
        %v794 = vrot.slane %v786, %v793
        %v796 = vunpack.c.l.s4 1983009808
        %v797 = vunpack.c.0.s8 %v796
        %v798 = vlaneseq
        %v799 = vshrl.u32 %v798, 7
        %v800 = vsub.s32 %v797, %v799
        %v801 = vrot.slane %v787, %v800
        %v802 = vcombine.low %v778, %v794
        %v803 = vcombine.high %v778, %v794
        %v805 = vunpack.c.l.s4 1934713408
        %v806 = vunpack.c.0.s8 %v805
        %v807 = vlaneseq
        %v808 = vshrl.u32 %v807, 7
        %v809 = vsub.s32 %v806, %v808
        %v810 = vrot.slane %v802, %v809
        %v812 = vunpack.c.l.s4 1934713408
        %v813 = vunpack.c.0.s8 %v812
        %v814 = vlaneseq
        %v815 = vshrl.u32 %v814, 7
        %v816 = vsub.s32 %v813, %v815
        %v817 = vrot.slane %v803, %v816
        %v818 = vcombine.low %v785, %v801
        %v819 = vcombine.high %v785, %v801
        %v821 = vunpack.c.l.s4 1934713408
        %v822 = vunpack.c.0.s8 %v821
        %v823 = vlaneseq
        %v824 = vshrl.u32 %v823, 7
        %v825 = vsub.s32 %v822, %v824
        %v826 = vrot.slane %v818, %v825
        %v828 = vunpack.c.l.s4 1934713408
        %v829 = vunpack.c.0.s8 %v828
        %v830 = vlaneseq
        %v831 = vshrl.u32 %v830, 7
        %v832 = vsub.s32 %v829, %v831
        %v833 = vrot.slane %v819, %v832
        %v834 = vcombine.high %v810, 0.0
        %v835 = vcombine.high %v817, 0.0
        %v836 = vcombine.high %v826, 0.0
        %v837 = vcombine.high %v833, 0.0
        %v838 = vcombine.low %v742, %v749
        %v840 = vunpack.c.l.s4 1983009808
        %v841 = vunpack.c.0.s8 %v840
        %v842 = vlaneseq
        %v843 = vshrl.u32 %v842, 7
        %v844 = vsub.s32 %v841, %v843
        %v845 = vrot.slane %v838, %v844
        %v846 = vcombine.low %v766, %v767
        %v848 = vunpack.c.l.s4 1983009808
        %v849 = vunpack.c.0.s8 %v848
        %v850 = vlaneseq
        %v851 = vshrl.u32 %v850, 7
        %v852 = vsub.s32 %v849, %v851
        %v853 = vrot.slane %v846, %v852
        %v854 = vcombine.low %v758, %v765
        %v856 = vunpack.c.l.s4 1983009808
        %v857 = vunpack.c.0.s8 %v856
        %v858 = vlaneseq
        %v859 = vshrl.u32 %v858, 7
        %v860 = vsub.s32 %v857, %v859
        %v861 = vrot.slane %v854, %v860
        %v862 = vcombine.low %v768, %v769
        %v864 = vunpack.c.l.s4 1983009808
        %v865 = vunpack.c.0.s8 %v864
        %v866 = vlaneseq
        %v867 = vshrl.u32 %v866, 7
        %v868 = vsub.s32 %v865, %v867
        %v869 = vrot.slane %v862, %v868
        %v870 = vcombine.low %v845, %v853
        %v871 = vcombine.high %v845, %v853
        %v873 = vunpack.c.l.s4 1934713408
        %v874 = vunpack.c.0.s8 %v873
        %v875 = vlaneseq
        %v876 = vshrl.u32 %v875, 7
        %v877 = vsub.s32 %v874, %v876
        %v878 = vrot.slane %v870, %v877
        %v880 = vunpack.c.l.s4 1934713408
        %v881 = vunpack.c.0.s8 %v880
        %v882 = vlaneseq
        %v883 = vshrl.u32 %v882, 7
        %v884 = vsub.s32 %v881, %v883
        %v885 = vrot.slane %v871, %v884
        %v886 = vcombine.low %v861, %v869
        %v887 = vcombine.high %v861, %v869
        %v889 = vunpack.c.l.s4 1934713408
        %v890 = vunpack.c.0.s8 %v889
        %v891 = vlaneseq
        %v892 = vshrl.u32 %v891, 7
        %v893 = vsub.s32 %v890, %v892
        %v894 = vrot.slane %v886, %v893
        %v896 = vunpack.c.l.s4 1934713408
        %v897 = vunpack.c.0.s8 %v896
        %v898 = vlaneseq
        %v899 = vshrl.u32 %v898, 7
        %v900 = vsub.s32 %v897, %v899
        %v901 = vrot.slane %v887, %v900
        %v902 = vcombine.low %v878, %v894
        %v903 = vcombine.high %v878, %v894
        %v904 = vcombine.low %v885, %v901
        %v905 = vcombine.high %v885, %v901
        %v906 = vcombine.low %v810, %v817
        %v908 = vunpack.c.l.s4 1983009808
        %v909 = vunpack.c.0.s8 %v908
        %v910 = vlaneseq
        %v911 = vshrl.u32 %v910, 7
        %v912 = vsub.s32 %v909, %v911
        %v913 = vrot.slane %v906, %v912
        %v914 = vcombine.low %v834, %v835
        %v916 = vunpack.c.l.s4 1983009808
        %v917 = vunpack.c.0.s8 %v916
        %v918 = vlaneseq
        %v919 = vshrl.u32 %v918, 7
        %v920 = vsub.s32 %v917, %v919
        %v921 = vrot.slane %v914, %v920
        %v922 = vcombine.low %v826, %v833
        %v924 = vunpack.c.l.s4 1983009808
        %v925 = vunpack.c.0.s8 %v924
        %v926 = vlaneseq
        %v927 = vshrl.u32 %v926, 7
        %v928 = vsub.s32 %v925, %v927
        %v929 = vrot.slane %v922, %v928
        %v930 = vcombine.low %v836, %v837
        %v932 = vunpack.c.l.s4 1983009808
        %v933 = vunpack.c.0.s8 %v932
        %v934 = vlaneseq
        %v935 = vshrl.u32 %v934, 7
        %v936 = vsub.s32 %v933, %v935
        %v937 = vrot.slane %v930, %v936
        %v938 = vcombine.low %v913, %v921
        %v939 = vcombine.high %v913, %v921
        %v941 = vunpack.c.l.s4 1934713408
        %v942 = vunpack.c.0.s8 %v941
        %v943 = vlaneseq
        %v944 = vshrl.u32 %v943, 7
        %v945 = vsub.s32 %v942, %v944
        %v946 = vrot.slane %v938, %v945
        %v948 = vunpack.c.l.s4 1934713408
        %v949 = vunpack.c.0.s8 %v948
        %v950 = vlaneseq
        %v951 = vshrl.u32 %v950, 7
        %v952 = vsub.s32 %v949, %v951
        %v953 = vrot.slane %v939, %v952
        %v954 = vcombine.low %v929, %v937
        %v955 = vcombine.high %v929, %v937
        %v957 = vunpack.c.l.s4 1934713408
        %v958 = vunpack.c.0.s8 %v957
        %v959 = vlaneseq
        %v960 = vshrl.u32 %v959, 7
        %v961 = vsub.s32 %v958, %v960
        %v962 = vrot.slane %v954, %v961
        %v964 = vunpack.c.l.s4 1934713408
        %v965 = vunpack.c.0.s8 %v964
        %v966 = vlaneseq
        %v967 = vshrl.u32 %v966, 7
        %v968 = vsub.s32 %v965, %v967
        %v969 = vrot.slane %v955, %v968
        %v970 = vcombine.low %v946, %v962
        %v971 = vcombine.high %v946, %v962
        %v972 = vcombine.low %v953, %v969
        %v973 = vcombine.high %v953, %v969
        %974 = vrot.lane.b32.xlu0 %v685, 96
        %v975 = vpop.permute.xlu0 %974
        %976 = vrot.lane.b32.xlu0 %v687, 96
        %v977 = vpop.permute.xlu0 %976
        %978 = vrot.lane.b32.xlu0 %v691, 96
        %v979 = vpop.permute.xlu0 %978
        %980 = vrot.lane.b32.xlu0 %v693, 96
        %v981 = vpop.permute.xlu0 %980
        %982 = vrot.lane.b32.xlu0 %v697, 96
        %v983 = vpop.permute.xlu0 %982
        %984 = vrot.lane.b32.xlu0 %v699, 96
        %v985 = vpop.permute.xlu0 %984
        %v992 = vcombine.low %v669, %v979
        %v993 = vcombine.high %v669, %v979
        %v995 = vunpack.c.l.s4 1983009808
        %v996 = vunpack.c.0.s8 %v995
        %v997 = vlaneseq
        %v998 = vshrl.u32 %v997, 7
        %v999 = vsub.s32 %v996, %v998
        %v1000 = vrot.slane %v992, %v999
        %v1002 = vunpack.c.l.s4 1983009808
        %v1003 = vunpack.c.0.s8 %v1002
        %v1004 = vlaneseq
        %v1005 = vshrl.u32 %v1004, 7
        %v1006 = vsub.s32 %v1003, %v1005
        %v1007 = vrot.slane %v993, %v1006
        %v1008 = vcombine.low %v975, %v983
        %v1009 = vcombine.high %v975, %v983
        %v1011 = vunpack.c.l.s4 1983009808
        %v1012 = vunpack.c.0.s8 %v1011
        %v1013 = vlaneseq
        %v1014 = vshrl.u32 %v1013, 7
        %v1015 = vsub.s32 %v1012, %v1014
        %v1016 = vrot.slane %v1008, %v1015
        %v1018 = vunpack.c.l.s4 1983009808
        %v1019 = vunpack.c.0.s8 %v1018
        %v1020 = vlaneseq
        %v1021 = vshrl.u32 %v1020, 7
        %v1022 = vsub.s32 %v1019, %v1021
        %v1023 = vrot.slane %v1009, %v1022
        %v1024 = vcombine.low %v1000, %v1016
        %v1025 = vcombine.high %v1000, %v1016
        %v1027 = vunpack.c.l.s4 1934713408
        %v1028 = vunpack.c.0.s8 %v1027
        %v1029 = vlaneseq
        %v1030 = vshrl.u32 %v1029, 7
        %v1031 = vsub.s32 %v1028, %v1030
        %v1032 = vrot.slane %v1024, %v1031
        %v1034 = vunpack.c.l.s4 1934713408
        %v1035 = vunpack.c.0.s8 %v1034
        %v1036 = vlaneseq
        %v1037 = vshrl.u32 %v1036, 7
        %v1038 = vsub.s32 %v1035, %v1037
        %v1039 = vrot.slane %v1025, %v1038
        %v1040 = vcombine.low %v1007, %v1023
        %v1041 = vcombine.high %v1007, %v1023
        %v1043 = vunpack.c.l.s4 1934713408
        %v1044 = vunpack.c.0.s8 %v1043
        %v1045 = vlaneseq
        %v1046 = vshrl.u32 %v1045, 7
        %v1047 = vsub.s32 %v1044, %v1046
        %v1048 = vrot.slane %v1040, %v1047
        %v1050 = vunpack.c.l.s4 1934713408
        %v1051 = vunpack.c.0.s8 %v1050
        %v1052 = vlaneseq
        %v1053 = vshrl.u32 %v1052, 7
        %v1054 = vsub.s32 %v1051, %v1053
        %v1055 = vrot.slane %v1041, %v1054
        %v1056 = vcombine.high %v1032, 0.0
        %v1057 = vcombine.high %v1039, 0.0
        %v1058 = vcombine.high %v1048, 0.0
        %v1059 = vcombine.high %v1055, 0.0
        %v1060 = vcombine.low %v671, %v981
        %v1061 = vcombine.high %v671, %v981
        %v1063 = vunpack.c.l.s4 1983009808
        %v1064 = vunpack.c.0.s8 %v1063
        %v1065 = vlaneseq
        %v1066 = vshrl.u32 %v1065, 7
        %v1067 = vsub.s32 %v1064, %v1066
        %v1068 = vrot.slane %v1060, %v1067
        %v1070 = vunpack.c.l.s4 1983009808
        %v1071 = vunpack.c.0.s8 %v1070
        %v1072 = vlaneseq
        %v1073 = vshrl.u32 %v1072, 7
        %v1074 = vsub.s32 %v1071, %v1073
        %v1075 = vrot.slane %v1061, %v1074
        %v1076 = vcombine.low %v977, %v985
        %v1077 = vcombine.high %v977, %v985
        %v1079 = vunpack.c.l.s4 1983009808
        %v1080 = vunpack.c.0.s8 %v1079
        %v1081 = vlaneseq
        %v1082 = vshrl.u32 %v1081, 7
        %v1083 = vsub.s32 %v1080, %v1082
        %v1084 = vrot.slane %v1076, %v1083
        %v1086 = vunpack.c.l.s4 1983009808
        %v1087 = vunpack.c.0.s8 %v1086
        %v1088 = vlaneseq
        %v1089 = vshrl.u32 %v1088, 7
        %v1090 = vsub.s32 %v1087, %v1089
        %v1091 = vrot.slane %v1077, %v1090
        %v1092 = vcombine.low %v1068, %v1084
        %v1093 = vcombine.high %v1068, %v1084
        %v1095 = vunpack.c.l.s4 1934713408
        %v1096 = vunpack.c.0.s8 %v1095
        %v1097 = vlaneseq
        %v1098 = vshrl.u32 %v1097, 7
        %v1099 = vsub.s32 %v1096, %v1098
        %v1100 = vrot.slane %v1092, %v1099
        %v1102 = vunpack.c.l.s4 1934713408
        %v1103 = vunpack.c.0.s8 %v1102
        %v1104 = vlaneseq
        %v1105 = vshrl.u32 %v1104, 7
        %v1106 = vsub.s32 %v1103, %v1105
        %v1107 = vrot.slane %v1093, %v1106
        %v1108 = vcombine.low %v1075, %v1091
        %v1109 = vcombine.high %v1075, %v1091
        %v1111 = vunpack.c.l.s4 1934713408
        %v1112 = vunpack.c.0.s8 %v1111
        %v1113 = vlaneseq
        %v1114 = vshrl.u32 %v1113, 7
        %v1115 = vsub.s32 %v1112, %v1114
        %v1116 = vrot.slane %v1108, %v1115
        %v1118 = vunpack.c.l.s4 1934713408
        %v1119 = vunpack.c.0.s8 %v1118
        %v1120 = vlaneseq
        %v1121 = vshrl.u32 %v1120, 7
        %v1122 = vsub.s32 %v1119, %v1121
        %v1123 = vrot.slane %v1109, %v1122
        %v1124 = vcombine.high %v1100, 0.0
        %v1125 = vcombine.high %v1107, 0.0
        %v1126 = vcombine.high %v1116, 0.0
        %v1127 = vcombine.high %v1123, 0.0
        %v1128 = vcombine.low %v1032, %v1039
        %v1130 = vunpack.c.l.s4 1983009808
        %v1131 = vunpack.c.0.s8 %v1130
        %v1132 = vlaneseq
        %v1133 = vshrl.u32 %v1132, 7
        %v1134 = vsub.s32 %v1131, %v1133
        %v1135 = vrot.slane %v1128, %v1134
        %v1136 = vcombine.low %v1056, %v1057
        %v1138 = vunpack.c.l.s4 1983009808
        %v1139 = vunpack.c.0.s8 %v1138
        %v1140 = vlaneseq
        %v1141 = vshrl.u32 %v1140, 7
        %v1142 = vsub.s32 %v1139, %v1141
        %v1143 = vrot.slane %v1136, %v1142
        %v1144 = vcombine.low %v1048, %v1055
        %v1146 = vunpack.c.l.s4 1983009808
        %v1147 = vunpack.c.0.s8 %v1146
        %v1148 = vlaneseq
        %v1149 = vshrl.u32 %v1148, 7
        %v1150 = vsub.s32 %v1147, %v1149
        %v1151 = vrot.slane %v1144, %v1150
        %v1152 = vcombine.low %v1058, %v1059
        %v1154 = vunpack.c.l.s4 1983009808
        %v1155 = vunpack.c.0.s8 %v1154
        %v1156 = vlaneseq
        %v1157 = vshrl.u32 %v1156, 7
        %v1158 = vsub.s32 %v1155, %v1157
        %v1159 = vrot.slane %v1152, %v1158
        %v1160 = vcombine.low %v1135, %v1143
        %v1161 = vcombine.high %v1135, %v1143
        %v1163 = vunpack.c.l.s4 1934713408
        %v1164 = vunpack.c.0.s8 %v1163
        %v1165 = vlaneseq
        %v1166 = vshrl.u32 %v1165, 7
        %v1167 = vsub.s32 %v1164, %v1166
        %v1168 = vrot.slane %v1160, %v1167
        %v1170 = vunpack.c.l.s4 1934713408
        %v1171 = vunpack.c.0.s8 %v1170
        %v1172 = vlaneseq
        %v1173 = vshrl.u32 %v1172, 7
        %v1174 = vsub.s32 %v1171, %v1173
        %v1175 = vrot.slane %v1161, %v1174
        %v1176 = vcombine.low %v1151, %v1159
        %v1177 = vcombine.high %v1151, %v1159
        %v1179 = vunpack.c.l.s4 1934713408
        %v1180 = vunpack.c.0.s8 %v1179
        %v1181 = vlaneseq
        %v1182 = vshrl.u32 %v1181, 7
        %v1183 = vsub.s32 %v1180, %v1182
        %v1184 = vrot.slane %v1176, %v1183
        %v1186 = vunpack.c.l.s4 1934713408
        %v1187 = vunpack.c.0.s8 %v1186
        %v1188 = vlaneseq
        %v1189 = vshrl.u32 %v1188, 7
        %v1190 = vsub.s32 %v1187, %v1189
        %v1191 = vrot.slane %v1177, %v1190
        %v1192 = vcombine.low %v1168, %v1184
        %v1193 = vcombine.high %v1168, %v1184
        %v1194 = vcombine.low %v1175, %v1191
        %v1195 = vcombine.high %v1175, %v1191
        %v1196 = vcombine.low %v1100, %v1107
        %v1198 = vunpack.c.l.s4 1983009808
        %v1199 = vunpack.c.0.s8 %v1198
        %v1200 = vlaneseq
        %v1201 = vshrl.u32 %v1200, 7
        %v1202 = vsub.s32 %v1199, %v1201
        %v1203 = vrot.slane %v1196, %v1202
        %v1204 = vcombine.low %v1124, %v1125
        %v1206 = vunpack.c.l.s4 1983009808
        %v1207 = vunpack.c.0.s8 %v1206
        %v1208 = vlaneseq
        %v1209 = vshrl.u32 %v1208, 7
        %v1210 = vsub.s32 %v1207, %v1209
        %v1211 = vrot.slane %v1204, %v1210
        %v1212 = vcombine.low %v1116, %v1123
        %v1214 = vunpack.c.l.s4 1983009808
        %v1215 = vunpack.c.0.s8 %v1214
        %v1216 = vlaneseq
        %v1217 = vshrl.u32 %v1216, 7
        %v1218 = vsub.s32 %v1215, %v1217
        %v1219 = vrot.slane %v1212, %v1218
        %v1220 = vcombine.low %v1126, %v1127
        %v1222 = vunpack.c.l.s4 1983009808
        %v1223 = vunpack.c.0.s8 %v1222
        %v1224 = vlaneseq
        %v1225 = vshrl.u32 %v1224, 7
        %v1226 = vsub.s32 %v1223, %v1225
        %v1227 = vrot.slane %v1220, %v1226
        %v1228 = vcombine.low %v1203, %v1211
        %v1229 = vcombine.high %v1203, %v1211
        %v1231 = vunpack.c.l.s4 1934713408
        %v1232 = vunpack.c.0.s8 %v1231
        %v1233 = vlaneseq
        %v1234 = vshrl.u32 %v1233, 7
        %v1235 = vsub.s32 %v1232, %v1234
        %v1236 = vrot.slane %v1228, %v1235
        %v1238 = vunpack.c.l.s4 1934713408
        %v1239 = vunpack.c.0.s8 %v1238
        %v1240 = vlaneseq
        %v1241 = vshrl.u32 %v1240, 7
        %v1242 = vsub.s32 %v1239, %v1241
        %v1243 = vrot.slane %v1229, %v1242
        %v1244 = vcombine.low %v1219, %v1227
        %v1245 = vcombine.high %v1219, %v1227
        %v1247 = vunpack.c.l.s4 1934713408
        %v1248 = vunpack.c.0.s8 %v1247
        %v1249 = vlaneseq
        %v1250 = vshrl.u32 %v1249, 7
        %v1251 = vsub.s32 %v1248, %v1250
        %v1252 = vrot.slane %v1244, %v1251
        %v1254 = vunpack.c.l.s4 1934713408
        %v1255 = vunpack.c.0.s8 %v1254
        %v1256 = vlaneseq
        %v1257 = vshrl.u32 %v1256, 7
        %v1258 = vsub.s32 %v1255, %v1257
        %v1259 = vrot.slane %v1245, %v1258
        %v1260 = vcombine.low %v1236, %v1252
        %v1261 = vcombine.high %v1236, %v1252
        %v1262 = vcombine.low %v1243, %v1259
        %v1263 = vcombine.high %v1243, %v1259
        %1264 = vrot.lane.b32.xlu0 %v685, 64
        %v1265 = vpop.permute.xlu0 %1264
        %1266 = vrot.lane.b32.xlu0 %v687, 64
        %v1267 = vpop.permute.xlu0 %1266
        %1268 = vrot.lane.b32.xlu0 %v691, 64
        %v1269 = vpop.permute.xlu0 %1268
        %1270 = vrot.lane.b32.xlu0 %v693, 64
        %v1271 = vpop.permute.xlu0 %1270
        %1272 = vrot.lane.b32.xlu0 %v697, 64
        %v1273 = vpop.permute.xlu0 %1272
        %1274 = vrot.lane.b32.xlu0 %v699, 64
        %v1275 = vpop.permute.xlu0 %1274
        %v1282 = vcombine.low %v677, %v1269
        %v1283 = vcombine.high %v677, %v1269
        %v1285 = vunpack.c.l.s4 1983009808
        %v1286 = vunpack.c.0.s8 %v1285
        %v1287 = vlaneseq
        %v1288 = vshrl.u32 %v1287, 7
        %v1289 = vsub.s32 %v1286, %v1288
        %v1290 = vrot.slane %v1282, %v1289
        %v1292 = vunpack.c.l.s4 1983009808
        %v1293 = vunpack.c.0.s8 %v1292
        %v1294 = vlaneseq
        %v1295 = vshrl.u32 %v1294, 7
        %v1296 = vsub.s32 %v1293, %v1295
        %v1297 = vrot.slane %v1283, %v1296
        %v1298 = vcombine.low %v1265, %v1273
        %v1299 = vcombine.high %v1265, %v1273
        %v1301 = vunpack.c.l.s4 1983009808
        %v1302 = vunpack.c.0.s8 %v1301
        %v1303 = vlaneseq
        %v1304 = vshrl.u32 %v1303, 7
        %v1305 = vsub.s32 %v1302, %v1304
        %v1306 = vrot.slane %v1298, %v1305
        %v1308 = vunpack.c.l.s4 1983009808
        %v1309 = vunpack.c.0.s8 %v1308
        %v1310 = vlaneseq
        %v1311 = vshrl.u32 %v1310, 7
        %v1312 = vsub.s32 %v1309, %v1311
        %v1313 = vrot.slane %v1299, %v1312
        %v1314 = vcombine.low %v1290, %v1306
        %v1315 = vcombine.high %v1290, %v1306
        %v1317 = vunpack.c.l.s4 1934713408
        %v1318 = vunpack.c.0.s8 %v1317
        %v1319 = vlaneseq
        %v1320 = vshrl.u32 %v1319, 7
        %v1321 = vsub.s32 %v1318, %v1320
        %v1322 = vrot.slane %v1314, %v1321
        %v1324 = vunpack.c.l.s4 1934713408
        %v1325 = vunpack.c.0.s8 %v1324
        %v1326 = vlaneseq
        %v1327 = vshrl.u32 %v1326, 7
        %v1328 = vsub.s32 %v1325, %v1327
        %v1329 = vrot.slane %v1315, %v1328
        %v1330 = vcombine.low %v1297, %v1313
        %v1331 = vcombine.high %v1297, %v1313
        %v1333 = vunpack.c.l.s4 1934713408
        %v1334 = vunpack.c.0.s8 %v1333
        %v1335 = vlaneseq
        %v1336 = vshrl.u32 %v1335, 7
        %v1337 = vsub.s32 %v1334, %v1336
        %v1338 = vrot.slane %v1330, %v1337
        %v1340 = vunpack.c.l.s4 1934713408
        %v1341 = vunpack.c.0.s8 %v1340
        %v1342 = vlaneseq
        %v1343 = vshrl.u32 %v1342, 7
        %v1344 = vsub.s32 %v1341, %v1343
        %v1345 = vrot.slane %v1331, %v1344
        %v1346 = vcombine.high %v1322, 0.0
        %v1347 = vcombine.high %v1329, 0.0
        %v1348 = vcombine.high %v1338, 0.0
        %v1349 = vcombine.high %v1345, 0.0
        %v1350 = vcombine.low %v679, %v1271
        %v1351 = vcombine.high %v679, %v1271
        %v1353 = vunpack.c.l.s4 1983009808
        %v1354 = vunpack.c.0.s8 %v1353
        %v1355 = vlaneseq
        %v1356 = vshrl.u32 %v1355, 7
        %v1357 = vsub.s32 %v1354, %v1356
        %v1358 = vrot.slane %v1350, %v1357
        %v1360 = vunpack.c.l.s4 1983009808
        %v1361 = vunpack.c.0.s8 %v1360
        %v1362 = vlaneseq
        %v1363 = vshrl.u32 %v1362, 7
        %v1364 = vsub.s32 %v1361, %v1363
        %v1365 = vrot.slane %v1351, %v1364
        %v1366 = vcombine.low %v1267, %v1275
        %v1367 = vcombine.high %v1267, %v1275
        %v1369 = vunpack.c.l.s4 1983009808
        %v1370 = vunpack.c.0.s8 %v1369
        %v1371 = vlaneseq
        %v1372 = vshrl.u32 %v1371, 7
        %v1373 = vsub.s32 %v1370, %v1372
        %v1374 = vrot.slane %v1366, %v1373
        %v1376 = vunpack.c.l.s4 1983009808
        %v1377 = vunpack.c.0.s8 %v1376
        %v1378 = vlaneseq
        %v1379 = vshrl.u32 %v1378, 7
        %v1380 = vsub.s32 %v1377, %v1379
        %v1381 = vrot.slane %v1367, %v1380
        %v1382 = vcombine.low %v1358, %v1374
        %v1383 = vcombine.high %v1358, %v1374
        %v1385 = vunpack.c.l.s4 1934713408
        %v1386 = vunpack.c.0.s8 %v1385
        %v1387 = vlaneseq
        %v1388 = vshrl.u32 %v1387, 7
        %v1389 = vsub.s32 %v1386, %v1388
        %v1390 = vrot.slane %v1382, %v1389
        %v1392 = vunpack.c.l.s4 1934713408
        %v1393 = vunpack.c.0.s8 %v1392
        %v1394 = vlaneseq
        %v1395 = vshrl.u32 %v1394, 7
        %v1396 = vsub.s32 %v1393, %v1395
        %v1397 = vrot.slane %v1383, %v1396
        %v1398 = vcombine.low %v1365, %v1381
        %v1399 = vcombine.high %v1365, %v1381
        %v1401 = vunpack.c.l.s4 1934713408
        %v1402 = vunpack.c.0.s8 %v1401
        %v1403 = vlaneseq
        %v1404 = vshrl.u32 %v1403, 7
        %v1405 = vsub.s32 %v1402, %v1404
        %v1406 = vrot.slane %v1398, %v1405
        %v1408 = vunpack.c.l.s4 1934713408
        %v1409 = vunpack.c.0.s8 %v1408
        %v1410 = vlaneseq
        %v1411 = vshrl.u32 %v1410, 7
        %v1412 = vsub.s32 %v1409, %v1411
        %v1413 = vrot.slane %v1399, %v1412
        %v1414 = vcombine.high %v1390, 0.0
        %v1415 = vcombine.high %v1397, 0.0
        %v1416 = vcombine.high %v1406, 0.0
        %v1417 = vcombine.high %v1413, 0.0
        %v1418 = vcombine.low %v1322, %v1329
        %v1420 = vunpack.c.l.s4 1983009808
        %v1421 = vunpack.c.0.s8 %v1420
        %v1422 = vlaneseq
        %v1423 = vshrl.u32 %v1422, 7
        %v1424 = vsub.s32 %v1421, %v1423
        %v1425 = vrot.slane %v1418, %v1424
        %v1426 = vcombine.low %v1346, %v1347
        %v1428 = vunpack.c.l.s4 1983009808
        %v1429 = vunpack.c.0.s8 %v1428
        %v1430 = vlaneseq
        %v1431 = vshrl.u32 %v1430, 7
        %v1432 = vsub.s32 %v1429, %v1431
        %v1433 = vrot.slane %v1426, %v1432
        %v1434 = vcombine.low %v1338, %v1345
        %v1436 = vunpack.c.l.s4 1983009808
        %v1437 = vunpack.c.0.s8 %v1436
        %v1438 = vlaneseq
        %v1439 = vshrl.u32 %v1438, 7
        %v1440 = vsub.s32 %v1437, %v1439
        %v1441 = vrot.slane %v1434, %v1440
        %v1442 = vcombine.low %v1348, %v1349
        %v1444 = vunpack.c.l.s4 1983009808
        %v1445 = vunpack.c.0.s8 %v1444
        %v1446 = vlaneseq
        %v1447 = vshrl.u32 %v1446, 7
        %v1448 = vsub.s32 %v1445, %v1447
        %v1449 = vrot.slane %v1442, %v1448
        %v1450 = vcombine.low %v1425, %v1433
        %v1451 = vcombine.high %v1425, %v1433
        %v1453 = vunpack.c.l.s4 1934713408
        %v1454 = vunpack.c.0.s8 %v1453
        %v1455 = vlaneseq
        %v1456 = vshrl.u32 %v1455, 7
        %v1457 = vsub.s32 %v1454, %v1456
        %v1458 = vrot.slane %v1450, %v1457
        %v1460 = vunpack.c.l.s4 1934713408
        %v1461 = vunpack.c.0.s8 %v1460
        %v1462 = vlaneseq
        %v1463 = vshrl.u32 %v1462, 7
        %v1464 = vsub.s32 %v1461, %v1463
        %v1465 = vrot.slane %v1451, %v1464
        %v1466 = vcombine.low %v1441, %v1449
        %v1467 = vcombine.high %v1441, %v1449
        %v1469 = vunpack.c.l.s4 1934713408
        %v1470 = vunpack.c.0.s8 %v1469
        %v1471 = vlaneseq
        %v1472 = vshrl.u32 %v1471, 7
        %v1473 = vsub.s32 %v1470, %v1472
        %v1474 = vrot.slane %v1466, %v1473
        %v1476 = vunpack.c.l.s4 1934713408
        %v1477 = vunpack.c.0.s8 %v1476
        %v1478 = vlaneseq
        %v1479 = vshrl.u32 %v1478, 7
        %v1480 = vsub.s32 %v1477, %v1479
        %v1481 = vrot.slane %v1467, %v1480
        %v1482 = vcombine.low %v1458, %v1474
        %v1483 = vcombine.high %v1458, %v1474
        %v1484 = vcombine.low %v1465, %v1481
        %v1485 = vcombine.high %v1465, %v1481
        %v1486 = vcombine.low %v1390, %v1397
        %v1488 = vunpack.c.l.s4 1983009808
        %v1489 = vunpack.c.0.s8 %v1488
        %v1490 = vlaneseq
        %v1491 = vshrl.u32 %v1490, 7
        %v1492 = vsub.s32 %v1489, %v1491
        %v1493 = vrot.slane %v1486, %v1492
        %v1494 = vcombine.low %v1414, %v1415
        %v1496 = vunpack.c.l.s4 1983009808
        %v1497 = vunpack.c.0.s8 %v1496
        %v1498 = vlaneseq
        %v1499 = vshrl.u32 %v1498, 7
        %v1500 = vsub.s32 %v1497, %v1499
        %v1501 = vrot.slane %v1494, %v1500
        %v1502 = vcombine.low %v1406, %v1413
        %v1504 = vunpack.c.l.s4 1983009808
        %v1505 = vunpack.c.0.s8 %v1504
        %v1506 = vlaneseq
        %v1507 = vshrl.u32 %v1506, 7
        %v1508 = vsub.s32 %v1505, %v1507
        %v1509 = vrot.slane %v1502, %v1508
        %v1510 = vcombine.low %v1416, %v1417
        %v1512 = vunpack.c.l.s4 1983009808
        %v1513 = vunpack.c.0.s8 %v1512
        %v1514 = vlaneseq
        %v1515 = vshrl.u32 %v1514, 7
        %v1516 = vsub.s32 %v1513, %v1515
        %v1517 = vrot.slane %v1510, %v1516
        %v1518 = vcombine.low %v1493, %v1501
        %v1519 = vcombine.high %v1493, %v1501
        %v1521 = vunpack.c.l.s4 1934713408
        %v1522 = vunpack.c.0.s8 %v1521
        %v1523 = vlaneseq
        %v1524 = vshrl.u32 %v1523, 7
        %v1525 = vsub.s32 %v1522, %v1524
        %v1526 = vrot.slane %v1518, %v1525
        %v1528 = vunpack.c.l.s4 1934713408
        %v1529 = vunpack.c.0.s8 %v1528
        %v1530 = vlaneseq
        %v1531 = vshrl.u32 %v1530, 7
        %v1532 = vsub.s32 %v1529, %v1531
        %v1533 = vrot.slane %v1519, %v1532
        %v1534 = vcombine.low %v1509, %v1517
        %v1535 = vcombine.high %v1509, %v1517
        %v1537 = vunpack.c.l.s4 1934713408
        %v1538 = vunpack.c.0.s8 %v1537
        %v1539 = vlaneseq
        %v1540 = vshrl.u32 %v1539, 7
        %v1541 = vsub.s32 %v1538, %v1540
        %v1542 = vrot.slane %v1534, %v1541
        %v1544 = vunpack.c.l.s4 1934713408
        %v1545 = vunpack.c.0.s8 %v1544
        %v1546 = vlaneseq
        %v1547 = vshrl.u32 %v1546, 7
        %v1548 = vsub.s32 %v1545, %v1547
        %v1549 = vrot.slane %v1535, %v1548
        %v1550 = vcombine.low %v1526, %v1542
        %v1551 = vcombine.high %v1526, %v1542
        %v1552 = vcombine.low %v1533, %v1549
        %v1553 = vcombine.high %v1533, %v1549
        %v1554 = vld [vmem:[%s5] sm:$0xff]
        %v1555 = vld [vmem:[%s5 + $0x8] sm:$0xff]
        %v1556 = vld [vmem:[%s5 + $0x10] sm:$0xff]
        %v1557 = vld [vmem:[%s5 + $0x18] sm:$0xff]
        %v1558 = vld [vmem:[%s6] sm:$0x1]
        %v1559 = vmul.f32 %v902, 0.35355338
        %v1560 = vmul.f32 %v903, 0.35355338
        %v1561 = vmul.f32 %v904, 0.35355338
        %v1562 = vmul.f32 %v905, 0.35355338
        %vm1563 = vcmask 64512
        %v1565 = vsel %vm1563, %v1559, 0
        %v1568 = vsel %vm1563, %v1192, 0
        %1570 = vmatprep.subr.mxu0 0.0
        %1571 = vmatpush1.xpose.msra.mxu0 0.0
        %1572 = vmatprep.subr.mxu0 0.0
        %1573 = vmatpush1.xpose.msra.mxu0 0.0
        %1574 = vmatprep.subr.mxu0 0.0
        %1575 = vmatpush1.xpose.msra.mxu0 0.0
        %1576 = vmatprep.subr.mxu0 0.0
        %1577 = vmatpush1.xpose.msra.mxu0 0.0
        %1578 = vmatprep.subr.mxu0 0.0
        %1579 = vmatpush1.xpose.msra.mxu0 0.0
        %1580 = vmatprep.subr.mxu0 0.0
        %1581 = vmatpush1.xpose.msra.mxu0 0.0
        %1582 = vmatprep.subr.mxu0 0.0
        %1583 = vmatpush1.xpose.msra.mxu0 0.0
        %1584 = vmatprep.subr.mxu0 0.0
        %1585 = vmatpush1.xpose.msra.mxu0 0.0
        %1586 = vmatprep.subr.mxu0 0.0
        %1587 = vmatpush1.xpose.msra.mxu0 0.0
        %1588 = vmatprep.subr.mxu0 0.0
        %1589 = vmatpush1.xpose.msra.mxu0 0.0
        %1590 = vmatprep.subr.mxu0 0.0
        %1591 = vmatpush1.xpose.msra.mxu0 0.0
        %1592 = vmatprep.subr.mxu0 0.0
        %1593 = vmatpush1.xpose.msra.mxu0 0.0
        %1594 = vmatprep.subr.mxu0 0.0
        %1595 = vmatpush1.xpose.msra.mxu0 0.0
        %1596 = vmatprep.subr.mxu0 0.0
        %1597 = vmatpush1.xpose.msra.mxu0 0.0
        %1598 = vmatprep.subr.mxu0 0.0
        %1599 = vmatpush1.xpose.msra.mxu0 0.0
        %1600 = vmatprep.subr.mxu0 0.0
        %1601 = vmatpush1.xpose.msra.mxu0 %v1568
        %1602 = vmatprep.subr.mxu0 0.0
        %1603 = vmatpush2.xpose.msra.mxu0 0.0
        %1604 = vmatprep.subr.mxu0 0.0
        %1605 = vmatpush2.xpose.msra.mxu0 0.0
        %1606 = vmatprep.subr.mxu0 0.0
        %1607 = vmatpush2.xpose.msra.mxu0 0.0
        %1608 = vmatprep.subr.mxu0 0.0
        %1609 = vmatpush2.xpose.msra.mxu0 0.0
        %1610 = vmatprep.subr.mxu0 0.0
        %1611 = vmatpush2.xpose.msra.mxu0 0.0
        %1612 = vmatprep.subr.mxu0 0.0
        %1613 = vmatpush2.xpose.msra.mxu0 0.0
        %1614 = vmatprep.subr.mxu0 0.0
        %1615 = vmatpush2.xpose.msra.mxu0 0.0
        %1616 = vmatprep.subr.mxu0 0.0
        %1617 = vmatpush2.xpose.msra.mxu0 0.0
        %1618 = vmatprep.subr.mxu0 0.0
        %1619 = vmatpush2.xpose.msra.mxu0 0.0
        %1620 = vmatprep.subr.mxu0 0.0
        %1621 = vmatpush2.xpose.msra.mxu0 0.0
        %1622 = vmatprep.subr.mxu0 0.0
        %1623 = vmatpush2.xpose.msra.mxu0 0.0
        %1624 = vmatprep.subr.mxu0 0.0
        %1625 = vmatpush2.xpose.msra.mxu0 0.0
        %1626 = vmatprep.subr.mxu0 0.0
        %1627 = vmatpush2.xpose.msra.mxu0 0.0
        %1628 = vmatprep.subr.mxu0 0.0
        %1629 = vmatpush2.xpose.msra.mxu0 0.0
        %1630 = vmatprep.subr.mxu0 0.0
        %1631 = vmatpush2.xpose.msra.mxu0 0.0
        %1632 = vmatprep.subr.mxu0 0.0
        %1633 = vmatpush2.xpose.msra.mxu0 0.0
        %1634 = vmatprep.mubr.f32.mxu0 0.0
        %1635 = vmatmul.mubr.f32.gmra.mxu0 %v1565
        %v1636 = vpop.f32.mrf.mxu0
        %v1637 = vadd.f32 0.0, %v1636
        %v1638 = vpop.f32.mrf.mxu0
        %1639 = vdwg.mxu0
        %v1641 = vsel %vm1563, %v1560, 0
        %v1644 = vsel %vm1563, %v1193, 0
        %1646 = vmatprep.subr.mxu0 0.0
        %1647 = vmatpush1.xpose.msra.mxu0 0.0
        %1648 = vmatprep.subr.mxu0 0.0
        %1649 = vmatpush1.xpose.msra.mxu0 0.0
        %1650 = vmatprep.subr.mxu0 0.0
        %1651 = vmatpush1.xpose.msra.mxu0 0.0
        %1652 = vmatprep.subr.mxu0 0.0
        %1653 = vmatpush1.xpose.msra.mxu0 0.0
        %1654 = vmatprep.subr.mxu0 0.0
        %1655 = vmatpush1.xpose.msra.mxu0 0.0
        %1656 = vmatprep.subr.mxu0 0.0
        %1657 = vmatpush1.xpose.msra.mxu0 0.0
        %1658 = vmatprep.subr.mxu0 0.0
        %1659 = vmatpush1.xpose.msra.mxu0 0.0
        %1660 = vmatprep.subr.mxu0 0.0
        %1661 = vmatpush1.xpose.msra.mxu0 0.0
        %1662 = vmatprep.subr.mxu0 0.0
        %1663 = vmatpush1.xpose.msra.mxu0 0.0
        %1664 = vmatprep.subr.mxu0 0.0
        %1665 = vmatpush1.xpose.msra.mxu0 0.0
        %1666 = vmatprep.subr.mxu0 0.0
        %1667 = vmatpush1.xpose.msra.mxu0 0.0
        %1668 = vmatprep.subr.mxu0 0.0
        %1669 = vmatpush1.xpose.msra.mxu0 0.0
        %1670 = vmatprep.subr.mxu0 0.0
        %1671 = vmatpush1.xpose.msra.mxu0 0.0
        %1672 = vmatprep.subr.mxu0 0.0
        %1673 = vmatpush1.xpose.msra.mxu0 0.0
        %1674 = vmatprep.subr.mxu0 0.0
        %1675 = vmatpush1.xpose.msra.mxu0 0.0
        %1676 = vmatprep.subr.mxu0 0.0
        %1677 = vmatpush1.xpose.msra.mxu0 %v1644
        %1678 = vmatprep.subr.mxu0 0.0
        %1679 = vmatpush2.xpose.msra.mxu0 0.0
        %1680 = vmatprep.subr.mxu0 0.0
        %1681 = vmatpush2.xpose.msra.mxu0 0.0
        %1682 = vmatprep.subr.mxu0 0.0
        %1683 = vmatpush2.xpose.msra.mxu0 0.0
        %1684 = vmatprep.subr.mxu0 0.0
        %1685 = vmatpush2.xpose.msra.mxu0 0.0
        %1686 = vmatprep.subr.mxu0 0.0
        %1687 = vmatpush2.xpose.msra.mxu0 0.0
        %1688 = vmatprep.subr.mxu0 0.0
        %1689 = vmatpush2.xpose.msra.mxu0 0.0
        %1690 = vmatprep.subr.mxu0 0.0
        %1691 = vmatpush2.xpose.msra.mxu0 0.0
        %1692 = vmatprep.subr.mxu0 0.0
        %1693 = vmatpush2.xpose.msra.mxu0 0.0
        %1694 = vmatprep.subr.mxu0 0.0
        %1695 = vmatpush2.xpose.msra.mxu0 0.0
        %1696 = vmatprep.subr.mxu0 0.0
        %1697 = vmatpush2.xpose.msra.mxu0 0.0
        %1698 = vmatprep.subr.mxu0 0.0
        %1699 = vmatpush2.xpose.msra.mxu0 0.0
        %1700 = vmatprep.subr.mxu0 0.0
        %1701 = vmatpush2.xpose.msra.mxu0 0.0
        %1702 = vmatprep.subr.mxu0 0.0
        %1703 = vmatpush2.xpose.msra.mxu0 0.0
        %1704 = vmatprep.subr.mxu0 0.0
        %1705 = vmatpush2.xpose.msra.mxu0 0.0
        %1706 = vmatprep.subr.mxu0 0.0
        %1707 = vmatpush2.xpose.msra.mxu0 0.0
        %1708 = vmatprep.subr.mxu0 0.0
        %1709 = vmatpush2.xpose.msra.mxu0 0.0
        %1710 = vmatprep.mubr.f32.mxu0 0.0
        %1711 = vmatmul.mubr.f32.gmra.mxu0 %v1641
        %v1712 = vpop.f32.mrf.mxu0
        %v1713 = vadd.f32 0.0, %v1712
        %v1714 = vpop.f32.mrf.mxu0
        %1715 = vdwg.mxu0
        %v1717 = vsel %vm1563, %v1561, 0
        %v1720 = vsel %vm1563, %v1194, 0
        %1722 = vmatprep.subr.mxu0 0.0
        %1723 = vmatpush1.xpose.msra.mxu0 0.0
        %1724 = vmatprep.subr.mxu0 0.0
        %1725 = vmatpush1.xpose.msra.mxu0 0.0
        %1726 = vmatprep.subr.mxu0 0.0
        %1727 = vmatpush1.xpose.msra.mxu0 0.0
        %1728 = vmatprep.subr.mxu0 0.0
        %1729 = vmatpush1.xpose.msra.mxu0 0.0
        %1730 = vmatprep.subr.mxu0 0.0
        %1731 = vmatpush1.xpose.msra.mxu0 0.0
        %1732 = vmatprep.subr.mxu0 0.0
        %1733 = vmatpush1.xpose.msra.mxu0 0.0
        %1734 = vmatprep.subr.mxu0 0.0
        %1735 = vmatpush1.xpose.msra.mxu0 0.0
        %1736 = vmatprep.subr.mxu0 0.0
        %1737 = vmatpush1.xpose.msra.mxu0 0.0
        %1738 = vmatprep.subr.mxu0 0.0
        %1739 = vmatpush1.xpose.msra.mxu0 0.0
        %1740 = vmatprep.subr.mxu0 0.0
        %1741 = vmatpush1.xpose.msra.mxu0 0.0
        %1742 = vmatprep.subr.mxu0 0.0
        %1743 = vmatpush1.xpose.msra.mxu0 0.0
        %1744 = vmatprep.subr.mxu0 0.0
        %1745 = vmatpush1.xpose.msra.mxu0 0.0
        %1746 = vmatprep.subr.mxu0 0.0
        %1747 = vmatpush1.xpose.msra.mxu0 0.0
        %1748 = vmatprep.subr.mxu0 0.0
        %1749 = vmatpush1.xpose.msra.mxu0 0.0
        %1750 = vmatprep.subr.mxu0 0.0
        %1751 = vmatpush1.xpose.msra.mxu0 0.0
        %1752 = vmatprep.subr.mxu0 0.0
        %1753 = vmatpush1.xpose.msra.mxu0 %v1720
        %1754 = vmatprep.subr.mxu0 0.0
        %1755 = vmatpush2.xpose.msra.mxu0 0.0
        %1756 = vmatprep.subr.mxu0 0.0
        %1757 = vmatpush2.xpose.msra.mxu0 0.0
        %1758 = vmatprep.subr.mxu0 0.0
        %1759 = vmatpush2.xpose.msra.mxu0 0.0
        %1760 = vmatprep.subr.mxu0 0.0
        %1761 = vmatpush2.xpose.msra.mxu0 0.0
        %1762 = vmatprep.subr.mxu0 0.0
        %1763 = vmatpush2.xpose.msra.mxu0 0.0
        %1764 = vmatprep.subr.mxu0 0.0
        %1765 = vmatpush2.xpose.msra.mxu0 0.0
        %1766 = vmatprep.subr.mxu0 0.0
        %1767 = vmatpush2.xpose.msra.mxu0 0.0
        %1768 = vmatprep.subr.mxu0 0.0
        %1769 = vmatpush2.xpose.msra.mxu0 0.0
        %1770 = vmatprep.subr.mxu0 0.0
        %1771 = vmatpush2.xpose.msra.mxu0 0.0
        %1772 = vmatprep.subr.mxu0 0.0
        %1773 = vmatpush2.xpose.msra.mxu0 0.0
        %1774 = vmatprep.subr.mxu0 0.0
        %1775 = vmatpush2.xpose.msra.mxu0 0.0
        %1776 = vmatprep.subr.mxu0 0.0
        %1777 = vmatpush2.xpose.msra.mxu0 0.0
        %1778 = vmatprep.subr.mxu0 0.0
        %1779 = vmatpush2.xpose.msra.mxu0 0.0
        %1780 = vmatprep.subr.mxu0 0.0
        %1781 = vmatpush2.xpose.msra.mxu0 0.0
        %1782 = vmatprep.subr.mxu0 0.0
        %1783 = vmatpush2.xpose.msra.mxu0 0.0
        %1784 = vmatprep.subr.mxu0 0.0
        %1785 = vmatpush2.xpose.msra.mxu0 0.0
        %1786 = vmatprep.mubr.f32.mxu0 0.0
        %1787 = vmatmul.mubr.f32.gmra.mxu0 %v1717
        %v1788 = vpop.f32.mrf.mxu0
        %v1789 = vadd.f32 0.0, %v1788
        %v1790 = vpop.f32.mrf.mxu0
        %1791 = vdwg.mxu0
        %v1793 = vsel %vm1563, %v1562, 0
        %v1796 = vsel %vm1563, %v1195, 0
        %1798 = vmatprep.subr.mxu0 0.0
        %1799 = vmatpush1.xpose.msra.mxu0 0.0
        %1800 = vmatprep.subr.mxu0 0.0
        %1801 = vmatpush1.xpose.msra.mxu0 0.0
        %1802 = vmatprep.subr.mxu0 0.0
        %1803 = vmatpush1.xpose.msra.mxu0 0.0
        %1804 = vmatprep.subr.mxu0 0.0
        %1805 = vmatpush1.xpose.msra.mxu0 0.0
        %1806 = vmatprep.subr.mxu0 0.0
        %1807 = vmatpush1.xpose.msra.mxu0 0.0
        %1808 = vmatprep.subr.mxu0 0.0
        %1809 = vmatpush1.xpose.msra.mxu0 0.0
        %1810 = vmatprep.subr.mxu0 0.0
        %1811 = vmatpush1.xpose.msra.mxu0 0.0
        %1812 = vmatprep.subr.mxu0 0.0
        %1813 = vmatpush1.xpose.msra.mxu0 0.0
        %1814 = vmatprep.subr.mxu0 0.0
        %1815 = vmatpush1.xpose.msra.mxu0 0.0
        %1816 = vmatprep.subr.mxu0 0.0
        %1817 = vmatpush1.xpose.msra.mxu0 0.0
        %1818 = vmatprep.subr.mxu0 0.0
        %1819 = vmatpush1.xpose.msra.mxu0 0.0
        %1820 = vmatprep.subr.mxu0 0.0
        %1821 = vmatpush1.xpose.msra.mxu0 0.0
        %1822 = vmatprep.subr.mxu0 0.0
        %1823 = vmatpush1.xpose.msra.mxu0 0.0
        %1824 = vmatprep.subr.mxu0 0.0
        %1825 = vmatpush1.xpose.msra.mxu0 0.0
        %1826 = vmatprep.subr.mxu0 0.0
        %1827 = vmatpush1.xpose.msra.mxu0 0.0
        %1828 = vmatprep.subr.mxu0 0.0
        %1829 = vmatpush1.xpose.msra.mxu0 %v1796
        %1830 = vmatprep.subr.mxu0 0.0
        %1831 = vmatpush2.xpose.msra.mxu0 0.0
        %1832 = vmatprep.subr.mxu0 0.0
        %1833 = vmatpush2.xpose.msra.mxu0 0.0
        %1834 = vmatprep.subr.mxu0 0.0
        %1835 = vmatpush2.xpose.msra.mxu0 0.0
        %1836 = vmatprep.subr.mxu0 0.0
        %1837 = vmatpush2.xpose.msra.mxu0 0.0
        %1838 = vmatprep.subr.mxu0 0.0
        %1839 = vmatpush2.xpose.msra.mxu0 0.0
        %1840 = vmatprep.subr.mxu0 0.0
        %1841 = vmatpush2.xpose.msra.mxu0 0.0
        %1842 = vmatprep.subr.mxu0 0.0
        %1843 = vmatpush2.xpose.msra.mxu0 0.0
        %1844 = vmatprep.subr.mxu0 0.0
        %1845 = vmatpush2.xpose.msra.mxu0 0.0
        %1846 = vmatprep.subr.mxu0 0.0
        %1847 = vmatpush2.xpose.msra.mxu0 0.0
        %1848 = vmatprep.subr.mxu0 0.0
        %1849 = vmatpush2.xpose.msra.mxu0 0.0
        %1850 = vmatprep.subr.mxu0 0.0
        %1851 = vmatpush2.xpose.msra.mxu0 0.0
        %1852 = vmatprep.subr.mxu0 0.0
        %1853 = vmatpush2.xpose.msra.mxu0 0.0
        %1854 = vmatprep.subr.mxu0 0.0
        %1855 = vmatpush2.xpose.msra.mxu0 0.0
        %1856 = vmatprep.subr.mxu0 0.0
        %1857 = vmatpush2.xpose.msra.mxu0 0.0
        %1858 = vmatprep.subr.mxu0 0.0
        %1859 = vmatpush2.xpose.msra.mxu0 0.0
        %1860 = vmatprep.subr.mxu0 0.0
        %1861 = vmatpush2.xpose.msra.mxu0 0.0
        %1862 = vmatprep.mubr.f32.mxu0 0.0
        %1863 = vmatmul.mubr.f32.gmra.mxu0 %v1793
        %v1864 = vpop.f32.mrf.mxu0
        %v1865 = vadd.f32 0.0, %v1864
        %v1866 = vpop.f32.mrf.mxu0
        %1867 = vdwg.mxu0
        %v1868 = vlaneseq
        %v1869 = vshrl.u32 %v1868, 7
        %v1870 = vlaneseq
        %v1871 = vand.u32 %v1870, 127
        %vm1872 = vcmp.ge.s32.totalorder %v1869, %v1871
        %v1873 = vsel %vm1872, 1, 0
        %vm1874 = vcmp.eq.s32.totalorder %v1873, 1
        %v1875 = vsel %vm1874, %v1637, -1e+09
        %v1876 = vsel %vm1874, %v1713, -1e+09
        %v1877 = vsel %vm1874, %v1789, -1e+09
        %v1878 = vsel %vm1874, %v1865, -1e+09
        %v1879 = vsel %vm1563, %v1875, -inf
        %1880 = vmax.xlane.f32.xlu0 %v1879
        %v1881 = vpop.xlane.xlu0 %1880
        %v1882 = vsel %vm1563, %v1876, -inf
        %1883 = vmax.xlane.f32.xlu0 %v1882
        %v1884 = vpop.xlane.xlu0 %1883
        %v1885 = vsel %vm1563, %v1877, -inf
        %1886 = vmax.xlane.f32.xlu0 %v1885
        %v1887 = vpop.xlane.xlu0 %1886
        %v1888 = vsel %vm1563, %v1878, -inf
        %1889 = vmax.xlane.f32.xlu0 %v1888
        %v1890 = vpop.xlane.xlu0 %1889
        %v1891 = vsub.f32 -inf, %v1881
        %v1892 = vsub.f32 -inf, %v1884
        %v1893 = vsub.f32 -inf, %v1887
        %v1894 = vsub.f32 -inf, %v1890
        %v1895 = vmul.f32 %v1891, 1.442695
        %v1896 = vpow.pop %v1895
        %v1897 = vmul.f32 %v1892, 1.442695
        %v1898 = vpow.pop %v1897
        %v1899 = vmul.f32 %v1893, 1.442695
        %v1900 = vpow.pop %v1899
        %v1901 = vmul.f32 %v1894, 1.442695
        %v1902 = vpow.pop %v1901
        %v1903 = vsub.f32 %v1875, %v1881
        %v1904 = vsub.f32 %v1876, %v1884
        %v1905 = vsub.f32 %v1877, %v1887
        %v1906 = vsub.f32 %v1878, %v1890
        %v1907 = vmul.f32 %v1903, 1.442695
        %v1908 = vpow.pop %v1907
        %v1909 = vmul.f32 %v1904, 1.442695
        %v1910 = vpow.pop %v1909
        %v1911 = vmul.f32 %v1905, 1.442695
        %v1912 = vpow.pop %v1911
        %v1913 = vmul.f32 %v1906, 1.442695
        %v1914 = vpow.pop %v1913
        %v1915 = vmul.f32 %v1896, 0.0
        %v1916 = vmul.f32 %v1898, 0.0
        %v1917 = vmul.f32 %v1900, 0.0
        %v1918 = vmul.f32 %v1902, 0.0
        %v1919 = vsel %vm1563, %v1908, 0.0
        %1920 = vadd.xlane.f32.xlu0 %v1919
        %v1921 = vpop.xlane.xlu0 %1920
        %v1922 = vsel %vm1563, %v1910, 0.0
        %1923 = vadd.xlane.f32.xlu0 %v1922
        %v1924 = vpop.xlane.xlu0 %1923
        %v1925 = vsel %vm1563, %v1912, 0.0
        %1926 = vadd.xlane.f32.xlu0 %v1925
        %v1927 = vpop.xlane.xlu0 %1926
        %v1928 = vsel %vm1563, %v1914, 0.0
        %1929 = vadd.xlane.f32.xlu0 %v1928
        %v1930 = vpop.xlane.xlu0 %1929
        %v1931 = vadd.f32 %v1915, %v1921
        %v1932 = vadd.f32 %v1916, %v1924
        %v1933 = vadd.f32 %v1917, %v1927
        %v1934 = vadd.f32 %v1918, %v1930
        %v1936 = vsel %vm1563, %v1908, 0
        %1938 = vmatprep.subr.mxu0 0.0
        %1939 = vmatpush1.msra.mxu0 0.0
        %1940 = vmatprep.subr.mxu0 0.0
        %1941 = vmatpush1.msra.mxu0 0.0
        %1942 = vmatprep.subr.mxu0 0.0
        %1943 = vmatpush1.msra.mxu0 0.0
        %1944 = vmatprep.subr.mxu0 0.0
        %1945 = vmatpush1.msra.mxu0 0.0
        %1946 = vmatprep.subr.mxu0 0.0
        %1947 = vmatpush1.msra.mxu0 0.0
        %1948 = vmatprep.subr.mxu0 0.0
        %1949 = vmatpush1.msra.mxu0 0.0
        %1950 = vmatprep.subr.mxu0 0.0
        %1951 = vmatpush1.msra.mxu0 0.0
        %1952 = vmatprep.subr.mxu0 0.0
        %1953 = vmatpush1.msra.mxu0 0.0
        %1954 = vmatprep.subr.mxu0 0.0
        %1955 = vmatpush1.msra.mxu0 0.0
        %1956 = vmatprep.subr.mxu0 0.0
        %1957 = vmatpush1.msra.mxu0 0.0
        %1958 = vmatprep.subr.mxu0 0.0
        %1959 = vmatpush1.msra.mxu0 0.0
        %1960 = vmatprep.subr.mxu0 0.0
        %1961 = vmatpush1.msra.mxu0 0.0
        %1962 = vmatprep.subr.mxu0 0.0
        %1963 = vmatpush1.msra.mxu0 0.0
        %1964 = vmatprep.subr.mxu0 0.0
        %1965 = vmatpush1.msra.mxu0 0.0
        %1966 = vmatprep.subr.mxu0 0.0
        %1967 = vmatpush1.msra.mxu0 0.0
        %1968 = vmatprep.subr.mxu0 0.0
        %1969 = vmatpush1.msra.mxu0 %v1482
        %1970 = vmatprep.subr.mxu0 0.0
        %1971 = vmatpush2.msra.mxu0 0.0
        %1972 = vmatprep.subr.mxu0 0.0
        %1973 = vmatpush2.msra.mxu0 0.0
        %1974 = vmatprep.subr.mxu0 0.0
        %1975 = vmatpush2.msra.mxu0 0.0
        %1976 = vmatprep.subr.mxu0 0.0
        %1977 = vmatpush2.msra.mxu0 0.0
        %1978 = vmatprep.subr.mxu0 0.0
        %1979 = vmatpush2.msra.mxu0 0.0
        %1980 = vmatprep.subr.mxu0 0.0
        %1981 = vmatpush2.msra.mxu0 0.0
        %1982 = vmatprep.subr.mxu0 0.0
        %1983 = vmatpush2.msra.mxu0 0.0
        %1984 = vmatprep.subr.mxu0 0.0
        %1985 = vmatpush2.msra.mxu0 0.0
        %1986 = vmatprep.subr.mxu0 0.0
        %1987 = vmatpush2.msra.mxu0 0.0
        %1988 = vmatprep.subr.mxu0 0.0
        %1989 = vmatpush2.msra.mxu0 0.0
        %1990 = vmatprep.subr.mxu0 0.0
        %1991 = vmatpush2.msra.mxu0 0.0
        %1992 = vmatprep.subr.mxu0 0.0
        %1993 = vmatpush2.msra.mxu0 0.0
        %1994 = vmatprep.subr.mxu0 0.0
        %1995 = vmatpush2.msra.mxu0 0.0
        %1996 = vmatprep.subr.mxu0 0.0
        %1997 = vmatpush2.msra.mxu0 0.0
        %1998 = vmatprep.subr.mxu0 0.0
        %1999 = vmatpush2.msra.mxu0 0.0
        %2000 = vmatprep.subr.mxu0 0.0
        %2001 = vmatpush2.msra.mxu0 0.0
        %2002 = vmatprep.mubr.f32.mxu0 0.0
        %2003 = vmatmul.mubr.f32.gmra.mxu0 %v1936
        %v2004 = vpop.f32.mrf.mxu0
        %v2005 = vadd.f32 0.0, %v2004
        %v2006 = vpop.f32.mrf.mxu0
        %2007 = vdwg.mxu0
        %v2009 = vsel %vm1563, %v1910, 0
        %2011 = vmatprep.subr.mxu0 0.0
        %2012 = vmatpush1.msra.mxu0 0.0
        %2013 = vmatprep.subr.mxu0 0.0
        %2014 = vmatpush1.msra.mxu0 0.0
        %2015 = vmatprep.subr.mxu0 0.0
        %2016 = vmatpush1.msra.mxu0 0.0
        %2017 = vmatprep.subr.mxu0 0.0
        %2018 = vmatpush1.msra.mxu0 0.0
        %2019 = vmatprep.subr.mxu0 0.0
        %2020 = vmatpush1.msra.mxu0 0.0
        %2021 = vmatprep.subr.mxu0 0.0
        %2022 = vmatpush1.msra.mxu0 0.0
        %2023 = vmatprep.subr.mxu0 0.0
        %2024 = vmatpush1.msra.mxu0 0.0
        %2025 = vmatprep.subr.mxu0 0.0
        %2026 = vmatpush1.msra.mxu0 0.0
        %2027 = vmatprep.subr.mxu0 0.0
        %2028 = vmatpush1.msra.mxu0 0.0
        %2029 = vmatprep.subr.mxu0 0.0
        %2030 = vmatpush1.msra.mxu0 0.0
        %2031 = vmatprep.subr.mxu0 0.0
        %2032 = vmatpush1.msra.mxu0 0.0
        %2033 = vmatprep.subr.mxu0 0.0
        %2034 = vmatpush1.msra.mxu0 0.0
        %2035 = vmatprep.subr.mxu0 0.0
        %2036 = vmatpush1.msra.mxu0 0.0
        %2037 = vmatprep.subr.mxu0 0.0
        %2038 = vmatpush1.msra.mxu0 0.0
        %2039 = vmatprep.subr.mxu0 0.0
        %2040 = vmatpush1.msra.mxu0 0.0
        %2041 = vmatprep.subr.mxu0 0.0
        %2042 = vmatpush1.msra.mxu0 %v1483
        %2043 = vmatprep.subr.mxu0 0.0
        %2044 = vmatpush2.msra.mxu0 0.0
        %2045 = vmatprep.subr.mxu0 0.0
        %2046 = vmatpush2.msra.mxu0 0.0
        %2047 = vmatprep.subr.mxu0 0.0
        %2048 = vmatpush2.msra.mxu0 0.0
        %2049 = vmatprep.subr.mxu0 0.0
        %2050 = vmatpush2.msra.mxu0 0.0
        %2051 = vmatprep.subr.mxu0 0.0
        %2052 = vmatpush2.msra.mxu0 0.0
        %2053 = vmatprep.subr.mxu0 0.0
        %2054 = vmatpush2.msra.mxu0 0.0
        %2055 = vmatprep.subr.mxu0 0.0
        %2056 = vmatpush2.msra.mxu0 0.0
        %2057 = vmatprep.subr.mxu0 0.0
        %2058 = vmatpush2.msra.mxu0 0.0
        %2059 = vmatprep.subr.mxu0 0.0
        %2060 = vmatpush2.msra.mxu0 0.0
        %2061 = vmatprep.subr.mxu0 0.0
        %2062 = vmatpush2.msra.mxu0 0.0
        %2063 = vmatprep.subr.mxu0 0.0
        %2064 = vmatpush2.msra.mxu0 0.0
        %2065 = vmatprep.subr.mxu0 0.0
        %2066 = vmatpush2.msra.mxu0 0.0
        %2067 = vmatprep.subr.mxu0 0.0
        %2068 = vmatpush2.msra.mxu0 0.0
        %2069 = vmatprep.subr.mxu0 0.0
        %2070 = vmatpush2.msra.mxu0 0.0
        %2071 = vmatprep.subr.mxu0 0.0
        %2072 = vmatpush2.msra.mxu0 0.0
        %2073 = vmatprep.subr.mxu0 0.0
        %2074 = vmatpush2.msra.mxu0 0.0
        %2075 = vmatprep.mubr.f32.mxu0 0.0
        %2076 = vmatmul.mubr.f32.gmra.mxu0 %v2009
        %v2077 = vpop.f32.mrf.mxu0
        %v2078 = vadd.f32 0.0, %v2077
        %v2079 = vpop.f32.mrf.mxu0
        %2080 = vdwg.mxu0
        %v2082 = vsel %vm1563, %v1912, 0
        %2084 = vmatprep.subr.mxu0 0.0
        %2085 = vmatpush1.msra.mxu0 0.0
        %2086 = vmatprep.subr.mxu0 0.0
        %2087 = vmatpush1.msra.mxu0 0.0
        %2088 = vmatprep.subr.mxu0 0.0
        %2089 = vmatpush1.msra.mxu0 0.0
        %2090 = vmatprep.subr.mxu0 0.0
        %2091 = vmatpush1.msra.mxu0 0.0
        %2092 = vmatprep.subr.mxu0 0.0
        %2093 = vmatpush1.msra.mxu0 0.0
        %2094 = vmatprep.subr.mxu0 0.0
        %2095 = vmatpush1.msra.mxu0 0.0
        %2096 = vmatprep.subr.mxu0 0.0
        %2097 = vmatpush1.msra.mxu0 0.0
        %2098 = vmatprep.subr.mxu0 0.0
        %2099 = vmatpush1.msra.mxu0 0.0
        %2100 = vmatprep.subr.mxu0 0.0
        %2101 = vmatpush1.msra.mxu0 0.0
        %2102 = vmatprep.subr.mxu0 0.0
        %2103 = vmatpush1.msra.mxu0 0.0
        %2104 = vmatprep.subr.mxu0 0.0
        %2105 = vmatpush1.msra.mxu0 0.0
        %2106 = vmatprep.subr.mxu0 0.0
        %2107 = vmatpush1.msra.mxu0 0.0
        %2108 = vmatprep.subr.mxu0 0.0
        %2109 = vmatpush1.msra.mxu0 0.0
        %2110 = vmatprep.subr.mxu0 0.0
        %2111 = vmatpush1.msra.mxu0 0.0
        %2112 = vmatprep.subr.mxu0 0.0
        %2113 = vmatpush1.msra.mxu0 0.0
        %2114 = vmatprep.subr.mxu0 0.0
        %2115 = vmatpush1.msra.mxu0 %v1484
        %2116 = vmatprep.subr.mxu0 0.0
        %2117 = vmatpush2.msra.mxu0 0.0
        %2118 = vmatprep.subr.mxu0 0.0
        %2119 = vmatpush2.msra.mxu0 0.0
        %2120 = vmatprep.subr.mxu0 0.0
        %2121 = vmatpush2.msra.mxu0 0.0
        %2122 = vmatprep.subr.mxu0 0.0
        %2123 = vmatpush2.msra.mxu0 0.0
        %2124 = vmatprep.subr.mxu0 0.0
        %2125 = vmatpush2.msra.mxu0 0.0
        %2126 = vmatprep.subr.mxu0 0.0
        %2127 = vmatpush2.msra.mxu0 0.0
        %2128 = vmatprep.subr.mxu0 0.0
        %2129 = vmatpush2.msra.mxu0 0.0
        %2130 = vmatprep.subr.mxu0 0.0
        %2131 = vmatpush2.msra.mxu0 0.0
        %2132 = vmatprep.subr.mxu0 0.0
        %2133 = vmatpush2.msra.mxu0 0.0
        %2134 = vmatprep.subr.mxu0 0.0
        %2135 = vmatpush2.msra.mxu0 0.0
        %2136 = vmatprep.subr.mxu0 0.0
        %2137 = vmatpush2.msra.mxu0 0.0
        %2138 = vmatprep.subr.mxu0 0.0
        %2139 = vmatpush2.msra.mxu0 0.0
        %2140 = vmatprep.subr.mxu0 0.0
        %2141 = vmatpush2.msra.mxu0 0.0
        %2142 = vmatprep.subr.mxu0 0.0
        %2143 = vmatpush2.msra.mxu0 0.0
        %2144 = vmatprep.subr.mxu0 0.0
        %2145 = vmatpush2.msra.mxu0 0.0
        %2146 = vmatprep.subr.mxu0 0.0
        %2147 = vmatpush2.msra.mxu0 0.0
        %2148 = vmatprep.mubr.f32.mxu0 0.0
        %2149 = vmatmul.mubr.f32.gmra.mxu0 %v2082
        %v2150 = vpop.f32.mrf.mxu0
        %v2151 = vadd.f32 0.0, %v2150
        %v2152 = vpop.f32.mrf.mxu0
        %2153 = vdwg.mxu0
        %v2155 = vsel %vm1563, %v1914, 0
        %2157 = vmatprep.subr.mxu0 0.0
        %2158 = vmatpush1.msra.mxu0 0.0
        %2159 = vmatprep.subr.mxu0 0.0
        %2160 = vmatpush1.msra.mxu0 0.0
        %2161 = vmatprep.subr.mxu0 0.0
        %2162 = vmatpush1.msra.mxu0 0.0
        %2163 = vmatprep.subr.mxu0 0.0
        %2164 = vmatpush1.msra.mxu0 0.0
        %2165 = vmatprep.subr.mxu0 0.0
        %2166 = vmatpush1.msra.mxu0 0.0
        %2167 = vmatprep.subr.mxu0 0.0
        %2168 = vmatpush1.msra.mxu0 0.0
        %2169 = vmatprep.subr.mxu0 0.0
        %2170 = vmatpush1.msra.mxu0 0.0
        %2171 = vmatprep.subr.mxu0 0.0
        %2172 = vmatpush1.msra.mxu0 0.0
        %2173 = vmatprep.subr.mxu0 0.0
        %2174 = vmatpush1.msra.mxu0 0.0
        %2175 = vmatprep.subr.mxu0 0.0
        %2176 = vmatpush1.msra.mxu0 0.0
        %2177 = vmatprep.subr.mxu0 0.0
        %2178 = vmatpush1.msra.mxu0 0.0
        %2179 = vmatprep.subr.mxu0 0.0
        %2180 = vmatpush1.msra.mxu0 0.0
        %2181 = vmatprep.subr.mxu0 0.0
        %2182 = vmatpush1.msra.mxu0 0.0
        %2183 = vmatprep.subr.mxu0 0.0
        %2184 = vmatpush1.msra.mxu0 0.0
        %2185 = vmatprep.subr.mxu0 0.0
        %2186 = vmatpush1.msra.mxu0 0.0
        %2187 = vmatprep.subr.mxu0 0.0
        %2188 = vmatpush1.msra.mxu0 %v1485
        %2189 = vmatprep.subr.mxu0 0.0
        %2190 = vmatpush2.msra.mxu0 0.0
        %2191 = vmatprep.subr.mxu0 0.0
        %2192 = vmatpush2.msra.mxu0 0.0
        %2193 = vmatprep.subr.mxu0 0.0
        %2194 = vmatpush2.msra.mxu0 0.0
        %2195 = vmatprep.subr.mxu0 0.0
        %2196 = vmatpush2.msra.mxu0 0.0
        %2197 = vmatprep.subr.mxu0 0.0
        %2198 = vmatpush2.msra.mxu0 0.0
        %2199 = vmatprep.subr.mxu0 0.0
        %2200 = vmatpush2.msra.mxu0 0.0
        %2201 = vmatprep.subr.mxu0 0.0
        %2202 = vmatpush2.msra.mxu0 0.0
        %2203 = vmatprep.subr.mxu0 0.0
        %2204 = vmatpush2.msra.mxu0 0.0
        %2205 = vmatprep.subr.mxu0 0.0
        %2206 = vmatpush2.msra.mxu0 0.0
        %2207 = vmatprep.subr.mxu0 0.0
        %2208 = vmatpush2.msra.mxu0 0.0
        %2209 = vmatprep.subr.mxu0 0.0
        %2210 = vmatpush2.msra.mxu0 0.0
        %2211 = vmatprep.subr.mxu0 0.0
        %2212 = vmatpush2.msra.mxu0 0.0
        %2213 = vmatprep.subr.mxu0 0.0
        %2214 = vmatpush2.msra.mxu0 0.0
        %2215 = vmatprep.subr.mxu0 0.0
        %2216 = vmatpush2.msra.mxu0 0.0
        %2217 = vmatprep.subr.mxu0 0.0
        %2218 = vmatpush2.msra.mxu0 0.0
        %2219 = vmatprep.subr.mxu0 0.0
        %2220 = vmatpush2.msra.mxu0 0.0
        %2221 = vmatprep.mubr.f32.mxu0 0.0
        %2222 = vmatmul.mubr.f32.gmra.mxu0 %v2155
        %v2223 = vpop.f32.mrf.mxu0
        %v2224 = vadd.f32 0.0, %v2223
        %v2225 = vpop.f32.mrf.mxu0
        %2226 = vdwg.mxu0
        %v2227 = vadd.f32 %v1915, %v2005
        %v2228 = vadd.f32 %v1916, %v2078
        %v2229 = vadd.f32 %v1917, %v2151
        %v2230 = vadd.f32 %v1918, %v2224
        %v2231 = vrcp.pop %v1931
        %v2232 = vmul.f32 %v2227, %v2231
        %v2233 = vrcp.pop %v1932
        %v2234 = vmul.f32 %v2228, %v2233
        %v2235 = vrcp.pop %v1933
        %v2236 = vmul.f32 %v2229, %v2235
        %v2237 = vrcp.pop %v1934
        %v2238 = vmul.f32 %v2230, %v2237
        %v2240 = vsel %vm1563, %v2232, 0
        %2242 = vmatprep.subr.mxu0 0.0
        %2243 = vmatpush1.msra.mxu0 0.0
        %2244 = vmatprep.subr.mxu0 0.0
        %2245 = vmatpush1.msra.mxu0 0.0
        %2246 = vmatprep.subr.mxu0 0.0
        %2247 = vmatpush1.msra.mxu0 0.0
        %2248 = vmatprep.subr.mxu0 0.0
        %2249 = vmatpush1.msra.mxu0 0.0
        %2250 = vmatprep.subr.mxu0 0.0
        %2251 = vmatpush1.msra.mxu0 0.0
        %2252 = vmatprep.subr.mxu0 0.0
        %2253 = vmatpush1.msra.mxu0 0.0
        %2254 = vmatprep.subr.mxu0 0.0
        %2255 = vmatpush1.msra.mxu0 0.0
        %2256 = vmatprep.subr.mxu0 0.0
        %2257 = vmatpush1.msra.mxu0 0.0
        %2258 = vmatprep.subr.mxu0 0.0
        %2259 = vmatpush1.msra.mxu0 0.0
        %2260 = vmatprep.subr.mxu0 0.0
        %2261 = vmatpush1.msra.mxu0 0.0
        %2262 = vmatprep.subr.mxu0 0.0
        %2263 = vmatpush1.msra.mxu0 0.0
        %2264 = vmatprep.subr.mxu0 0.0
        %2265 = vmatpush1.msra.mxu0 0.0
        %2266 = vmatprep.subr.mxu0 0.0
        %2267 = vmatpush1.msra.mxu0 0.0
        %2268 = vmatprep.subr.mxu0 0.0
        %2269 = vmatpush1.msra.mxu0 0.0
        %2270 = vmatprep.subr.mxu0 0.0
        %2271 = vmatpush1.msra.mxu0 0.0
        %2272 = vmatprep.subr.mxu0 0.0
        %2273 = vmatpush1.msra.mxu0 %v1554
        %2274 = vmatprep.subr.mxu0 0.0
        %2275 = vmatpush2.msra.mxu0 0.0
        %2276 = vmatprep.subr.mxu0 0.0
        %2277 = vmatpush2.msra.mxu0 0.0
        %2278 = vmatprep.subr.mxu0 0.0
        %2279 = vmatpush2.msra.mxu0 0.0
        %2280 = vmatprep.subr.mxu0 0.0
        %2281 = vmatpush2.msra.mxu0 0.0
        %2282 = vmatprep.subr.mxu0 0.0
        %2283 = vmatpush2.msra.mxu0 0.0
        %2284 = vmatprep.subr.mxu0 0.0
        %2285 = vmatpush2.msra.mxu0 0.0
        %2286 = vmatprep.subr.mxu0 0.0
        %2287 = vmatpush2.msra.mxu0 0.0
        %2288 = vmatprep.subr.mxu0 0.0
        %2289 = vmatpush2.msra.mxu0 0.0
        %2290 = vmatprep.subr.mxu0 0.0
        %2291 = vmatpush2.msra.mxu0 0.0
        %2292 = vmatprep.subr.mxu0 0.0
        %2293 = vmatpush2.msra.mxu0 0.0
        %2294 = vmatprep.subr.mxu0 0.0
        %2295 = vmatpush2.msra.mxu0 0.0
        %2296 = vmatprep.subr.mxu0 0.0
        %2297 = vmatpush2.msra.mxu0 0.0
        %2298 = vmatprep.subr.mxu0 0.0
        %2299 = vmatpush2.msra.mxu0 0.0
        %2300 = vmatprep.subr.mxu0 0.0
        %2301 = vmatpush2.msra.mxu0 0.0
        %2302 = vmatprep.subr.mxu0 0.0
        %2303 = vmatpush2.msra.mxu0 0.0
        %2304 = vmatprep.subr.mxu0 0.0
        %2305 = vmatpush2.msra.mxu0 0.0
        %2306 = vmatprep.mubr.f32.mxu0 0.0
        %2307 = vmatmul.mubr.f32.gmra.mxu0 %v2240
        %v2308 = vpop.f32.mrf.mxu0
        %v2309 = vadd.f32 0.0, %v2308
        %v2310 = vpop.f32.mrf.mxu0
        %2311 = vdwg.mxu0
        %v2313 = vsel %vm1563, %v2234, 0
        %2315 = vmatprep.subr.mxu0 0.0
        %2316 = vmatpush1.msra.mxu0 0.0
        %2317 = vmatprep.subr.mxu0 0.0
        %2318 = vmatpush1.msra.mxu0 0.0
        %2319 = vmatprep.subr.mxu0 0.0
        %2320 = vmatpush1.msra.mxu0 0.0
        %2321 = vmatprep.subr.mxu0 0.0
        %2322 = vmatpush1.msra.mxu0 0.0
        %2323 = vmatprep.subr.mxu0 0.0
        %2324 = vmatpush1.msra.mxu0 0.0
        %2325 = vmatprep.subr.mxu0 0.0
        %2326 = vmatpush1.msra.mxu0 0.0
        %2327 = vmatprep.subr.mxu0 0.0
        %2328 = vmatpush1.msra.mxu0 0.0
        %2329 = vmatprep.subr.mxu0 0.0
        %2330 = vmatpush1.msra.mxu0 0.0
        %2331 = vmatprep.subr.mxu0 0.0
        %2332 = vmatpush1.msra.mxu0 0.0
        %2333 = vmatprep.subr.mxu0 0.0
        %2334 = vmatpush1.msra.mxu0 0.0
        %2335 = vmatprep.subr.mxu0 0.0
        %2336 = vmatpush1.msra.mxu0 0.0
        %2337 = vmatprep.subr.mxu0 0.0
        %2338 = vmatpush1.msra.mxu0 0.0
        %2339 = vmatprep.subr.mxu0 0.0
        %2340 = vmatpush1.msra.mxu0 0.0
        %2341 = vmatprep.subr.mxu0 0.0
        %2342 = vmatpush1.msra.mxu0 0.0
        %2343 = vmatprep.subr.mxu0 0.0
        %2344 = vmatpush1.msra.mxu0 0.0
        %2345 = vmatprep.subr.mxu0 0.0
        %2346 = vmatpush1.msra.mxu0 %v1555
        %2347 = vmatprep.subr.mxu0 0.0
        %2348 = vmatpush2.msra.mxu0 0.0
        %2349 = vmatprep.subr.mxu0 0.0
        %2350 = vmatpush2.msra.mxu0 0.0
        %2351 = vmatprep.subr.mxu0 0.0
        %2352 = vmatpush2.msra.mxu0 0.0
        %2353 = vmatprep.subr.mxu0 0.0
        %2354 = vmatpush2.msra.mxu0 0.0
        %2355 = vmatprep.subr.mxu0 0.0
        %2356 = vmatpush2.msra.mxu0 0.0
        %2357 = vmatprep.subr.mxu0 0.0
        %2358 = vmatpush2.msra.mxu0 0.0
        %2359 = vmatprep.subr.mxu0 0.0
        %2360 = vmatpush2.msra.mxu0 0.0
        %2361 = vmatprep.subr.mxu0 0.0
        %2362 = vmatpush2.msra.mxu0 0.0
        %2363 = vmatprep.subr.mxu0 0.0
        %2364 = vmatpush2.msra.mxu0 0.0
        %2365 = vmatprep.subr.mxu0 0.0
        %2366 = vmatpush2.msra.mxu0 0.0
        %2367 = vmatprep.subr.mxu0 0.0
        %2368 = vmatpush2.msra.mxu0 0.0
        %2369 = vmatprep.subr.mxu0 0.0
        %2370 = vmatpush2.msra.mxu0 0.0
        %2371 = vmatprep.subr.mxu0 0.0
        %2372 = vmatpush2.msra.mxu0 0.0
        %2373 = vmatprep.subr.mxu0 0.0
        %2374 = vmatpush2.msra.mxu0 0.0
        %2375 = vmatprep.subr.mxu0 0.0
        %2376 = vmatpush2.msra.mxu0 0.0
        %2377 = vmatprep.subr.mxu0 0.0
        %2378 = vmatpush2.msra.mxu0 0.0
        %2379 = vmatprep.mubr.f32.mxu0 0.0
        %2380 = vmatmul.mubr.f32.gmra.mxu0 %v2313
        %v2381 = vpop.f32.mrf.mxu0
        %v2382 = vadd.f32 0.0, %v2381
        %v2383 = vpop.f32.mrf.mxu0
        %2384 = vdwg.mxu0
        %v2386 = vsel %vm1563, %v2236, 0
        %2388 = vmatprep.subr.mxu0 0.0
        %2389 = vmatpush1.msra.mxu0 0.0
        %2390 = vmatprep.subr.mxu0 0.0
        %2391 = vmatpush1.msra.mxu0 0.0
        %2392 = vmatprep.subr.mxu0 0.0
        %2393 = vmatpush1.msra.mxu0 0.0
        %2394 = vmatprep.subr.mxu0 0.0
        %2395 = vmatpush1.msra.mxu0 0.0
        %2396 = vmatprep.subr.mxu0 0.0
        %2397 = vmatpush1.msra.mxu0 0.0
        %2398 = vmatprep.subr.mxu0 0.0
        %2399 = vmatpush1.msra.mxu0 0.0
        %2400 = vmatprep.subr.mxu0 0.0
        %2401 = vmatpush1.msra.mxu0 0.0
        %2402 = vmatprep.subr.mxu0 0.0
        %2403 = vmatpush1.msra.mxu0 0.0
        %2404 = vmatprep.subr.mxu0 0.0
        %2405 = vmatpush1.msra.mxu0 0.0
        %2406 = vmatprep.subr.mxu0 0.0
        %2407 = vmatpush1.msra.mxu0 0.0
        %2408 = vmatprep.subr.mxu0 0.0
        %2409 = vmatpush1.msra.mxu0 0.0
        %2410 = vmatprep.subr.mxu0 0.0
        %2411 = vmatpush1.msra.mxu0 0.0
        %2412 = vmatprep.subr.mxu0 0.0
        %2413 = vmatpush1.msra.mxu0 0.0
        %2414 = vmatprep.subr.mxu0 0.0
        %2415 = vmatpush1.msra.mxu0 0.0
        %2416 = vmatprep.subr.mxu0 0.0
        %2417 = vmatpush1.msra.mxu0 0.0
        %2418 = vmatprep.subr.mxu0 0.0
        %2419 = vmatpush1.msra.mxu0 %v1556
        %2420 = vmatprep.subr.mxu0 0.0
        %2421 = vmatpush2.msra.mxu0 0.0
        %2422 = vmatprep.subr.mxu0 0.0
        %2423 = vmatpush2.msra.mxu0 0.0
        %2424 = vmatprep.subr.mxu0 0.0
        %2425 = vmatpush2.msra.mxu0 0.0
        %2426 = vmatprep.subr.mxu0 0.0
        %2427 = vmatpush2.msra.mxu0 0.0
        %2428 = vmatprep.subr.mxu0 0.0
        %2429 = vmatpush2.msra.mxu0 0.0
        %2430 = vmatprep.subr.mxu0 0.0
        %2431 = vmatpush2.msra.mxu0 0.0
        %2432 = vmatprep.subr.mxu0 0.0
        %2433 = vmatpush2.msra.mxu0 0.0
        %2434 = vmatprep.subr.mxu0 0.0
        %2435 = vmatpush2.msra.mxu0 0.0
        %2436 = vmatprep.subr.mxu0 0.0
        %2437 = vmatpush2.msra.mxu0 0.0
        %2438 = vmatprep.subr.mxu0 0.0
        %2439 = vmatpush2.msra.mxu0 0.0
        %2440 = vmatprep.subr.mxu0 0.0
        %2441 = vmatpush2.msra.mxu0 0.0
        %2442 = vmatprep.subr.mxu0 0.0
        %2443 = vmatpush2.msra.mxu0 0.0
        %2444 = vmatprep.subr.mxu0 0.0
        %2445 = vmatpush2.msra.mxu0 0.0
        %2446 = vmatprep.subr.mxu0 0.0
        %2447 = vmatpush2.msra.mxu0 0.0
        %2448 = vmatprep.subr.mxu0 0.0
        %2449 = vmatpush2.msra.mxu0 0.0
        %2450 = vmatprep.subr.mxu0 0.0
        %2451 = vmatpush2.msra.mxu0 0.0
        %2452 = vmatprep.mubr.f32.mxu0 0.0
        %2453 = vmatmul.mubr.f32.gmra.mxu0 %v2386
        %v2454 = vpop.f32.mrf.mxu0
        %v2455 = vadd.f32 0.0, %v2454
        %v2456 = vpop.f32.mrf.mxu0
        %2457 = vdwg.mxu0
        %v2459 = vsel %vm1563, %v2238, 0
        %2461 = vmatprep.subr.mxu0 0.0
        %2462 = vmatpush1.msra.mxu0 0.0
        %2463 = vmatprep.subr.mxu0 0.0
        %2464 = vmatpush1.msra.mxu0 0.0
        %2465 = vmatprep.subr.mxu0 0.0
        %2466 = vmatpush1.msra.mxu0 0.0
        %2467 = vmatprep.subr.mxu0 0.0
        %2468 = vmatpush1.msra.mxu0 0.0
        %2469 = vmatprep.subr.mxu0 0.0
        %2470 = vmatpush1.msra.mxu0 0.0
        %2471 = vmatprep.subr.mxu0 0.0
        %2472 = vmatpush1.msra.mxu0 0.0
        %2473 = vmatprep.subr.mxu0 0.0
        %2474 = vmatpush1.msra.mxu0 0.0
        %2475 = vmatprep.subr.mxu0 0.0
        %2476 = vmatpush1.msra.mxu0 0.0
        %2477 = vmatprep.subr.mxu0 0.0
        %2478 = vmatpush1.msra.mxu0 0.0
        %2479 = vmatprep.subr.mxu0 0.0
        %2480 = vmatpush1.msra.mxu0 0.0
        %2481 = vmatprep.subr.mxu0 0.0
        %2482 = vmatpush1.msra.mxu0 0.0
        %2483 = vmatprep.subr.mxu0 0.0
        %2484 = vmatpush1.msra.mxu0 0.0
        %2485 = vmatprep.subr.mxu0 0.0
        %2486 = vmatpush1.msra.mxu0 0.0
        %2487 = vmatprep.subr.mxu0 0.0
        %2488 = vmatpush1.msra.mxu0 0.0
        %2489 = vmatprep.subr.mxu0 0.0
        %2490 = vmatpush1.msra.mxu0 0.0
        %2491 = vmatprep.subr.mxu0 0.0
        %2492 = vmatpush1.msra.mxu0 %v1557
        %2493 = vmatprep.subr.mxu0 0.0
        %2494 = vmatpush2.msra.mxu0 0.0
        %2495 = vmatprep.subr.mxu0 0.0
        %2496 = vmatpush2.msra.mxu0 0.0
        %2497 = vmatprep.subr.mxu0 0.0
        %2498 = vmatpush2.msra.mxu0 0.0
        %2499 = vmatprep.subr.mxu0 0.0
        %2500 = vmatpush2.msra.mxu0 0.0
        %2501 = vmatprep.subr.mxu0 0.0
        %2502 = vmatpush2.msra.mxu0 0.0
        %2503 = vmatprep.subr.mxu0 0.0
        %2504 = vmatpush2.msra.mxu0 0.0
        %2505 = vmatprep.subr.mxu0 0.0
        %2506 = vmatpush2.msra.mxu0 0.0
        %2507 = vmatprep.subr.mxu0 0.0
        %2508 = vmatpush2.msra.mxu0 0.0
        %2509 = vmatprep.subr.mxu0 0.0
        %2510 = vmatpush2.msra.mxu0 0.0
        %2511 = vmatprep.subr.mxu0 0.0
        %2512 = vmatpush2.msra.mxu0 0.0
        %2513 = vmatprep.subr.mxu0 0.0
        %2514 = vmatpush2.msra.mxu0 0.0
        %2515 = vmatprep.subr.mxu0 0.0
        %2516 = vmatpush2.msra.mxu0 0.0
        %2517 = vmatprep.subr.mxu0 0.0
        %2518 = vmatpush2.msra.mxu0 0.0
        %2519 = vmatprep.subr.mxu0 0.0
        %2520 = vmatpush2.msra.mxu0 0.0
        %2521 = vmatprep.subr.mxu0 0.0
        %2522 = vmatpush2.msra.mxu0 0.0
        %2523 = vmatprep.subr.mxu0 0.0
        %2524 = vmatpush2.msra.mxu0 0.0
        %2525 = vmatprep.mubr.f32.mxu0 0.0
        %2526 = vmatmul.mubr.f32.gmra.mxu0 %v2459
        %v2527 = vpop.f32.mrf.mxu0
        %v2528 = vadd.f32 0.0, %v2527
        %v2529 = vpop.f32.mrf.mxu0
        %2530 = vdwg.mxu0
        %v2531 = vsel %vm515, %v2309, 0.0
        %v2532 = vsel %vm515, %v2382, 0.0
        %v2533 = vadd.f32 %v2531, %v2532
        %v2534 = vsel %vm515, %v2455, 0.0
        %v2535 = vadd.f32 %v2533, %v2534
        %v2536 = vsel %vm515, %v2528, 0.0
        %v2537 = vadd.f32 %v2535, %v2536
        %v2538 = vmul.f32 %v970, 0.35355338
        %v2539 = vmul.f32 %v971, 0.35355338
        %v2540 = vmul.f32 %v972, 0.35355338
        %v2541 = vmul.f32 %v973, 0.35355338
        %v2543 = vsel %vm1563, %v2538, 0
        %2545 = vmatprep.subr.mxu0 0.0
        %2546 = vmatpush1.xpose.msra.mxu0 0.0
        %2547 = vmatprep.subr.mxu0 0.0
        %2548 = vmatpush1.xpose.msra.mxu0 0.0
        %2549 = vmatprep.subr.mxu0 0.0
        %2550 = vmatpush1.xpose.msra.mxu0 0.0
        %2551 = vmatprep.subr.mxu0 0.0
        %2552 = vmatpush1.xpose.msra.mxu0 0.0
        %2553 = vmatprep.subr.mxu0 0.0
        %2554 = vmatpush1.xpose.msra.mxu0 0.0
        %2555 = vmatprep.subr.mxu0 0.0
        %2556 = vmatpush1.xpose.msra.mxu0 0.0
        %2557 = vmatprep.subr.mxu0 0.0
        %2558 = vmatpush1.xpose.msra.mxu0 0.0
        %2559 = vmatprep.subr.mxu0 0.0
        %2560 = vmatpush1.xpose.msra.mxu0 0.0
        %2561 = vmatprep.subr.mxu0 0.0
        %2562 = vmatpush1.xpose.msra.mxu0 0.0
        %2563 = vmatprep.subr.mxu0 0.0
        %2564 = vmatpush1.xpose.msra.mxu0 0.0
        %2565 = vmatprep.subr.mxu0 0.0
        %2566 = vmatpush1.xpose.msra.mxu0 0.0
        %2567 = vmatprep.subr.mxu0 0.0
        %2568 = vmatpush1.xpose.msra.mxu0 0.0
        %2569 = vmatprep.subr.mxu0 0.0
        %2570 = vmatpush1.xpose.msra.mxu0 0.0
        %2571 = vmatprep.subr.mxu0 0.0
        %2572 = vmatpush1.xpose.msra.mxu0 0.0
        %2573 = vmatprep.subr.mxu0 0.0
        %2574 = vmatpush1.xpose.msra.mxu0 0.0
        %2575 = vmatprep.subr.mxu0 0.0
        %2576 = vmatpush1.xpose.msra.mxu0 %v1568
        %2577 = vmatprep.subr.mxu0 0.0
        %2578 = vmatpush2.xpose.msra.mxu0 0.0
        %2579 = vmatprep.subr.mxu0 0.0
        %2580 = vmatpush2.xpose.msra.mxu0 0.0
        %2581 = vmatprep.subr.mxu0 0.0
        %2582 = vmatpush2.xpose.msra.mxu0 0.0
        %2583 = vmatprep.subr.mxu0 0.0
        %2584 = vmatpush2.xpose.msra.mxu0 0.0
        %2585 = vmatprep.subr.mxu0 0.0
        %2586 = vmatpush2.xpose.msra.mxu0 0.0
        %2587 = vmatprep.subr.mxu0 0.0
        %2588 = vmatpush2.xpose.msra.mxu0 0.0
        %2589 = vmatprep.subr.mxu0 0.0
        %2590 = vmatpush2.xpose.msra.mxu0 0.0
        %2591 = vmatprep.subr.mxu0 0.0
        %2592 = vmatpush2.xpose.msra.mxu0 0.0
        %2593 = vmatprep.subr.mxu0 0.0
        %2594 = vmatpush2.xpose.msra.mxu0 0.0
        %2595 = vmatprep.subr.mxu0 0.0
        %2596 = vmatpush2.xpose.msra.mxu0 0.0
        %2597 = vmatprep.subr.mxu0 0.0
        %2598 = vmatpush2.xpose.msra.mxu0 0.0
        %2599 = vmatprep.subr.mxu0 0.0
        %2600 = vmatpush2.xpose.msra.mxu0 0.0
        %2601 = vmatprep.subr.mxu0 0.0
        %2602 = vmatpush2.xpose.msra.mxu0 0.0
        %2603 = vmatprep.subr.mxu0 0.0
        %2604 = vmatpush2.xpose.msra.mxu0 0.0
        %2605 = vmatprep.subr.mxu0 0.0
        %2606 = vmatpush2.xpose.msra.mxu0 0.0
        %2607 = vmatprep.subr.mxu0 0.0
        %2608 = vmatpush2.xpose.msra.mxu0 0.0
        %2609 = vmatprep.mubr.f32.mxu0 0.0
        %2610 = vmatmul.mubr.f32.gmra.mxu0 %v2543
        %v2611 = vpop.f32.mrf.mxu0
        %v2612 = vadd.f32 0.0, %v2611
        %v2613 = vpop.f32.mrf.mxu0
        %2614 = vdwg.mxu0
        %v2616 = vsel %vm1563, %v2539, 0
        %2618 = vmatprep.subr.mxu0 0.0
        %2619 = vmatpush1.xpose.msra.mxu0 0.0
        %2620 = vmatprep.subr.mxu0 0.0
        %2621 = vmatpush1.xpose.msra.mxu0 0.0
        %2622 = vmatprep.subr.mxu0 0.0
        %2623 = vmatpush1.xpose.msra.mxu0 0.0
        %2624 = vmatprep.subr.mxu0 0.0
        %2625 = vmatpush1.xpose.msra.mxu0 0.0
        %2626 = vmatprep.subr.mxu0 0.0
        %2627 = vmatpush1.xpose.msra.mxu0 0.0
        %2628 = vmatprep.subr.mxu0 0.0
        %2629 = vmatpush1.xpose.msra.mxu0 0.0
        %2630 = vmatprep.subr.mxu0 0.0
        %2631 = vmatpush1.xpose.msra.mxu0 0.0
        %2632 = vmatprep.subr.mxu0 0.0
        %2633 = vmatpush1.xpose.msra.mxu0 0.0
        %2634 = vmatprep.subr.mxu0 0.0
        %2635 = vmatpush1.xpose.msra.mxu0 0.0
        %2636 = vmatprep.subr.mxu0 0.0
        %2637 = vmatpush1.xpose.msra.mxu0 0.0
        %2638 = vmatprep.subr.mxu0 0.0
        %2639 = vmatpush1.xpose.msra.mxu0 0.0
        %2640 = vmatprep.subr.mxu0 0.0
        %2641 = vmatpush1.xpose.msra.mxu0 0.0
        %2642 = vmatprep.subr.mxu0 0.0
        %2643 = vmatpush1.xpose.msra.mxu0 0.0
        %2644 = vmatprep.subr.mxu0 0.0
        %2645 = vmatpush1.xpose.msra.mxu0 0.0
        %2646 = vmatprep.subr.mxu0 0.0
        %2647 = vmatpush1.xpose.msra.mxu0 0.0
        %2648 = vmatprep.subr.mxu0 0.0
        %2649 = vmatpush1.xpose.msra.mxu0 %v1644
        %2650 = vmatprep.subr.mxu0 0.0
        %2651 = vmatpush2.xpose.msra.mxu0 0.0
        %2652 = vmatprep.subr.mxu0 0.0
        %2653 = vmatpush2.xpose.msra.mxu0 0.0
        %2654 = vmatprep.subr.mxu0 0.0
        %2655 = vmatpush2.xpose.msra.mxu0 0.0
        %2656 = vmatprep.subr.mxu0 0.0
        %2657 = vmatpush2.xpose.msra.mxu0 0.0
        %2658 = vmatprep.subr.mxu0 0.0
        %2659 = vmatpush2.xpose.msra.mxu0 0.0
        %2660 = vmatprep.subr.mxu0 0.0
        %2661 = vmatpush2.xpose.msra.mxu0 0.0
        %2662 = vmatprep.subr.mxu0 0.0
        %2663 = vmatpush2.xpose.msra.mxu0 0.0
        %2664 = vmatprep.subr.mxu0 0.0
        %2665 = vmatpush2.xpose.msra.mxu0 0.0
        %2666 = vmatprep.subr.mxu0 0.0
        %2667 = vmatpush2.xpose.msra.mxu0 0.0
        %2668 = vmatprep.subr.mxu0 0.0
        %2669 = vmatpush2.xpose.msra.mxu0 0.0
        %2670 = vmatprep.subr.mxu0 0.0
        %2671 = vmatpush2.xpose.msra.mxu0 0.0
        %2672 = vmatprep.subr.mxu0 0.0
        %2673 = vmatpush2.xpose.msra.mxu0 0.0
        %2674 = vmatprep.subr.mxu0 0.0
        %2675 = vmatpush2.xpose.msra.mxu0 0.0
        %2676 = vmatprep.subr.mxu0 0.0
        %2677 = vmatpush2.xpose.msra.mxu0 0.0
        %2678 = vmatprep.subr.mxu0 0.0
        %2679 = vmatpush2.xpose.msra.mxu0 0.0
        %2680 = vmatprep.subr.mxu0 0.0
        %2681 = vmatpush2.xpose.msra.mxu0 0.0
        %2682 = vmatprep.mubr.f32.mxu0 0.0
        %2683 = vmatmul.mubr.f32.gmra.mxu0 %v2616
        %v2684 = vpop.f32.mrf.mxu0
        %v2685 = vadd.f32 0.0, %v2684
        %v2686 = vpop.f32.mrf.mxu0
        %2687 = vdwg.mxu0
        %v2689 = vsel %vm1563, %v2540, 0
        %2691 = vmatprep.subr.mxu0 0.0
        %2692 = vmatpush1.xpose.msra.mxu0 0.0
        %2693 = vmatprep.subr.mxu0 0.0
        %2694 = vmatpush1.xpose.msra.mxu0 0.0
        %2695 = vmatprep.subr.mxu0 0.0
        %2696 = vmatpush1.xpose.msra.mxu0 0.0
        %2697 = vmatprep.subr.mxu0 0.0
        %2698 = vmatpush1.xpose.msra.mxu0 0.0
        %2699 = vmatprep.subr.mxu0 0.0
        %2700 = vmatpush1.xpose.msra.mxu0 0.0
        %2701 = vmatprep.subr.mxu0 0.0
        %2702 = vmatpush1.xpose.msra.mxu0 0.0
        %2703 = vmatprep.subr.mxu0 0.0
        %2704 = vmatpush1.xpose.msra.mxu0 0.0
        %2705 = vmatprep.subr.mxu0 0.0
        %2706 = vmatpush1.xpose.msra.mxu0 0.0
        %2707 = vmatprep.subr.mxu0 0.0
        %2708 = vmatpush1.xpose.msra.mxu0 0.0
        %2709 = vmatprep.subr.mxu0 0.0
        %2710 = vmatpush1.xpose.msra.mxu0 0.0
        %2711 = vmatprep.subr.mxu0 0.0
        %2712 = vmatpush1.xpose.msra.mxu0 0.0
        %2713 = vmatprep.subr.mxu0 0.0
        %2714 = vmatpush1.xpose.msra.mxu0 0.0
        %2715 = vmatprep.subr.mxu0 0.0
        %2716 = vmatpush1.xpose.msra.mxu0 0.0
        %2717 = vmatprep.subr.mxu0 0.0
        %2718 = vmatpush1.xpose.msra.mxu0 0.0
        %2719 = vmatprep.subr.mxu0 0.0
        %2720 = vmatpush1.xpose.msra.mxu0 0.0
        %2721 = vmatprep.subr.mxu0 0.0
        %2722 = vmatpush1.xpose.msra.mxu0 %v1720
        %2723 = vmatprep.subr.mxu0 0.0
        %2724 = vmatpush2.xpose.msra.mxu0 0.0
        %2725 = vmatprep.subr.mxu0 0.0
        %2726 = vmatpush2.xpose.msra.mxu0 0.0
        %2727 = vmatprep.subr.mxu0 0.0
        %2728 = vmatpush2.xpose.msra.mxu0 0.0
        %2729 = vmatprep.subr.mxu0 0.0
        %2730 = vmatpush2.xpose.msra.mxu0 0.0
        %2731 = vmatprep.subr.mxu0 0.0
        %2732 = vmatpush2.xpose.msra.mxu0 0.0
        %2733 = vmatprep.subr.mxu0 0.0
        %2734 = vmatpush2.xpose.msra.mxu0 0.0
        %2735 = vmatprep.subr.mxu0 0.0
        %2736 = vmatpush2.xpose.msra.mxu0 0.0
        %2737 = vmatprep.subr.mxu0 0.0
        %2738 = vmatpush2.xpose.msra.mxu0 0.0
        %2739 = vmatprep.subr.mxu0 0.0
        %2740 = vmatpush2.xpose.msra.mxu0 0.0
        %2741 = vmatprep.subr.mxu0 0.0
        %2742 = vmatpush2.xpose.msra.mxu0 0.0
        %2743 = vmatprep.subr.mxu0 0.0
        %2744 = vmatpush2.xpose.msra.mxu0 0.0
        %2745 = vmatprep.subr.mxu0 0.0
        %2746 = vmatpush2.xpose.msra.mxu0 0.0
        %2747 = vmatprep.subr.mxu0 0.0
        %2748 = vmatpush2.xpose.msra.mxu0 0.0
        %2749 = vmatprep.subr.mxu0 0.0
        %2750 = vmatpush2.xpose.msra.mxu0 0.0
        %2751 = vmatprep.subr.mxu0 0.0
        %2752 = vmatpush2.xpose.msra.mxu0 0.0
        %2753 = vmatprep.subr.mxu0 0.0
        %2754 = vmatpush2.xpose.msra.mxu0 0.0
        %2755 = vmatprep.mubr.f32.mxu0 0.0
        %2756 = vmatmul.mubr.f32.gmra.mxu0 %v2689
        %v2757 = vpop.f32.mrf.mxu0
        %v2758 = vadd.f32 0.0, %v2757
        %v2759 = vpop.f32.mrf.mxu0
        %2760 = vdwg.mxu0
        %v2762 = vsel %vm1563, %v2541, 0
        %2764 = vmatprep.subr.mxu0 0.0
        %2765 = vmatpush1.xpose.msra.mxu0 0.0
        %2766 = vmatprep.subr.mxu0 0.0
        %2767 = vmatpush1.xpose.msra.mxu0 0.0
        %2768 = vmatprep.subr.mxu0 0.0
        %2769 = vmatpush1.xpose.msra.mxu0 0.0
        %2770 = vmatprep.subr.mxu0 0.0
        %2771 = vmatpush1.xpose.msra.mxu0 0.0
        %2772 = vmatprep.subr.mxu0 0.0
        %2773 = vmatpush1.xpose.msra.mxu0 0.0
        %2774 = vmatprep.subr.mxu0 0.0
        %2775 = vmatpush1.xpose.msra.mxu0 0.0
        %2776 = vmatprep.subr.mxu0 0.0
        %2777 = vmatpush1.xpose.msra.mxu0 0.0
        %2778 = vmatprep.subr.mxu0 0.0
        %2779 = vmatpush1.xpose.msra.mxu0 0.0
        %2780 = vmatprep.subr.mxu0 0.0
        %2781 = vmatpush1.xpose.msra.mxu0 0.0
        %2782 = vmatprep.subr.mxu0 0.0
        %2783 = vmatpush1.xpose.msra.mxu0 0.0
        %2784 = vmatprep.subr.mxu0 0.0
        %2785 = vmatpush1.xpose.msra.mxu0 0.0
        %2786 = vmatprep.subr.mxu0 0.0
        %2787 = vmatpush1.xpose.msra.mxu0 0.0
        %2788 = vmatprep.subr.mxu0 0.0
        %2789 = vmatpush1.xpose.msra.mxu0 0.0
        %2790 = vmatprep.subr.mxu0 0.0
        %2791 = vmatpush1.xpose.msra.mxu0 0.0
        %2792 = vmatprep.subr.mxu0 0.0
        %2793 = vmatpush1.xpose.msra.mxu0 0.0
        %2794 = vmatprep.subr.mxu0 0.0
        %2795 = vmatpush1.xpose.msra.mxu0 %v1796
        %2796 = vmatprep.subr.mxu0 0.0
        %2797 = vmatpush2.xpose.msra.mxu0 0.0
        %2798 = vmatprep.subr.mxu0 0.0
        %2799 = vmatpush2.xpose.msra.mxu0 0.0
        %2800 = vmatprep.subr.mxu0 0.0
        %2801 = vmatpush2.xpose.msra.mxu0 0.0
        %2802 = vmatprep.subr.mxu0 0.0
        %2803 = vmatpush2.xpose.msra.mxu0 0.0
        %2804 = vmatprep.subr.mxu0 0.0
        %2805 = vmatpush2.xpose.msra.mxu0 0.0
        %2806 = vmatprep.subr.mxu0 0.0
        %2807 = vmatpush2.xpose.msra.mxu0 0.0
        %2808 = vmatprep.subr.mxu0 0.0
        %2809 = vmatpush2.xpose.msra.mxu0 0.0
        %2810 = vmatprep.subr.mxu0 0.0
        %2811 = vmatpush2.xpose.msra.mxu0 0.0
        %2812 = vmatprep.subr.mxu0 0.0
        %2813 = vmatpush2.xpose.msra.mxu0 0.0
        %2814 = vmatprep.subr.mxu0 0.0
        %2815 = vmatpush2.xpose.msra.mxu0 0.0
        %2816 = vmatprep.subr.mxu0 0.0
        %2817 = vmatpush2.xpose.msra.mxu0 0.0
        %2818 = vmatprep.subr.mxu0 0.0
        %2819 = vmatpush2.xpose.msra.mxu0 0.0
        %2820 = vmatprep.subr.mxu0 0.0
        %2821 = vmatpush2.xpose.msra.mxu0 0.0
        %2822 = vmatprep.subr.mxu0 0.0
        %2823 = vmatpush2.xpose.msra.mxu0 0.0
        %2824 = vmatprep.subr.mxu0 0.0
        %2825 = vmatpush2.xpose.msra.mxu0 0.0
        %2826 = vmatprep.subr.mxu0 0.0
        %2827 = vmatpush2.xpose.msra.mxu0 0.0
        %2828 = vmatprep.mubr.f32.mxu0 0.0
        %2829 = vmatmul.mubr.f32.gmra.mxu0 %v2762
        %v2830 = vpop.f32.mrf.mxu0
        %v2831 = vadd.f32 0.0, %v2830
        %v2832 = vpop.f32.mrf.mxu0
        %2833 = vdwg.mxu0
        %v2834 = vsel %vm1563, %v2612, -inf
        %2835 = vmax.xlane.f32.xlu0 %v2834
        %v2836 = vpop.xlane.xlu0 %2835
        %v2837 = vsel %vm1563, %v2685, -inf
        %2838 = vmax.xlane.f32.xlu0 %v2837
        %v2839 = vpop.xlane.xlu0 %2838
        %v2840 = vsel %vm1563, %v2758, -inf
        %2841 = vmax.xlane.f32.xlu0 %v2840
        %v2842 = vpop.xlane.xlu0 %2841
        %v2843 = vsel %vm1563, %v2831, -inf
        %2844 = vmax.xlane.f32.xlu0 %v2843
        %v2845 = vpop.xlane.xlu0 %2844
        %v2846 = vsub.f32 -inf, %v2836
        %v2847 = vsub.f32 -inf, %v2839
        %v2848 = vsub.f32 -inf, %v2842
        %v2849 = vsub.f32 -inf, %v2845
        %v2850 = vmul.f32 %v2846, 1.442695
        %v2851 = vpow.pop %v2850
        %v2852 = vmul.f32 %v2847, 1.442695
        %v2853 = vpow.pop %v2852
        %v2854 = vmul.f32 %v2848, 1.442695
        %v2855 = vpow.pop %v2854
        %v2856 = vmul.f32 %v2849, 1.442695
        %v2857 = vpow.pop %v2856
        %v2858 = vsub.f32 %v2612, %v2836
        %v2859 = vsub.f32 %v2685, %v2839
        %v2860 = vsub.f32 %v2758, %v2842
        %v2861 = vsub.f32 %v2831, %v2845
        %v2862 = vmul.f32 %v2858, 1.442695
        %v2863 = vpow.pop %v2862
        %v2864 = vmul.f32 %v2859, 1.442695
        %v2865 = vpow.pop %v2864
        %v2866 = vmul.f32 %v2860, 1.442695
        %v2867 = vpow.pop %v2866
        %v2868 = vmul.f32 %v2861, 1.442695
        %v2869 = vpow.pop %v2868
        %v2870 = vmul.f32 %v2851, 0.0
        %v2871 = vmul.f32 %v2853, 0.0
        %v2872 = vmul.f32 %v2855, 0.0
        %v2873 = vmul.f32 %v2857, 0.0
        %v2874 = vsel %vm1563, %v2863, 0.0
        %2875 = vadd.xlane.f32.xlu0 %v2874
        %v2876 = vpop.xlane.xlu0 %2875
        %v2877 = vsel %vm1563, %v2865, 0.0
        %2878 = vadd.xlane.f32.xlu0 %v2877
        %v2879 = vpop.xlane.xlu0 %2878
        %v2880 = vsel %vm1563, %v2867, 0.0
        %2881 = vadd.xlane.f32.xlu0 %v2880
        %v2882 = vpop.xlane.xlu0 %2881
        %v2883 = vsel %vm1563, %v2869, 0.0
        %2884 = vadd.xlane.f32.xlu0 %v2883
        %v2885 = vpop.xlane.xlu0 %2884
        %v2886 = vadd.f32 %v2870, %v2876
        %v2887 = vadd.f32 %v2871, %v2879
        %v2888 = vadd.f32 %v2872, %v2882
        %v2889 = vadd.f32 %v2873, %v2885
        %v2891 = vsel %vm1563, %v2863, 0
        %2893 = vmatprep.subr.mxu0 0.0
        %2894 = vmatpush1.msra.mxu0 0.0
        %2895 = vmatprep.subr.mxu0 0.0
        %2896 = vmatpush1.msra.mxu0 0.0
        %2897 = vmatprep.subr.mxu0 0.0
        %2898 = vmatpush1.msra.mxu0 0.0
        %2899 = vmatprep.subr.mxu0 0.0
        %2900 = vmatpush1.msra.mxu0 0.0
        %2901 = vmatprep.subr.mxu0 0.0
        %2902 = vmatpush1.msra.mxu0 0.0
        %2903 = vmatprep.subr.mxu0 0.0
        %2904 = vmatpush1.msra.mxu0 0.0
        %2905 = vmatprep.subr.mxu0 0.0
        %2906 = vmatpush1.msra.mxu0 0.0
        %2907 = vmatprep.subr.mxu0 0.0
        %2908 = vmatpush1.msra.mxu0 0.0
        %2909 = vmatprep.subr.mxu0 0.0
        %2910 = vmatpush1.msra.mxu0 0.0
        %2911 = vmatprep.subr.mxu0 0.0
        %2912 = vmatpush1.msra.mxu0 0.0
        %2913 = vmatprep.subr.mxu0 0.0
        %2914 = vmatpush1.msra.mxu0 0.0
        %2915 = vmatprep.subr.mxu0 0.0
        %2916 = vmatpush1.msra.mxu0 0.0
        %2917 = vmatprep.subr.mxu0 0.0
        %2918 = vmatpush1.msra.mxu0 0.0
        %2919 = vmatprep.subr.mxu0 0.0
        %2920 = vmatpush1.msra.mxu0 0.0
        %2921 = vmatprep.subr.mxu0 0.0
        %2922 = vmatpush1.msra.mxu0 0.0
        %2923 = vmatprep.subr.mxu0 0.0
        %2924 = vmatpush1.msra.mxu0 %v1482
        %2925 = vmatprep.subr.mxu0 0.0
        %2926 = vmatpush2.msra.mxu0 0.0
        %2927 = vmatprep.subr.mxu0 0.0
        %2928 = vmatpush2.msra.mxu0 0.0
        %2929 = vmatprep.subr.mxu0 0.0
        %2930 = vmatpush2.msra.mxu0 0.0
        %2931 = vmatprep.subr.mxu0 0.0
        %2932 = vmatpush2.msra.mxu0 0.0
        %2933 = vmatprep.subr.mxu0 0.0
        %2934 = vmatpush2.msra.mxu0 0.0
        %2935 = vmatprep.subr.mxu0 0.0
        %2936 = vmatpush2.msra.mxu0 0.0
        %2937 = vmatprep.subr.mxu0 0.0
        %2938 = vmatpush2.msra.mxu0 0.0
        %2939 = vmatprep.subr.mxu0 0.0
        %2940 = vmatpush2.msra.mxu0 0.0
        %2941 = vmatprep.subr.mxu0 0.0
        %2942 = vmatpush2.msra.mxu0 0.0
        %2943 = vmatprep.subr.mxu0 0.0
        %2944 = vmatpush2.msra.mxu0 0.0
        %2945 = vmatprep.subr.mxu0 0.0
        %2946 = vmatpush2.msra.mxu0 0.0
        %2947 = vmatprep.subr.mxu0 0.0
        %2948 = vmatpush2.msra.mxu0 0.0
        %2949 = vmatprep.subr.mxu0 0.0
        %2950 = vmatpush2.msra.mxu0 0.0
        %2951 = vmatprep.subr.mxu0 0.0
        %2952 = vmatpush2.msra.mxu0 0.0
        %2953 = vmatprep.subr.mxu0 0.0
        %2954 = vmatpush2.msra.mxu0 0.0
        %2955 = vmatprep.subr.mxu0 0.0
        %2956 = vmatpush2.msra.mxu0 0.0
        %2957 = vmatprep.mubr.f32.mxu0 0.0
        %2958 = vmatmul.mubr.f32.gmra.mxu0 %v2891
        %v2959 = vpop.f32.mrf.mxu0
        %v2960 = vadd.f32 0.0, %v2959
        %v2961 = vpop.f32.mrf.mxu0
        %2962 = vdwg.mxu0
        %v2964 = vsel %vm1563, %v2865, 0
        %2966 = vmatprep.subr.mxu0 0.0
        %2967 = vmatpush1.msra.mxu0 0.0
        %2968 = vmatprep.subr.mxu0 0.0
        %2969 = vmatpush1.msra.mxu0 0.0
        %2970 = vmatprep.subr.mxu0 0.0
        %2971 = vmatpush1.msra.mxu0 0.0
        %2972 = vmatprep.subr.mxu0 0.0
        %2973 = vmatpush1.msra.mxu0 0.0
        %2974 = vmatprep.subr.mxu0 0.0
        %2975 = vmatpush1.msra.mxu0 0.0
        %2976 = vmatprep.subr.mxu0 0.0
        %2977 = vmatpush1.msra.mxu0 0.0
        %2978 = vmatprep.subr.mxu0 0.0
        %2979 = vmatpush1.msra.mxu0 0.0
        %2980 = vmatprep.subr.mxu0 0.0
        %2981 = vmatpush1.msra.mxu0 0.0
        %2982 = vmatprep.subr.mxu0 0.0
        %2983 = vmatpush1.msra.mxu0 0.0
        %2984 = vmatprep.subr.mxu0 0.0
        %2985 = vmatpush1.msra.mxu0 0.0
        %2986 = vmatprep.subr.mxu0 0.0
        %2987 = vmatpush1.msra.mxu0 0.0
        %2988 = vmatprep.subr.mxu0 0.0
        %2989 = vmatpush1.msra.mxu0 0.0
        %2990 = vmatprep.subr.mxu0 0.0
        %2991 = vmatpush1.msra.mxu0 0.0
        %2992 = vmatprep.subr.mxu0 0.0
        %2993 = vmatpush1.msra.mxu0 0.0
        %2994 = vmatprep.subr.mxu0 0.0
        %2995 = vmatpush1.msra.mxu0 0.0
        %2996 = vmatprep.subr.mxu0 0.0
        %2997 = vmatpush1.msra.mxu0 %v1483
        %2998 = vmatprep.subr.mxu0 0.0
        %2999 = vmatpush2.msra.mxu0 0.0
        %3000 = vmatprep.subr.mxu0 0.0
        %3001 = vmatpush2.msra.mxu0 0.0
        %3002 = vmatprep.subr.mxu0 0.0
        %3003 = vmatpush2.msra.mxu0 0.0
        %3004 = vmatprep.subr.mxu0 0.0
        %3005 = vmatpush2.msra.mxu0 0.0
        %3006 = vmatprep.subr.mxu0 0.0
        %3007 = vmatpush2.msra.mxu0 0.0
        %3008 = vmatprep.subr.mxu0 0.0
        %3009 = vmatpush2.msra.mxu0 0.0
        %3010 = vmatprep.subr.mxu0 0.0
        %3011 = vmatpush2.msra.mxu0 0.0
        %3012 = vmatprep.subr.mxu0 0.0
        %3013 = vmatpush2.msra.mxu0 0.0
        %3014 = vmatprep.subr.mxu0 0.0
        %3015 = vmatpush2.msra.mxu0 0.0
        %3016 = vmatprep.subr.mxu0 0.0
        %3017 = vmatpush2.msra.mxu0 0.0
        %3018 = vmatprep.subr.mxu0 0.0
        %3019 = vmatpush2.msra.mxu0 0.0
        %3020 = vmatprep.subr.mxu0 0.0
        %3021 = vmatpush2.msra.mxu0 0.0
        %3022 = vmatprep.subr.mxu0 0.0
        %3023 = vmatpush2.msra.mxu0 0.0
        %3024 = vmatprep.subr.mxu0 0.0
        %3025 = vmatpush2.msra.mxu0 0.0
        %3026 = vmatprep.subr.mxu0 0.0
        %3027 = vmatpush2.msra.mxu0 0.0
        %3028 = vmatprep.subr.mxu0 0.0
        %3029 = vmatpush2.msra.mxu0 0.0
        %3030 = vmatprep.mubr.f32.mxu0 0.0
        %3031 = vmatmul.mubr.f32.gmra.mxu0 %v2964
        %v3032 = vpop.f32.mrf.mxu0
        %v3033 = vadd.f32 0.0, %v3032
        %v3034 = vpop.f32.mrf.mxu0
        %3035 = vdwg.mxu0
        %v3037 = vsel %vm1563, %v2867, 0
        %3039 = vmatprep.subr.mxu0 0.0
        %3040 = vmatpush1.msra.mxu0 0.0
        %3041 = vmatprep.subr.mxu0 0.0
        %3042 = vmatpush1.msra.mxu0 0.0
        %3043 = vmatprep.subr.mxu0 0.0
        %3044 = vmatpush1.msra.mxu0 0.0
        %3045 = vmatprep.subr.mxu0 0.0
        %3046 = vmatpush1.msra.mxu0 0.0
        %3047 = vmatprep.subr.mxu0 0.0
        %3048 = vmatpush1.msra.mxu0 0.0
        %3049 = vmatprep.subr.mxu0 0.0
        %3050 = vmatpush1.msra.mxu0 0.0
        %3051 = vmatprep.subr.mxu0 0.0
        %3052 = vmatpush1.msra.mxu0 0.0
        %3053 = vmatprep.subr.mxu0 0.0
        %3054 = vmatpush1.msra.mxu0 0.0
        %3055 = vmatprep.subr.mxu0 0.0
        %3056 = vmatpush1.msra.mxu0 0.0
        %3057 = vmatprep.subr.mxu0 0.0
        %3058 = vmatpush1.msra.mxu0 0.0
        %3059 = vmatprep.subr.mxu0 0.0
        %3060 = vmatpush1.msra.mxu0 0.0
        %3061 = vmatprep.subr.mxu0 0.0
        %3062 = vmatpush1.msra.mxu0 0.0
        %3063 = vmatprep.subr.mxu0 0.0
        %3064 = vmatpush1.msra.mxu0 0.0
        %3065 = vmatprep.subr.mxu0 0.0
        %3066 = vmatpush1.msra.mxu0 0.0
        %3067 = vmatprep.subr.mxu0 0.0
        %3068 = vmatpush1.msra.mxu0 0.0
        %3069 = vmatprep.subr.mxu0 0.0
        %3070 = vmatpush1.msra.mxu0 %v1484
        %3071 = vmatprep.subr.mxu0 0.0
        %3072 = vmatpush2.msra.mxu0 0.0
        %3073 = vmatprep.subr.mxu0 0.0
        %3074 = vmatpush2.msra.mxu0 0.0
        %3075 = vmatprep.subr.mxu0 0.0
        %3076 = vmatpush2.msra.mxu0 0.0
        %3077 = vmatprep.subr.mxu0 0.0
        %3078 = vmatpush2.msra.mxu0 0.0
        %3079 = vmatprep.subr.mxu0 0.0
        %3080 = vmatpush2.msra.mxu0 0.0
        %3081 = vmatprep.subr.mxu0 0.0
        %3082 = vmatpush2.msra.mxu0 0.0
        %3083 = vmatprep.subr.mxu0 0.0
        %3084 = vmatpush2.msra.mxu0 0.0
        %3085 = vmatprep.subr.mxu0 0.0
        %3086 = vmatpush2.msra.mxu0 0.0
        %3087 = vmatprep.subr.mxu0 0.0
        %3088 = vmatpush2.msra.mxu0 0.0
        %3089 = vmatprep.subr.mxu0 0.0
        %3090 = vmatpush2.msra.mxu0 0.0
        %3091 = vmatprep.subr.mxu0 0.0
        %3092 = vmatpush2.msra.mxu0 0.0
        %3093 = vmatprep.subr.mxu0 0.0
        %3094 = vmatpush2.msra.mxu0 0.0
        %3095 = vmatprep.subr.mxu0 0.0
        %3096 = vmatpush2.msra.mxu0 0.0
        %3097 = vmatprep.subr.mxu0 0.0
        %3098 = vmatpush2.msra.mxu0 0.0
        %3099 = vmatprep.subr.mxu0 0.0
        %3100 = vmatpush2.msra.mxu0 0.0
        %3101 = vmatprep.subr.mxu0 0.0
        %3102 = vmatpush2.msra.mxu0 0.0
        %3103 = vmatprep.mubr.f32.mxu0 0.0
        %3104 = vmatmul.mubr.f32.gmra.mxu0 %v3037
        %v3105 = vpop.f32.mrf.mxu0
        %v3106 = vadd.f32 0.0, %v3105
        %v3107 = vpop.f32.mrf.mxu0
        %3108 = vdwg.mxu0
        %v3110 = vsel %vm1563, %v2869, 0
        %3112 = vmatprep.subr.mxu0 0.0
        %3113 = vmatpush1.msra.mxu0 0.0
        %3114 = vmatprep.subr.mxu0 0.0
        %3115 = vmatpush1.msra.mxu0 0.0
        %3116 = vmatprep.subr.mxu0 0.0
        %3117 = vmatpush1.msra.mxu0 0.0
        %3118 = vmatprep.subr.mxu0 0.0
        %3119 = vmatpush1.msra.mxu0 0.0
        %3120 = vmatprep.subr.mxu0 0.0
        %3121 = vmatpush1.msra.mxu0 0.0
        %3122 = vmatprep.subr.mxu0 0.0
        %3123 = vmatpush1.msra.mxu0 0.0
        %3124 = vmatprep.subr.mxu0 0.0
        %3125 = vmatpush1.msra.mxu0 0.0
        %3126 = vmatprep.subr.mxu0 0.0
        %3127 = vmatpush1.msra.mxu0 0.0
        %3128 = vmatprep.subr.mxu0 0.0
        %3129 = vmatpush1.msra.mxu0 0.0
        %3130 = vmatprep.subr.mxu0 0.0
        %3131 = vmatpush1.msra.mxu0 0.0
        %3132 = vmatprep.subr.mxu0 0.0
        %3133 = vmatpush1.msra.mxu0 0.0
        %3134 = vmatprep.subr.mxu0 0.0
        %3135 = vmatpush1.msra.mxu0 0.0
        %3136 = vmatprep.subr.mxu0 0.0
        %3137 = vmatpush1.msra.mxu0 0.0
        %3138 = vmatprep.subr.mxu0 0.0
        %3139 = vmatpush1.msra.mxu0 0.0
        %3140 = vmatprep.subr.mxu0 0.0
        %3141 = vmatpush1.msra.mxu0 0.0
        %3142 = vmatprep.subr.mxu0 0.0
        %3143 = vmatpush1.msra.mxu0 %v1485
        %3144 = vmatprep.subr.mxu0 0.0
        %3145 = vmatpush2.msra.mxu0 0.0
        %3146 = vmatprep.subr.mxu0 0.0
        %3147 = vmatpush2.msra.mxu0 0.0
        %3148 = vmatprep.subr.mxu0 0.0
        %3149 = vmatpush2.msra.mxu0 0.0
        %3150 = vmatprep.subr.mxu0 0.0
        %3151 = vmatpush2.msra.mxu0 0.0
        %3152 = vmatprep.subr.mxu0 0.0
        %3153 = vmatpush2.msra.mxu0 0.0
        %3154 = vmatprep.subr.mxu0 0.0
        %3155 = vmatpush2.msra.mxu0 0.0
        %3156 = vmatprep.subr.mxu0 0.0
        %3157 = vmatpush2.msra.mxu0 0.0
        %3158 = vmatprep.subr.mxu0 0.0
        %3159 = vmatpush2.msra.mxu0 0.0
        %3160 = vmatprep.subr.mxu0 0.0
        %3161 = vmatpush2.msra.mxu0 0.0
        %3162 = vmatprep.subr.mxu0 0.0
        %3163 = vmatpush2.msra.mxu0 0.0
        %3164 = vmatprep.subr.mxu0 0.0
        %3165 = vmatpush2.msra.mxu0 0.0
        %3166 = vmatprep.subr.mxu0 0.0
        %3167 = vmatpush2.msra.mxu0 0.0
        %3168 = vmatprep.subr.mxu0 0.0
        %3169 = vmatpush2.msra.mxu0 0.0
        %3170 = vmatprep.subr.mxu0 0.0
        %3171 = vmatpush2.msra.mxu0 0.0
        %3172 = vmatprep.subr.mxu0 0.0
        %3173 = vmatpush2.msra.mxu0 0.0
        %3174 = vmatprep.subr.mxu0 0.0
        %3175 = vmatpush2.msra.mxu0 0.0
        %3176 = vmatprep.mubr.f32.mxu0 0.0
        %3177 = vmatmul.mubr.f32.gmra.mxu0 %v3110
        %v3178 = vpop.f32.mrf.mxu0
        %v3179 = vadd.f32 0.0, %v3178
        %v3180 = vpop.f32.mrf.mxu0
        %3181 = vdwg.mxu0
        %v3182 = vadd.f32 %v2870, %v2960
        %v3183 = vadd.f32 %v2871, %v3033
        %v3184 = vadd.f32 %v2872, %v3106
        %v3185 = vadd.f32 %v2873, %v3179
        %v3187 = vsel %vm1563, %v1260, 0
        %3189 = vmatprep.subr.mxu0 0.0
        %3190 = vmatpush1.xpose.msra.mxu0 0.0
        %3191 = vmatprep.subr.mxu0 0.0
        %3192 = vmatpush1.xpose.msra.mxu0 0.0
        %3193 = vmatprep.subr.mxu0 0.0
        %3194 = vmatpush1.xpose.msra.mxu0 0.0
        %3195 = vmatprep.subr.mxu0 0.0
        %3196 = vmatpush1.xpose.msra.mxu0 0.0
        %3197 = vmatprep.subr.mxu0 0.0
        %3198 = vmatpush1.xpose.msra.mxu0 0.0
        %3199 = vmatprep.subr.mxu0 0.0
        %3200 = vmatpush1.xpose.msra.mxu0 0.0
        %3201 = vmatprep.subr.mxu0 0.0
        %3202 = vmatpush1.xpose.msra.mxu0 0.0
        %3203 = vmatprep.subr.mxu0 0.0
        %3204 = vmatpush1.xpose.msra.mxu0 0.0
        %3205 = vmatprep.subr.mxu0 0.0
        %3206 = vmatpush1.xpose.msra.mxu0 0.0
        %3207 = vmatprep.subr.mxu0 0.0
        %3208 = vmatpush1.xpose.msra.mxu0 0.0
        %3209 = vmatprep.subr.mxu0 0.0
        %3210 = vmatpush1.xpose.msra.mxu0 0.0
        %3211 = vmatprep.subr.mxu0 0.0
        %3212 = vmatpush1.xpose.msra.mxu0 0.0
        %3213 = vmatprep.subr.mxu0 0.0
        %3214 = vmatpush1.xpose.msra.mxu0 0.0
        %3215 = vmatprep.subr.mxu0 0.0
        %3216 = vmatpush1.xpose.msra.mxu0 0.0
        %3217 = vmatprep.subr.mxu0 0.0
        %3218 = vmatpush1.xpose.msra.mxu0 0.0
        %3219 = vmatprep.subr.mxu0 0.0
        %3220 = vmatpush1.xpose.msra.mxu0 %v3187
        %3221 = vmatprep.subr.mxu0 0.0
        %3222 = vmatpush2.xpose.msra.mxu0 0.0
        %3223 = vmatprep.subr.mxu0 0.0
        %3224 = vmatpush2.xpose.msra.mxu0 0.0
        %3225 = vmatprep.subr.mxu0 0.0
        %3226 = vmatpush2.xpose.msra.mxu0 0.0
        %3227 = vmatprep.subr.mxu0 0.0
        %3228 = vmatpush2.xpose.msra.mxu0 0.0
        %3229 = vmatprep.subr.mxu0 0.0
        %3230 = vmatpush2.xpose.msra.mxu0 0.0
        %3231 = vmatprep.subr.mxu0 0.0
        %3232 = vmatpush2.xpose.msra.mxu0 0.0
        %3233 = vmatprep.subr.mxu0 0.0
        %3234 = vmatpush2.xpose.msra.mxu0 0.0
        %3235 = vmatprep.subr.mxu0 0.0
        %3236 = vmatpush2.xpose.msra.mxu0 0.0
        %3237 = vmatprep.subr.mxu0 0.0
        %3238 = vmatpush2.xpose.msra.mxu0 0.0
        %3239 = vmatprep.subr.mxu0 0.0
        %3240 = vmatpush2.xpose.msra.mxu0 0.0
        %3241 = vmatprep.subr.mxu0 0.0
        %3242 = vmatpush2.xpose.msra.mxu0 0.0
        %3243 = vmatprep.subr.mxu0 0.0
        %3244 = vmatpush2.xpose.msra.mxu0 0.0
        %3245 = vmatprep.subr.mxu0 0.0
        %3246 = vmatpush2.xpose.msra.mxu0 0.0
        %3247 = vmatprep.subr.mxu0 0.0
        %3248 = vmatpush2.xpose.msra.mxu0 0.0
        %3249 = vmatprep.subr.mxu0 0.0
        %3250 = vmatpush2.xpose.msra.mxu0 0.0
        %3251 = vmatprep.subr.mxu0 0.0
        %3252 = vmatpush2.xpose.msra.mxu0 0.0
        %3253 = vmatprep.mubr.f32.mxu0 0.0
        %3254 = vmatmul.mubr.f32.gmra.mxu0 %v2543
        %v3255 = vpop.f32.mrf.mxu0
        %v3256 = vadd.f32 0.0, %v3255
        %v3257 = vpop.f32.mrf.mxu0
        %3258 = vdwg.mxu0
        %v3260 = vsel %vm1563, %v1261, 0
        %3262 = vmatprep.subr.mxu0 0.0
        %3263 = vmatpush1.xpose.msra.mxu0 0.0
        %3264 = vmatprep.subr.mxu0 0.0
        %3265 = vmatpush1.xpose.msra.mxu0 0.0
        %3266 = vmatprep.subr.mxu0 0.0
        %3267 = vmatpush1.xpose.msra.mxu0 0.0
        %3268 = vmatprep.subr.mxu0 0.0
        %3269 = vmatpush1.xpose.msra.mxu0 0.0
        %3270 = vmatprep.subr.mxu0 0.0
        %3271 = vmatpush1.xpose.msra.mxu0 0.0
        %3272 = vmatprep.subr.mxu0 0.0
        %3273 = vmatpush1.xpose.msra.mxu0 0.0
        %3274 = vmatprep.subr.mxu0 0.0
        %3275 = vmatpush1.xpose.msra.mxu0 0.0
        %3276 = vmatprep.subr.mxu0 0.0
        %3277 = vmatpush1.xpose.msra.mxu0 0.0
        %3278 = vmatprep.subr.mxu0 0.0
        %3279 = vmatpush1.xpose.msra.mxu0 0.0
        %3280 = vmatprep.subr.mxu0 0.0
        %3281 = vmatpush1.xpose.msra.mxu0 0.0
        %3282 = vmatprep.subr.mxu0 0.0
        %3283 = vmatpush1.xpose.msra.mxu0 0.0
        %3284 = vmatprep.subr.mxu0 0.0
        %3285 = vmatpush1.xpose.msra.mxu0 0.0
        %3286 = vmatprep.subr.mxu0 0.0
        %3287 = vmatpush1.xpose.msra.mxu0 0.0
        %3288 = vmatprep.subr.mxu0 0.0
        %3289 = vmatpush1.xpose.msra.mxu0 0.0
        %3290 = vmatprep.subr.mxu0 0.0
        %3291 = vmatpush1.xpose.msra.mxu0 0.0
        %3292 = vmatprep.subr.mxu0 0.0
        %3293 = vmatpush1.xpose.msra.mxu0 %v3260
        %3294 = vmatprep.subr.mxu0 0.0
        %3295 = vmatpush2.xpose.msra.mxu0 0.0
        %3296 = vmatprep.subr.mxu0 0.0
        %3297 = vmatpush2.xpose.msra.mxu0 0.0
        %3298 = vmatprep.subr.mxu0 0.0
        %3299 = vmatpush2.xpose.msra.mxu0 0.0
        %3300 = vmatprep.subr.mxu0 0.0
        %3301 = vmatpush2.xpose.msra.mxu0 0.0
        %3302 = vmatprep.subr.mxu0 0.0
        %3303 = vmatpush2.xpose.msra.mxu0 0.0
        %3304 = vmatprep.subr.mxu0 0.0
        %3305 = vmatpush2.xpose.msra.mxu0 0.0
        %3306 = vmatprep.subr.mxu0 0.0
        %3307 = vmatpush2.xpose.msra.mxu0 0.0
        %3308 = vmatprep.subr.mxu0 0.0
        %3309 = vmatpush2.xpose.msra.mxu0 0.0
        %3310 = vmatprep.subr.mxu0 0.0
        %3311 = vmatpush2.xpose.msra.mxu0 0.0
        %3312 = vmatprep.subr.mxu0 0.0
        %3313 = vmatpush2.xpose.msra.mxu0 0.0
        %3314 = vmatprep.subr.mxu0 0.0
        %3315 = vmatpush2.xpose.msra.mxu0 0.0
        %3316 = vmatprep.subr.mxu0 0.0
        %3317 = vmatpush2.xpose.msra.mxu0 0.0
        %3318 = vmatprep.subr.mxu0 0.0
        %3319 = vmatpush2.xpose.msra.mxu0 0.0
        %3320 = vmatprep.subr.mxu0 0.0
        %3321 = vmatpush2.xpose.msra.mxu0 0.0
        %3322 = vmatprep.subr.mxu0 0.0
        %3323 = vmatpush2.xpose.msra.mxu0 0.0
        %3324 = vmatprep.subr.mxu0 0.0
        %3325 = vmatpush2.xpose.msra.mxu0 0.0
        %3326 = vmatprep.mubr.f32.mxu0 0.0
        %3327 = vmatmul.mubr.f32.gmra.mxu0 %v2616
        %v3328 = vpop.f32.mrf.mxu0
        %v3329 = vadd.f32 0.0, %v3328
        %v3330 = vpop.f32.mrf.mxu0
        %3331 = vdwg.mxu0
        %v3333 = vsel %vm1563, %v1262, 0
        %3335 = vmatprep.subr.mxu0 0.0
        %3336 = vmatpush1.xpose.msra.mxu0 0.0
        %3337 = vmatprep.subr.mxu0 0.0
        %3338 = vmatpush1.xpose.msra.mxu0 0.0
        %3339 = vmatprep.subr.mxu0 0.0
        %3340 = vmatpush1.xpose.msra.mxu0 0.0
        %3341 = vmatprep.subr.mxu0 0.0
        %3342 = vmatpush1.xpose.msra.mxu0 0.0
        %3343 = vmatprep.subr.mxu0 0.0
        %3344 = vmatpush1.xpose.msra.mxu0 0.0
        %3345 = vmatprep.subr.mxu0 0.0
        %3346 = vmatpush1.xpose.msra.mxu0 0.0
        %3347 = vmatprep.subr.mxu0 0.0
        %3348 = vmatpush1.xpose.msra.mxu0 0.0
        %3349 = vmatprep.subr.mxu0 0.0
        %3350 = vmatpush1.xpose.msra.mxu0 0.0
        %3351 = vmatprep.subr.mxu0 0.0
        %3352 = vmatpush1.xpose.msra.mxu0 0.0
        %3353 = vmatprep.subr.mxu0 0.0
        %3354 = vmatpush1.xpose.msra.mxu0 0.0
        %3355 = vmatprep.subr.mxu0 0.0
        %3356 = vmatpush1.xpose.msra.mxu0 0.0
        %3357 = vmatprep.subr.mxu0 0.0
        %3358 = vmatpush1.xpose.msra.mxu0 0.0
        %3359 = vmatprep.subr.mxu0 0.0
        %3360 = vmatpush1.xpose.msra.mxu0 0.0
        %3361 = vmatprep.subr.mxu0 0.0
        %3362 = vmatpush1.xpose.msra.mxu0 0.0
        %3363 = vmatprep.subr.mxu0 0.0
        %3364 = vmatpush1.xpose.msra.mxu0 0.0
        %3365 = vmatprep.subr.mxu0 0.0
        %3366 = vmatpush1.xpose.msra.mxu0 %v3333
        %3367 = vmatprep.subr.mxu0 0.0
        %3368 = vmatpush2.xpose.msra.mxu0 0.0
        %3369 = vmatprep.subr.mxu0 0.0
        %3370 = vmatpush2.xpose.msra.mxu0 0.0
        %3371 = vmatprep.subr.mxu0 0.0
        %3372 = vmatpush2.xpose.msra.mxu0 0.0
        %3373 = vmatprep.subr.mxu0 0.0
        %3374 = vmatpush2.xpose.msra.mxu0 0.0
        %3375 = vmatprep.subr.mxu0 0.0
        %3376 = vmatpush2.xpose.msra.mxu0 0.0
        %3377 = vmatprep.subr.mxu0 0.0
        %3378 = vmatpush2.xpose.msra.mxu0 0.0
        %3379 = vmatprep.subr.mxu0 0.0
        %3380 = vmatpush2.xpose.msra.mxu0 0.0
        %3381 = vmatprep.subr.mxu0 0.0
        %3382 = vmatpush2.xpose.msra.mxu0 0.0
        %3383 = vmatprep.subr.mxu0 0.0
        %3384 = vmatpush2.xpose.msra.mxu0 0.0
        %3385 = vmatprep.subr.mxu0 0.0
        %3386 = vmatpush2.xpose.msra.mxu0 0.0
        %3387 = vmatprep.subr.mxu0 0.0
        %3388 = vmatpush2.xpose.msra.mxu0 0.0
        %3389 = vmatprep.subr.mxu0 0.0
        %3390 = vmatpush2.xpose.msra.mxu0 0.0
        %3391 = vmatprep.subr.mxu0 0.0
        %3392 = vmatpush2.xpose.msra.mxu0 0.0
        %3393 = vmatprep.subr.mxu0 0.0
        %3394 = vmatpush2.xpose.msra.mxu0 0.0
        %3395 = vmatprep.subr.mxu0 0.0
        %3396 = vmatpush2.xpose.msra.mxu0 0.0
        %3397 = vmatprep.subr.mxu0 0.0
        %3398 = vmatpush2.xpose.msra.mxu0 0.0
        %3399 = vmatprep.mubr.f32.mxu0 0.0
        %3400 = vmatmul.mubr.f32.gmra.mxu0 %v2689
        %v3401 = vpop.f32.mrf.mxu0
        %v3402 = vadd.f32 0.0, %v3401
        %v3403 = vpop.f32.mrf.mxu0
        %3404 = vdwg.mxu0
        %v3406 = vsel %vm1563, %v1263, 0
        %3408 = vmatprep.subr.mxu0 0.0
        %3409 = vmatpush1.xpose.msra.mxu0 0.0
        %3410 = vmatprep.subr.mxu0 0.0
        %3411 = vmatpush1.xpose.msra.mxu0 0.0
        %3412 = vmatprep.subr.mxu0 0.0
        %3413 = vmatpush1.xpose.msra.mxu0 0.0
        %3414 = vmatprep.subr.mxu0 0.0
        %3415 = vmatpush1.xpose.msra.mxu0 0.0
        %3416 = vmatprep.subr.mxu0 0.0
        %3417 = vmatpush1.xpose.msra.mxu0 0.0
        %3418 = vmatprep.subr.mxu0 0.0
        %3419 = vmatpush1.xpose.msra.mxu0 0.0
        %3420 = vmatprep.subr.mxu0 0.0
        %3421 = vmatpush1.xpose.msra.mxu0 0.0
        %3422 = vmatprep.subr.mxu0 0.0
        %3423 = vmatpush1.xpose.msra.mxu0 0.0
        %3424 = vmatprep.subr.mxu0 0.0
        %3425 = vmatpush1.xpose.msra.mxu0 0.0
        %3426 = vmatprep.subr.mxu0 0.0
        %3427 = vmatpush1.xpose.msra.mxu0 0.0
        %3428 = vmatprep.subr.mxu0 0.0
        %3429 = vmatpush1.xpose.msra.mxu0 0.0
        %3430 = vmatprep.subr.mxu0 0.0
        %3431 = vmatpush1.xpose.msra.mxu0 0.0
        %3432 = vmatprep.subr.mxu0 0.0
        %3433 = vmatpush1.xpose.msra.mxu0 0.0
        %3434 = vmatprep.subr.mxu0 0.0
        %3435 = vmatpush1.xpose.msra.mxu0 0.0
        %3436 = vmatprep.subr.mxu0 0.0
        %3437 = vmatpush1.xpose.msra.mxu0 0.0
        %3438 = vmatprep.subr.mxu0 0.0
        %3439 = vmatpush1.xpose.msra.mxu0 %v3406
        %3440 = vmatprep.subr.mxu0 0.0
        %3441 = vmatpush2.xpose.msra.mxu0 0.0
        %3442 = vmatprep.subr.mxu0 0.0
        %3443 = vmatpush2.xpose.msra.mxu0 0.0
        %3444 = vmatprep.subr.mxu0 0.0
        %3445 = vmatpush2.xpose.msra.mxu0 0.0
        %3446 = vmatprep.subr.mxu0 0.0
        %3447 = vmatpush2.xpose.msra.mxu0 0.0
        %3448 = vmatprep.subr.mxu0 0.0
        %3449 = vmatpush2.xpose.msra.mxu0 0.0
        %3450 = vmatprep.subr.mxu0 0.0
        %3451 = vmatpush2.xpose.msra.mxu0 0.0
        %3452 = vmatprep.subr.mxu0 0.0
        %3453 = vmatpush2.xpose.msra.mxu0 0.0
        %3454 = vmatprep.subr.mxu0 0.0
        %3455 = vmatpush2.xpose.msra.mxu0 0.0
        %3456 = vmatprep.subr.mxu0 0.0
        %3457 = vmatpush2.xpose.msra.mxu0 0.0
        %3458 = vmatprep.subr.mxu0 0.0
        %3459 = vmatpush2.xpose.msra.mxu0 0.0
        %3460 = vmatprep.subr.mxu0 0.0
        %3461 = vmatpush2.xpose.msra.mxu0 0.0
        %3462 = vmatprep.subr.mxu0 0.0
        %3463 = vmatpush2.xpose.msra.mxu0 0.0
        %3464 = vmatprep.subr.mxu0 0.0
        %3465 = vmatpush2.xpose.msra.mxu0 0.0
        %3466 = vmatprep.subr.mxu0 0.0
        %3467 = vmatpush2.xpose.msra.mxu0 0.0
        %3468 = vmatprep.subr.mxu0 0.0
        %3469 = vmatpush2.xpose.msra.mxu0 0.0
        %3470 = vmatprep.subr.mxu0 0.0
        %3471 = vmatpush2.xpose.msra.mxu0 0.0
        %3472 = vmatprep.mubr.f32.mxu0 0.0
        %3473 = vmatmul.mubr.f32.gmra.mxu0 %v2762
        %v3474 = vpop.f32.mrf.mxu0
        %v3475 = vadd.f32 0.0, %v3474
        %v3476 = vpop.f32.mrf.mxu0
        %3477 = vdwg.mxu0
        %v3478 = vadd.s32 %v1869, 8
        %v3479 = vadd.s32 %v1871, 8
        %vm3480 = vcmp.ge.s32.totalorder %v3478, %v3479
        %v3481 = vsel %vm3480, 1, 0
        %vm3482 = vcmp.eq.s32.totalorder %v3481, 1
        %v3483 = vsel %vm3482, %v3256, -1e+09
        %v3484 = vsel %vm3482, %v3329, -1e+09
        %v3485 = vsel %vm3482, %v3402, -1e+09
        %v3486 = vsel %vm3482, %v3475, -1e+09
        %v3487 = vsel %vm1563, %v3483, -inf
        %3488 = vmax.xlane.f32.xlu0 %v3487
        %v3489 = vpop.xlane.xlu0 %3488
        %v3490 = vsel %vm1563, %v3484, -inf
        %3491 = vmax.xlane.f32.xlu0 %v3490
        %v3492 = vpop.xlane.xlu0 %3491
        %v3493 = vsel %vm1563, %v3485, -inf
        %3494 = vmax.xlane.f32.xlu0 %v3493
        %v3495 = vpop.xlane.xlu0 %3494
        %v3496 = vsel %vm1563, %v3486, -inf
        %3497 = vmax.xlane.f32.xlu0 %v3496
        %v3498 = vpop.xlane.xlu0 %3497
        %v3499 = vmax.f32 %v2836, %v3489
        %v3500 = vmax.f32 %v2839, %v3492
        %v3501 = vmax.f32 %v2842, %v3495
        %v3502 = vmax.f32 %v2845, %v3498
        %v3503 = vsub.f32 %v2836, %v3499
        %v3504 = vsub.f32 %v2839, %v3500
        %v3505 = vsub.f32 %v2842, %v3501
        %v3506 = vsub.f32 %v2845, %v3502
        %v3507 = vmul.f32 %v3503, 1.442695
        %v3508 = vpow.pop %v3507
        %v3509 = vmul.f32 %v3504, 1.442695
        %v3510 = vpow.pop %v3509
        %v3511 = vmul.f32 %v3505, 1.442695
        %v3512 = vpow.pop %v3511
        %v3513 = vmul.f32 %v3506, 1.442695
        %v3514 = vpow.pop %v3513
        %v3515 = vsub.f32 %v3483, %v3499
        %v3516 = vsub.f32 %v3484, %v3500
        %v3517 = vsub.f32 %v3485, %v3501
        %v3518 = vsub.f32 %v3486, %v3502
        %v3519 = vmul.f32 %v3515, 1.442695
        %v3520 = vpow.pop %v3519
        %v3521 = vmul.f32 %v3516, 1.442695
        %v3522 = vpow.pop %v3521
        %v3523 = vmul.f32 %v3517, 1.442695
        %v3524 = vpow.pop %v3523
        %v3525 = vmul.f32 %v3518, 1.442695
        %v3526 = vpow.pop %v3525
        %v3527 = vmul.f32 %v3508, %v2886
        %v3528 = vmul.f32 %v3510, %v2887
        %v3529 = vmul.f32 %v3512, %v2888
        %v3530 = vmul.f32 %v3514, %v2889
        %v3531 = vsel %vm1563, %v3520, 0.0
        %3532 = vadd.xlane.f32.xlu0 %v3531
        %v3533 = vpop.xlane.xlu0 %3532
        %v3534 = vsel %vm1563, %v3522, 0.0
        %3535 = vadd.xlane.f32.xlu0 %v3534
        %v3536 = vpop.xlane.xlu0 %3535
        %v3537 = vsel %vm1563, %v3524, 0.0
        %3538 = vadd.xlane.f32.xlu0 %v3537
        %v3539 = vpop.xlane.xlu0 %3538
        %v3540 = vsel %vm1563, %v3526, 0.0
        %3541 = vadd.xlane.f32.xlu0 %v3540
        %v3542 = vpop.xlane.xlu0 %3541
        %v3543 = vadd.f32 %v3527, %v3533
        %v3544 = vadd.f32 %v3528, %v3536
        %v3545 = vadd.f32 %v3529, %v3539
        %v3546 = vadd.f32 %v3530, %v3542
        %v3547 = vmul.f32 %v3508, %v3182
        %v3548 = vmul.f32 %v3510, %v3183
        %v3549 = vmul.f32 %v3512, %v3184
        %v3550 = vmul.f32 %v3514, %v3185
        %v3552 = vsel %vm1563, %v3520, 0
        %3554 = vmatprep.subr.mxu0 0.0
        %3555 = vmatpush1.msra.mxu0 0.0
        %3556 = vmatprep.subr.mxu0 0.0
        %3557 = vmatpush1.msra.mxu0 0.0
        %3558 = vmatprep.subr.mxu0 0.0
        %3559 = vmatpush1.msra.mxu0 0.0
        %3560 = vmatprep.subr.mxu0 0.0
        %3561 = vmatpush1.msra.mxu0 0.0
        %3562 = vmatprep.subr.mxu0 0.0
        %3563 = vmatpush1.msra.mxu0 0.0
        %3564 = vmatprep.subr.mxu0 0.0
        %3565 = vmatpush1.msra.mxu0 0.0
        %3566 = vmatprep.subr.mxu0 0.0
        %3567 = vmatpush1.msra.mxu0 0.0
        %3568 = vmatprep.subr.mxu0 0.0
        %3569 = vmatpush1.msra.mxu0 0.0
        %3570 = vmatprep.subr.mxu0 0.0
        %3571 = vmatpush1.msra.mxu0 0.0
        %3572 = vmatprep.subr.mxu0 0.0
        %3573 = vmatpush1.msra.mxu0 0.0
        %3574 = vmatprep.subr.mxu0 0.0
        %3575 = vmatpush1.msra.mxu0 0.0
        %3576 = vmatprep.subr.mxu0 0.0
        %3577 = vmatpush1.msra.mxu0 0.0
        %3578 = vmatprep.subr.mxu0 0.0
        %3579 = vmatpush1.msra.mxu0 0.0
        %3580 = vmatprep.subr.mxu0 0.0
        %3581 = vmatpush1.msra.mxu0 0.0
        %3582 = vmatprep.subr.mxu0 0.0
        %3583 = vmatpush1.msra.mxu0 0.0
        %3584 = vmatprep.subr.mxu0 0.0
        %3585 = vmatpush1.msra.mxu0 %v1550
        %3586 = vmatprep.subr.mxu0 0.0
        %3587 = vmatpush2.msra.mxu0 0.0
        %3588 = vmatprep.subr.mxu0 0.0
        %3589 = vmatpush2.msra.mxu0 0.0
        %3590 = vmatprep.subr.mxu0 0.0
        %3591 = vmatpush2.msra.mxu0 0.0
        %3592 = vmatprep.subr.mxu0 0.0
        %3593 = vmatpush2.msra.mxu0 0.0
        %3594 = vmatprep.subr.mxu0 0.0
        %3595 = vmatpush2.msra.mxu0 0.0
        %3596 = vmatprep.subr.mxu0 0.0
        %3597 = vmatpush2.msra.mxu0 0.0
        %3598 = vmatprep.subr.mxu0 0.0
        %3599 = vmatpush2.msra.mxu0 0.0
        %3600 = vmatprep.subr.mxu0 0.0
        %3601 = vmatpush2.msra.mxu0 0.0
        %3602 = vmatprep.subr.mxu0 0.0
        %3603 = vmatpush2.msra.mxu0 0.0
        %3604 = vmatprep.subr.mxu0 0.0
        %3605 = vmatpush2.msra.mxu0 0.0
        %3606 = vmatprep.subr.mxu0 0.0
        %3607 = vmatpush2.msra.mxu0 0.0
        %3608 = vmatprep.subr.mxu0 0.0
        %3609 = vmatpush2.msra.mxu0 0.0
        %3610 = vmatprep.subr.mxu0 0.0
        %3611 = vmatpush2.msra.mxu0 0.0
        %3612 = vmatprep.subr.mxu0 0.0
        %3613 = vmatpush2.msra.mxu0 0.0
        %3614 = vmatprep.subr.mxu0 0.0
        %3615 = vmatpush2.msra.mxu0 0.0
        %3616 = vmatprep.subr.mxu0 0.0
        %3617 = vmatpush2.msra.mxu0 0.0
        %3618 = vmatprep.mubr.f32.mxu0 0.0
        %3619 = vmatmul.mubr.f32.gmra.mxu0 %v3552
        %v3620 = vpop.f32.mrf.mxu0
        %v3621 = vadd.f32 0.0, %v3620
        %v3622 = vpop.f32.mrf.mxu0
        %3623 = vdwg.mxu0
        %v3625 = vsel %vm1563, %v3522, 0
        %3627 = vmatprep.subr.mxu0 0.0
        %3628 = vmatpush1.msra.mxu0 0.0
        %3629 = vmatprep.subr.mxu0 0.0
        %3630 = vmatpush1.msra.mxu0 0.0
        %3631 = vmatprep.subr.mxu0 0.0
        %3632 = vmatpush1.msra.mxu0 0.0
        %3633 = vmatprep.subr.mxu0 0.0
        %3634 = vmatpush1.msra.mxu0 0.0
        %3635 = vmatprep.subr.mxu0 0.0
        %3636 = vmatpush1.msra.mxu0 0.0
        %3637 = vmatprep.subr.mxu0 0.0
        %3638 = vmatpush1.msra.mxu0 0.0
        %3639 = vmatprep.subr.mxu0 0.0
        %3640 = vmatpush1.msra.mxu0 0.0
        %3641 = vmatprep.subr.mxu0 0.0
        %3642 = vmatpush1.msra.mxu0 0.0
        %3643 = vmatprep.subr.mxu0 0.0
        %3644 = vmatpush1.msra.mxu0 0.0
        %3645 = vmatprep.subr.mxu0 0.0
        %3646 = vmatpush1.msra.mxu0 0.0
        %3647 = vmatprep.subr.mxu0 0.0
        %3648 = vmatpush1.msra.mxu0 0.0
        %3649 = vmatprep.subr.mxu0 0.0
        %3650 = vmatpush1.msra.mxu0 0.0
        %3651 = vmatprep.subr.mxu0 0.0
        %3652 = vmatpush1.msra.mxu0 0.0
        %3653 = vmatprep.subr.mxu0 0.0
        %3654 = vmatpush1.msra.mxu0 0.0
        %3655 = vmatprep.subr.mxu0 0.0
        %3656 = vmatpush1.msra.mxu0 0.0
        %3657 = vmatprep.subr.mxu0 0.0
        %3658 = vmatpush1.msra.mxu0 %v1551
        %3659 = vmatprep.subr.mxu0 0.0
        %3660 = vmatpush2.msra.mxu0 0.0
        %3661 = vmatprep.subr.mxu0 0.0
        %3662 = vmatpush2.msra.mxu0 0.0
        %3663 = vmatprep.subr.mxu0 0.0
        %3664 = vmatpush2.msra.mxu0 0.0
        %3665 = vmatprep.subr.mxu0 0.0
        %3666 = vmatpush2.msra.mxu0 0.0
        %3667 = vmatprep.subr.mxu0 0.0
        %3668 = vmatpush2.msra.mxu0 0.0
        %3669 = vmatprep.subr.mxu0 0.0
        %3670 = vmatpush2.msra.mxu0 0.0
        %3671 = vmatprep.subr.mxu0 0.0
        %3672 = vmatpush2.msra.mxu0 0.0
        %3673 = vmatprep.subr.mxu0 0.0
        %3674 = vmatpush2.msra.mxu0 0.0
        %3675 = vmatprep.subr.mxu0 0.0
        %3676 = vmatpush2.msra.mxu0 0.0
        %3677 = vmatprep.subr.mxu0 0.0
        %3678 = vmatpush2.msra.mxu0 0.0
        %3679 = vmatprep.subr.mxu0 0.0
        %3680 = vmatpush2.msra.mxu0 0.0
        %3681 = vmatprep.subr.mxu0 0.0
        %3682 = vmatpush2.msra.mxu0 0.0
        %3683 = vmatprep.subr.mxu0 0.0
        %3684 = vmatpush2.msra.mxu0 0.0
        %3685 = vmatprep.subr.mxu0 0.0
        %3686 = vmatpush2.msra.mxu0 0.0
        %3687 = vmatprep.subr.mxu0 0.0
        %3688 = vmatpush2.msra.mxu0 0.0
        %3689 = vmatprep.subr.mxu0 0.0
        %3690 = vmatpush2.msra.mxu0 0.0
        %3691 = vmatprep.mubr.f32.mxu0 0.0
        %3692 = vmatmul.mubr.f32.gmra.mxu0 %v3625
        %v3693 = vpop.f32.mrf.mxu0
        %v3694 = vadd.f32 0.0, %v3693
        %v3695 = vpop.f32.mrf.mxu0
        %3696 = vdwg.mxu0
        %v3698 = vsel %vm1563, %v3524, 0
        %3700 = vmatprep.subr.mxu0 0.0
        %3701 = vmatpush1.msra.mxu0 0.0
        %3702 = vmatprep.subr.mxu0 0.0
        %3703 = vmatpush1.msra.mxu0 0.0
        %3704 = vmatprep.subr.mxu0 0.0
        %3705 = vmatpush1.msra.mxu0 0.0
        %3706 = vmatprep.subr.mxu0 0.0
        %3707 = vmatpush1.msra.mxu0 0.0
        %3708 = vmatprep.subr.mxu0 0.0
        %3709 = vmatpush1.msra.mxu0 0.0
        %3710 = vmatprep.subr.mxu0 0.0
        %3711 = vmatpush1.msra.mxu0 0.0
        %3712 = vmatprep.subr.mxu0 0.0
        %3713 = vmatpush1.msra.mxu0 0.0
        %3714 = vmatprep.subr.mxu0 0.0
        %3715 = vmatpush1.msra.mxu0 0.0
        %3716 = vmatprep.subr.mxu0 0.0
        %3717 = vmatpush1.msra.mxu0 0.0
        %3718 = vmatprep.subr.mxu0 0.0
        %3719 = vmatpush1.msra.mxu0 0.0
        %3720 = vmatprep.subr.mxu0 0.0
        %3721 = vmatpush1.msra.mxu0 0.0
        %3722 = vmatprep.subr.mxu0 0.0
        %3723 = vmatpush1.msra.mxu0 0.0
        %3724 = vmatprep.subr.mxu0 0.0
        %3725 = vmatpush1.msra.mxu0 0.0
        %3726 = vmatprep.subr.mxu0 0.0
        %3727 = vmatpush1.msra.mxu0 0.0
        %3728 = vmatprep.subr.mxu0 0.0
        %3729 = vmatpush1.msra.mxu0 0.0
        %3730 = vmatprep.subr.mxu0 0.0
        %3731 = vmatpush1.msra.mxu0 %v1552
        %3732 = vmatprep.subr.mxu0 0.0
        %3733 = vmatpush2.msra.mxu0 0.0
        %3734 = vmatprep.subr.mxu0 0.0
        %3735 = vmatpush2.msra.mxu0 0.0
        %3736 = vmatprep.subr.mxu0 0.0
        %3737 = vmatpush2.msra.mxu0 0.0
        %3738 = vmatprep.subr.mxu0 0.0
        %3739 = vmatpush2.msra.mxu0 0.0
        %3740 = vmatprep.subr.mxu0 0.0
        %3741 = vmatpush2.msra.mxu0 0.0
        %3742 = vmatprep.subr.mxu0 0.0
        %3743 = vmatpush2.msra.mxu0 0.0
        %3744 = vmatprep.subr.mxu0 0.0
        %3745 = vmatpush2.msra.mxu0 0.0
        %3746 = vmatprep.subr.mxu0 0.0
        %3747 = vmatpush2.msra.mxu0 0.0
        %3748 = vmatprep.subr.mxu0 0.0
        %3749 = vmatpush2.msra.mxu0 0.0
        %3750 = vmatprep.subr.mxu0 0.0
        %3751 = vmatpush2.msra.mxu0 0.0
        %3752 = vmatprep.subr.mxu0 0.0
        %3753 = vmatpush2.msra.mxu0 0.0
        %3754 = vmatprep.subr.mxu0 0.0
        %3755 = vmatpush2.msra.mxu0 0.0
        %3756 = vmatprep.subr.mxu0 0.0
        %3757 = vmatpush2.msra.mxu0 0.0
        %3758 = vmatprep.subr.mxu0 0.0
        %3759 = vmatpush2.msra.mxu0 0.0
        %3760 = vmatprep.subr.mxu0 0.0
        %3761 = vmatpush2.msra.mxu0 0.0
        %3762 = vmatprep.subr.mxu0 0.0
        %3763 = vmatpush2.msra.mxu0 0.0
        %3764 = vmatprep.mubr.f32.mxu0 0.0
        %3765 = vmatmul.mubr.f32.gmra.mxu0 %v3698
        %v3766 = vpop.f32.mrf.mxu0
        %v3767 = vadd.f32 0.0, %v3766
        %v3768 = vpop.f32.mrf.mxu0
        %3769 = vdwg.mxu0
        %v3771 = vsel %vm1563, %v3526, 0
        %3773 = vmatprep.subr.mxu0 0.0
        %3774 = vmatpush1.msra.mxu0 0.0
        %3775 = vmatprep.subr.mxu0 0.0
        %3776 = vmatpush1.msra.mxu0 0.0
        %3777 = vmatprep.subr.mxu0 0.0
        %3778 = vmatpush1.msra.mxu0 0.0
        %3779 = vmatprep.subr.mxu0 0.0
        %3780 = vmatpush1.msra.mxu0 0.0
        %3781 = vmatprep.subr.mxu0 0.0
        %3782 = vmatpush1.msra.mxu0 0.0
        %3783 = vmatprep.subr.mxu0 0.0
        %3784 = vmatpush1.msra.mxu0 0.0
        %3785 = vmatprep.subr.mxu0 0.0
        %3786 = vmatpush1.msra.mxu0 0.0
        %3787 = vmatprep.subr.mxu0 0.0
        %3788 = vmatpush1.msra.mxu0 0.0
        %3789 = vmatprep.subr.mxu0 0.0
        %3790 = vmatpush1.msra.mxu0 0.0
        %3791 = vmatprep.subr.mxu0 0.0
        %3792 = vmatpush1.msra.mxu0 0.0
        %3793 = vmatprep.subr.mxu0 0.0
        %3794 = vmatpush1.msra.mxu0 0.0
        %3795 = vmatprep.subr.mxu0 0.0
        %3796 = vmatpush1.msra.mxu0 0.0
        %3797 = vmatprep.subr.mxu0 0.0
        %3798 = vmatpush1.msra.mxu0 0.0
        %3799 = vmatprep.subr.mxu0 0.0
        %3800 = vmatpush1.msra.mxu0 0.0
        %3801 = vmatprep.subr.mxu0 0.0
        %3802 = vmatpush1.msra.mxu0 0.0
        %3803 = vmatprep.subr.mxu0 0.0
        %3804 = vmatpush1.msra.mxu0 %v1553
        %3805 = vmatprep.subr.mxu0 0.0
        %3806 = vmatpush2.msra.mxu0 0.0
        %3807 = vmatprep.subr.mxu0 0.0
        %3808 = vmatpush2.msra.mxu0 0.0
        %3809 = vmatprep.subr.mxu0 0.0
        %3810 = vmatpush2.msra.mxu0 0.0
        %3811 = vmatprep.subr.mxu0 0.0
        %3812 = vmatpush2.msra.mxu0 0.0
        %3813 = vmatprep.subr.mxu0 0.0
        %3814 = vmatpush2.msra.mxu0 0.0
        %3815 = vmatprep.subr.mxu0 0.0
        %3816 = vmatpush2.msra.mxu0 0.0
        %3817 = vmatprep.subr.mxu0 0.0
        %3818 = vmatpush2.msra.mxu0 0.0
        %3819 = vmatprep.subr.mxu0 0.0
        %3820 = vmatpush2.msra.mxu0 0.0
        %3821 = vmatprep.subr.mxu0 0.0
        %3822 = vmatpush2.msra.mxu0 0.0
        %3823 = vmatprep.subr.mxu0 0.0
        %3824 = vmatpush2.msra.mxu0 0.0
        %3825 = vmatprep.subr.mxu0 0.0
        %3826 = vmatpush2.msra.mxu0 0.0
        %3827 = vmatprep.subr.mxu0 0.0
        %3828 = vmatpush2.msra.mxu0 0.0
        %3829 = vmatprep.subr.mxu0 0.0
        %3830 = vmatpush2.msra.mxu0 0.0
        %3831 = vmatprep.subr.mxu0 0.0
        %3832 = vmatpush2.msra.mxu0 0.0
        %3833 = vmatprep.subr.mxu0 0.0
        %3834 = vmatpush2.msra.mxu0 0.0
        %3835 = vmatprep.subr.mxu0 0.0
        %3836 = vmatpush2.msra.mxu0 0.0
        %3837 = vmatprep.mubr.f32.mxu0 0.0
        %3838 = vmatmul.mubr.f32.gmra.mxu0 %v3771
        %v3839 = vpop.f32.mrf.mxu0
        %v3840 = vadd.f32 0.0, %v3839
        %v3841 = vpop.f32.mrf.mxu0
        %3842 = vdwg.mxu0
        %v3843 = vadd.f32 %v3547, %v3621
        %v3844 = vadd.f32 %v3548, %v3694
        %v3845 = vadd.f32 %v3549, %v3767
        %v3846 = vadd.f32 %v3550, %v3840
        %v3847 = vrcp.pop %v3543
        %v3848 = vmul.f32 %v3843, %v3847
        %v3849 = vrcp.pop %v3544
        %v3850 = vmul.f32 %v3844, %v3849
        %v3851 = vrcp.pop %v3545
        %v3852 = vmul.f32 %v3845, %v3851
        %v3853 = vrcp.pop %v3546
        %v3854 = vmul.f32 %v3846, %v3853
        %v3856 = vsel %vm1563, %v3848, 0
        %3858 = vmatprep.subr.mxu0 0.0
        %3859 = vmatpush1.msra.mxu0 0.0
        %3860 = vmatprep.subr.mxu0 0.0
        %3861 = vmatpush1.msra.mxu0 0.0
        %3862 = vmatprep.subr.mxu0 0.0
        %3863 = vmatpush1.msra.mxu0 0.0
        %3864 = vmatprep.subr.mxu0 0.0
        %3865 = vmatpush1.msra.mxu0 0.0
        %3866 = vmatprep.subr.mxu0 0.0
        %3867 = vmatpush1.msra.mxu0 0.0
        %3868 = vmatprep.subr.mxu0 0.0
        %3869 = vmatpush1.msra.mxu0 0.0
        %3870 = vmatprep.subr.mxu0 0.0
        %3871 = vmatpush1.msra.mxu0 0.0
        %3872 = vmatprep.subr.mxu0 0.0
        %3873 = vmatpush1.msra.mxu0 0.0
        %3874 = vmatprep.subr.mxu0 0.0
        %3875 = vmatpush1.msra.mxu0 0.0
        %3876 = vmatprep.subr.mxu0 0.0
        %3877 = vmatpush1.msra.mxu0 0.0
        %3878 = vmatprep.subr.mxu0 0.0
        %3879 = vmatpush1.msra.mxu0 0.0
        %3880 = vmatprep.subr.mxu0 0.0
        %3881 = vmatpush1.msra.mxu0 0.0
        %3882 = vmatprep.subr.mxu0 0.0
        %3883 = vmatpush1.msra.mxu0 0.0
        %3884 = vmatprep.subr.mxu0 0.0
        %3885 = vmatpush1.msra.mxu0 0.0
        %3886 = vmatprep.subr.mxu0 0.0
        %3887 = vmatpush1.msra.mxu0 0.0
        %3888 = vmatprep.subr.mxu0 0.0
        %3889 = vmatpush1.msra.mxu0 %v1554
        %3890 = vmatprep.subr.mxu0 0.0
        %3891 = vmatpush2.msra.mxu0 0.0
        %3892 = vmatprep.subr.mxu0 0.0
        %3893 = vmatpush2.msra.mxu0 0.0
        %3894 = vmatprep.subr.mxu0 0.0
        %3895 = vmatpush2.msra.mxu0 0.0
        %3896 = vmatprep.subr.mxu0 0.0
        %3897 = vmatpush2.msra.mxu0 0.0
        %3898 = vmatprep.subr.mxu0 0.0
        %3899 = vmatpush2.msra.mxu0 0.0
        %3900 = vmatprep.subr.mxu0 0.0
        %3901 = vmatpush2.msra.mxu0 0.0
        %3902 = vmatprep.subr.mxu0 0.0
        %3903 = vmatpush2.msra.mxu0 0.0
        %3904 = vmatprep.subr.mxu0 0.0
        %3905 = vmatpush2.msra.mxu0 0.0
        %3906 = vmatprep.subr.mxu0 0.0
        %3907 = vmatpush2.msra.mxu0 0.0
        %3908 = vmatprep.subr.mxu0 0.0
        %3909 = vmatpush2.msra.mxu0 0.0
        %3910 = vmatprep.subr.mxu0 0.0
        %3911 = vmatpush2.msra.mxu0 0.0
        %3912 = vmatprep.subr.mxu0 0.0
        %3913 = vmatpush2.msra.mxu0 0.0
        %3914 = vmatprep.subr.mxu0 0.0
        %3915 = vmatpush2.msra.mxu0 0.0
        %3916 = vmatprep.subr.mxu0 0.0
        %3917 = vmatpush2.msra.mxu0 0.0
        %3918 = vmatprep.subr.mxu0 0.0
        %3919 = vmatpush2.msra.mxu0 0.0
        %3920 = vmatprep.subr.mxu0 0.0
        %3921 = vmatpush2.msra.mxu0 0.0
        %3922 = vmatprep.mubr.f32.mxu0 0.0
        %3923 = vmatmul.mubr.f32.gmra.mxu0 %v3856
        %v3924 = vpop.f32.mrf.mxu0
        %v3925 = vadd.f32 0.0, %v3924
        %v3926 = vpop.f32.mrf.mxu0
        %3927 = vdwg.mxu0
        %v3929 = vsel %vm1563, %v3850, 0
        %3931 = vmatprep.subr.mxu0 0.0
        %3932 = vmatpush1.msra.mxu0 0.0
        %3933 = vmatprep.subr.mxu0 0.0
        %3934 = vmatpush1.msra.mxu0 0.0
        %3935 = vmatprep.subr.mxu0 0.0
        %3936 = vmatpush1.msra.mxu0 0.0
        %3937 = vmatprep.subr.mxu0 0.0
        %3938 = vmatpush1.msra.mxu0 0.0
        %3939 = vmatprep.subr.mxu0 0.0
        %3940 = vmatpush1.msra.mxu0 0.0
        %3941 = vmatprep.subr.mxu0 0.0
        %3942 = vmatpush1.msra.mxu0 0.0
        %3943 = vmatprep.subr.mxu0 0.0
        %3944 = vmatpush1.msra.mxu0 0.0
        %3945 = vmatprep.subr.mxu0 0.0
        %3946 = vmatpush1.msra.mxu0 0.0
        %3947 = vmatprep.subr.mxu0 0.0
        %3948 = vmatpush1.msra.mxu0 0.0
        %3949 = vmatprep.subr.mxu0 0.0
        %3950 = vmatpush1.msra.mxu0 0.0
        %3951 = vmatprep.subr.mxu0 0.0
        %3952 = vmatpush1.msra.mxu0 0.0
        %3953 = vmatprep.subr.mxu0 0.0
        %3954 = vmatpush1.msra.mxu0 0.0
        %3955 = vmatprep.subr.mxu0 0.0
        %3956 = vmatpush1.msra.mxu0 0.0
        %3957 = vmatprep.subr.mxu0 0.0
        %3958 = vmatpush1.msra.mxu0 0.0
        %3959 = vmatprep.subr.mxu0 0.0
        %3960 = vmatpush1.msra.mxu0 0.0
        %3961 = vmatprep.subr.mxu0 0.0
        %3962 = vmatpush1.msra.mxu0 %v1555
        %3963 = vmatprep.subr.mxu0 0.0
        %3964 = vmatpush2.msra.mxu0 0.0
        %3965 = vmatprep.subr.mxu0 0.0
        %3966 = vmatpush2.msra.mxu0 0.0
        %3967 = vmatprep.subr.mxu0 0.0
        %3968 = vmatpush2.msra.mxu0 0.0
        %3969 = vmatprep.subr.mxu0 0.0
        %3970 = vmatpush2.msra.mxu0 0.0
        %3971 = vmatprep.subr.mxu0 0.0
        %3972 = vmatpush2.msra.mxu0 0.0
        %3973 = vmatprep.subr.mxu0 0.0
        %3974 = vmatpush2.msra.mxu0 0.0
        %3975 = vmatprep.subr.mxu0 0.0
        %3976 = vmatpush2.msra.mxu0 0.0
        %3977 = vmatprep.subr.mxu0 0.0
        %3978 = vmatpush2.msra.mxu0 0.0
        %3979 = vmatprep.subr.mxu0 0.0
        %3980 = vmatpush2.msra.mxu0 0.0
        %3981 = vmatprep.subr.mxu0 0.0
        %3982 = vmatpush2.msra.mxu0 0.0
        %3983 = vmatprep.subr.mxu0 0.0
        %3984 = vmatpush2.msra.mxu0 0.0
        %3985 = vmatprep.subr.mxu0 0.0
        %3986 = vmatpush2.msra.mxu0 0.0
        %3987 = vmatprep.subr.mxu0 0.0
        %3988 = vmatpush2.msra.mxu0 0.0
        %3989 = vmatprep.subr.mxu0 0.0
        %3990 = vmatpush2.msra.mxu0 0.0
        %3991 = vmatprep.subr.mxu0 0.0
        %3992 = vmatpush2.msra.mxu0 0.0
        %3993 = vmatprep.subr.mxu0 0.0
        %3994 = vmatpush2.msra.mxu0 0.0
        %3995 = vmatprep.mubr.f32.mxu0 0.0
        %3996 = vmatmul.mubr.f32.gmra.mxu0 %v3929
        %v3997 = vpop.f32.mrf.mxu0
        %v3998 = vadd.f32 0.0, %v3997
        %v3999 = vpop.f32.mrf.mxu0
        %4000 = vdwg.mxu0
        %v4002 = vsel %vm1563, %v3852, 0
        %4004 = vmatprep.subr.mxu0 0.0
        %4005 = vmatpush1.msra.mxu0 0.0
        %4006 = vmatprep.subr.mxu0 0.0
        %4007 = vmatpush1.msra.mxu0 0.0
        %4008 = vmatprep.subr.mxu0 0.0
        %4009 = vmatpush1.msra.mxu0 0.0
        %4010 = vmatprep.subr.mxu0 0.0
        %4011 = vmatpush1.msra.mxu0 0.0
        %4012 = vmatprep.subr.mxu0 0.0
        %4013 = vmatpush1.msra.mxu0 0.0
        %4014 = vmatprep.subr.mxu0 0.0
        %4015 = vmatpush1.msra.mxu0 0.0
        %4016 = vmatprep.subr.mxu0 0.0
        %4017 = vmatpush1.msra.mxu0 0.0
        %4018 = vmatprep.subr.mxu0 0.0
        %4019 = vmatpush1.msra.mxu0 0.0
        %4020 = vmatprep.subr.mxu0 0.0
        %4021 = vmatpush1.msra.mxu0 0.0
        %4022 = vmatprep.subr.mxu0 0.0
        %4023 = vmatpush1.msra.mxu0 0.0
        %4024 = vmatprep.subr.mxu0 0.0
        %4025 = vmatpush1.msra.mxu0 0.0
        %4026 = vmatprep.subr.mxu0 0.0
        %4027 = vmatpush1.msra.mxu0 0.0
        %4028 = vmatprep.subr.mxu0 0.0
        %4029 = vmatpush1.msra.mxu0 0.0
        %4030 = vmatprep.subr.mxu0 0.0
        %4031 = vmatpush1.msra.mxu0 0.0
        %4032 = vmatprep.subr.mxu0 0.0
        %4033 = vmatpush1.msra.mxu0 0.0
        %4034 = vmatprep.subr.mxu0 0.0
        %4035 = vmatpush1.msra.mxu0 %v1556
        %4036 = vmatprep.subr.mxu0 0.0
        %4037 = vmatpush2.msra.mxu0 0.0
        %4038 = vmatprep.subr.mxu0 0.0
        %4039 = vmatpush2.msra.mxu0 0.0
        %4040 = vmatprep.subr.mxu0 0.0
        %4041 = vmatpush2.msra.mxu0 0.0
        %4042 = vmatprep.subr.mxu0 0.0
        %4043 = vmatpush2.msra.mxu0 0.0
        %4044 = vmatprep.subr.mxu0 0.0
        %4045 = vmatpush2.msra.mxu0 0.0
        %4046 = vmatprep.subr.mxu0 0.0
        %4047 = vmatpush2.msra.mxu0 0.0
        %4048 = vmatprep.subr.mxu0 0.0
        %4049 = vmatpush2.msra.mxu0 0.0
        %4050 = vmatprep.subr.mxu0 0.0
        %4051 = vmatpush2.msra.mxu0 0.0
        %4052 = vmatprep.subr.mxu0 0.0
        %4053 = vmatpush2.msra.mxu0 0.0
        %4054 = vmatprep.subr.mxu0 0.0
        %4055 = vmatpush2.msra.mxu0 0.0
        %4056 = vmatprep.subr.mxu0 0.0
        %4057 = vmatpush2.msra.mxu0 0.0
        %4058 = vmatprep.subr.mxu0 0.0
        %4059 = vmatpush2.msra.mxu0 0.0
        %4060 = vmatprep.subr.mxu0 0.0
        %4061 = vmatpush2.msra.mxu0 0.0
        %4062 = vmatprep.subr.mxu0 0.0
        %4063 = vmatpush2.msra.mxu0 0.0
        %4064 = vmatprep.subr.mxu0 0.0
        %4065 = vmatpush2.msra.mxu0 0.0
        %4066 = vmatprep.subr.mxu0 0.0
        %4067 = vmatpush2.msra.mxu0 0.0
        %4068 = vmatprep.mubr.f32.mxu0 0.0
        %4069 = vmatmul.mubr.f32.gmra.mxu0 %v4002
        %v4070 = vpop.f32.mrf.mxu0
        %v4071 = vadd.f32 0.0, %v4070
        %v4072 = vpop.f32.mrf.mxu0
        %4073 = vdwg.mxu0
        %v4075 = vsel %vm1563, %v3854, 0
        %4077 = vmatprep.subr.mxu0 0.0
        %4078 = vmatpush1.msra.mxu0 0.0
        %4079 = vmatprep.subr.mxu0 0.0
        %4080 = vmatpush1.msra.mxu0 0.0
        %4081 = vmatprep.subr.mxu0 0.0
        %4082 = vmatpush1.msra.mxu0 0.0
        %4083 = vmatprep.subr.mxu0 0.0
        %4084 = vmatpush1.msra.mxu0 0.0
        %4085 = vmatprep.subr.mxu0 0.0
        %4086 = vmatpush1.msra.mxu0 0.0
        %4087 = vmatprep.subr.mxu0 0.0
        %4088 = vmatpush1.msra.mxu0 0.0
        %4089 = vmatprep.subr.mxu0 0.0
        %4090 = vmatpush1.msra.mxu0 0.0
        %4091 = vmatprep.subr.mxu0 0.0
        %4092 = vmatpush1.msra.mxu0 0.0
        %4093 = vmatprep.subr.mxu0 0.0
        %4094 = vmatpush1.msra.mxu0 0.0
        %4095 = vmatprep.subr.mxu0 0.0
        %4096 = vmatpush1.msra.mxu0 0.0
        %4097 = vmatprep.subr.mxu0 0.0
        %4098 = vmatpush1.msra.mxu0 0.0
        %4099 = vmatprep.subr.mxu0 0.0
        %4100 = vmatpush1.msra.mxu0 0.0
        %4101 = vmatprep.subr.mxu0 0.0
        %4102 = vmatpush1.msra.mxu0 0.0
        %4103 = vmatprep.subr.mxu0 0.0
        %4104 = vmatpush1.msra.mxu0 0.0
        %4105 = vmatprep.subr.mxu0 0.0
        %4106 = vmatpush1.msra.mxu0 0.0
        %4107 = vmatprep.subr.mxu0 0.0
        %4108 = vmatpush1.msra.mxu0 %v1557
        %4109 = vmatprep.subr.mxu0 0.0
        %4110 = vmatpush2.msra.mxu0 0.0
        %4111 = vmatprep.subr.mxu0 0.0
        %4112 = vmatpush2.msra.mxu0 0.0
        %4113 = vmatprep.subr.mxu0 0.0
        %4114 = vmatpush2.msra.mxu0 0.0
        %4115 = vmatprep.subr.mxu0 0.0
        %4116 = vmatpush2.msra.mxu0 0.0
        %4117 = vmatprep.subr.mxu0 0.0
        %4118 = vmatpush2.msra.mxu0 0.0
        %4119 = vmatprep.subr.mxu0 0.0
        %4120 = vmatpush2.msra.mxu0 0.0
        %4121 = vmatprep.subr.mxu0 0.0
        %4122 = vmatpush2.msra.mxu0 0.0
        %4123 = vmatprep.subr.mxu0 0.0
        %4124 = vmatpush2.msra.mxu0 0.0
        %4125 = vmatprep.subr.mxu0 0.0
        %4126 = vmatpush2.msra.mxu0 0.0
        %4127 = vmatprep.subr.mxu0 0.0
        %4128 = vmatpush2.msra.mxu0 0.0
        %4129 = vmatprep.subr.mxu0 0.0
        %4130 = vmatpush2.msra.mxu0 0.0
        %4131 = vmatprep.subr.mxu0 0.0
        %4132 = vmatpush2.msra.mxu0 0.0
        %4133 = vmatprep.subr.mxu0 0.0
        %4134 = vmatpush2.msra.mxu0 0.0
        %4135 = vmatprep.subr.mxu0 0.0
        %4136 = vmatpush2.msra.mxu0 0.0
        %4137 = vmatprep.subr.mxu0 0.0
        %4138 = vmatpush2.msra.mxu0 0.0
        %4139 = vmatprep.subr.mxu0 0.0
        %4140 = vmatpush2.msra.mxu0 0.0
        %4141 = vmatprep.mubr.f32.mxu0 0.0
        %4142 = vmatmul.mubr.f32.gmra.mxu0 %v4075
        %v4143 = vpop.f32.mrf.mxu0
        %v4144 = vadd.f32 0.0, %v4143
        %v4145 = vpop.f32.mrf.mxu0
        %4146 = vdwg.mxu0
        %v4147 = vsel %vm515, %v3925, 0.0
        %v4148 = vsel %vm515, %v3998, 0.0
        %v4149 = vadd.f32 %v4147, %v4148
        %v4150 = vsel %vm515, %v4071, 0.0
        %v4151 = vadd.f32 %v4149, %v4150
        %v4152 = vsel %vm515, %v4144, 0.0
        %v4153 = vadd.f32 %v4151, %v4152
        %v4155 = vlaneseq
        %v4156 = vshrl.u32 %v4155, 7
        %v4157 = vsub.s32 0, %v4156
        %v4158 = vrot.slane %v1558, %v4157
        %v4160 = vadd.f32 %v2537, %v4158
        %v4161 = vadd.f32 %v4153, %v4158
        %v4162 = vadd.f32 %v511, %v4160
        %v4163 = vadd.f32 %v512, %v4161
        %v4164 = vld [vmem:[%s7] sm:$0x1]
        %v4165 = vld [vmem:[%s8] sm:$0x1]
        %v4166 = vsel %vm515, %v4162, 0.0
        %4167 = vadd.xlane.f32.xlu0 %v4166
        %v4168 = vpop.xlane.xlu0 %4167
        %v4169 = vsel %vm515, %v4163, 0.0
        %4170 = vadd.xlane.f32.xlu0 %v4169
        %v4171 = vpop.xlane.xlu0 %4170
        %v4172 = vmul.f32 %v4168, %v522
        %v4173 = vmul.f32 %v4171, %v522
        %v4174 = vsub.f32 %v4162, %v4172
        %v4175 = vsub.f32 %v4163, %v4173
        %v4176 = vmul.f32 %v4174, %v4174
        %v4177 = vmul.f32 %v4175, %v4175
        %v4178 = vsel %vm515, %v4176, 0.0
        %4179 = vadd.xlane.f32.xlu0 %v4178
        %v4180 = vpop.xlane.xlu0 %4179
        %v4181 = vsel %vm515, %v4177, 0.0
        %4182 = vadd.xlane.f32.xlu0 %v4181
        %v4183 = vpop.xlane.xlu0 %4182
        %v4184 = vmul.f32 %v4180, %v535
        %v4185 = vmul.f32 %v4183, %v535
        %v4186 = vrsqrt.pop %v4184
        %v4187 = vmul.f32 %v4184, %v4186
        %vm4188 = vcmp.eq.f32.partialorder %v4184, inf
        %v4189 = vsel %vm4188, %v4184, %v4187
        %vm4190 = vcmp.eq.f32.partialorder %v4184, 0.0
        %v4191 = vand.u32 %v4184, 2147483648
        %v4192 = vsel %vm4190, %v4191, %v4189
        %v4193 = vrsqrt.pop %v4185
        %v4194 = vmul.f32 %v4185, %v4193
        %vm4195 = vcmp.eq.f32.partialorder %v4185, inf
        %v4196 = vsel %vm4195, %v4185, %v4194
        %vm4197 = vcmp.eq.f32.partialorder %v4185, 0.0
        %v4198 = vand.u32 %v4185, 2147483648
        %v4199 = vsel %vm4197, %v4198, %v4196
        %v4200 = vadd.f32 %v4192, 1e-07
        %v4201 = vadd.f32 %v4199, 1e-07
        %v4202 = vrcp.pop %v4200
        %v4203 = vmul.f32 %v4174, %v4202
        %v4204 = vrcp.pop %v4201
        %v4205 = vmul.f32 %v4175, %v4204
        %v4207 = vlaneseq
        %v4208 = vshrl.u32 %v4207, 7
        %v4209 = vsub.s32 0, %v4208
        %v4210 = vrot.slane %v4164, %v4209
        %v4212 = vmul.f32 %v4210, %v4203
        %v4213 = vmul.f32 %v4210, %v4205
        %v4215 = vlaneseq
        %v4216 = vshrl.u32 %v4215, 7
        %v4217 = vsub.s32 0, %v4216
        %v4218 = vrot.slane %v4165, %v4217
        %v4220 = vadd.f32 %v4212, %v4218
        %v4221 = vadd.f32 %v4213, %v4218
        %v4222 = vld [vmem:[%s9] sm:$0xff]
        %v4223 = vld [vmem:[%s9 + $0x8] sm:$0xff]
        %v4224 = vld [vmem:[%s9 + $0x10] sm:$0xff]
        %v4225 = vld [vmem:[%s9 + $0x18] sm:$0xff]
        %v4226 = vld [vmem:[%s10] sm:$0x1]
        %v4228 = vlaneseq
        %v4229 = vshrl.u32 %v4228, 7
        %v4230 = vsub.s32 0, %v4229
        %v4231 = vrot.slane %v4226, %v4230
        %v4234 = vsel %vm515, %v4220, 0
        %v4237 = vsel %vm515, %v4221, 0
        %4239 = vmatprep.subr.mxu0 0.0
        %4240 = vmatpush1.msra.mxu0 0.0
        %4241 = vmatprep.subr.mxu0 0.0
        %4242 = vmatpush1.msra.mxu0 0.0
        %4243 = vmatprep.subr.mxu0 0.0
        %4244 = vmatpush1.msra.mxu0 0.0
        %4245 = vmatprep.subr.mxu0 0.0
        %4246 = vmatpush1.msra.mxu0 0.0
        %4247 = vmatprep.subr.mxu0 0.0
        %4248 = vmatpush1.msra.mxu0 0.0
        %4249 = vmatprep.subr.mxu0 0.0
        %4250 = vmatpush1.msra.mxu0 0.0
        %4251 = vmatprep.subr.mxu0 0.0
        %4252 = vmatpush1.msra.mxu0 0.0
        %4253 = vmatprep.subr.mxu0 0.0
        %4254 = vmatpush1.msra.mxu0 0.0
        %4255 = vmatprep.subr.mxu0 0.0
        %4256 = vmatpush1.msra.mxu0 0.0
        %4257 = vmatprep.subr.mxu0 0.0
        %4258 = vmatpush1.msra.mxu0 0.0
        %4259 = vmatprep.subr.mxu0 0.0
        %4260 = vmatpush1.msra.mxu0 0.0
        %4261 = vmatprep.subr.mxu0 0.0
        %4262 = vmatpush1.msra.mxu0 0.0
        %4263 = vmatprep.subr.mxu0 0.0
        %4264 = vmatpush1.msra.mxu0 %v4225
        %4265 = vmatprep.subr.mxu0 0.0
        %4266 = vmatpush1.msra.mxu0 %v4224
        %4267 = vmatprep.subr.mxu0 0.0
        %4268 = vmatpush1.msra.mxu0 %v4223
        %4269 = vmatprep.subr.mxu0 0.0
        %4270 = vmatpush1.msra.mxu0 %v4222
        %4271 = vmatprep.subr.mxu0 0.0
        %4272 = vmatpush2.msra.mxu0 0.0
        %4273 = vmatprep.subr.mxu0 0.0
        %4274 = vmatpush2.msra.mxu0 0.0
        %4275 = vmatprep.subr.mxu0 0.0
        %4276 = vmatpush2.msra.mxu0 0.0
        %4277 = vmatprep.subr.mxu0 0.0
        %4278 = vmatpush2.msra.mxu0 0.0
        %4279 = vmatprep.subr.mxu0 0.0
        %4280 = vmatpush2.msra.mxu0 0.0
        %4281 = vmatprep.subr.mxu0 0.0
        %4282 = vmatpush2.msra.mxu0 0.0
        %4283 = vmatprep.subr.mxu0 0.0
        %4284 = vmatpush2.msra.mxu0 0.0
        %4285 = vmatprep.subr.mxu0 0.0
        %4286 = vmatpush2.msra.mxu0 0.0
        %4287 = vmatprep.subr.mxu0 0.0
        %4288 = vmatpush2.msra.mxu0 0.0
        %4289 = vmatprep.subr.mxu0 0.0
        %4290 = vmatpush2.msra.mxu0 0.0
        %4291 = vmatprep.subr.mxu0 0.0
        %4292 = vmatpush2.msra.mxu0 0.0
        %4293 = vmatprep.subr.mxu0 0.0
        %4294 = vmatpush2.msra.mxu0 0.0
        %4295 = vmatprep.subr.mxu0 0.0
        %4296 = vmatpush2.msra.mxu0 0.0
        %4297 = vmatprep.subr.mxu0 0.0
        %4298 = vmatpush2.msra.mxu0 0.0
        %4299 = vmatprep.subr.mxu0 0.0
        %4300 = vmatpush2.msra.mxu0 0.0
        %4301 = vmatprep.subr.mxu0 0.0
        %4302 = vmatpush2.msra.mxu0 0.0
        %4303 = vmatprep.mubr.f32.mxu0 0.0
        %4304 = vmatmul.mubr.f32.gmra.mxu0 %v4234
        %v4305 = vpop.f32.mrf.mxu0
        %v4306 = vadd.f32 %v4231, %v4305
        %v4307 = vpop.f32.mrf.mxu0
        %4308 = vmatprep.mubr.f32.mxu0 0.0
        %4309 = vmatmul.mubr.f32.gmra.mxu0 %v4237
        %v4310 = vpop.f32.mrf.mxu0
        %v4311 = vadd.f32 %v4231, %v4310
        %v4312 = vpop.f32.mrf.mxu0
        %4313 = vdwg.mxu0
        %v4314 = vmul.f32 %v4306, 0.5
        %v4315 = vmul.f32 %v4311, 0.5
        %v4316 = vmul.f32 %v4306, 0.70710677
        %v4317 = vmul.f32 %v4311, 0.70710677
        %v4318 = verf.f32.pop %v4316
        %v4319 = verf.f32.pop %v4317
        %v4320 = vadd.f32 %v4318, 1.0
        %v4321 = vadd.f32 %v4319, 1.0
        %v4322 = vmul.f32 %v4314, %v4320
        %v4323 = vmul.f32 %v4315, %v4321
        %v4324 = vld [vmem:[%s11] sm:$0xff]
        %v4325 = vld [vmem:[%s11 + $0x8] sm:$0xff]
        %v4326 = vld [vmem:[%s11 + $0x10] sm:$0xff]
        %v4327 = vld [vmem:[%s11 + $0x18] sm:$0xff]
        %v4328 = vld [vmem:[%s11 + $0x20] sm:$0xff]
        %v4329 = vld [vmem:[%s11 + $0x28] sm:$0xff]
        %v4330 = vld [vmem:[%s11 + $0x30] sm:$0xff]
        %v4331 = vld [vmem:[%s11 + $0x38] sm:$0xff]
        %v4332 = vld [vmem:[%s11 + $0x40] sm:$0xff]
        %v4333 = vld [vmem:[%s11 + $0x48] sm:$0xff]
        %v4334 = vld [vmem:[%s11 + $0x50] sm:$0xff]
        %v4335 = vld [vmem:[%s11 + $0x58] sm:$0xff]
        %v4336 = vld [vmem:[%s11 + $0x60] sm:$0xff]
        %v4337 = vld [vmem:[%s11 + $0x68] sm:$0xff]
        %v4338 = vld [vmem:[%s11 + $0x70] sm:$0xff]
        %v4339 = vld [vmem:[%s11 + $0x78] sm:$0xff]
        %4340 = vmatprep.subr.mxu0 0.0
        %4341 = vmatpush1.msra.mxu0 %v4339
        %4342 = vmatprep.subr.mxu0 0.0
        %4343 = vmatpush1.msra.mxu0 %v4338
        %4344 = vmatprep.subr.mxu0 0.0
        %4345 = vmatpush1.msra.mxu0 %v4337
        %4346 = vmatprep.subr.mxu0 0.0
        %4347 = vmatpush1.msra.mxu0 %v4336
        %4348 = vmatprep.subr.mxu0 0.0
        %4349 = vmatpush1.msra.mxu0 %v4335
        %4350 = vmatprep.subr.mxu0 0.0
        %4351 = vmatpush1.msra.mxu0 %v4334
        %4352 = vmatprep.subr.mxu0 0.0
        %4353 = vmatpush1.msra.mxu0 %v4333
        %4354 = vmatprep.subr.mxu0 0.0
        %4355 = vmatpush1.msra.mxu0 %v4332
        %4356 = vmatprep.subr.mxu0 0.0
        %4357 = vmatpush1.msra.mxu0 %v4331
        %4358 = vmatprep.subr.mxu0 0.0
        %4359 = vmatpush1.msra.mxu0 %v4330
        %4360 = vmatprep.subr.mxu0 0.0
        %4361 = vmatpush1.msra.mxu0 %v4329
        %4362 = vmatprep.subr.mxu0 0.0
        %4363 = vmatpush1.msra.mxu0 %v4328
        %4364 = vmatprep.subr.mxu0 0.0
        %4365 = vmatpush1.msra.mxu0 %v4327
        %4366 = vmatprep.subr.mxu0 0.0
        %4367 = vmatpush1.msra.mxu0 %v4326
        %4368 = vmatprep.subr.mxu0 0.0
        %4369 = vmatpush1.msra.mxu0 %v4325
        %4370 = vmatprep.subr.mxu0 0.0
        %4371 = vmatpush1.msra.mxu0 %v4324
        %4372 = vmatprep.subr.mxu0 0.0
        %4373 = vmatpush2.msra.mxu0 0.0
        %4374 = vmatprep.subr.mxu0 0.0
        %4375 = vmatpush2.msra.mxu0 0.0
        %4376 = vmatprep.subr.mxu0 0.0
        %4377 = vmatpush2.msra.mxu0 0.0
        %4378 = vmatprep.subr.mxu0 0.0
        %4379 = vmatpush2.msra.mxu0 0.0
        %4380 = vmatprep.subr.mxu0 0.0
        %4381 = vmatpush2.msra.mxu0 0.0
        %4382 = vmatprep.subr.mxu0 0.0
        %4383 = vmatpush2.msra.mxu0 0.0
        %4384 = vmatprep.subr.mxu0 0.0
        %4385 = vmatpush2.msra.mxu0 0.0
        %4386 = vmatprep.subr.mxu0 0.0
        %4387 = vmatpush2.msra.mxu0 0.0
        %4388 = vmatprep.subr.mxu0 0.0
        %4389 = vmatpush2.msra.mxu0 0.0
        %4390 = vmatprep.subr.mxu0 0.0
        %4391 = vmatpush2.msra.mxu0 0.0
        %4392 = vmatprep.subr.mxu0 0.0
        %4393 = vmatpush2.msra.mxu0 0.0
        %4394 = vmatprep.subr.mxu0 0.0
        %4395 = vmatpush2.msra.mxu0 0.0
        %4396 = vmatprep.subr.mxu0 0.0
        %4397 = vmatpush2.msra.mxu0 0.0
        %4398 = vmatprep.subr.mxu0 0.0
        %4399 = vmatpush2.msra.mxu0 0.0
        %4400 = vmatprep.subr.mxu0 0.0
        %4401 = vmatpush2.msra.mxu0 0.0
        %4402 = vmatprep.subr.mxu0 0.0
        %4403 = vmatpush2.msra.mxu0 0.0
        %4404 = vmatprep.mubr.f32.mxu0 0.0
        %4405 = vmatmul.mubr.f32.gmra.mxu0 %v4322
        %v4406 = vpop.f32.mrf.mxu0
        %v4407 = vadd.f32 0.0, %v4406
        %v4408 = vpop.f32.mrf.mxu0
        %4409 = vmatprep.mubr.f32.mxu0 0.0
        %4410 = vmatmul.mubr.f32.gmra.mxu0 %v4323
        %v4411 = vpop.f32.mrf.mxu0
        %v4412 = vadd.f32 0.0, %v4411
        %v4413 = vpop.f32.mrf.mxu0
        %4414 = vdwg.mxu0
        %v4415 = vadd.f32 %v4162, %v4407
        %v4416 = vadd.f32 %v4163, %v4412
        %v4417 = vld [vmem:[%s12] sm:$0x1]
        %v4419 = vlaneseq
        %v4420 = vshrl.u32 %v4419, 7
        %v4421 = vsub.s32 0, %v4420
        %v4422 = vrot.slane %v4417, %v4421
        %v4424 = vadd.f32 %v4415, %v4422
        %v4425 = vadd.f32 %v4416, %v4422
        %4426 = vst.msk [vmem:[%s491] sm:$0xff] %vm515, %v4424
        %4427 = vst.msk [vmem:[%s491 + $0x8] sm:$0xff] %vm515, %v4425
        %s4428 = sand.u32 %s319, 1
        %s4429 = scalar_lea.sflag [#allocation3], %s4428
        %s4430 = sand.u32 %s319, 1
        %s4431 = smul.addr %s4430, 16
        %s4432 = scalar_lea.vmem [#allocation2], %s4431
        %s4433 = sand.u32 %s33, 1
        %s4434 = scalar_lea.sflag [#allocation5], %s4433
        %s4435 = sand.u32 %s345, 1
        %s4436 = smul.addr %s4435, 16
        %s4437 = scalar_lea.vmem [#allocation4], %s4436
        %s4438 = sand.u32 %s33, 1
        %s4439 = scalar_lea.sflag [#allocation5], %s4438
        %s4440 = sand.u32 %s371, 1
        %s4441 = smul.addr %s4440, 16
        %s4442 = scalar_lea.vmem [#allocation6], %s4441
        // Predicated region
        $region73: #{tpu_custom_call.1} parent=71 // pred_check
          %p4443 = pneg %p329
        $region74: #{tpu_custom_call.1} parent=71 // pred_check_branch
          %4445 = sbr.rel (%p4443) target = $region76
        $region75: #{tpu_custom_call.1} parent=71 // pred_region
          %s4447 = ssub.s32 256, 256
          %4448 = vsyncadd %s4429, %s4447
          %s4449 = smul.addr %s33, 2
          %s4450 = smul.addr %s4449, 128
          %s4451 = scalar_lea.hbm %s13, %s4450
          %s4452 = sshll.u32 %s4432, 4
          %s4453 = int_to_ptr.vmem [resolvable:$true] %s4452
          %4458 = dma.vmem_to_hbm [thread:$0]  %s4453, 256, %s4451, %s4429, 128, 128, 8
        $region76: #{tpu_custom_call.1} parent=71 // pred_fallthru
          _
        // Predicated region
        $region77: #{tpu_custom_call.1} parent=71 // pred_check
          %p4459 = pneg %p355
        $region78: #{tpu_custom_call.1} parent=71 // pred_check_branch
          %4461 = sbr.rel (%p4459) target = $region80
        $region79: #{tpu_custom_call.1} parent=71 // pred_region
          %s4463 = ssub.s32 256, 256
          %4464 = vsyncadd %s4434, %s4463
          %s4465 = smul.addr %s33, 2
          %s4466 = smul.addr %s4465, 128
          %s4467 = scalar_lea.hbm %s14, %s4466
          %s4468 = sshll.u32 %s4437, 4
          %s4469 = int_to_ptr.vmem [resolvable:$true] %s4468
          %4474 = dma.vmem_to_hbm [thread:$0]  %s4469, 256, %s4467, %s4434, 128, 128, 8
        $region80: #{tpu_custom_call.1} parent=71 // pred_fallthru
          _
        // Predicated region
        $region81: #{tpu_custom_call.1} parent=71 // pred_check
          %p4475 = pneg %p381
        $region82: #{tpu_custom_call.1} parent=71 // pred_check_branch
          %4477 = sbr.rel (%p4475) target = $region84
        $region83: #{tpu_custom_call.1} parent=71 // pred_region
          %s4479 = ssub.s32 256, 256
          %4480 = vsyncadd %s4439, %s4479
          %s4481 = smul.addr %s33, 2
          %s4482 = smul.addr %s4481, 128
          %s4483 = scalar_lea.hbm %s15, %s4482
          %s4484 = sshll.u32 %s4442, 4
          %s4485 = int_to_ptr.vmem [resolvable:$true] %s4484
          %4490 = dma.vmem_to_hbm [thread:$0]  %s4485, 256, %s4483, %s4439, 128, 128, 8
        $region84: #{tpu_custom_call.1} parent=71 // pred_fallthru
          _
      $region72: #{tpu_custom_call.1} parent=5 // pred_fallthru
        _
      %p4491 = scmp.le.s32.totalorder 2, %s28
      // Predicated region
      $region85: #{tpu_custom_call.1} parent=5 // pred_check
        %p4492 = pneg %p4491
      $region86: #{tpu_custom_call.1} parent=5 // pred_check_branch
        %4494 = sbr.rel (%p4492) target = $region88
      $region87: #{tpu_custom_call.1} parent=5 // pred_region
        %s4495 = ssub.s32 %s28, 2
        // Predicated region
        $region89: #{tpu_custom_call.1} parent=87 // pred_check
          %p4496 = pneg %p335
        $region90: #{tpu_custom_call.1} parent=87 // pred_check_branch
          %4498 = sbr.rel (%p4496) target = $region92
        $region91: #{tpu_custom_call.1} parent=87 // pred_region
          %s4499 = sand.u32 %s320, 1
          %s4500 = scalar_lea.sflag [#allocation3], %s4499
          %s4501 = sand.u32 %s320, 1
          %s4502 = smul.addr %s4501, 16
          %s4503 = scalar_lea.vmem [#allocation2], %s4502
          %4504 = dma.done %s4500, 256
        $region92: #{tpu_custom_call.1} parent=87 // pred_fallthru
          _
        // Predicated region
        $region93: #{tpu_custom_call.1} parent=87 // pred_check
          %p4505 = pneg %p361
        $region94: #{tpu_custom_call.1} parent=87 // pred_check_branch
          %4507 = sbr.rel (%p4505) target = $region96
        $region95: #{tpu_custom_call.1} parent=87 // pred_region
          %s4508 = sand.u32 %s34, 1
          %s4509 = scalar_lea.sflag [#allocation5], %s4508
          %s4510 = sand.u32 %s346, 1
          %s4511 = smul.addr %s4510, 16
          %s4512 = scalar_lea.vmem [#allocation4], %s4511
          %4513 = dma.done %s4509, 256
        $region96: #{tpu_custom_call.1} parent=87 // pred_fallthru
          _
        // Predicated region
        $region97: #{tpu_custom_call.1} parent=87 // pred_check
          %p4514 = pneg %p387
        $region98: #{tpu_custom_call.1} parent=87 // pred_check_branch
          %4516 = sbr.rel (%p4514) target = $region100
        $region99: #{tpu_custom_call.1} parent=87 // pred_region
          %s4517 = sand.u32 %s34, 1
          %s4518 = scalar_lea.sflag [#allocation5], %s4517
          %s4519 = sand.u32 %s372, 1
          %s4520 = smul.addr %s4519, 16
          %s4521 = scalar_lea.vmem [#allocation6], %s4520
          %4522 = dma.done %s4518, 256
        $region100: #{tpu_custom_call.1} parent=87 // pred_fallthru
          _
      $region88: #{tpu_custom_call.1} parent=5 // pred_fallthru
        _
    $region6: #{tpu_custom_call.1} parent=1 // loop_footer
      %s32 = sadd.s32 1, %s28
    $region7: #{tpu_custom_call.1} parent=1 // loop_footer_branch
      %27 = sbr.rel target = $region3
    $region8: #{tpu_custom_call.1} parent=1 // loop_exit
      _
    %4523 = vsyncpa [#allocation3], 1
    %s4524 = scalar_lea.sflag [#allocation3], 1
    %4525 = vsyncpa %s4524, 1
    %4526 = vsyncpa [#allocation5], 1
    %s4527 = scalar_lea.sflag [#allocation5], 1
    %4528 = vsyncpa %s4527, 1

</llo_original>
